<compile_context>
chip_gen: v7x
topology: tpu7x:2x2x1
jax: 0.10.0
libtpu: 0.0.40
codegen_flags: <defaults>
</compile_context>

<pallas_src>
import jax
import jax.numpy as jnp
from jax.experimental import pallas as pl
from jax.experimental.pallas import tpu as pltpu


def _pad_rows(n):
    # Flat-activation rows: >= n + 2 (room for the dy*W+dx overhang of the
    # shifted conv slices), rounded up to a multiple of 8 sublanes.
    return ((n + 2 + 7) // 8) * 8


def _im2col_conv(src_ref, w_ref, im2col_ref, conv_ref, *, W, Cin, M):
    """3x3 valid conv over the flat (row = y*W + x) layout, K-fused.

    Stages the 9 shifted taps into a bf16 (M, 9*Cin) scratch, then one matmul
    against w (9*Cin, Cout).  conv_ref holds the RAW conv output (no bias/ReLU
    -- those are folded into pooling).  Columns W-2, W-1 of each output row are
    wrap-around garbage that pooling never reads.
    """
    for k in range(9):
        dy, dx = divmod(k, 3)
        off = dy * W + dx
        im2col_ref[:, k * Cin:(k + 1) * Cin] = (
            src_ref[off:off + M, :].astype(jnp.bfloat16))
    conv_ref[...] = jnp.dot(im2col_ref[...], w_ref[...],
                            preferred_element_type=jnp.float32)


def _pool_bias_relu(conv_ref, b_ref, dst_ref, *, W, Hp, Wp, tail_rows):
    """MaxPool(2,2, stride 2) + bias + ReLU (commute with max) via strided loads.

    Pooled row py lands at dst rows [py*Wp, (py+1)*Wp) -- the next conv's flat
    input layout.  tail_rows overhang rows are zeroed so shifted slices of dst
    stay finite/deterministic.
    """
    for py in range(Hp):
        base0 = (2 * py) * W
        base1 = base0 + W
        q = jnp.maximum(
            jnp.maximum(conv_ref[pl.ds(base0, Wp, stride=2), :],
                        conv_ref[pl.ds(base0 + 1, Wp, stride=2), :]),
            jnp.maximum(conv_ref[pl.ds(base1, Wp, stride=2), :],
                        conv_ref[pl.ds(base1 + 1, Wp, stride=2), :]))
        dst_ref[py * Wp:(py + 1) * Wp, :] = jnp.maximum(q + b_ref[...], 0.0)
    if tail_rows > 0:
        dst_ref[Hp * Wp:Hp * Wp + tail_rows, :] = jnp.zeros(
            (tail_rows, dst_ref.shape[1]), jnp.float32)


def ripeness_classifier_forward(x_nchw, params):
    x = jnp.transpose(x_nchw, (0, 2, 3, 1)).astype(jnp.float32)   # NCHW -> NHWC
    B, H1, W1, Cin = x.shape

    # Static geometry of the 3x (conv3x3 valid + maxpool2x2) stack.
    Ho1, Wo1 = H1 - 2, W1 - 2
    Hp1, Wp1 = Ho1 // 2, Wo1 // 2
    Ho2, Wo2 = Hp1 - 2, Wp1 - 2
    Hp2, Wp2 = Ho2 // 2, Wo2 // 2
    Ho3, Wo3 = Hp2 - 2, Wp2 - 2
    Hp3, Wp3 = Ho3 // 2, Wo3 // 2

    C1 = params["w1"].shape[-1]
    C2 = params["w2"].shape[-1]
    C3 = params["w3"].shape[-1]
    Dh = params["w4"].shape[-1]
    n_cls = params["w5"].shape[-1]
    n_flat = Hp3 * Wp3
    flat_dim = n_flat * C3
    assert params["w4"].shape[0] == flat_dim, "flatten dim mismatch"

    M1, M2, M3 = Ho1 * W1, Ho2 * Wp1, Ho3 * Wp2          # full-width conv rows
    rows1 = _pad_rows(H1 * W1)
    rows2 = _pad_rows(Hp1 * Wp1)
    rows3 = _pad_rows(Hp2 * Wp2)

    # Flatten spatial dims (row = y*W + x).  The pad rows (needed so shifted
    # conv slices stay in bounds) fuse with the NCHW->NHWC transpose copy.
    x2d = jnp.pad(x.reshape(B, H1 * W1, Cin),
                  ((0, 0), (0, rows1 - H1 * W1), (0, 0)))

    # K-fused bf16 weights: (9*Cin, Cout) rows ordered (dy, dx, c) -- exactly
    # the im2col column ordering.  Biases stay f32.
    w1 = params["w1"].reshape(9 * Cin, C1).astype(jnp.bfloat16)
    w2 = params["w2"].reshape(9 * C1, C2).astype(jnp.bfloat16)
    w3 = params["w3"].reshape(9 * C2, C3).astype(jnp.bfloat16)
    w4 = params["w4"].astype(jnp.bfloat16)                # (flat_dim, Dh)
    w5 = params["w5"].astype(jnp.bfloat16)                # (Dh, n_cls)
    b1 = params["b1"].reshape(1, C1).astype(jnp.float32)
    b2 = params["b2"].reshape(1, C2).astype(jnp.float32)
    b3 = params["b3"].reshape(1, C3).astype(jnp.float32)
    b4 = params["b4"].reshape(1, Dh).astype(jnp.float32)
    b5 = params["b5"].reshape(1, n_cls).astype(jnp.float32)

    def kernel(x_ref, w1_ref, b1_ref, w2_ref, b2_ref, w3_ref, b3_ref,
               w4_ref, b4_ref, w5_ref, b5_ref, o_ref,
               im2col1, conv1, act2, im2col2, conv2, act3,
               im2col3, conv3, flat_in):
        # ---- conv1 (K=9*Cin) + pool -> act2 -------------------------------
        _im2col_conv(x_ref, w1_ref, im2col1, conv1, W=W1, Cin=Cin, M=M1)
        _pool_bias_relu(conv1, b1_ref, act2, W=W1, Hp=Hp1, Wp=Wp1,
                        tail_rows=rows2 - Hp1 * Wp1)

        # ---- conv2 (K=9*C1) + pool -> act3 --------------------------------
        _im2col_conv(act2, w2_ref, im2col2, conv2, W=Wp1, Cin=C1, M=M2)
        _pool_bias_relu(conv2, b2_ref, act3, W=Wp1, Hp=Hp2, Wp=Wp2,
                        tail_rows=rows3 - Hp2 * Wp2)

        # ---- conv3 (K=9*C2); pooling writes the Flatten vector directly ----
        _im2col_conv(act3, w3_ref, im2col3, conv3, W=Wp2, Cin=C2, M=M3)
        for py in range(Hp3):
            for px in range(Wp3):
                r0 = (2 * py) * Wp2 + 2 * px
                r1 = r0 + Wp2
                q = jnp.maximum(
                    jnp.maximum(conv3[r0:r0 + 1, :], conv3[r0 + 1:r0 + 2, :]),
                    jnp.maximum(conv3[r1:r1 + 1, :], conv3[r1 + 1:r1 + 2, :]))
                q = jnp.maximum(q + b3_ref[...], 0.0)            # (1, C3) f32
                pix = py * Wp3 + px                              # Keras (y,x,c)
                flat_in[:, pix * C3:(pix + 1) * C3] = q.astype(jnp.bfloat16)

        # ---- Dense(flat_dim -> Dh) + ReLU: one K=flat_dim matmul ----------
        hidden = jnp.dot(flat_in[...], w4_ref[...],
                         preferred_element_type=jnp.float32) + b4_ref[...]
        hidden = jnp.maximum(hidden, 0.0)                        # (1, Dh) f32

        # ---- Dense(Dh -> n_cls) + softmax ----------------------------------
        logits = jnp.dot(hidden.astype(jnp.bfloat16), w5_ref[...],
                         preferred_element_type=jnp.float32) + b5_ref[...]
        m = jnp.max(logits, axis=-1, keepdims=True)
        e = jnp.exp(logits - m)
        denom = jnp.sum(e, axis=-1, keepdims=True)
        o_ref[...] = (e * pl.reciprocal(denom, approx=False)).astype(o_ref.dtype)

    def whole(arr):
        return pl.BlockSpec(tuple(arr.shape), lambda b, n=arr.ndim: (0,) * n)

    in_specs = [
        pl.BlockSpec((None, rows1, Cin), lambda b: (b, 0, 0)),   # one image/step
        whole(w1), whole(b1), whole(w2), whole(b2), whole(w3), whole(b3),
        whole(w4), whole(b4), whole(w5), whole(b5),
    ]
    out_specs = pl.BlockSpec((None, 1, n_cls), lambda b: (b, 0, 0))

    scratch_shapes = [
        pltpu.VMEM((M1, 9 * Cin), jnp.bfloat16),   # im2col, layer 1
        pltpu.VMEM((M1, C1), jnp.float32),         # raw conv1 output
        pltpu.VMEM((rows2, C1), jnp.float32),      # pooled act -> conv2 input
        pltpu.VMEM((M2, 9 * C1), jnp.bfloat16),    # im2col, layer 2
        pltpu.VMEM((M2, C2), jnp.float32),         # raw conv2 output
        pltpu.VMEM((rows3, C2), jnp.float32),      # pooled act -> conv3 input
        pltpu.VMEM((M3, 9 * C2), jnp.bfloat16),    # im2col, layer 3
        pltpu.VMEM((M3, C3), jnp.float32),         # raw conv3 output
        pltpu.VMEM((1, flat_dim), jnp.bfloat16),   # lane-dense Flatten vector
    ]

    conv_flops = 2 * (M1 * 9 * Cin * C1 + M2 * 9 * C1 * C2 + M3 * 9 * C2 * C3)
    dense_flops = 2 * (flat_dim * Dh + Dh * n_cls)
    weight_bytes = 2 * (w1.size + w2.size + w3.size + w4.size + w5.size) \
        + 4 * (C1 + C2 + C3 + Dh + n_cls)
    cost = pl.CostEstimate(
        flops=B * (conv_flops + dense_flops),
        transcendentals=B * n_cls,
        bytes_accessed=B * (rows1 * Cin + n_cls) * 4 + weight_bytes)

    out = pl.pallas_call(
        kernel,
        out_shape=jax.ShapeDtypeStruct((B, 1, n_cls), jnp.float32),
        grid=(B,),
        in_specs=in_specs,
        out_specs=out_specs,
        scratch_shapes=scratch_shapes,
        compiler_params=pltpu.CompilerParams(
            dimension_semantics=("parallel",),      # v7x: images split over TCs
            vmem_limit_bytes=32 * 1024 * 1024),
        cost_estimate=cost,
    )(x2d, w1, b1, w2, b2, w3, b3, w4, b4, w5, b5)

    return out.reshape(B, n_cls)


def init_params(key, in_ch=3, flat_dim=512):
    ks = jax.random.split(key, 10)

    def w(k, shape, scale=0.05):
        return (scale * jax.random.normal(k, shape)).astype(jnp.float32)

    return {
        "w1": w(ks[0], (3, 3, in_ch, 32)), "b1": w(ks[5], (32,), 0.01),
        "w2": w(ks[1], (3, 3, 32, 64)),    "b2": w(ks[6], (64,), 0.01),
        "w3": w(ks[2], (3, 3, 64, 128)),   "b3": w(ks[7], (128,), 0.01),
        "w4": w(ks[3], (flat_dim, 128)),   "b4": w(ks[8], (128,), 0.01),
        "w5": w(ks[4], (128, 4)),          "b5": w(ks[9], (4,), 0.01),
    }


if __name__ == "__main__":
    key = jax.random.PRNGKey(0)
    kx, kp = jax.random.split(key)
    # Small input consistent with the 3x (conv3x3 valid + pool2x2) stack:
    # 32 -> 30 -> 15 -> 13 -> 6 -> 4 -> 2   =>  flatten dim = 2*2*128 = 512
    x = jax.random.uniform(kx, (2, 3, 32, 32), dtype=jnp.float32)  # NCHW
    params = init_params(kp, in_ch=3, flat_dim=512)

    out = jax.jit(ripeness_classifier_forward)(x, params)
    out = jax.block_until_ready(out)

    assert out.shape == (2, 4), out.shape
    assert bool(jnp.all(jnp.isfinite(out)))
    # softmax rows sum to ~1 (exact f32 reciprocal)
    assert bool(jnp.all(jnp.abs(out.sum(axis=-1) - 1.0) < 1e-3))
    print("KERNEL_OK")
</pallas_src>

<mosaic_0001>
module attributes {stable_mosaic.version = 11 : i64} {
  func.func @kernel(%arg0: i32, %arg1: memref<1x1032x3xf32, #tpu.memory_space<vmem>>, %arg2: memref<27x32xbf16, #tpu.memory_space<vmem>>, %arg3: memref<1x32xf32, #tpu.memory_space<vmem>>, %arg4: memref<288x64xbf16, #tpu.memory_space<vmem>>, %arg5: memref<1x64xf32, #tpu.memory_space<vmem>>, %arg6: memref<576x128xbf16, #tpu.memory_space<vmem>>, %arg7: memref<1x128xf32, #tpu.memory_space<vmem>>, %arg8: memref<512x128xbf16, #tpu.memory_space<vmem>>, %arg9: memref<1x128xf32, #tpu.memory_space<vmem>>, %arg10: memref<128x4xbf16, #tpu.memory_space<vmem>>, %arg11: memref<1x4xf32, #tpu.memory_space<vmem>>, %arg12: memref<1x1x4xf32, #tpu.memory_space<vmem>>, %arg13: memref<960x27xbf16, #tpu.memory_space<vmem>>, %arg14: memref<960x32xf32, #tpu.memory_space<vmem>>, %arg15: memref<232x32xf32, #tpu.memory_space<vmem>>, %arg16: memref<195x288xbf16, #tpu.memory_space<vmem>>, %arg17: memref<195x64xf32, #tpu.memory_space<vmem>>, %arg18: memref<40x64xf32, #tpu.memory_space<vmem>>, %arg19: memref<24x576xbf16, #tpu.memory_space<vmem>>, %arg20: memref<24x128xf32, #tpu.memory_space<vmem>>, %arg21: memref<1x512xbf16, #tpu.memory_space<vmem>>) attributes {dimension_semantics = [#tpu.dimension_semantics<parallel>], iteration_bounds = array<i64: 2>, scalar_prefetch = 0 : i64, scratch_operands = 9 : i64, tpu.core_type = #tpu.core_type<tc>, window_params = [{transform_indices = @transform_0, window_bounds = array<i64: 1, 1032, 3>}, {pipeline_mode = #tpu.pipeline_mode<synchronous>, transform_indices = @transform_1, window_bounds = array<i64: 27, 32>}, {pipeline_mode = #tpu.pipeline_mode<synchronous>, transform_indices = @transform_2, window_bounds = array<i64: 1, 32>}, {pipeline_mode = #tpu.pipeline_mode<synchronous>, transform_indices = @transform_3, window_bounds = array<i64: 288, 64>}, {pipeline_mode = #tpu.pipeline_mode<synchronous>, transform_indices = @transform_4, window_bounds = array<i64: 1, 64>}, {pipeline_mode = #tpu.pipeline_mode<synchronous>, transform_indices = @transform_5, window_bounds = array<i64: 576, 128>}, {pipeline_mode = #tpu.pipeline_mode<synchronous>, transform_indices = @transform_6, window_bounds = array<i64: 1, 128>}, {pipeline_mode = #tpu.pipeline_mode<synchronous>, transform_indices = @transform_7, window_bounds = array<i64: 512, 128>}, {pipeline_mode = #tpu.pipeline_mode<synchronous>, transform_indices = @transform_8, window_bounds = array<i64: 1, 128>}, {pipeline_mode = #tpu.pipeline_mode<synchronous>, transform_indices = @transform_9, window_bounds = array<i64: 128, 4>}, {pipeline_mode = #tpu.pipeline_mode<synchronous>, transform_indices = @transform_10, window_bounds = array<i64: 1, 4>}, {transform_indices = @transform_11, window_bounds = array<i64: 1, 1, 4>}]} {
    %c0 = arith.constant 0 : index
    %c0_0 = arith.constant 0 : index
    %c0_1 = arith.constant 0 : index
    %0 = vector.load %arg1[%c0, %c0_0, %c0_1] : memref<1x1032x3xf32, #tpu.memory_space<vmem>>, vector<1x960x3xf32>
    %1 = vector.shape_cast %0 : vector<1x960x3xf32> to vector<960x3xf32>
    %2 = arith.truncf %1 : vector<960x3xf32> to vector<960x3xbf16>
    %c0_2 = arith.constant 0 : index
    %c0_3 = arith.constant 0 : index
    %3 = vector.load %arg13[%c0_2, %c0_3] : memref<960x27xbf16, #tpu.memory_space<vmem>>, vector<960x3xbf16>
    tpu.vector_store %arg13[%c0_2, %c0_3], %2 {strides = array<i32>} : memref<960x27xbf16, #tpu.memory_space<vmem>>, vector<960x3xbf16>,
    %c0_4 = arith.constant 0 : index
    %c1 = arith.constant 1 : index
    %c0_5 = arith.constant 0 : index
    %4 = vector.load %arg1[%c0_4, %c1, %c0_5] : memref<1x1032x3xf32, #tpu.memory_space<vmem>>, vector<1x960x3xf32>
    %5 = vector.shape_cast %4 : vector<1x960x3xf32> to vector<960x3xf32>
    %6 = arith.truncf %5 : vector<960x3xf32> to vector<960x3xbf16>
    %c0_6 = arith.constant 0 : index
    %c3 = arith.constant 3 : index
    %7 = vector.load %arg13[%c0_6, %c3] : memref<960x27xbf16, #tpu.memory_space<vmem>>, vector<960x3xbf16>
    tpu.vector_store %arg13[%c0_6, %c3], %6 {strides = array<i32>} : memref<960x27xbf16, #tpu.memory_space<vmem>>, vector<960x3xbf16>,
    %c0_7 = arith.constant 0 : index
    %c2 = arith.constant 2 : index
    %c0_8 = arith.constant 0 : index
    %8 = vector.load %arg1[%c0_7, %c2, %c0_8] : memref<1x1032x3xf32, #tpu.memory_space<vmem>>, vector<1x960x3xf32>
    %9 = vector.shape_cast %8 : vector<1x960x3xf32> to vector<960x3xf32>
    %10 = arith.truncf %9 : vector<960x3xf32> to vector<960x3xbf16>
    %c0_9 = arith.constant 0 : index
    %c6 = arith.constant 6 : index
    %11 = vector.load %arg13[%c0_9, %c6] : memref<960x27xbf16, #tpu.memory_space<vmem>>, vector<960x3xbf16>
    tpu.vector_store %arg13[%c0_9, %c6], %10 {strides = array<i32>} : memref<960x27xbf16, #tpu.memory_space<vmem>>, vector<960x3xbf16>,
    %c0_10 = arith.constant 0 : index
    %c32 = arith.constant 32 : index
    %c0_11 = arith.constant 0 : index
    %12 = vector.load %arg1[%c0_10, %c32, %c0_11] : memref<1x1032x3xf32, #tpu.memory_space<vmem>>, vector<1x960x3xf32>
    %13 = vector.shape_cast %12 : vector<1x960x3xf32> to vector<960x3xf32>
    %14 = arith.truncf %13 : vector<960x3xf32> to vector<960x3xbf16>
    %c0_12 = arith.constant 0 : index
    %c9 = arith.constant 9 : index
    %15 = vector.load %arg13[%c0_12, %c9] : memref<960x27xbf16, #tpu.memory_space<vmem>>, vector<960x3xbf16>
    tpu.vector_store %arg13[%c0_12, %c9], %14 {strides = array<i32>} : memref<960x27xbf16, #tpu.memory_space<vmem>>, vector<960x3xbf16>,
    %c0_13 = arith.constant 0 : index
    %c33 = arith.constant 33 : index
    %c0_14 = arith.constant 0 : index
    %16 = vector.load %arg1[%c0_13, %c33, %c0_14] : memref<1x1032x3xf32, #tpu.memory_space<vmem>>, vector<1x960x3xf32>
    %17 = vector.shape_cast %16 : vector<1x960x3xf32> to vector<960x3xf32>
    %18 = arith.truncf %17 : vector<960x3xf32> to vector<960x3xbf16>
    %c0_15 = arith.constant 0 : index
    %c12 = arith.constant 12 : index
    %19 = vector.load %arg13[%c0_15, %c12] : memref<960x27xbf16, #tpu.memory_space<vmem>>, vector<960x3xbf16>
    tpu.vector_store %arg13[%c0_15, %c12], %18 {strides = array<i32>} : memref<960x27xbf16, #tpu.memory_space<vmem>>, vector<960x3xbf16>,
    %c0_16 = arith.constant 0 : index
    %c34 = arith.constant 34 : index
    %c0_17 = arith.constant 0 : index
    %20 = vector.load %arg1[%c0_16, %c34, %c0_17] : memref<1x1032x3xf32, #tpu.memory_space<vmem>>, vector<1x960x3xf32>
    %21 = vector.shape_cast %20 : vector<1x960x3xf32> to vector<960x3xf32>
    %22 = arith.truncf %21 : vector<960x3xf32> to vector<960x3xbf16>
    %c0_18 = arith.constant 0 : index
    %c15 = arith.constant 15 : index
    %23 = vector.load %arg13[%c0_18, %c15] : memref<960x27xbf16, #tpu.memory_space<vmem>>, vector<960x3xbf16>
    tpu.vector_store %arg13[%c0_18, %c15], %22 {strides = array<i32>} : memref<960x27xbf16, #tpu.memory_space<vmem>>, vector<960x3xbf16>,
    %c0_19 = arith.constant 0 : index
    %c64 = arith.constant 64 : index
    %c0_20 = arith.constant 0 : index
    %24 = vector.load %arg1[%c0_19, %c64, %c0_20] : memref<1x1032x3xf32, #tpu.memory_space<vmem>>, vector<1x960x3xf32>
    %25 = vector.shape_cast %24 : vector<1x960x3xf32> to vector<960x3xf32>
    %26 = arith.truncf %25 : vector<960x3xf32> to vector<960x3xbf16>
    %c0_21 = arith.constant 0 : index
    %c18 = arith.constant 18 : index
    %27 = vector.load %arg13[%c0_21, %c18] : memref<960x27xbf16, #tpu.memory_space<vmem>>, vector<960x3xbf16>
    tpu.vector_store %arg13[%c0_21, %c18], %26 {strides = array<i32>} : memref<960x27xbf16, #tpu.memory_space<vmem>>, vector<960x3xbf16>,
    %c0_22 = arith.constant 0 : index
    %c65 = arith.constant 65 : index
    %c0_23 = arith.constant 0 : index
    %28 = vector.load %arg1[%c0_22, %c65, %c0_23] : memref<1x1032x3xf32, #tpu.memory_space<vmem>>, vector<1x960x3xf32>
    %29 = vector.shape_cast %28 : vector<1x960x3xf32> to vector<960x3xf32>
    %30 = arith.truncf %29 : vector<960x3xf32> to vector<960x3xbf16>
    %c0_24 = arith.constant 0 : index
    %c21 = arith.constant 21 : index
    %31 = vector.load %arg13[%c0_24, %c21] : memref<960x27xbf16, #tpu.memory_space<vmem>>, vector<960x3xbf16>
    tpu.vector_store %arg13[%c0_24, %c21], %30 {strides = array<i32>} : memref<960x27xbf16, #tpu.memory_space<vmem>>, vector<960x3xbf16>,
    %c0_25 = arith.constant 0 : index
    %c66 = arith.constant 66 : index
    %c0_26 = arith.constant 0 : index
    %32 = vector.load %arg1[%c0_25, %c66, %c0_26] : memref<1x1032x3xf32, #tpu.memory_space<vmem>>, vector<1x960x3xf32>
    %33 = vector.shape_cast %32 : vector<1x960x3xf32> to vector<960x3xf32>
    %34 = arith.truncf %33 : vector<960x3xf32> to vector<960x3xbf16>
    %c0_27 = arith.constant 0 : index
    %c24 = arith.constant 24 : index
    %35 = vector.load %arg13[%c0_27, %c24] : memref<960x27xbf16, #tpu.memory_space<vmem>>, vector<960x3xbf16>
    tpu.vector_store %arg13[%c0_27, %c24], %34 {strides = array<i32>} : memref<960x27xbf16, #tpu.memory_space<vmem>>, vector<960x3xbf16>,
    %c0_28 = arith.constant 0 : index
    %c0_29 = arith.constant 0 : index
    %36 = vector.load %arg13[%c0_28, %c0_29] : memref<960x27xbf16, #tpu.memory_space<vmem>>, vector<960x27xbf16>
    %c0_30 = arith.constant 0 : index
    %c0_31 = arith.constant 0 : index
    %37 = vector.load %arg2[%c0_30, %c0_31] : memref<27x32xbf16, #tpu.memory_space<vmem>>, vector<27x32xbf16>
    %cst = arith.constant dense<0.000000e+00> : vector<960x32xf32>
    %38 = tpu.matmul %36, %37, %cst {dimension_numbers = #tpu.dot_dimension_numbers<[1], [0], [0], [1], [0, 0, 1, 1], [], []>} : vector<960x27xbf16>, vector<27x32xbf16>, vector<960x32xf32> -> vector<960x32xf32>
    %c0_32 = arith.constant 0 : index
    %c0_33 = arith.constant 0 : index
    %39 = vector.load %arg14[%c0_32, %c0_33] : memref<960x32xf32, #tpu.memory_space<vmem>>, vector<960x32xf32>
    tpu.vector_store %arg14[%c0_32, %c0_33], %38 {strides = array<i32>} : memref<960x32xf32, #tpu.memory_space<vmem>>, vector<960x32xf32>,
    %c0_34 = arith.constant 0 : index
    %c0_35 = arith.constant 0 : index
    %40 = tpu.strided_load %arg14[%c0_34, %c0_35] {strides = array<i32: 2, 1>} : memref<960x32xf32, #tpu.memory_space<vmem>>, vector<15x32xf32>
    %c1_36 = arith.constant 1 : index
    %c0_37 = arith.constant 0 : index
    %41 = tpu.strided_load %arg14[%c1_36, %c0_37] {strides = array<i32: 2, 1>} : memref<960x32xf32, #tpu.memory_space<vmem>>, vector<15x32xf32>
    %42 = arith.maximumf %40, %41 : vector<15x32xf32>
    %c32_38 = arith.constant 32 : index
    %c0_39 = arith.constant 0 : index
    %43 = tpu.strided_load %arg14[%c32_38, %c0_39] {strides = array<i32: 2, 1>} : memref<960x32xf32, #tpu.memory_space<vmem>>, vector<15x32xf32>
    %c33_40 = arith.constant 33 : index
    %c0_41 = arith.constant 0 : index
    %44 = tpu.strided_load %arg14[%c33_40, %c0_41] {strides = array<i32: 2, 1>} : memref<960x32xf32, #tpu.memory_space<vmem>>, vector<15x32xf32>
    %45 = arith.maximumf %43, %44 : vector<15x32xf32>
    %46 = arith.maximumf %42, %45 : vector<15x32xf32>
    %c0_42 = arith.constant 0 : index
    %c0_43 = arith.constant 0 : index
    %47 = vector.load %arg3[%c0_42, %c0_43] : memref<1x32xf32, #tpu.memory_space<vmem>>, vector<1x32xf32>
    %48 = vector.broadcast %47 : vector<1x32xf32> to vector<15x32xf32>
    %49 = arith.addf %46, %48 : vector<15x32xf32>
    %cst_44 = arith.constant 0.000000e+00 : f32
    %50 = vector.broadcast %cst_44 : f32 to vector<15x32xf32>
    %51 = arith.maximumf %49, %50 : vector<15x32xf32>
    %c0_45 = arith.constant 0 : index
    %c0_46 = arith.constant 0 : index
    %52 = vector.load %arg15[%c0_45, %c0_46] : memref<232x32xf32, #tpu.memory_space<vmem>>, vector<15x32xf32>
    tpu.vector_store %arg15[%c0_45, %c0_46], %51 {strides = array<i32>} : memref<232x32xf32, #tpu.memory_space<vmem>>, vector<15x32xf32>,
    %c64_47 = arith.constant 64 : index
    %c0_48 = arith.constant 0 : index
    %53 = tpu.strided_load %arg14[%c64_47, %c0_48] {strides = array<i32: 2, 1>} : memref<960x32xf32, #tpu.memory_space<vmem>>, vector<15x32xf32>
    %c65_49 = arith.constant 65 : index
    %c0_50 = arith.constant 0 : index
    %54 = tpu.strided_load %arg14[%c65_49, %c0_50] {strides = array<i32: 2, 1>} : memref<960x32xf32, #tpu.memory_space<vmem>>, vector<15x32xf32>
    %55 = arith.maximumf %53, %54 : vector<15x32xf32>
    %c96 = arith.constant 96 : index
    %c0_51 = arith.constant 0 : index
    %56 = tpu.strided_load %arg14[%c96, %c0_51] {strides = array<i32: 2, 1>} : memref<960x32xf32, #tpu.memory_space<vmem>>, vector<15x32xf32>
    %c97 = arith.constant 97 : index
    %c0_52 = arith.constant 0 : index
    %57 = tpu.strided_load %arg14[%c97, %c0_52] {strides = array<i32: 2, 1>} : memref<960x32xf32, #tpu.memory_space<vmem>>, vector<15x32xf32>
    %58 = arith.maximumf %56, %57 : vector<15x32xf32>
    %59 = arith.maximumf %55, %58 : vector<15x32xf32>
    %c0_53 = arith.constant 0 : index
    %c0_54 = arith.constant 0 : index
    %60 = vector.load %arg3[%c0_53, %c0_54] : memref<1x32xf32, #tpu.memory_space<vmem>>, vector<1x32xf32>
    %61 = vector.broadcast %60 : vector<1x32xf32> to vector<15x32xf32>
    %62 = arith.addf %59, %61 : vector<15x32xf32>
    %cst_55 = arith.constant 0.000000e+00 : f32
    %63 = vector.broadcast %cst_55 : f32 to vector<15x32xf32>
    %64 = arith.maximumf %62, %63 : vector<15x32xf32>
    %c15_56 = arith.constant 15 : index
    %c0_57 = arith.constant 0 : index
    %65 = vector.load %arg15[%c15_56, %c0_57] : memref<232x32xf32, #tpu.memory_space<vmem>>, vector<15x32xf32>
    tpu.vector_store %arg15[%c15_56, %c0_57], %64 {strides = array<i32>} : memref<232x32xf32, #tpu.memory_space<vmem>>, vector<15x32xf32>,
    %c128 = arith.constant 128 : index
    %c0_58 = arith.constant 0 : index
    %66 = tpu.strided_load %arg14[%c128, %c0_58] {strides = array<i32: 2, 1>} : memref<960x32xf32, #tpu.memory_space<vmem>>, vector<15x32xf32>
    %c129 = arith.constant 129 : index
    %c0_59 = arith.constant 0 : index
    %67 = tpu.strided_load %arg14[%c129, %c0_59] {strides = array<i32: 2, 1>} : memref<960x32xf32, #tpu.memory_space<vmem>>, vector<15x32xf32>
    %68 = arith.maximumf %66, %67 : vector<15x32xf32>
    %c160 = arith.constant 160 : index
    %c0_60 = arith.constant 0 : index
    %69 = tpu.strided_load %arg14[%c160, %c0_60] {strides = array<i32: 2, 1>} : memref<960x32xf32, #tpu.memory_space<vmem>>, vector<15x32xf32>
    %c161 = arith.constant 161 : index
    %c0_61 = arith.constant 0 : index
    %70 = tpu.strided_load %arg14[%c161, %c0_61] {strides = array<i32: 2, 1>} : memref<960x32xf32, #tpu.memory_space<vmem>>, vector<15x32xf32>
    %71 = arith.maximumf %69, %70 : vector<15x32xf32>
    %72 = arith.maximumf %68, %71 : vector<15x32xf32>
    %c0_62 = arith.constant 0 : index
    %c0_63 = arith.constant 0 : index
    %73 = vector.load %arg3[%c0_62, %c0_63] : memref<1x32xf32, #tpu.memory_space<vmem>>, vector<1x32xf32>
    %74 = vector.broadcast %73 : vector<1x32xf32> to vector<15x32xf32>
    %75 = arith.addf %72, %74 : vector<15x32xf32>
    %cst_64 = arith.constant 0.000000e+00 : f32
    %76 = vector.broadcast %cst_64 : f32 to vector<15x32xf32>
    %77 = arith.maximumf %75, %76 : vector<15x32xf32>
    %c30 = arith.constant 30 : index
    %c0_65 = arith.constant 0 : index
    %78 = vector.load %arg15[%c30, %c0_65] : memref<232x32xf32, #tpu.memory_space<vmem>>, vector<15x32xf32>
    tpu.vector_store %arg15[%c30, %c0_65], %77 {strides = array<i32>} : memref<232x32xf32, #tpu.memory_space<vmem>>, vector<15x32xf32>,
    %c192 = arith.constant 192 : index
    %c0_66 = arith.constant 0 : index
    %79 = tpu.strided_load %arg14[%c192, %c0_66] {strides = array<i32: 2, 1>} : memref<960x32xf32, #tpu.memory_space<vmem>>, vector<15x32xf32>
    %c193 = arith.constant 193 : index
    %c0_67 = arith.constant 0 : index
    %80 = tpu.strided_load %arg14[%c193, %c0_67] {strides = array<i32: 2, 1>} : memref<960x32xf32, #tpu.memory_space<vmem>>, vector<15x32xf32>
    %81 = arith.maximumf %79, %80 : vector<15x32xf32>
    %c224 = arith.constant 224 : index
    %c0_68 = arith.constant 0 : index
    %82 = tpu.strided_load %arg14[%c224, %c0_68] {strides = array<i32: 2, 1>} : memref<960x32xf32, #tpu.memory_space<vmem>>, vector<15x32xf32>
    %c225 = arith.constant 225 : index
    %c0_69 = arith.constant 0 : index
    %83 = tpu.strided_load %arg14[%c225, %c0_69] {strides = array<i32: 2, 1>} : memref<960x32xf32, #tpu.memory_space<vmem>>, vector<15x32xf32>
    %84 = arith.maximumf %82, %83 : vector<15x32xf32>
    %85 = arith.maximumf %81, %84 : vector<15x32xf32>
    %c0_70 = arith.constant 0 : index
    %c0_71 = arith.constant 0 : index
    %86 = vector.load %arg3[%c0_70, %c0_71] : memref<1x32xf32, #tpu.memory_space<vmem>>, vector<1x32xf32>
    %87 = vector.broadcast %86 : vector<1x32xf32> to vector<15x32xf32>
    %88 = arith.addf %85, %87 : vector<15x32xf32>
    %cst_72 = arith.constant 0.000000e+00 : f32
    %89 = vector.broadcast %cst_72 : f32 to vector<15x32xf32>
    %90 = arith.maximumf %88, %89 : vector<15x32xf32>
    %c45 = arith.constant 45 : index
    %c0_73 = arith.constant 0 : index
    %91 = vector.load %arg15[%c45, %c0_73] : memref<232x32xf32, #tpu.memory_space<vmem>>, vector<15x32xf32>
    tpu.vector_store %arg15[%c45, %c0_73], %90 {strides = array<i32>} : memref<232x32xf32, #tpu.memory_space<vmem>>, vector<15x32xf32>,
    %c256 = arith.constant 256 : index
    %c0_74 = arith.constant 0 : index
    %92 = tpu.strided_load %arg14[%c256, %c0_74] {strides = array<i32: 2, 1>} : memref<960x32xf32, #tpu.memory_space<vmem>>, vector<15x32xf32>
    %c257 = arith.constant 257 : index
    %c0_75 = arith.constant 0 : index
    %93 = tpu.strided_load %arg14[%c257, %c0_75] {strides = array<i32: 2, 1>} : memref<960x32xf32, #tpu.memory_space<vmem>>, vector<15x32xf32>
    %94 = arith.maximumf %92, %93 : vector<15x32xf32>
    %c288 = arith.constant 288 : index
    %c0_76 = arith.constant 0 : index
    %95 = tpu.strided_load %arg14[%c288, %c0_76] {strides = array<i32: 2, 1>} : memref<960x32xf32, #tpu.memory_space<vmem>>, vector<15x32xf32>
    %c289 = arith.constant 289 : index
    %c0_77 = arith.constant 0 : index
    %96 = tpu.strided_load %arg14[%c289, %c0_77] {strides = array<i32: 2, 1>} : memref<960x32xf32, #tpu.memory_space<vmem>>, vector<15x32xf32>
    %97 = arith.maximumf %95, %96 : vector<15x32xf32>
    %98 = arith.maximumf %94, %97 : vector<15x32xf32>
    %c0_78 = arith.constant 0 : index
    %c0_79 = arith.constant 0 : index
    %99 = vector.load %arg3[%c0_78, %c0_79] : memref<1x32xf32, #tpu.memory_space<vmem>>, vector<1x32xf32>
    %100 = vector.broadcast %99 : vector<1x32xf32> to vector<15x32xf32>
    %101 = arith.addf %98, %100 : vector<15x32xf32>
    %cst_80 = arith.constant 0.000000e+00 : f32
    %102 = vector.broadcast %cst_80 : f32 to vector<15x32xf32>
    %103 = arith.maximumf %101, %102 : vector<15x32xf32>
    %c60 = arith.constant 60 : index
    %c0_81 = arith.constant 0 : index
    %104 = vector.load %arg15[%c60, %c0_81] : memref<232x32xf32, #tpu.memory_space<vmem>>, vector<15x32xf32>
    tpu.vector_store %arg15[%c60, %c0_81], %103 {strides = array<i32>} : memref<232x32xf32, #tpu.memory_space<vmem>>, vector<15x32xf32>,
    %c320 = arith.constant 320 : index
    %c0_82 = arith.constant 0 : index
    %105 = tpu.strided_load %arg14[%c320, %c0_82] {strides = array<i32: 2, 1>} : memref<960x32xf32, #tpu.memory_space<vmem>>, vector<15x32xf32>
    %c321 = arith.constant 321 : index
    %c0_83 = arith.constant 0 : index
    %106 = tpu.strided_load %arg14[%c321, %c0_83] {strides = array<i32: 2, 1>} : memref<960x32xf32, #tpu.memory_space<vmem>>, vector<15x32xf32>
    %107 = arith.maximumf %105, %106 : vector<15x32xf32>
    %c352 = arith.constant 352 : index
    %c0_84 = arith.constant 0 : index
    %108 = tpu.strided_load %arg14[%c352, %c0_84] {strides = array<i32: 2, 1>} : memref<960x32xf32, #tpu.memory_space<vmem>>, vector<15x32xf32>
    %c353 = arith.constant 353 : index
    %c0_85 = arith.constant 0 : index
    %109 = tpu.strided_load %arg14[%c353, %c0_85] {strides = array<i32: 2, 1>} : memref<960x32xf32, #tpu.memory_space<vmem>>, vector<15x32xf32>
    %110 = arith.maximumf %108, %109 : vector<15x32xf32>
    %111 = arith.maximumf %107, %110 : vector<15x32xf32>
    %c0_86 = arith.constant 0 : index
    %c0_87 = arith.constant 0 : index
    %112 = vector.load %arg3[%c0_86, %c0_87] : memref<1x32xf32, #tpu.memory_space<vmem>>, vector<1x32xf32>
    %113 = vector.broadcast %112 : vector<1x32xf32> to vector<15x32xf32>
    %114 = arith.addf %111, %113 : vector<15x32xf32>
    %cst_88 = arith.constant 0.000000e+00 : f32
    %115 = vector.broadcast %cst_88 : f32 to vector<15x32xf32>
    %116 = arith.maximumf %114, %115 : vector<15x32xf32>
    %c75 = arith.constant 75 : index
    %c0_89 = arith.constant 0 : index
    %117 = vector.load %arg15[%c75, %c0_89] : memref<232x32xf32, #tpu.memory_space<vmem>>, vector<15x32xf32>
    tpu.vector_store %arg15[%c75, %c0_89], %116 {strides = array<i32>} : memref<232x32xf32, #tpu.memory_space<vmem>>, vector<15x32xf32>,
    %c384 = arith.constant 384 : index
    %c0_90 = arith.constant 0 : index
    %118 = tpu.strided_load %arg14[%c384, %c0_90] {strides = array<i32: 2, 1>} : memref<960x32xf32, #tpu.memory_space<vmem>>, vector<15x32xf32>
    %c385 = arith.constant 385 : index
    %c0_91 = arith.constant 0 : index
    %119 = tpu.strided_load %arg14[%c385, %c0_91] {strides = array<i32: 2, 1>} : memref<960x32xf32, #tpu.memory_space<vmem>>, vector<15x32xf32>
    %120 = arith.maximumf %118, %119 : vector<15x32xf32>
    %c416 = arith.constant 416 : index
    %c0_92 = arith.constant 0 : index
    %121 = tpu.strided_load %arg14[%c416, %c0_92] {strides = array<i32: 2, 1>} : memref<960x32xf32, #tpu.memory_space<vmem>>, vector<15x32xf32>
    %c417 = arith.constant 417 : index
    %c0_93 = arith.constant 0 : index
    %122 = tpu.strided_load %arg14[%c417, %c0_93] {strides = array<i32: 2, 1>} : memref<960x32xf32, #tpu.memory_space<vmem>>, vector<15x32xf32>
    %123 = arith.maximumf %121, %122 : vector<15x32xf32>
    %124 = arith.maximumf %120, %123 : vector<15x32xf32>
    %c0_94 = arith.constant 0 : index
    %c0_95 = arith.constant 0 : index
    %125 = vector.load %arg3[%c0_94, %c0_95] : memref<1x32xf32, #tpu.memory_space<vmem>>, vector<1x32xf32>
    %126 = vector.broadcast %125 : vector<1x32xf32> to vector<15x32xf32>
    %127 = arith.addf %124, %126 : vector<15x32xf32>
    %cst_96 = arith.constant 0.000000e+00 : f32
    %128 = vector.broadcast %cst_96 : f32 to vector<15x32xf32>
    %129 = arith.maximumf %127, %128 : vector<15x32xf32>
    %c90 = arith.constant 90 : index
    %c0_97 = arith.constant 0 : index
    %130 = vector.load %arg15[%c90, %c0_97] : memref<232x32xf32, #tpu.memory_space<vmem>>, vector<15x32xf32>
    tpu.vector_store %arg15[%c90, %c0_97], %129 {strides = array<i32>} : memref<232x32xf32, #tpu.memory_space<vmem>>, vector<15x32xf32>,
    %c448 = arith.constant 448 : index
    %c0_98 = arith.constant 0 : index
    %131 = tpu.strided_load %arg14[%c448, %c0_98] {strides = array<i32: 2, 1>} : memref<960x32xf32, #tpu.memory_space<vmem>>, vector<15x32xf32>
    %c449 = arith.constant 449 : index
    %c0_99 = arith.constant 0 : index
    %132 = tpu.strided_load %arg14[%c449, %c0_99] {strides = array<i32: 2, 1>} : memref<960x32xf32, #tpu.memory_space<vmem>>, vector<15x32xf32>
    %133 = arith.maximumf %131, %132 : vector<15x32xf32>
    %c480 = arith.constant 480 : index
    %c0_100 = arith.constant 0 : index
    %134 = tpu.strided_load %arg14[%c480, %c0_100] {strides = array<i32: 2, 1>} : memref<960x32xf32, #tpu.memory_space<vmem>>, vector<15x32xf32>
    %c481 = arith.constant 481 : index
    %c0_101 = arith.constant 0 : index
    %135 = tpu.strided_load %arg14[%c481, %c0_101] {strides = array<i32: 2, 1>} : memref<960x32xf32, #tpu.memory_space<vmem>>, vector<15x32xf32>
    %136 = arith.maximumf %134, %135 : vector<15x32xf32>
    %137 = arith.maximumf %133, %136 : vector<15x32xf32>
    %c0_102 = arith.constant 0 : index
    %c0_103 = arith.constant 0 : index
    %138 = vector.load %arg3[%c0_102, %c0_103] : memref<1x32xf32, #tpu.memory_space<vmem>>, vector<1x32xf32>
    %139 = vector.broadcast %138 : vector<1x32xf32> to vector<15x32xf32>
    %140 = arith.addf %137, %139 : vector<15x32xf32>
    %cst_104 = arith.constant 0.000000e+00 : f32
    %141 = vector.broadcast %cst_104 : f32 to vector<15x32xf32>
    %142 = arith.maximumf %140, %141 : vector<15x32xf32>
    %c105 = arith.constant 105 : index
    %c0_105 = arith.constant 0 : index
    %143 = vector.load %arg15[%c105, %c0_105] : memref<232x32xf32, #tpu.memory_space<vmem>>, vector<15x32xf32>
    tpu.vector_store %arg15[%c105, %c0_105], %142 {strides = array<i32>} : memref<232x32xf32, #tpu.memory_space<vmem>>, vector<15x32xf32>,
    %c512 = arith.constant 512 : index
    %c0_106 = arith.constant 0 : index
    %144 = tpu.strided_load %arg14[%c512, %c0_106] {strides = array<i32: 2, 1>} : memref<960x32xf32, #tpu.memory_space<vmem>>, vector<15x32xf32>
    %c513 = arith.constant 513 : index
    %c0_107 = arith.constant 0 : index
    %145 = tpu.strided_load %arg14[%c513, %c0_107] {strides = array<i32: 2, 1>} : memref<960x32xf32, #tpu.memory_space<vmem>>, vector<15x32xf32>
    %146 = arith.maximumf %144, %145 : vector<15x32xf32>
    %c544 = arith.constant 544 : index
    %c0_108 = arith.constant 0 : index
    %147 = tpu.strided_load %arg14[%c544, %c0_108] {strides = array<i32: 2, 1>} : memref<960x32xf32, #tpu.memory_space<vmem>>, vector<15x32xf32>
    %c545 = arith.constant 545 : index
    %c0_109 = arith.constant 0 : index
    %148 = tpu.strided_load %arg14[%c545, %c0_109] {strides = array<i32: 2, 1>} : memref<960x32xf32, #tpu.memory_space<vmem>>, vector<15x32xf32>
    %149 = arith.maximumf %147, %148 : vector<15x32xf32>
    %150 = arith.maximumf %146, %149 : vector<15x32xf32>
    %c0_110 = arith.constant 0 : index
    %c0_111 = arith.constant 0 : index
    %151 = vector.load %arg3[%c0_110, %c0_111] : memref<1x32xf32, #tpu.memory_space<vmem>>, vector<1x32xf32>
    %152 = vector.broadcast %151 : vector<1x32xf32> to vector<15x32xf32>
    %153 = arith.addf %150, %152 : vector<15x32xf32>
    %cst_112 = arith.constant 0.000000e+00 : f32
    %154 = vector.broadcast %cst_112 : f32 to vector<15x32xf32>
    %155 = arith.maximumf %153, %154 : vector<15x32xf32>
    %c120 = arith.constant 120 : index
    %c0_113 = arith.constant 0 : index
    %156 = vector.load %arg15[%c120, %c0_113] : memref<232x32xf32, #tpu.memory_space<vmem>>, vector<15x32xf32>
    tpu.vector_store %arg15[%c120, %c0_113], %155 {strides = array<i32>} : memref<232x32xf32, #tpu.memory_space<vmem>>, vector<15x32xf32>,
    %c576 = arith.constant 576 : index
    %c0_114 = arith.constant 0 : index
    %157 = tpu.strided_load %arg14[%c576, %c0_114] {strides = array<i32: 2, 1>} : memref<960x32xf32, #tpu.memory_space<vmem>>, vector<15x32xf32>
    %c577 = arith.constant 577 : index
    %c0_115 = arith.constant 0 : index
    %158 = tpu.strided_load %arg14[%c577, %c0_115] {strides = array<i32: 2, 1>} : memref<960x32xf32, #tpu.memory_space<vmem>>, vector<15x32xf32>
    %159 = arith.maximumf %157, %158 : vector<15x32xf32>
    %c608 = arith.constant 608 : index
    %c0_116 = arith.constant 0 : index
    %160 = tpu.strided_load %arg14[%c608, %c0_116] {strides = array<i32: 2, 1>} : memref<960x32xf32, #tpu.memory_space<vmem>>, vector<15x32xf32>
    %c609 = arith.constant 609 : index
    %c0_117 = arith.constant 0 : index
    %161 = tpu.strided_load %arg14[%c609, %c0_117] {strides = array<i32: 2, 1>} : memref<960x32xf32, #tpu.memory_space<vmem>>, vector<15x32xf32>
    %162 = arith.maximumf %160, %161 : vector<15x32xf32>
    %163 = arith.maximumf %159, %162 : vector<15x32xf32>
    %c0_118 = arith.constant 0 : index
    %c0_119 = arith.constant 0 : index
    %164 = vector.load %arg3[%c0_118, %c0_119] : memref<1x32xf32, #tpu.memory_space<vmem>>, vector<1x32xf32>
    %165 = vector.broadcast %164 : vector<1x32xf32> to vector<15x32xf32>
    %166 = arith.addf %163, %165 : vector<15x32xf32>
    %cst_120 = arith.constant 0.000000e+00 : f32
    %167 = vector.broadcast %cst_120 : f32 to vector<15x32xf32>
    %168 = arith.maximumf %166, %167 : vector<15x32xf32>
    %c135 = arith.constant 135 : index
    %c0_121 = arith.constant 0 : index
    %169 = vector.load %arg15[%c135, %c0_121] : memref<232x32xf32, #tpu.memory_space<vmem>>, vector<15x32xf32>
    tpu.vector_store %arg15[%c135, %c0_121], %168 {strides = array<i32>} : memref<232x32xf32, #tpu.memory_space<vmem>>, vector<15x32xf32>,
    %c640 = arith.constant 640 : index
    %c0_122 = arith.constant 0 : index
    %170 = tpu.strided_load %arg14[%c640, %c0_122] {strides = array<i32: 2, 1>} : memref<960x32xf32, #tpu.memory_space<vmem>>, vector<15x32xf32>
    %c641 = arith.constant 641 : index
    %c0_123 = arith.constant 0 : index
    %171 = tpu.strided_load %arg14[%c641, %c0_123] {strides = array<i32: 2, 1>} : memref<960x32xf32, #tpu.memory_space<vmem>>, vector<15x32xf32>
    %172 = arith.maximumf %170, %171 : vector<15x32xf32>
    %c672 = arith.constant 672 : index
    %c0_124 = arith.constant 0 : index
    %173 = tpu.strided_load %arg14[%c672, %c0_124] {strides = array<i32: 2, 1>} : memref<960x32xf32, #tpu.memory_space<vmem>>, vector<15x32xf32>
    %c673 = arith.constant 673 : index
    %c0_125 = arith.constant 0 : index
    %174 = tpu.strided_load %arg14[%c673, %c0_125] {strides = array<i32: 2, 1>} : memref<960x32xf32, #tpu.memory_space<vmem>>, vector<15x32xf32>
    %175 = arith.maximumf %173, %174 : vector<15x32xf32>
    %176 = arith.maximumf %172, %175 : vector<15x32xf32>
    %c0_126 = arith.constant 0 : index
    %c0_127 = arith.constant 0 : index
    %177 = vector.load %arg3[%c0_126, %c0_127] : memref<1x32xf32, #tpu.memory_space<vmem>>, vector<1x32xf32>
    %178 = vector.broadcast %177 : vector<1x32xf32> to vector<15x32xf32>
    %179 = arith.addf %176, %178 : vector<15x32xf32>
    %cst_128 = arith.constant 0.000000e+00 : f32
    %180 = vector.broadcast %cst_128 : f32 to vector<15x32xf32>
    %181 = arith.maximumf %179, %180 : vector<15x32xf32>
    %c150 = arith.constant 150 : index
    %c0_129 = arith.constant 0 : index
    %182 = vector.load %arg15[%c150, %c0_129] : memref<232x32xf32, #tpu.memory_space<vmem>>, vector<15x32xf32>
    tpu.vector_store %arg15[%c150, %c0_129], %181 {strides = array<i32>} : memref<232x32xf32, #tpu.memory_space<vmem>>, vector<15x32xf32>,
    %c704 = arith.constant 704 : index
    %c0_130 = arith.constant 0 : index
    %183 = tpu.strided_load %arg14[%c704, %c0_130] {strides = array<i32: 2, 1>} : memref<960x32xf32, #tpu.memory_space<vmem>>, vector<15x32xf32>
    %c705 = arith.constant 705 : index
    %c0_131 = arith.constant 0 : index
    %184 = tpu.strided_load %arg14[%c705, %c0_131] {strides = array<i32: 2, 1>} : memref<960x32xf32, #tpu.memory_space<vmem>>, vector<15x32xf32>
    %185 = arith.maximumf %183, %184 : vector<15x32xf32>
    %c736 = arith.constant 736 : index
    %c0_132 = arith.constant 0 : index
    %186 = tpu.strided_load %arg14[%c736, %c0_132] {strides = array<i32: 2, 1>} : memref<960x32xf32, #tpu.memory_space<vmem>>, vector<15x32xf32>
    %c737 = arith.constant 737 : index
    %c0_133 = arith.constant 0 : index
    %187 = tpu.strided_load %arg14[%c737, %c0_133] {strides = array<i32: 2, 1>} : memref<960x32xf32, #tpu.memory_space<vmem>>, vector<15x32xf32>
    %188 = arith.maximumf %186, %187 : vector<15x32xf32>
    %189 = arith.maximumf %185, %188 : vector<15x32xf32>
    %c0_134 = arith.constant 0 : index
    %c0_135 = arith.constant 0 : index
    %190 = vector.load %arg3[%c0_134, %c0_135] : memref<1x32xf32, #tpu.memory_space<vmem>>, vector<1x32xf32>
    %191 = vector.broadcast %190 : vector<1x32xf32> to vector<15x32xf32>
    %192 = arith.addf %189, %191 : vector<15x32xf32>
    %cst_136 = arith.constant 0.000000e+00 : f32
    %193 = vector.broadcast %cst_136 : f32 to vector<15x32xf32>
    %194 = arith.maximumf %192, %193 : vector<15x32xf32>
    %c165 = arith.constant 165 : index
    %c0_137 = arith.constant 0 : index
    %195 = vector.load %arg15[%c165, %c0_137] : memref<232x32xf32, #tpu.memory_space<vmem>>, vector<15x32xf32>
    tpu.vector_store %arg15[%c165, %c0_137], %194 {strides = array<i32>} : memref<232x32xf32, #tpu.memory_space<vmem>>, vector<15x32xf32>,
    %c768 = arith.constant 768 : index
    %c0_138 = arith.constant 0 : index
    %196 = tpu.strided_load %arg14[%c768, %c0_138] {strides = array<i32: 2, 1>} : memref<960x32xf32, #tpu.memory_space<vmem>>, vector<15x32xf32>
    %c769 = arith.constant 769 : index
    %c0_139 = arith.constant 0 : index
    %197 = tpu.strided_load %arg14[%c769, %c0_139] {strides = array<i32: 2, 1>} : memref<960x32xf32, #tpu.memory_space<vmem>>, vector<15x32xf32>
    %198 = arith.maximumf %196, %197 : vector<15x32xf32>
    %c800 = arith.constant 800 : index
    %c0_140 = arith.constant 0 : index
    %199 = tpu.strided_load %arg14[%c800, %c0_140] {strides = array<i32: 2, 1>} : memref<960x32xf32, #tpu.memory_space<vmem>>, vector<15x32xf32>
    %c801 = arith.constant 801 : index
    %c0_141 = arith.constant 0 : index
    %200 = tpu.strided_load %arg14[%c801, %c0_141] {strides = array<i32: 2, 1>} : memref<960x32xf32, #tpu.memory_space<vmem>>, vector<15x32xf32>
    %201 = arith.maximumf %199, %200 : vector<15x32xf32>
    %202 = arith.maximumf %198, %201 : vector<15x32xf32>
    %c0_142 = arith.constant 0 : index
    %c0_143 = arith.constant 0 : index
    %203 = vector.load %arg3[%c0_142, %c0_143] : memref<1x32xf32, #tpu.memory_space<vmem>>, vector<1x32xf32>
    %204 = vector.broadcast %203 : vector<1x32xf32> to vector<15x32xf32>
    %205 = arith.addf %202, %204 : vector<15x32xf32>
    %cst_144 = arith.constant 0.000000e+00 : f32
    %206 = vector.broadcast %cst_144 : f32 to vector<15x32xf32>
    %207 = arith.maximumf %205, %206 : vector<15x32xf32>
    %c180 = arith.constant 180 : index
    %c0_145 = arith.constant 0 : index
    %208 = vector.load %arg15[%c180, %c0_145] : memref<232x32xf32, #tpu.memory_space<vmem>>, vector<15x32xf32>
    tpu.vector_store %arg15[%c180, %c0_145], %207 {strides = array<i32>} : memref<232x32xf32, #tpu.memory_space<vmem>>, vector<15x32xf32>,
    %c832 = arith.constant 832 : index
    %c0_146 = arith.constant 0 : index
    %209 = tpu.strided_load %arg14[%c832, %c0_146] {strides = array<i32: 2, 1>} : memref<960x32xf32, #tpu.memory_space<vmem>>, vector<15x32xf32>
    %c833 = arith.constant 833 : index
    %c0_147 = arith.constant 0 : index
    %210 = tpu.strided_load %arg14[%c833, %c0_147] {strides = array<i32: 2, 1>} : memref<960x32xf32, #tpu.memory_space<vmem>>, vector<15x32xf32>
    %211 = arith.maximumf %209, %210 : vector<15x32xf32>
    %c864 = arith.constant 864 : index
    %c0_148 = arith.constant 0 : index
    %212 = tpu.strided_load %arg14[%c864, %c0_148] {strides = array<i32: 2, 1>} : memref<960x32xf32, #tpu.memory_space<vmem>>, vector<15x32xf32>
    %c865 = arith.constant 865 : index
    %c0_149 = arith.constant 0 : index
    %213 = tpu.strided_load %arg14[%c865, %c0_149] {strides = array<i32: 2, 1>} : memref<960x32xf32, #tpu.memory_space<vmem>>, vector<15x32xf32>
    %214 = arith.maximumf %212, %213 : vector<15x32xf32>
    %215 = arith.maximumf %211, %214 : vector<15x32xf32>
    %c0_150 = arith.constant 0 : index
    %c0_151 = arith.constant 0 : index
    %216 = vector.load %arg3[%c0_150, %c0_151] : memref<1x32xf32, #tpu.memory_space<vmem>>, vector<1x32xf32>
    %217 = vector.broadcast %216 : vector<1x32xf32> to vector<15x32xf32>
    %218 = arith.addf %215, %217 : vector<15x32xf32>
    %cst_152 = arith.constant 0.000000e+00 : f32
    %219 = vector.broadcast %cst_152 : f32 to vector<15x32xf32>
    %220 = arith.maximumf %218, %219 : vector<15x32xf32>
    %c195 = arith.constant 195 : index
    %c0_153 = arith.constant 0 : index
    %221 = vector.load %arg15[%c195, %c0_153] : memref<232x32xf32, #tpu.memory_space<vmem>>, vector<15x32xf32>
    tpu.vector_store %arg15[%c195, %c0_153], %220 {strides = array<i32>} : memref<232x32xf32, #tpu.memory_space<vmem>>, vector<15x32xf32>,
    %c896 = arith.constant 896 : index
    %c0_154 = arith.constant 0 : index
    %222 = tpu.strided_load %arg14[%c896, %c0_154] {strides = array<i32: 2, 1>} : memref<960x32xf32, #tpu.memory_space<vmem>>, vector<15x32xf32>
    %c897 = arith.constant 897 : index
    %c0_155 = arith.constant 0 : index
    %223 = tpu.strided_load %arg14[%c897, %c0_155] {strides = array<i32: 2, 1>} : memref<960x32xf32, #tpu.memory_space<vmem>>, vector<15x32xf32>
    %224 = arith.maximumf %222, %223 : vector<15x32xf32>
    %c928 = arith.constant 928 : index
    %c0_156 = arith.constant 0 : index
    %225 = tpu.strided_load %arg14[%c928, %c0_156] {strides = array<i32: 2, 1>} : memref<960x32xf32, #tpu.memory_space<vmem>>, vector<15x32xf32>
    %c929 = arith.constant 929 : index
    %c0_157 = arith.constant 0 : index
    %226 = tpu.strided_load %arg14[%c929, %c0_157] {strides = array<i32: 2, 1>} : memref<960x32xf32, #tpu.memory_space<vmem>>, vector<15x32xf32>
    %227 = arith.maximumf %225, %226 : vector<15x32xf32>
    %228 = arith.maximumf %224, %227 : vector<15x32xf32>
    %c0_158 = arith.constant 0 : index
    %c0_159 = arith.constant 0 : index
    %229 = vector.load %arg3[%c0_158, %c0_159] : memref<1x32xf32, #tpu.memory_space<vmem>>, vector<1x32xf32>
    %230 = vector.broadcast %229 : vector<1x32xf32> to vector<15x32xf32>
    %231 = arith.addf %228, %230 : vector<15x32xf32>
    %cst_160 = arith.constant 0.000000e+00 : f32
    %232 = vector.broadcast %cst_160 : f32 to vector<15x32xf32>
    %233 = arith.maximumf %231, %232 : vector<15x32xf32>
    %c210 = arith.constant 210 : index
    %c0_161 = arith.constant 0 : index
    %234 = vector.load %arg15[%c210, %c0_161] : memref<232x32xf32, #tpu.memory_space<vmem>>, vector<15x32xf32>
    tpu.vector_store %arg15[%c210, %c0_161], %233 {strides = array<i32>} : memref<232x32xf32, #tpu.memory_space<vmem>>, vector<15x32xf32>,
    %cst_162 = arith.constant 0.000000e+00 : f32
    %235 = vector.broadcast %cst_162 : f32 to vector<7x32xf32>
    %c225_163 = arith.constant 225 : index
    %c0_164 = arith.constant 0 : index
    %236 = vector.load %arg15[%c225_163, %c0_164] : memref<232x32xf32, #tpu.memory_space<vmem>>, vector<7x32xf32>
    tpu.vector_store %arg15[%c225_163, %c0_164], %235 {strides = array<i32>} : memref<232x32xf32, #tpu.memory_space<vmem>>, vector<7x32xf32>,
    %c0_165 = arith.constant 0 : index
    %c0_166 = arith.constant 0 : index
    %237 = vector.load %arg15[%c0_165, %c0_166] : memref<232x32xf32, #tpu.memory_space<vmem>>, vector<195x32xf32>
    %238 = arith.truncf %237 : vector<195x32xf32> to vector<195x32xbf16>
    %c0_167 = arith.constant 0 : index
    %c0_168 = arith.constant 0 : index
    %239 = vector.load %arg16[%c0_167, %c0_168] : memref<195x288xbf16, #tpu.memory_space<vmem>>, vector<195x32xbf16>
    tpu.vector_store %arg16[%c0_167, %c0_168], %238 {strides = array<i32>} : memref<195x288xbf16, #tpu.memory_space<vmem>>, vector<195x32xbf16>,
    %c1_169 = arith.constant 1 : index
    %c0_170 = arith.constant 0 : index
    %240 = vector.load %arg15[%c1_169, %c0_170] : memref<232x32xf32, #tpu.memory_space<vmem>>, vector<195x32xf32>
    %241 = arith.truncf %240 : vector<195x32xf32> to vector<195x32xbf16>
    %c0_171 = arith.constant 0 : index
    %c32_172 = arith.constant 32 : index
    %242 = vector.load %arg16[%c0_171, %c32_172] : memref<195x288xbf16, #tpu.memory_space<vmem>>, vector<195x32xbf16>
    tpu.vector_store %arg16[%c0_171, %c32_172], %241 {strides = array<i32>} : memref<195x288xbf16, #tpu.memory_space<vmem>>, vector<195x32xbf16>,
    %c2_173 = arith.constant 2 : index
    %c0_174 = arith.constant 0 : index
    %243 = vector.load %arg15[%c2_173, %c0_174] : memref<232x32xf32, #tpu.memory_space<vmem>>, vector<195x32xf32>
    %244 = arith.truncf %243 : vector<195x32xf32> to vector<195x32xbf16>
    %c0_175 = arith.constant 0 : index
    %c64_176 = arith.constant 64 : index
    %245 = vector.load %arg16[%c0_175, %c64_176] : memref<195x288xbf16, #tpu.memory_space<vmem>>, vector<195x32xbf16>
    tpu.vector_store %arg16[%c0_175, %c64_176], %244 {strides = array<i32>} : memref<195x288xbf16, #tpu.memory_space<vmem>>, vector<195x32xbf16>,
    %c15_177 = arith.constant 15 : index
    %c0_178 = arith.constant 0 : index
    %246 = vector.load %arg15[%c15_177, %c0_178] : memref<232x32xf32, #tpu.memory_space<vmem>>, vector<195x32xf32>
    %247 = arith.truncf %246 : vector<195x32xf32> to vector<195x32xbf16>
    %c0_179 = arith.constant 0 : index
    %c96_180 = arith.constant 96 : index
    %248 = vector.load %arg16[%c0_179, %c96_180] : memref<195x288xbf16, #tpu.memory_space<vmem>>, vector<195x32xbf16>
    tpu.vector_store %arg16[%c0_179, %c96_180], %247 {strides = array<i32>} : memref<195x288xbf16, #tpu.memory_space<vmem>>, vector<195x32xbf16>,
    %c16 = arith.constant 16 : index
    %c0_181 = arith.constant 0 : index
    %249 = vector.load %arg15[%c16, %c0_181] : memref<232x32xf32, #tpu.memory_space<vmem>>, vector<195x32xf32>
    %250 = arith.truncf %249 : vector<195x32xf32> to vector<195x32xbf16>
    %c0_182 = arith.constant 0 : index
    %c128_183 = arith.constant 128 : index
    %251 = vector.load %arg16[%c0_182, %c128_183] : memref<195x288xbf16, #tpu.memory_space<vmem>>, vector<195x32xbf16>
    tpu.vector_store %arg16[%c0_182, %c128_183], %250 {strides = array<i32>} : memref<195x288xbf16, #tpu.memory_space<vmem>>, vector<195x32xbf16>,
    %c17 = arith.constant 17 : index
    %c0_184 = arith.constant 0 : index
    %252 = vector.load %arg15[%c17, %c0_184] : memref<232x32xf32, #tpu.memory_space<vmem>>, vector<195x32xf32>
    %253 = arith.truncf %252 : vector<195x32xf32> to vector<195x32xbf16>
    %c0_185 = arith.constant 0 : index
    %c160_186 = arith.constant 160 : index
    %254 = vector.load %arg16[%c0_185, %c160_186] : memref<195x288xbf16, #tpu.memory_space<vmem>>, vector<195x32xbf16>
    tpu.vector_store %arg16[%c0_185, %c160_186], %253 {strides = array<i32>} : memref<195x288xbf16, #tpu.memory_space<vmem>>, vector<195x32xbf16>,
    %c30_187 = arith.constant 30 : index
    %c0_188 = arith.constant 0 : index
    %255 = vector.load %arg15[%c30_187, %c0_188] : memref<232x32xf32, #tpu.memory_space<vmem>>, vector<195x32xf32>
    %256 = arith.truncf %255 : vector<195x32xf32> to vector<195x32xbf16>
    %c0_189 = arith.constant 0 : index
    %c192_190 = arith.constant 192 : index
    %257 = vector.load %arg16[%c0_189, %c192_190] : memref<195x288xbf16, #tpu.memory_space<vmem>>, vector<195x32xbf16>
    tpu.vector_store %arg16[%c0_189, %c192_190], %256 {strides = array<i32>} : memref<195x288xbf16, #tpu.memory_space<vmem>>, vector<195x32xbf16>,
    %c31 = arith.constant 31 : index
    %c0_191 = arith.constant 0 : index
    %258 = vector.load %arg15[%c31, %c0_191] : memref<232x32xf32, #tpu.memory_space<vmem>>, vector<195x32xf32>
    %259 = arith.truncf %258 : vector<195x32xf32> to vector<195x32xbf16>
    %c0_192 = arith.constant 0 : index
    %c224_193 = arith.constant 224 : index
    %260 = vector.load %arg16[%c0_192, %c224_193] : memref<195x288xbf16, #tpu.memory_space<vmem>>, vector<195x32xbf16>
    tpu.vector_store %arg16[%c0_192, %c224_193], %259 {strides = array<i32>} : memref<195x288xbf16, #tpu.memory_space<vmem>>, vector<195x32xbf16>,
    %c32_194 = arith.constant 32 : index
    %c0_195 = arith.constant 0 : index
    %261 = vector.load %arg15[%c32_194, %c0_195] : memref<232x32xf32, #tpu.memory_space<vmem>>, vector<195x32xf32>
    %262 = arith.truncf %261 : vector<195x32xf32> to vector<195x32xbf16>
    %c0_196 = arith.constant 0 : index
    %c256_197 = arith.constant 256 : index
    %263 = vector.load %arg16[%c0_196, %c256_197] : memref<195x288xbf16, #tpu.memory_space<vmem>>, vector<195x32xbf16>
    tpu.vector_store %arg16[%c0_196, %c256_197], %262 {strides = array<i32>} : memref<195x288xbf16, #tpu.memory_space<vmem>>, vector<195x32xbf16>,
    %c0_198 = arith.constant 0 : index
    %c0_199 = arith.constant 0 : index
    %264 = vector.load %arg16[%c0_198, %c0_199] : memref<195x288xbf16, #tpu.memory_space<vmem>>, vector<195x288xbf16>
    %c0_200 = arith.constant 0 : index
    %c0_201 = arith.constant 0 : index
    %265 = vector.load %arg4[%c0_200, %c0_201] : memref<288x64xbf16, #tpu.memory_space<vmem>>, vector<288x64xbf16>
    %cst_202 = arith.constant dense<0.000000e+00> : vector<195x64xf32>
    %266 = tpu.matmul %264, %265, %cst_202 {dimension_numbers = #tpu.dot_dimension_numbers<[1], [0], [0], [1], [0, 0, 1, 1], [], []>} : vector<195x288xbf16>, vector<288x64xbf16>, vector<195x64xf32> -> vector<195x64xf32>
    %c0_203 = arith.constant 0 : index
    %c0_204 = arith.constant 0 : index
    %267 = vector.load %arg17[%c0_203, %c0_204] : memref<195x64xf32, #tpu.memory_space<vmem>>, vector<195x64xf32>
    tpu.vector_store %arg17[%c0_203, %c0_204], %266 {strides = array<i32>} : memref<195x64xf32, #tpu.memory_space<vmem>>, vector<195x64xf32>,
    %c0_205 = arith.constant 0 : index
    %c0_206 = arith.constant 0 : index
    %268 = tpu.strided_load %arg17[%c0_205, %c0_206] {strides = array<i32: 2, 1>} : memref<195x64xf32, #tpu.memory_space<vmem>>, vector<6x64xf32>
    %c1_207 = arith.constant 1 : index
    %c0_208 = arith.constant 0 : index
    %269 = tpu.strided_load %arg17[%c1_207, %c0_208] {strides = array<i32: 2, 1>} : memref<195x64xf32, #tpu.memory_space<vmem>>, vector<6x64xf32>
    %270 = arith.maximumf %268, %269 : vector<6x64xf32>
    %c15_209 = arith.constant 15 : index
    %c0_210 = arith.constant 0 : index
    %271 = tpu.strided_load %arg17[%c15_209, %c0_210] {strides = array<i32: 2, 1>} : memref<195x64xf32, #tpu.memory_space<vmem>>, vector<6x64xf32>
    %c16_211 = arith.constant 16 : index
    %c0_212 = arith.constant 0 : index
    %272 = tpu.strided_load %arg17[%c16_211, %c0_212] {strides = array<i32: 2, 1>} : memref<195x64xf32, #tpu.memory_space<vmem>>, vector<6x64xf32>
    %273 = arith.maximumf %271, %272 : vector<6x64xf32>
    %274 = arith.maximumf %270, %273 : vector<6x64xf32>
    %c0_213 = arith.constant 0 : index
    %c0_214 = arith.constant 0 : index
    %275 = vector.load %arg5[%c0_213, %c0_214] : memref<1x64xf32, #tpu.memory_space<vmem>>, vector<1x64xf32>
    %276 = vector.broadcast %275 : vector<1x64xf32> to vector<6x64xf32>
    %277 = arith.addf %274, %276 : vector<6x64xf32>
    %cst_215 = arith.constant 0.000000e+00 : f32
    %278 = vector.broadcast %cst_215 : f32 to vector<6x64xf32>
    %279 = arith.maximumf %277, %278 : vector<6x64xf32>
    %c0_216 = arith.constant 0 : index
    %c0_217 = arith.constant 0 : index
    %280 = vector.load %arg18[%c0_216, %c0_217] : memref<40x64xf32, #tpu.memory_space<vmem>>, vector<6x64xf32>
    tpu.vector_store %arg18[%c0_216, %c0_217], %279 {strides = array<i32>} : memref<40x64xf32, #tpu.memory_space<vmem>>, vector<6x64xf32>,
    %c30_218 = arith.constant 30 : index
    %c0_219 = arith.constant 0 : index
    %281 = tpu.strided_load %arg17[%c30_218, %c0_219] {strides = array<i32: 2, 1>} : memref<195x64xf32, #tpu.memory_space<vmem>>, vector<6x64xf32>
    %c31_220 = arith.constant 31 : index
    %c0_221 = arith.constant 0 : index
    %282 = tpu.strided_load %arg17[%c31_220, %c0_221] {strides = array<i32: 2, 1>} : memref<195x64xf32, #tpu.memory_space<vmem>>, vector<6x64xf32>
    %283 = arith.maximumf %281, %282 : vector<6x64xf32>
    %c45_222 = arith.constant 45 : index
    %c0_223 = arith.constant 0 : index
    %284 = tpu.strided_load %arg17[%c45_222, %c0_223] {strides = array<i32: 2, 1>} : memref<195x64xf32, #tpu.memory_space<vmem>>, vector<6x64xf32>
    %c46 = arith.constant 46 : index
    %c0_224 = arith.constant 0 : index
    %285 = tpu.strided_load %arg17[%c46, %c0_224] {strides = array<i32: 2, 1>} : memref<195x64xf32, #tpu.memory_space<vmem>>, vector<6x64xf32>
    %286 = arith.maximumf %284, %285 : vector<6x64xf32>
    %287 = arith.maximumf %283, %286 : vector<6x64xf32>
    %c0_225 = arith.constant 0 : index
    %c0_226 = arith.constant 0 : index
    %288 = vector.load %arg5[%c0_225, %c0_226] : memref<1x64xf32, #tpu.memory_space<vmem>>, vector<1x64xf32>
    %289 = vector.broadcast %288 : vector<1x64xf32> to vector<6x64xf32>
    %290 = arith.addf %287, %289 : vector<6x64xf32>
    %cst_227 = arith.constant 0.000000e+00 : f32
    %291 = vector.broadcast %cst_227 : f32 to vector<6x64xf32>
    %292 = arith.maximumf %290, %291 : vector<6x64xf32>
    %c6_228 = arith.constant 6 : index
    %c0_229 = arith.constant 0 : index
    %293 = vector.load %arg18[%c6_228, %c0_229] : memref<40x64xf32, #tpu.memory_space<vmem>>, vector<6x64xf32>
    tpu.vector_store %arg18[%c6_228, %c0_229], %292 {strides = array<i32>} : memref<40x64xf32, #tpu.memory_space<vmem>>, vector<6x64xf32>,
    %c60_230 = arith.constant 60 : index
    %c0_231 = arith.constant 0 : index
    %294 = tpu.strided_load %arg17[%c60_230, %c0_231] {strides = array<i32: 2, 1>} : memref<195x64xf32, #tpu.memory_space<vmem>>, vector<6x64xf32>
    %c61 = arith.constant 61 : index
    %c0_232 = arith.constant 0 : index
    %295 = tpu.strided_load %arg17[%c61, %c0_232] {strides = array<i32: 2, 1>} : memref<195x64xf32, #tpu.memory_space<vmem>>, vector<6x64xf32>
    %296 = arith.maximumf %294, %295 : vector<6x64xf32>
    %c75_233 = arith.constant 75 : index
    %c0_234 = arith.constant 0 : index
    %297 = tpu.strided_load %arg17[%c75_233, %c0_234] {strides = array<i32: 2, 1>} : memref<195x64xf32, #tpu.memory_space<vmem>>, vector<6x64xf32>
    %c76 = arith.constant 76 : index
    %c0_235 = arith.constant 0 : index
    %298 = tpu.strided_load %arg17[%c76, %c0_235] {strides = array<i32: 2, 1>} : memref<195x64xf32, #tpu.memory_space<vmem>>, vector<6x64xf32>
    %299 = arith.maximumf %297, %298 : vector<6x64xf32>
    %300 = arith.maximumf %296, %299 : vector<6x64xf32>
    %c0_236 = arith.constant 0 : index
    %c0_237 = arith.constant 0 : index
    %301 = vector.load %arg5[%c0_236, %c0_237] : memref<1x64xf32, #tpu.memory_space<vmem>>, vector<1x64xf32>
    %302 = vector.broadcast %301 : vector<1x64xf32> to vector<6x64xf32>
    %303 = arith.addf %300, %302 : vector<6x64xf32>
    %cst_238 = arith.constant 0.000000e+00 : f32
    %304 = vector.broadcast %cst_238 : f32 to vector<6x64xf32>
    %305 = arith.maximumf %303, %304 : vector<6x64xf32>
    %c12_239 = arith.constant 12 : index
    %c0_240 = arith.constant 0 : index
    %306 = vector.load %arg18[%c12_239, %c0_240] : memref<40x64xf32, #tpu.memory_space<vmem>>, vector<6x64xf32>
    tpu.vector_store %arg18[%c12_239, %c0_240], %305 {strides = array<i32>} : memref<40x64xf32, #tpu.memory_space<vmem>>, vector<6x64xf32>,
    %c90_241 = arith.constant 90 : index
    %c0_242 = arith.constant 0 : index
    %307 = tpu.strided_load %arg17[%c90_241, %c0_242] {strides = array<i32: 2, 1>} : memref<195x64xf32, #tpu.memory_space<vmem>>, vector<6x64xf32>
    %c91 = arith.constant 91 : index
    %c0_243 = arith.constant 0 : index
    %308 = tpu.strided_load %arg17[%c91, %c0_243] {strides = array<i32: 2, 1>} : memref<195x64xf32, #tpu.memory_space<vmem>>, vector<6x64xf32>
    %309 = arith.maximumf %307, %308 : vector<6x64xf32>
    %c105_244 = arith.constant 105 : index
    %c0_245 = arith.constant 0 : index
    %310 = tpu.strided_load %arg17[%c105_244, %c0_245] {strides = array<i32: 2, 1>} : memref<195x64xf32, #tpu.memory_space<vmem>>, vector<6x64xf32>
    %c106 = arith.constant 106 : index
    %c0_246 = arith.constant 0 : index
    %311 = tpu.strided_load %arg17[%c106, %c0_246] {strides = array<i32: 2, 1>} : memref<195x64xf32, #tpu.memory_space<vmem>>, vector<6x64xf32>
    %312 = arith.maximumf %310, %311 : vector<6x64xf32>
    %313 = arith.maximumf %309, %312 : vector<6x64xf32>
    %c0_247 = arith.constant 0 : index
    %c0_248 = arith.constant 0 : index
    %314 = vector.load %arg5[%c0_247, %c0_248] : memref<1x64xf32, #tpu.memory_space<vmem>>, vector<1x64xf32>
    %315 = vector.broadcast %314 : vector<1x64xf32> to vector<6x64xf32>
    %316 = arith.addf %313, %315 : vector<6x64xf32>
    %cst_249 = arith.constant 0.000000e+00 : f32
    %317 = vector.broadcast %cst_249 : f32 to vector<6x64xf32>
    %318 = arith.maximumf %316, %317 : vector<6x64xf32>
    %c18_250 = arith.constant 18 : index
    %c0_251 = arith.constant 0 : index
    %319 = vector.load %arg18[%c18_250, %c0_251] : memref<40x64xf32, #tpu.memory_space<vmem>>, vector<6x64xf32>
    tpu.vector_store %arg18[%c18_250, %c0_251], %318 {strides = array<i32>} : memref<40x64xf32, #tpu.memory_space<vmem>>, vector<6x64xf32>,
    %c120_252 = arith.constant 120 : index
    %c0_253 = arith.constant 0 : index
    %320 = tpu.strided_load %arg17[%c120_252, %c0_253] {strides = array<i32: 2, 1>} : memref<195x64xf32, #tpu.memory_space<vmem>>, vector<6x64xf32>
    %c121 = arith.constant 121 : index
    %c0_254 = arith.constant 0 : index
    %321 = tpu.strided_load %arg17[%c121, %c0_254] {strides = array<i32: 2, 1>} : memref<195x64xf32, #tpu.memory_space<vmem>>, vector<6x64xf32>
    %322 = arith.maximumf %320, %321 : vector<6x64xf32>
    %c135_255 = arith.constant 135 : index
    %c0_256 = arith.constant 0 : index
    %323 = tpu.strided_load %arg17[%c135_255, %c0_256] {strides = array<i32: 2, 1>} : memref<195x64xf32, #tpu.memory_space<vmem>>, vector<6x64xf32>
    %c136 = arith.constant 136 : index
    %c0_257 = arith.constant 0 : index
    %324 = tpu.strided_load %arg17[%c136, %c0_257] {strides = array<i32: 2, 1>} : memref<195x64xf32, #tpu.memory_space<vmem>>, vector<6x64xf32>
    %325 = arith.maximumf %323, %324 : vector<6x64xf32>
    %326 = arith.maximumf %322, %325 : vector<6x64xf32>
    %c0_258 = arith.constant 0 : index
    %c0_259 = arith.constant 0 : index
    %327 = vector.load %arg5[%c0_258, %c0_259] : memref<1x64xf32, #tpu.memory_space<vmem>>, vector<1x64xf32>
    %328 = vector.broadcast %327 : vector<1x64xf32> to vector<6x64xf32>
    %329 = arith.addf %326, %328 : vector<6x64xf32>
    %cst_260 = arith.constant 0.000000e+00 : f32
    %330 = vector.broadcast %cst_260 : f32 to vector<6x64xf32>
    %331 = arith.maximumf %329, %330 : vector<6x64xf32>
    %c24_261 = arith.constant 24 : index
    %c0_262 = arith.constant 0 : index
    %332 = vector.load %arg18[%c24_261, %c0_262] : memref<40x64xf32, #tpu.memory_space<vmem>>, vector<6x64xf32>
    tpu.vector_store %arg18[%c24_261, %c0_262], %331 {strides = array<i32>} : memref<40x64xf32, #tpu.memory_space<vmem>>, vector<6x64xf32>,
    %c150_263 = arith.constant 150 : index
    %c0_264 = arith.constant 0 : index
    %333 = tpu.strided_load %arg17[%c150_263, %c0_264] {strides = array<i32: 2, 1>} : memref<195x64xf32, #tpu.memory_space<vmem>>, vector<6x64xf32>
    %c151 = arith.constant 151 : index
    %c0_265 = arith.constant 0 : index
    %334 = tpu.strided_load %arg17[%c151, %c0_265] {strides = array<i32: 2, 1>} : memref<195x64xf32, #tpu.memory_space<vmem>>, vector<6x64xf32>
    %335 = arith.maximumf %333, %334 : vector<6x64xf32>
    %c165_266 = arith.constant 165 : index
    %c0_267 = arith.constant 0 : index
    %336 = tpu.strided_load %arg17[%c165_266, %c0_267] {strides = array<i32: 2, 1>} : memref<195x64xf32, #tpu.memory_space<vmem>>, vector<6x64xf32>
    %c166 = arith.constant 166 : index
    %c0_268 = arith.constant 0 : index
    %337 = tpu.strided_load %arg17[%c166, %c0_268] {strides = array<i32: 2, 1>} : memref<195x64xf32, #tpu.memory_space<vmem>>, vector<6x64xf32>
    %338 = arith.maximumf %336, %337 : vector<6x64xf32>
    %339 = arith.maximumf %335, %338 : vector<6x64xf32>
    %c0_269 = arith.constant 0 : index
    %c0_270 = arith.constant 0 : index
    %340 = vector.load %arg5[%c0_269, %c0_270] : memref<1x64xf32, #tpu.memory_space<vmem>>, vector<1x64xf32>
    %341 = vector.broadcast %340 : vector<1x64xf32> to vector<6x64xf32>
    %342 = arith.addf %339, %341 : vector<6x64xf32>
    %cst_271 = arith.constant 0.000000e+00 : f32
    %343 = vector.broadcast %cst_271 : f32 to vector<6x64xf32>
    %344 = arith.maximumf %342, %343 : vector<6x64xf32>
    %c30_272 = arith.constant 30 : index
    %c0_273 = arith.constant 0 : index
    %345 = vector.load %arg18[%c30_272, %c0_273] : memref<40x64xf32, #tpu.memory_space<vmem>>, vector<6x64xf32>
    tpu.vector_store %arg18[%c30_272, %c0_273], %344 {strides = array<i32>} : memref<40x64xf32, #tpu.memory_space<vmem>>, vector<6x64xf32>,
    %cst_274 = arith.constant 0.000000e+00 : f32
    %346 = vector.broadcast %cst_274 : f32 to vector<4x64xf32>
    %c36 = arith.constant 36 : index
    %c0_275 = arith.constant 0 : index
    %347 = vector.load %arg18[%c36, %c0_275] : memref<40x64xf32, #tpu.memory_space<vmem>>, vector<4x64xf32>
    tpu.vector_store %arg18[%c36, %c0_275], %346 {strides = array<i32>} : memref<40x64xf32, #tpu.memory_space<vmem>>, vector<4x64xf32>,
    %c0_276 = arith.constant 0 : index
    %c0_277 = arith.constant 0 : index
    %348 = vector.load %arg18[%c0_276, %c0_277] : memref<40x64xf32, #tpu.memory_space<vmem>>, vector<24x64xf32>
    %349 = arith.truncf %348 : vector<24x64xf32> to vector<24x64xbf16>
    %c0_278 = arith.constant 0 : index
    %c0_279 = arith.constant 0 : index
    %350 = vector.load %arg19[%c0_278, %c0_279] : memref<24x576xbf16, #tpu.memory_space<vmem>>, vector<24x64xbf16>
    tpu.vector_store %arg19[%c0_278, %c0_279], %349 {strides = array<i32>} : memref<24x576xbf16, #tpu.memory_space<vmem>>, vector<24x64xbf16>,
    %c1_280 = arith.constant 1 : index
    %c0_281 = arith.constant 0 : index
    %351 = vector.load %arg18[%c1_280, %c0_281] : memref<40x64xf32, #tpu.memory_space<vmem>>, vector<24x64xf32>
    %352 = arith.truncf %351 : vector<24x64xf32> to vector<24x64xbf16>
    %c0_282 = arith.constant 0 : index
    %c64_283 = arith.constant 64 : index
    %353 = vector.load %arg19[%c0_282, %c64_283] : memref<24x576xbf16, #tpu.memory_space<vmem>>, vector<24x64xbf16>
    tpu.vector_store %arg19[%c0_282, %c64_283], %352 {strides = array<i32>} : memref<24x576xbf16, #tpu.memory_space<vmem>>, vector<24x64xbf16>,
    %c2_284 = arith.constant 2 : index
    %c0_285 = arith.constant 0 : index
    %354 = vector.load %arg18[%c2_284, %c0_285] : memref<40x64xf32, #tpu.memory_space<vmem>>, vector<24x64xf32>
    %355 = arith.truncf %354 : vector<24x64xf32> to vector<24x64xbf16>
    %c0_286 = arith.constant 0 : index
    %c128_287 = arith.constant 128 : index
    %356 = vector.load %arg19[%c0_286, %c128_287] : memref<24x576xbf16, #tpu.memory_space<vmem>>, vector<24x64xbf16>
    tpu.vector_store %arg19[%c0_286, %c128_287], %355 {strides = array<i32>} : memref<24x576xbf16, #tpu.memory_space<vmem>>, vector<24x64xbf16>,
    %c6_288 = arith.constant 6 : index
    %c0_289 = arith.constant 0 : index
    %357 = vector.load %arg18[%c6_288, %c0_289] : memref<40x64xf32, #tpu.memory_space<vmem>>, vector<24x64xf32>
    %358 = arith.truncf %357 : vector<24x64xf32> to vector<24x64xbf16>
    %c0_290 = arith.constant 0 : index
    %c192_291 = arith.constant 192 : index
    %359 = vector.load %arg19[%c0_290, %c192_291] : memref<24x576xbf16, #tpu.memory_space<vmem>>, vector<24x64xbf16>
    tpu.vector_store %arg19[%c0_290, %c192_291], %358 {strides = array<i32>} : memref<24x576xbf16, #tpu.memory_space<vmem>>, vector<24x64xbf16>,
    %c7 = arith.constant 7 : index
    %c0_292 = arith.constant 0 : index
    %360 = vector.load %arg18[%c7, %c0_292] : memref<40x64xf32, #tpu.memory_space<vmem>>, vector<24x64xf32>
    %361 = arith.truncf %360 : vector<24x64xf32> to vector<24x64xbf16>
    %c0_293 = arith.constant 0 : index
    %c256_294 = arith.constant 256 : index
    %362 = vector.load %arg19[%c0_293, %c256_294] : memref<24x576xbf16, #tpu.memory_space<vmem>>, vector<24x64xbf16>
    tpu.vector_store %arg19[%c0_293, %c256_294], %361 {strides = array<i32>} : memref<24x576xbf16, #tpu.memory_space<vmem>>, vector<24x64xbf16>,
    %c8 = arith.constant 8 : index
    %c0_295 = arith.constant 0 : index
    %363 = vector.load %arg18[%c8, %c0_295] : memref<40x64xf32, #tpu.memory_space<vmem>>, vector<24x64xf32>
    %364 = arith.truncf %363 : vector<24x64xf32> to vector<24x64xbf16>
    %c0_296 = arith.constant 0 : index
    %c320_297 = arith.constant 320 : index
    %365 = vector.load %arg19[%c0_296, %c320_297] : memref<24x576xbf16, #tpu.memory_space<vmem>>, vector<24x64xbf16>
    tpu.vector_store %arg19[%c0_296, %c320_297], %364 {strides = array<i32>} : memref<24x576xbf16, #tpu.memory_space<vmem>>, vector<24x64xbf16>,
    %c12_298 = arith.constant 12 : index
    %c0_299 = arith.constant 0 : index
    %366 = vector.load %arg18[%c12_298, %c0_299] : memref<40x64xf32, #tpu.memory_space<vmem>>, vector<24x64xf32>
    %367 = arith.truncf %366 : vector<24x64xf32> to vector<24x64xbf16>
    %c0_300 = arith.constant 0 : index
    %c384_301 = arith.constant 384 : index
    %368 = vector.load %arg19[%c0_300, %c384_301] : memref<24x576xbf16, #tpu.memory_space<vmem>>, vector<24x64xbf16>
    tpu.vector_store %arg19[%c0_300, %c384_301], %367 {strides = array<i32>} : memref<24x576xbf16, #tpu.memory_space<vmem>>, vector<24x64xbf16>,
    %c13 = arith.constant 13 : index
    %c0_302 = arith.constant 0 : index
    %369 = vector.load %arg18[%c13, %c0_302] : memref<40x64xf32, #tpu.memory_space<vmem>>, vector<24x64xf32>
    %370 = arith.truncf %369 : vector<24x64xf32> to vector<24x64xbf16>
    %c0_303 = arith.constant 0 : index
    %c448_304 = arith.constant 448 : index
    %371 = vector.load %arg19[%c0_303, %c448_304] : memref<24x576xbf16, #tpu.memory_space<vmem>>, vector<24x64xbf16>
    tpu.vector_store %arg19[%c0_303, %c448_304], %370 {strides = array<i32>} : memref<24x576xbf16, #tpu.memory_space<vmem>>, vector<24x64xbf16>,
    %c14 = arith.constant 14 : index
    %c0_305 = arith.constant 0 : index
    %372 = vector.load %arg18[%c14, %c0_305] : memref<40x64xf32, #tpu.memory_space<vmem>>, vector<24x64xf32>
    %373 = arith.truncf %372 : vector<24x64xf32> to vector<24x64xbf16>
    %c0_306 = arith.constant 0 : index
    %c512_307 = arith.constant 512 : index
    %374 = vector.load %arg19[%c0_306, %c512_307] : memref<24x576xbf16, #tpu.memory_space<vmem>>, vector<24x64xbf16>
    tpu.vector_store %arg19[%c0_306, %c512_307], %373 {strides = array<i32>} : memref<24x576xbf16, #tpu.memory_space<vmem>>, vector<24x64xbf16>,
    %c0_308 = arith.constant 0 : index
    %c0_309 = arith.constant 0 : index
    %375 = vector.load %arg19[%c0_308, %c0_309] : memref<24x576xbf16, #tpu.memory_space<vmem>>, vector<24x576xbf16>
    %c0_310 = arith.constant 0 : index
    %c0_311 = arith.constant 0 : index
    %376 = vector.load %arg6[%c0_310, %c0_311] : memref<576x128xbf16, #tpu.memory_space<vmem>>, vector<576x128xbf16>
    %cst_312 = arith.constant dense<0.000000e+00> : vector<24x128xf32>
    %377 = tpu.matmul %375, %376, %cst_312 {dimension_numbers = #tpu.dot_dimension_numbers<[1], [0], [0], [1], [0, 0, 1, 1], [], []>} : vector<24x576xbf16>, vector<576x128xbf16>, vector<24x128xf32> -> vector<24x128xf32>
    %c0_313 = arith.constant 0 : index
    %c0_314 = arith.constant 0 : index
    %378 = vector.load %arg20[%c0_313, %c0_314] : memref<24x128xf32, #tpu.memory_space<vmem>>, vector<24x128xf32>
    tpu.vector_store %arg20[%c0_313, %c0_314], %377 {strides = array<i32>} : memref<24x128xf32, #tpu.memory_space<vmem>>, vector<24x128xf32>,
    %c0_315 = arith.constant 0 : index
    %c0_316 = arith.constant 0 : index
    %379 = vector.load %arg20[%c0_315, %c0_316] : memref<24x128xf32, #tpu.memory_space<vmem>>, vector<1x128xf32>
    %c1_317 = arith.constant 1 : index
    %c0_318 = arith.constant 0 : index
    %380 = vector.load %arg20[%c1_317, %c0_318] : memref<24x128xf32, #tpu.memory_space<vmem>>, vector<1x128xf32>
    %381 = arith.maximumf %379, %380 : vector<1x128xf32>
    %c6_319 = arith.constant 6 : index
    %c0_320 = arith.constant 0 : index
    %382 = vector.load %arg20[%c6_319, %c0_320] : memref<24x128xf32, #tpu.memory_space<vmem>>, vector<1x128xf32>
    %c7_321 = arith.constant 7 : index
    %c0_322 = arith.constant 0 : index
    %383 = vector.load %arg20[%c7_321, %c0_322] : memref<24x128xf32, #tpu.memory_space<vmem>>, vector<1x128xf32>
    %384 = arith.maximumf %382, %383 : vector<1x128xf32>
    %385 = arith.maximumf %381, %384 : vector<1x128xf32>
    %c0_323 = arith.constant 0 : index
    %c0_324 = arith.constant 0 : index
    %386 = vector.load %arg7[%c0_323, %c0_324] : memref<1x128xf32, #tpu.memory_space<vmem>>, vector<1x128xf32>
    %387 = arith.addf %385, %386 : vector<1x128xf32>
    %cst_325 = arith.constant 0.000000e+00 : f32
    %388 = vector.broadcast %cst_325 : f32 to vector<1x128xf32>
    %389 = arith.maximumf %387, %388 : vector<1x128xf32>
    %390 = arith.truncf %389 : vector<1x128xf32> to vector<1x128xbf16>
    %c0_326 = arith.constant 0 : index
    %c0_327 = arith.constant 0 : index
    %391 = vector.load %arg21[%c0_326, %c0_327] : memref<1x512xbf16, #tpu.memory_space<vmem>>, vector<1x128xbf16>
    tpu.vector_store %arg21[%c0_326, %c0_327], %390 {strides = array<i32>} : memref<1x512xbf16, #tpu.memory_space<vmem>>, vector<1x128xbf16>,
    %c2_328 = arith.constant 2 : index
    %c0_329 = arith.constant 0 : index
    %392 = vector.load %arg20[%c2_328, %c0_329] : memref<24x128xf32, #tpu.memory_space<vmem>>, vector<1x128xf32>
    %c3_330 = arith.constant 3 : index
    %c0_331 = arith.constant 0 : index
    %393 = vector.load %arg20[%c3_330, %c0_331] : memref<24x128xf32, #tpu.memory_space<vmem>>, vector<1x128xf32>
    %394 = arith.maximumf %392, %393 : vector<1x128xf32>
    %c8_332 = arith.constant 8 : index
    %c0_333 = arith.constant 0 : index
    %395 = vector.load %arg20[%c8_332, %c0_333] : memref<24x128xf32, #tpu.memory_space<vmem>>, vector<1x128xf32>
    %c9_334 = arith.constant 9 : index
    %c0_335 = arith.constant 0 : index
    %396 = vector.load %arg20[%c9_334, %c0_335] : memref<24x128xf32, #tpu.memory_space<vmem>>, vector<1x128xf32>
    %397 = arith.maximumf %395, %396 : vector<1x128xf32>
    %398 = arith.maximumf %394, %397 : vector<1x128xf32>
    %c0_336 = arith.constant 0 : index
    %c0_337 = arith.constant 0 : index
    %399 = vector.load %arg7[%c0_336, %c0_337] : memref<1x128xf32, #tpu.memory_space<vmem>>, vector<1x128xf32>
    %400 = arith.addf %398, %399 : vector<1x128xf32>
    %cst_338 = arith.constant 0.000000e+00 : f32
    %401 = vector.broadcast %cst_338 : f32 to vector<1x128xf32>
    %402 = arith.maximumf %400, %401 : vector<1x128xf32>
    %403 = arith.truncf %402 : vector<1x128xf32> to vector<1x128xbf16>
    %c0_339 = arith.constant 0 : index
    %c128_340 = arith.constant 128 : index
    %404 = vector.load %arg21[%c0_339, %c128_340] : memref<1x512xbf16, #tpu.memory_space<vmem>>, vector<1x128xbf16>
    tpu.vector_store %arg21[%c0_339, %c128_340], %403 {strides = array<i32>} : memref<1x512xbf16, #tpu.memory_space<vmem>>, vector<1x128xbf16>,
    %c12_341 = arith.constant 12 : index
    %c0_342 = arith.constant 0 : index
    %405 = vector.load %arg20[%c12_341, %c0_342] : memref<24x128xf32, #tpu.memory_space<vmem>>, vector<1x128xf32>
    %c13_343 = arith.constant 13 : index
    %c0_344 = arith.constant 0 : index
    %406 = vector.load %arg20[%c13_343, %c0_344] : memref<24x128xf32, #tpu.memory_space<vmem>>, vector<1x128xf32>
    %407 = arith.maximumf %405, %406 : vector<1x128xf32>
    %c18_345 = arith.constant 18 : index
    %c0_346 = arith.constant 0 : index
    %408 = vector.load %arg20[%c18_345, %c0_346] : memref<24x128xf32, #tpu.memory_space<vmem>>, vector<1x128xf32>
    %c19 = arith.constant 19 : index
    %c0_347 = arith.constant 0 : index
    %409 = vector.load %arg20[%c19, %c0_347] : memref<24x128xf32, #tpu.memory_space<vmem>>, vector<1x128xf32>
    %410 = arith.maximumf %408, %409 : vector<1x128xf32>
    %411 = arith.maximumf %407, %410 : vector<1x128xf32>
    %c0_348 = arith.constant 0 : index
    %c0_349 = arith.constant 0 : index
    %412 = vector.load %arg7[%c0_348, %c0_349] : memref<1x128xf32, #tpu.memory_space<vmem>>, vector<1x128xf32>
    %413 = arith.addf %411, %412 : vector<1x128xf32>
    %cst_350 = arith.constant 0.000000e+00 : f32
    %414 = vector.broadcast %cst_350 : f32 to vector<1x128xf32>
    %415 = arith.maximumf %413, %414 : vector<1x128xf32>
    %416 = arith.truncf %415 : vector<1x128xf32> to vector<1x128xbf16>
    %c0_351 = arith.constant 0 : index
    %c256_352 = arith.constant 256 : index
    %417 = vector.load %arg21[%c0_351, %c256_352] : memref<1x512xbf16, #tpu.memory_space<vmem>>, vector<1x128xbf16>
    tpu.vector_store %arg21[%c0_351, %c256_352], %416 {strides = array<i32>} : memref<1x512xbf16, #tpu.memory_space<vmem>>, vector<1x128xbf16>,
    %c14_353 = arith.constant 14 : index
    %c0_354 = arith.constant 0 : index
    %418 = vector.load %arg20[%c14_353, %c0_354] : memref<24x128xf32, #tpu.memory_space<vmem>>, vector<1x128xf32>
    %c15_355 = arith.constant 15 : index
    %c0_356 = arith.constant 0 : index
    %419 = vector.load %arg20[%c15_355, %c0_356] : memref<24x128xf32, #tpu.memory_space<vmem>>, vector<1x128xf32>
    %420 = arith.maximumf %418, %419 : vector<1x128xf32>
    %c20 = arith.constant 20 : index
    %c0_357 = arith.constant 0 : index
    %421 = vector.load %arg20[%c20, %c0_357] : memref<24x128xf32, #tpu.memory_space<vmem>>, vector<1x128xf32>
    %c21_358 = arith.constant 21 : index
    %c0_359 = arith.constant 0 : index
    %422 = vector.load %arg20[%c21_358, %c0_359] : memref<24x128xf32, #tpu.memory_space<vmem>>, vector<1x128xf32>
    %423 = arith.maximumf %421, %422 : vector<1x128xf32>
    %424 = arith.maximumf %420, %423 : vector<1x128xf32>
    %c0_360 = arith.constant 0 : index
    %c0_361 = arith.constant 0 : index
    %425 = vector.load %arg7[%c0_360, %c0_361] : memref<1x128xf32, #tpu.memory_space<vmem>>, vector<1x128xf32>
    %426 = arith.addf %424, %425 : vector<1x128xf32>
    %cst_362 = arith.constant 0.000000e+00 : f32
    %427 = vector.broadcast %cst_362 : f32 to vector<1x128xf32>
    %428 = arith.maximumf %426, %427 : vector<1x128xf32>
    %429 = arith.truncf %428 : vector<1x128xf32> to vector<1x128xbf16>
    %c0_363 = arith.constant 0 : index
    %c384_364 = arith.constant 384 : index
    %430 = vector.load %arg21[%c0_363, %c384_364] : memref<1x512xbf16, #tpu.memory_space<vmem>>, vector<1x128xbf16>
    tpu.vector_store %arg21[%c0_363, %c384_364], %429 {strides = array<i32>} : memref<1x512xbf16, #tpu.memory_space<vmem>>, vector<1x128xbf16>,
    %c0_365 = arith.constant 0 : index
    %c0_366 = arith.constant 0 : index
    %431 = vector.load %arg21[%c0_365, %c0_366] : memref<1x512xbf16, #tpu.memory_space<vmem>>, vector<1x512xbf16>
    %c0_367 = arith.constant 0 : index
    %c0_368 = arith.constant 0 : index
    %432 = vector.load %arg8[%c0_367, %c0_368] : memref<512x128xbf16, #tpu.memory_space<vmem>>, vector<512x128xbf16>
    %cst_369 = arith.constant dense<0.000000e+00> : vector<1x128xf32>
    %433 = tpu.matmul %431, %432, %cst_369 {dimension_numbers = #tpu.dot_dimension_numbers<[1], [0], [0], [1], [0, 0, 1, 1], [], []>} : vector<1x512xbf16>, vector<512x128xbf16>, vector<1x128xf32> -> vector<1x128xf32>
    %c0_370 = arith.constant 0 : index
    %c0_371 = arith.constant 0 : index
    %434 = vector.load %arg9[%c0_370, %c0_371] : memref<1x128xf32, #tpu.memory_space<vmem>>, vector<1x128xf32>
    %435 = arith.addf %433, %434 : vector<1x128xf32>
    %cst_372 = arith.constant 0.000000e+00 : f32
    %436 = vector.broadcast %cst_372 : f32 to vector<1x128xf32>
    %437 = arith.maximumf %435, %436 : vector<1x128xf32>
    %438 = arith.truncf %437 : vector<1x128xf32> to vector<1x128xbf16>
    %c0_373 = arith.constant 0 : index
    %c0_374 = arith.constant 0 : index
    %439 = vector.load %arg10[%c0_373, %c0_374] : memref<128x4xbf16, #tpu.memory_space<vmem>>, vector<128x4xbf16>
    %cst_375 = arith.constant dense<0.000000e+00> : vector<1x4xf32>
    %440 = tpu.matmul %438, %439, %cst_375 {dimension_numbers = #tpu.dot_dimension_numbers<[1], [0], [0], [1], [0, 0, 1, 1], [], []>} : vector<1x128xbf16>, vector<128x4xbf16>, vector<1x4xf32> -> vector<1x4xf32>
    %c0_376 = arith.constant 0 : index
    %c0_377 = arith.constant 0 : index
    %441 = vector.load %arg11[%c0_376, %c0_377] : memref<1x4xf32, #tpu.memory_space<vmem>>, vector<1x4xf32>
    %442 = arith.addf %440, %441 : vector<1x4xf32>
    %cst_378 = arith.constant dense<0xFF800000> : vector<1xf32>
    %443 = vector.multi_reduction <maximumf>, %442, %cst_378 [1] : vector<1x4xf32> to vector<1xf32>
    %444 = vector.shape_cast %443 : vector<1xf32> to vector<1x1xf32>
    %445 = vector.broadcast %444 : vector<1x1xf32> to vector<1x4xf32>
    %446 = arith.subf %442, %445 : vector<1x4xf32>
    %447 = math.exp %446 : vector<1x4xf32>
    %cst_379 = arith.constant dense<0.000000e+00> : vector<1xf32>
    %448 = vector.multi_reduction <add>, %447, %cst_379 [1] : vector<1x4xf32> to vector<1xf32>
    %449 = vector.shape_cast %448 : vector<1xf32> to vector<1x1xf32>
    %450 = tpu.reciprocal %449 : vector<1x1xf32> -> vector<1x1xf32>
    %451 = vector.broadcast %450 : vector<1x1xf32> to vector<1x4xf32>
    %452 = arith.mulf %447, %451 : vector<1x4xf32>
    %c0_380 = arith.constant 0 : index
    %c0_381 = arith.constant 0 : index
    %c0_382 = arith.constant 0 : index
    %453 = vector.load %arg12[%c0_380, %c0_381, %c0_382] : memref<1x1x4xf32, #tpu.memory_space<vmem>>, vector<1x1x4xf32>
    %454 = vector.shape_cast %453 : vector<1x1x4xf32> to vector<1x4xf32>
    %455 = vector.shape_cast %452 : vector<1x4xf32> to vector<1x1x4xf32>
    tpu.vector_store %arg12[%c0_380, %c0_381, %c0_382], %455 {strides = array<i32>} : memref<1x1x4xf32, #tpu.memory_space<vmem>>, vector<1x1x4xf32>,
    return
  }
  func.func @transform_0(%arg0: i32) -> (i32, i32, i32) {
    %c0_i32 = arith.constant 0 : i32
    %c0_i32_0 = arith.constant 0 : i32
    %c0_i32_1 = arith.constant 0 : i32
    return %arg0, %c0_i32, %c0_i32_0 : i32, i32, i32
  }
  func.func @transform_1(%arg0: i32) -> (i32, i32) {
    %c0_i32 = arith.constant 0 : i32
    %c0_i32_0 = arith.constant 0 : i32
    %c0_i32_1 = arith.constant 0 : i32
    return %c0_i32, %c0_i32_0 : i32, i32
  }
  func.func @transform_2(%arg0: i32) -> (i32, i32) {
    %c0_i32 = arith.constant 0 : i32
    %c0_i32_0 = arith.constant 0 : i32
    %c0_i32_1 = arith.constant 0 : i32
    return %c0_i32, %c0_i32_0 : i32, i32
  }
  func.func @transform_3(%arg0: i32) -> (i32, i32) {
    %c0_i32 = arith.constant 0 : i32
    %c0_i32_0 = arith.constant 0 : i32
    %c0_i32_1 = arith.constant 0 : i32
    return %c0_i32, %c0_i32_0 : i32, i32
  }
  func.func @transform_4(%arg0: i32) -> (i32, i32) {
    %c0_i32 = arith.constant 0 : i32
    %c0_i32_0 = arith.constant 0 : i32
    %c0_i32_1 = arith.constant 0 : i32
    return %c0_i32, %c0_i32_0 : i32, i32
  }
  func.func @transform_5(%arg0: i32) -> (i32, i32) {
    %c0_i32 = arith.constant 0 : i32
    %c0_i32_0 = arith.constant 0 : i32
    %c0_i32_1 = arith.constant 0 : i32
    return %c0_i32, %c0_i32_0 : i32, i32
  }
  func.func @transform_6(%arg0: i32) -> (i32, i32) {
    %c0_i32 = arith.constant 0 : i32
    %c0_i32_0 = arith.constant 0 : i32
    %c0_i32_1 = arith.constant 0 : i32
    return %c0_i32, %c0_i32_0 : i32, i32
  }
  func.func @transform_7(%arg0: i32) -> (i32, i32) {
    %c0_i32 = arith.constant 0 : i32
    %c0_i32_0 = arith.constant 0 : i32
    %c0_i32_1 = arith.constant 0 : i32
    return %c0_i32, %c0_i32_0 : i32, i32
  }
  func.func @transform_8(%arg0: i32) -> (i32, i32) {
    %c0_i32 = arith.constant 0 : i32
    %c0_i32_0 = arith.constant 0 : i32
    %c0_i32_1 = arith.constant 0 : i32
    return %c0_i32, %c0_i32_0 : i32, i32
  }
  func.func @transform_9(%arg0: i32) -> (i32, i32) {
    %c0_i32 = arith.constant 0 : i32
    %c0_i32_0 = arith.constant 0 : i32
    %c0_i32_1 = arith.constant 0 : i32
    return %c0_i32, %c0_i32_0 : i32, i32
  }
  func.func @transform_10(%arg0: i32) -> (i32, i32) {
    %c0_i32 = arith.constant 0 : i32
    %c0_i32_0 = arith.constant 0 : i32
    %c0_i32_1 = arith.constant 0 : i32
    return %c0_i32, %c0_i32_0 : i32, i32
  }
  func.func @transform_11(%arg0: i32) -> (i32, i32, i32) {
    %c0_i32 = arith.constant 0 : i32
    %c0_i32_0 = arith.constant 0 : i32
    %c0_i32_1 = arith.constant 0 : i32
    return %arg0, %c0_i32, %c0_i32_0 : i32, i32, i32
  }
}

</mosaic_0001>

<llo_original>
// kernel: ripeness_classifier_forward.1
$region0: #{ripeness_classifier_forward.1}
  #allocation0 [shape = 'u32[]', space=smem, size = 0x4, offset = 0x4, fixed_abs, tag = 'smem constant byte address 0x4 - core index']
  #allocation1 [shape = 'u32[144,128]{1,0:T(1,128)}', space=vmem, size = 0x12000, scoped, tag = 'internal scratch']
  #allocation2 [shape = 'bf16[960,27]{1,0:T(16,128)(2,1)}', space=vmem, size = 0x3c000, scoped, tag = 'scratch operand']
  #allocation3 [shape = 'f32[960,32]{1,0:T(8,128)}', space=vmem, size = 0x78000, scoped, tag = 'scratch operand']
  #allocation4 [shape = 'f32[232,32]{1,0:T(8,128)}', space=vmem, size = 0x1d000, scoped, tag = 'scratch operand']
  #allocation5 [shape = 'bf16[195,288]{1,0:T(8,128)(2,1)}', space=vmem, size = 0x25800, scoped, tag = 'scratch operand']
  #allocation6 [shape = 'f32[195,64]{1,0:T(8,128)}', space=vmem, size = 0x19000, scoped, tag = 'scratch operand']
  #allocation7 [shape = 'f32[40,64]{1,0:T(8,128)}', space=vmem, size = 0x5000, scoped, tag = 'scratch operand']
  #allocation8 [shape = 'bf16[24,576]{1,0:T(8,128)(2,1)}', space=vmem, size = 0x7800, scoped, tag = 'scratch operand']
  #allocation9 [shape = 'f32[24,128]{1,0:T(8,128)}', space=vmem, size = 0x3000, scoped, tag = 'scratch operand']
  #allocation10 [shape = 'bf16[1,512]{1,0:T(2,128)(2,1)}', space=vmem, size = 0x800, scoped, tag = 'scratch operand']
  %s0 = inlined_call_operand.vmem [shape: f32[2,1032,3], index: 0, kind: input, shape index: {}]
  %s1 = inlined_call_operand.vmem [shape: bf16[27,32], index: 1, kind: input, shape index: {}]
  %s2 = inlined_call_operand.vmem [shape: f32[1,32], index: 2, kind: input, shape index: {}]
  %s3 = inlined_call_operand.vmem [shape: bf16[288,64], index: 3, kind: input, shape index: {}]
  %s4 = inlined_call_operand.vmem [shape: f32[1,64], index: 4, kind: input, shape index: {}]
  %s5 = inlined_call_operand.vmem [shape: bf16[576,128], index: 5, kind: input, shape index: {}]
  %s6 = inlined_call_operand.vmem [shape: f32[1,128], index: 6, kind: input, shape index: {}]
  %s7 = inlined_call_operand.vmem [shape: bf16[512,128], index: 7, kind: input, shape index: {}]
  %s8 = inlined_call_operand.vmem [shape: f32[1,128], index: 8, kind: input, shape index: {}]
  %s9 = inlined_call_operand.vmem [shape: bf16[128,4], index: 9, kind: input, shape index: {}]
  %s10 = inlined_call_operand.vmem [shape: f32[1,4], index: 10, kind: input, shape index: {}]
  %s11 = inlined_call_operand.hbm [shape: f32[2,1,4], index: 11, kind: output, shape index: {}]
  %s12 = sld [smem:[#allocation0]]
  $region77: #{ripeness_classifier_forward.1} parent=0
    _
  %s14 = ssub.s32 1, %s12
  %s15 = scalar_select 0, %s14, %s12
  $region1: #{ripeness_classifier_forward.1} parent=0
    #allocation11 [shape = 'u8[1024]{0}', space=vmem, size = 0x400, scoped, tag = 'output window, operand 0']
    #allocation12 [shape = 's32[2]{0}', space=sflag, size = 0x8, scoped, tag = 'scoped memory for ripeness_classifier_forward.1']
    %16 = vsyncpa [#allocation12], 0
    %s17 = scalar_lea.sflag [#allocation12], 1
    %18 = vsyncpa %s17, 0
    loop: start=0, step=1, limit=4
    $region2: #{ripeness_classifier_forward.1} parent=1 // loop_pre_header
      _
    $region3: #{ripeness_classifier_forward.1} parent=1 // loop_header
      %s20 = sphi 0, %s24
      %p21 = scmp.ge.s32.totalorder %s20, 4
      %s30 = sphi 0, %s32
      %s33 = sphi 0, %s30
      %s34 = sphi 0, %s33
      %s50 = sphi 0, %s34
      %s54 = sphi 0, %s54
      %s56 = sphi 0, %s54
      %s57 = sphi 0, %s56
      %s71 = sphi 0, %s57
      %s75 = sphi 0, %s75
      %s77 = sphi 0, %s75
      %s78 = sphi 0, %s77
      %s92 = sphi 0, %s78
      %s96 = sphi 0, %s96
      %s98 = sphi 0, %s96
      %s99 = sphi 0, %s98
      %s113 = sphi 0, %s99
      %s117 = sphi 0, %s117
      %s119 = sphi 0, %s117
      %s120 = sphi 0, %s119
      %s134 = sphi 0, %s120
      %s138 = sphi 0, %s138
      %s140 = sphi 0, %s138
      %s141 = sphi 0, %s140
      %s155 = sphi 0, %s141
      %s159 = sphi 0, %s159
      %s161 = sphi 0, %s159
      %s162 = sphi 0, %s161
      %s176 = sphi 0, %s162
      %s180 = sphi 0, %s180
      %s182 = sphi 0, %s180
      %s183 = sphi 0, %s182
      %s197 = sphi 0, %s183
      %s201 = sphi 0, %s201
      %s203 = sphi 0, %s201
      %s204 = sphi 0, %s203
      %s218 = sphi 0, %s204
      %s222 = sphi 0, %s222
      %s224 = sphi 0, %s222
      %s225 = sphi 0, %s224
      %s239 = sphi 0, %s225
      %s243 = sphi 0, %s243
      %s245 = sphi 0, %s243
      %s246 = sphi 0, %s245
      %s260 = sphi 0, %s246
      %s266 = sphi 0, %s268
      %s269 = sphi 0, %s266
      %s270 = sphi 0, %s269
      %s286 = sphi 0, %s270
    $region4: #{ripeness_classifier_forward.1} parent=1 // loop_header_branch
      %23 = sbr.rel (%p21) target = $region8
    $region5: #{ripeness_classifier_forward.1} parent=1 // loop_body
      %s25 = ssub.s32 %s20, 1
      %s26 = ssub.s32 %s20, 2
      %s27 = sadd.s32 %s20, 1
      %s28 = ssub.s32 %s20, %s27
      %p29 = scmp.eq.s32.totalorder %s28, 0
      %s31 = sadd.s32 %s30, 1
      %s32 = scalar_select %p29, %s30, %s31
      %p35 = pneg %p29
      %p36 = scmp.eq.s32.totalorder %s20, 1
      %p37 = por %p35, %p36
      %p38 = scmp.ne.s32.totalorder %s30, %s33
      %p39 = scmp.eq.s32.totalorder %s20, 0
      %p40 = por %p38, %p39
      %p41 = scmp.ne.s32.totalorder %s30, %s33
      %p42 = scmp.eq.s32.totalorder %s25, 1
      %p43 = por %p41, %p42
      %p44 = scmp.ne.s32.totalorder %s33, %s34
      %p45 = scmp.eq.s32.totalorder %s25, 0
      %p46 = por %p44, %p45
      %p47 = scmp.ne.s32.totalorder %s33, %s34
      %p48 = scmp.eq.s32.totalorder %s26, 1
      %p49 = por %p47, %p48
      %p51 = scmp.ne.s32.totalorder %s34, %s50
      %p52 = scmp.eq.s32.totalorder %s26, 0
      %p53 = por %p51, %p52
      %s55 = sadd.s32 %s54, 1
      %p58 = scmp.eq.s32.totalorder %s20, 1
      %p59 = scmp.ne.s32.totalorder %s54, %s56
      %p60 = scmp.eq.s32.totalorder %s20, 0
      %p61 = por %p59, %p60
      %p62 = scmp.ne.s32.totalorder %s54, %s56
      %p63 = scmp.eq.s32.totalorder %s25, 1
      %p64 = por %p62, %p63
      %p65 = scmp.ne.s32.totalorder %s56, %s57
      %p66 = scmp.eq.s32.totalorder %s25, 0
      %p67 = por %p65, %p66
      %p68 = scmp.ne.s32.totalorder %s56, %s57
      %p69 = scmp.eq.s32.totalorder %s26, 1
      %p70 = por %p68, %p69
      %p72 = scmp.ne.s32.totalorder %s57, %s71
      %p73 = scmp.eq.s32.totalorder %s26, 0
      %p74 = por %p72, %p73
      %s76 = sadd.s32 %s75, 1
      %p79 = scmp.eq.s32.totalorder %s20, 1
      %p80 = scmp.ne.s32.totalorder %s75, %s77
      %p81 = scmp.eq.s32.totalorder %s20, 0
      %p82 = por %p80, %p81
      %p83 = scmp.ne.s32.totalorder %s75, %s77
      %p84 = scmp.eq.s32.totalorder %s25, 1
      %p85 = por %p83, %p84
      %p86 = scmp.ne.s32.totalorder %s77, %s78
      %p87 = scmp.eq.s32.totalorder %s25, 0
      %p88 = por %p86, %p87
      %p89 = scmp.ne.s32.totalorder %s77, %s78
      %p90 = scmp.eq.s32.totalorder %s26, 1
      %p91 = por %p89, %p90
      %p93 = scmp.ne.s32.totalorder %s78, %s92
      %p94 = scmp.eq.s32.totalorder %s26, 0
      %p95 = por %p93, %p94
      %s97 = sadd.s32 %s96, 1
      %p100 = scmp.eq.s32.totalorder %s20, 1
      %p101 = scmp.ne.s32.totalorder %s96, %s98
      %p102 = scmp.eq.s32.totalorder %s20, 0
      %p103 = por %p101, %p102
      %p104 = scmp.ne.s32.totalorder %s96, %s98
      %p105 = scmp.eq.s32.totalorder %s25, 1
      %p106 = por %p104, %p105
      %p107 = scmp.ne.s32.totalorder %s98, %s99
      %p108 = scmp.eq.s32.totalorder %s25, 0
      %p109 = por %p107, %p108
      %p110 = scmp.ne.s32.totalorder %s98, %s99
      %p111 = scmp.eq.s32.totalorder %s26, 1
      %p112 = por %p110, %p111
      %p114 = scmp.ne.s32.totalorder %s99, %s113
      %p115 = scmp.eq.s32.totalorder %s26, 0
      %p116 = por %p114, %p115
      %s118 = sadd.s32 %s117, 1
      %p121 = scmp.eq.s32.totalorder %s20, 1
      %p122 = scmp.ne.s32.totalorder %s117, %s119
      %p123 = scmp.eq.s32.totalorder %s20, 0
      %p124 = por %p122, %p123
      %p125 = scmp.ne.s32.totalorder %s117, %s119
      %p126 = scmp.eq.s32.totalorder %s25, 1
      %p127 = por %p125, %p126
      %p128 = scmp.ne.s32.totalorder %s119, %s120
      %p129 = scmp.eq.s32.totalorder %s25, 0
      %p130 = por %p128, %p129
      %p131 = scmp.ne.s32.totalorder %s119, %s120
      %p132 = scmp.eq.s32.totalorder %s26, 1
      %p133 = por %p131, %p132
      %p135 = scmp.ne.s32.totalorder %s120, %s134
      %p136 = scmp.eq.s32.totalorder %s26, 0
      %p137 = por %p135, %p136
      %s139 = sadd.s32 %s138, 1
      %p142 = scmp.eq.s32.totalorder %s20, 1
      %p143 = scmp.ne.s32.totalorder %s138, %s140
      %p144 = scmp.eq.s32.totalorder %s20, 0
      %p145 = por %p143, %p144
      %p146 = scmp.ne.s32.totalorder %s138, %s140
      %p147 = scmp.eq.s32.totalorder %s25, 1
      %p148 = por %p146, %p147
      %p149 = scmp.ne.s32.totalorder %s140, %s141
      %p150 = scmp.eq.s32.totalorder %s25, 0
      %p151 = por %p149, %p150
      %p152 = scmp.ne.s32.totalorder %s140, %s141
      %p153 = scmp.eq.s32.totalorder %s26, 1
      %p154 = por %p152, %p153
      %p156 = scmp.ne.s32.totalorder %s141, %s155
      %p157 = scmp.eq.s32.totalorder %s26, 0
      %p158 = por %p156, %p157
      %s160 = sadd.s32 %s159, 1
      %p163 = scmp.eq.s32.totalorder %s20, 1
      %p164 = scmp.ne.s32.totalorder %s159, %s161
      %p165 = scmp.eq.s32.totalorder %s20, 0
      %p166 = por %p164, %p165
      %p167 = scmp.ne.s32.totalorder %s159, %s161
      %p168 = scmp.eq.s32.totalorder %s25, 1
      %p169 = por %p167, %p168
      %p170 = scmp.ne.s32.totalorder %s161, %s162
      %p171 = scmp.eq.s32.totalorder %s25, 0
      %p172 = por %p170, %p171
      %p173 = scmp.ne.s32.totalorder %s161, %s162
      %p174 = scmp.eq.s32.totalorder %s26, 1
      %p175 = por %p173, %p174
      %p177 = scmp.ne.s32.totalorder %s162, %s176
      %p178 = scmp.eq.s32.totalorder %s26, 0
      %p179 = por %p177, %p178
      %s181 = sadd.s32 %s180, 1
      %p184 = scmp.eq.s32.totalorder %s20, 1
      %p185 = scmp.ne.s32.totalorder %s180, %s182
      %p186 = scmp.eq.s32.totalorder %s20, 0
      %p187 = por %p185, %p186
      %p188 = scmp.ne.s32.totalorder %s180, %s182
      %p189 = scmp.eq.s32.totalorder %s25, 1
      %p190 = por %p188, %p189
      %p191 = scmp.ne.s32.totalorder %s182, %s183
      %p192 = scmp.eq.s32.totalorder %s25, 0
      %p193 = por %p191, %p192
      %p194 = scmp.ne.s32.totalorder %s182, %s183
      %p195 = scmp.eq.s32.totalorder %s26, 1
      %p196 = por %p194, %p195
      %p198 = scmp.ne.s32.totalorder %s183, %s197
      %p199 = scmp.eq.s32.totalorder %s26, 0
      %p200 = por %p198, %p199
      %s202 = sadd.s32 %s201, 1
      %p205 = scmp.eq.s32.totalorder %s20, 1
      %p206 = scmp.ne.s32.totalorder %s201, %s203
      %p207 = scmp.eq.s32.totalorder %s20, 0
      %p208 = por %p206, %p207
      %p209 = scmp.ne.s32.totalorder %s201, %s203
      %p210 = scmp.eq.s32.totalorder %s25, 1
      %p211 = por %p209, %p210
      %p212 = scmp.ne.s32.totalorder %s203, %s204
      %p213 = scmp.eq.s32.totalorder %s25, 0
      %p214 = por %p212, %p213
      %p215 = scmp.ne.s32.totalorder %s203, %s204
      %p216 = scmp.eq.s32.totalorder %s26, 1
      %p217 = por %p215, %p216
      %p219 = scmp.ne.s32.totalorder %s204, %s218
      %p220 = scmp.eq.s32.totalorder %s26, 0
      %p221 = por %p219, %p220
      %s223 = sadd.s32 %s222, 1
      %p226 = scmp.eq.s32.totalorder %s20, 1
      %p227 = scmp.ne.s32.totalorder %s222, %s224
      %p228 = scmp.eq.s32.totalorder %s20, 0
      %p229 = por %p227, %p228
      %p230 = scmp.ne.s32.totalorder %s222, %s224
      %p231 = scmp.eq.s32.totalorder %s25, 1
      %p232 = por %p230, %p231
      %p233 = scmp.ne.s32.totalorder %s224, %s225
      %p234 = scmp.eq.s32.totalorder %s25, 0
      %p235 = por %p233, %p234
      %p236 = scmp.ne.s32.totalorder %s224, %s225
      %p237 = scmp.eq.s32.totalorder %s26, 1
      %p238 = por %p236, %p237
      %p240 = scmp.ne.s32.totalorder %s225, %s239
      %p241 = scmp.eq.s32.totalorder %s26, 0
      %p242 = por %p240, %p241
      %s244 = sadd.s32 %s243, 1
      %p247 = scmp.eq.s32.totalorder %s20, 1
      %p248 = scmp.ne.s32.totalorder %s243, %s245
      %p249 = scmp.eq.s32.totalorder %s20, 0
      %p250 = por %p248, %p249
      %p251 = scmp.ne.s32.totalorder %s243, %s245
      %p252 = scmp.eq.s32.totalorder %s25, 1
      %p253 = por %p251, %p252
      %p254 = scmp.ne.s32.totalorder %s245, %s246
      %p255 = scmp.eq.s32.totalorder %s25, 0
      %p256 = por %p254, %p255
      %p257 = scmp.ne.s32.totalorder %s245, %s246
      %p258 = scmp.eq.s32.totalorder %s26, 1
      %p259 = por %p257, %p258
      %p261 = scmp.ne.s32.totalorder %s246, %s260
      %p262 = scmp.eq.s32.totalorder %s26, 0
      %p263 = por %p261, %p262
      %s264 = ssub.s32 %s20, %s27
      %p265 = scmp.eq.s32.totalorder %s264, 0
      %s267 = sadd.s32 %s266, 1
      %s268 = scalar_select %p265, %s266, %s267
      %p271 = pneg %p265
      %p272 = scmp.eq.s32.totalorder %s20, 1
      %p273 = por %p271, %p272
      %p274 = scmp.ne.s32.totalorder %s266, %s269
      %p275 = scmp.eq.s32.totalorder %s20, 0
      %p276 = por %p274, %p275
      %p277 = scmp.ne.s32.totalorder %s266, %s269
      %p278 = scmp.eq.s32.totalorder %s25, 1
      %p279 = por %p277, %p278
      %p280 = scmp.ne.s32.totalorder %s269, %s270
      %p281 = scmp.eq.s32.totalorder %s25, 0
      %p282 = por %p280, %p281
      %p283 = scmp.ne.s32.totalorder %s269, %s270
      %p284 = scmp.eq.s32.totalorder %s26, 1
      %p285 = por %p283, %p284
      %p287 = scmp.ne.s32.totalorder %s270, %s286
      %p288 = scmp.eq.s32.totalorder %s26, 0
      %p289 = por %p287, %p288
      %p290 = scmp.le.s32.totalorder 1, %s20
      %p291 = scmp.lt.s32.totalorder %s20, 3
      %p292 = pnand %p290, %p291
      %p293 = pneg %p292
      // Predicated region
      $region9: #{ripeness_classifier_forward.1} parent=5 // pred_check
        _
      $region10: #{ripeness_classifier_forward.1} parent=5 // pred_check_branch
        %295 = sbr.rel (%p292) target = $region12
      $region11: #{ripeness_classifier_forward.1} parent=5 // pred_region
        %s296 = ssub.s32 %s20, 1
        // Predicated region
        $region13: #{ripeness_classifier_forward.1} parent=11 // pred_check
          %p297 = pneg %p67
        $region14: #{ripeness_classifier_forward.1} parent=11 // pred_check_branch
          %299 = sbr.rel (%p297) target = $region16
        $region15: #{ripeness_classifier_forward.1} parent=11 // pred_region
          _
        $region16: #{ripeness_classifier_forward.1} parent=11 // pred_fallthru
          _
        // Predicated region
        $region17: #{ripeness_classifier_forward.1} parent=11 // pred_check
          %p300 = pneg %p88
        $region18: #{ripeness_classifier_forward.1} parent=11 // pred_check_branch
          %302 = sbr.rel (%p300) target = $region20
        $region19: #{ripeness_classifier_forward.1} parent=11 // pred_region
          _
        $region20: #{ripeness_classifier_forward.1} parent=11 // pred_fallthru
          _
        // Predicated region
        $region21: #{ripeness_classifier_forward.1} parent=11 // pred_check
          %p303 = pneg %p109
        $region22: #{ripeness_classifier_forward.1} parent=11 // pred_check_branch
          %305 = sbr.rel (%p303) target = $region24
        $region23: #{ripeness_classifier_forward.1} parent=11 // pred_region
          _
        $region24: #{ripeness_classifier_forward.1} parent=11 // pred_fallthru
          _
        // Predicated region
        $region25: #{ripeness_classifier_forward.1} parent=11 // pred_check
          %p306 = pneg %p130
        $region26: #{ripeness_classifier_forward.1} parent=11 // pred_check_branch
          %308 = sbr.rel (%p306) target = $region28
        $region27: #{ripeness_classifier_forward.1} parent=11 // pred_region
          _
        $region28: #{ripeness_classifier_forward.1} parent=11 // pred_fallthru
          _
        // Predicated region
        $region29: #{ripeness_classifier_forward.1} parent=11 // pred_check
          %p309 = pneg %p151
        $region30: #{ripeness_classifier_forward.1} parent=11 // pred_check_branch
          %311 = sbr.rel (%p309) target = $region32
        $region31: #{ripeness_classifier_forward.1} parent=11 // pred_region
          _
        $region32: #{ripeness_classifier_forward.1} parent=11 // pred_fallthru
          _
        // Predicated region
        $region33: #{ripeness_classifier_forward.1} parent=11 // pred_check
          %p312 = pneg %p172
        $region34: #{ripeness_classifier_forward.1} parent=11 // pred_check_branch
          %314 = sbr.rel (%p312) target = $region36
        $region35: #{ripeness_classifier_forward.1} parent=11 // pred_region
          _
        $region36: #{ripeness_classifier_forward.1} parent=11 // pred_fallthru
          _
        // Predicated region
        $region37: #{ripeness_classifier_forward.1} parent=11 // pred_check
          %p315 = pneg %p193
        $region38: #{ripeness_classifier_forward.1} parent=11 // pred_check_branch
          %317 = sbr.rel (%p315) target = $region40
        $region39: #{ripeness_classifier_forward.1} parent=11 // pred_region
          _
        $region40: #{ripeness_classifier_forward.1} parent=11 // pred_fallthru
          _
        // Predicated region
        $region41: #{ripeness_classifier_forward.1} parent=11 // pred_check
          %p318 = pneg %p214
        $region42: #{ripeness_classifier_forward.1} parent=11 // pred_check_branch
          %320 = sbr.rel (%p318) target = $region44
        $region43: #{ripeness_classifier_forward.1} parent=11 // pred_region
          _
        $region44: #{ripeness_classifier_forward.1} parent=11 // pred_fallthru
          _
        // Predicated region
        $region45: #{ripeness_classifier_forward.1} parent=11 // pred_check
          %p321 = pneg %p235
        $region46: #{ripeness_classifier_forward.1} parent=11 // pred_check_branch
          %323 = sbr.rel (%p321) target = $region48
        $region47: #{ripeness_classifier_forward.1} parent=11 // pred_region
          _
        $region48: #{ripeness_classifier_forward.1} parent=11 // pred_fallthru
          _
        // Predicated region
        $region49: #{ripeness_classifier_forward.1} parent=11 // pred_check
          %p324 = pneg %p256
        $region50: #{ripeness_classifier_forward.1} parent=11 // pred_check_branch
          %326 = sbr.rel (%p324) target = $region52
        $region51: #{ripeness_classifier_forward.1} parent=11 // pred_region
          _
        $region52: #{ripeness_classifier_forward.1} parent=11 // pred_fallthru
          _
      $region12: #{ripeness_classifier_forward.1} parent=5 // pred_fallthru
        _
      %p327 = scmp.lt.s32.totalorder %s20, 2
      // Predicated region
      $region53: #{ripeness_classifier_forward.1} parent=5 // pred_check
        %p328 = pneg %p327
      $region54: #{ripeness_classifier_forward.1} parent=5 // pred_check_branch
        %330 = sbr.rel (%p328) target = $region56
      $region55: #{ripeness_classifier_forward.1} parent=5 // pred_region
        // Predicated region
        $region57: #{ripeness_classifier_forward.1} parent=55 // pred_check
          %p331 = pneg %p40
        $region58: #{ripeness_classifier_forward.1} parent=55 // pred_check_branch
          %333 = sbr.rel (%p331) target = $region60
        $region59: #{ripeness_classifier_forward.1} parent=55 // pred_region
          %p334 = scmp.lt.s32.totalorder %s20, 1
          %s335 = scalar_select %p334, %s20, 1
          %s336 = smul.addr %s335, 129
          %s337 = smul.addr %s336, 8
          %s338 = scalar_lea.vmem %s0, %s337
        $region60: #{ripeness_classifier_forward.1} parent=55 // pred_fallthru
          _
      $region56: #{ripeness_classifier_forward.1} parent=5 // pred_fallthru
        _
      %p339 = scmp.le.s32.totalorder 1, %s20
      %p340 = scmp.lt.s32.totalorder %s20, 3
      %p341 = pnand %p339, %p340
      %p342 = pneg %p341
      // Predicated region
      $region61: #{ripeness_classifier_forward.1} parent=5 // pred_check
        _
      $region62: #{ripeness_classifier_forward.1} parent=5 // pred_check_branch
        %344 = sbr.rel (%p341) target = $region64
      $region63: #{ripeness_classifier_forward.1} parent=5 // pred_region
        %s345 = ssub.s32 %s20, 1
        %p346 = scmp.lt.s32.totalorder %s25, 1
        %s347 = scalar_select %p346, %s25, 1
        %s348 = smul.addr %s347, 129
        %s349 = smul.addr %s348, 8
        %s350 = scalar_lea.vmem %s0, %s349
        %p351 = pneg %p46
        %p352 = pneg %p43
        %p353 = pneg %p67
        %p354 = pneg %p64
        %p355 = pneg %p88
        %p356 = pneg %p85
        %p357 = pneg %p109
        %p358 = pneg %p106
        %p359 = pneg %p130
        %p360 = pneg %p127
        %p361 = pneg %p151
        %p362 = pneg %p148
        %p363 = pneg %p172
        %p364 = pneg %p169
        %p365 = pneg %p193
        %p366 = pneg %p190
        %p367 = pneg %p214
        %p368 = pneg %p211
        %p369 = pneg %p235
        %p370 = pneg %p232
        %p371 = pneg %p256
        %p372 = pneg %p253
        %p373 = pneg %p282
        %p374 = pneg %p279
        %s375 = sand.u32 %s269, 1
        %s376 = scalar_lea.sflag [#allocation12], %s375
        %s377 = sand.u32 %s269, 1
        %s378 = scalar_lea.vmem [#allocation11], %s377
        %p379 = scmp.lt.s32.totalorder %s25, 1
        %s380 = scalar_select %p379, %s25, 1
        %s381 = smul.addr %s380, 129
        %s382 = smul.addr %s381, 8
        %s383 = scalar_lea.vmem %s0, %s382
        %v385 = vld [vmem:[%s383] sm:$0xff]
        %v386 = vld [vmem:[%s383 + $0x8] sm:$0xff]
        %v387 = vld [vmem:[%s383 + $0x10] sm:$0xff]
        %v388 = vld [vmem:[%s383 + $0x18] sm:$0xff]
        %v389 = vld [vmem:[%s383 + $0x20] sm:$0xff]
        %v390 = vld [vmem:[%s383 + $0x28] sm:$0xff]
        %v391 = vld [vmem:[%s383 + $0x30] sm:$0xff]
        %v392 = vld [vmem:[%s383 + $0x38] sm:$0xff]
        %v393 = vld [vmem:[%s383 + $0x40] sm:$0xff]
        %v394 = vld [vmem:[%s383 + $0x48] sm:$0xff]
        %v395 = vld [vmem:[%s383 + $0x50] sm:$0xff]
        %v396 = vld [vmem:[%s383 + $0x58] sm:$0xff]
        %v397 = vld [vmem:[%s383 + $0x60] sm:$0xff]
        %v398 = vld [vmem:[%s383 + $0x68] sm:$0xff]
        %v399 = vld [vmem:[%s383 + $0x70] sm:$0xff]
        %v400 = vld [vmem:[%s383 + $0x78] sm:$0xff]
        %v401 = vld [vmem:[%s383 + $0x80] sm:$0xff]
        %v402 = vld [vmem:[%s383 + $0x88] sm:$0xff]
        %v403 = vld [vmem:[%s383 + $0x90] sm:$0xff]
        %v404 = vld [vmem:[%s383 + $0x98] sm:$0xff]
        %v405 = vld [vmem:[%s383 + $0xa0] sm:$0xff]
        %v406 = vld [vmem:[%s383 + $0xa8] sm:$0xff]
        %v407 = vld [vmem:[%s383 + $0xb0] sm:$0xff]
        %v408 = vld [vmem:[%s383 + $0xb8] sm:$0xff]
        %v409 = vld [vmem:[%s383 + $0xc0] sm:$0xff]
        %v410 = vld [vmem:[%s383 + $0xc8] sm:$0xff]
        %v411 = vld [vmem:[%s383 + $0xd0] sm:$0xff]
        %v412 = vld [vmem:[%s383 + $0xd8] sm:$0xff]
        %v413 = vld [vmem:[%s383 + $0xe0] sm:$0xff]
        %v414 = vld [vmem:[%s383 + $0xe8] sm:$0xff]
        %v415 = vld [vmem:[%s383 + $0xf0] sm:$0xff]
        %v416 = vld [vmem:[%s383 + $0xf8] sm:$0xff]
        %v417 = vld [vmem:[%s383 + $0x100] sm:$0xff]
        %v418 = vld [vmem:[%s383 + $0x108] sm:$0xff]
        %v419 = vld [vmem:[%s383 + $0x110] sm:$0xff]
        %v420 = vld [vmem:[%s383 + $0x118] sm:$0xff]
        %v421 = vld [vmem:[%s383 + $0x120] sm:$0xff]
        %v422 = vld [vmem:[%s383 + $0x128] sm:$0xff]
        %v423 = vld [vmem:[%s383 + $0x130] sm:$0xff]
        %v424 = vld [vmem:[%s383 + $0x138] sm:$0xff]
        %v425 = vld [vmem:[%s383 + $0x140] sm:$0xff]
        %v426 = vld [vmem:[%s383 + $0x148] sm:$0xff]
        %v427 = vld [vmem:[%s383 + $0x150] sm:$0xff]
        %v428 = vld [vmem:[%s383 + $0x158] sm:$0xff]
        %v429 = vld [vmem:[%s383 + $0x160] sm:$0xff]
        %v430 = vld [vmem:[%s383 + $0x168] sm:$0xff]
        %v431 = vld [vmem:[%s383 + $0x170] sm:$0xff]
        %v432 = vld [vmem:[%s383 + $0x178] sm:$0xff]
        %v433 = vld [vmem:[%s383 + $0x180] sm:$0xff]
        %v434 = vld [vmem:[%s383 + $0x188] sm:$0xff]
        %v435 = vld [vmem:[%s383 + $0x190] sm:$0xff]
        %v436 = vld [vmem:[%s383 + $0x198] sm:$0xff]
        %v437 = vld [vmem:[%s383 + $0x1a0] sm:$0xff]
        %v438 = vld [vmem:[%s383 + $0x1a8] sm:$0xff]
        %v439 = vld [vmem:[%s383 + $0x1b0] sm:$0xff]
        %v440 = vld [vmem:[%s383 + $0x1b8] sm:$0xff]
        %v441 = vld [vmem:[%s383 + $0x1c0] sm:$0xff]
        %v442 = vld [vmem:[%s383 + $0x1c8] sm:$0xff]
        %v443 = vld [vmem:[%s383 + $0x1d0] sm:$0xff]
        %v444 = vld [vmem:[%s383 + $0x1d8] sm:$0xff]
        %v445 = vld [vmem:[%s383 + $0x1e0] sm:$0xff]
        %v446 = vld [vmem:[%s383 + $0x1e8] sm:$0xff]
        %v447 = vld [vmem:[%s383 + $0x1f0] sm:$0xff]
        %v448 = vld [vmem:[%s383 + $0x1f8] sm:$0xff]
        %v449 = vld [vmem:[%s383 + $0x200] sm:$0xff]
        %v450 = vld [vmem:[%s383 + $0x208] sm:$0xff]
        %v451 = vld [vmem:[%s383 + $0x210] sm:$0xff]
        %v452 = vld [vmem:[%s383 + $0x218] sm:$0xff]
        %v453 = vld [vmem:[%s383 + $0x220] sm:$0xff]
        %v454 = vld [vmem:[%s383 + $0x228] sm:$0xff]
        %v455 = vld [vmem:[%s383 + $0x230] sm:$0xff]
        %v456 = vld [vmem:[%s383 + $0x238] sm:$0xff]
        %v457 = vld [vmem:[%s383 + $0x240] sm:$0xff]
        %v458 = vld [vmem:[%s383 + $0x248] sm:$0xff]
        %v459 = vld [vmem:[%s383 + $0x250] sm:$0xff]
        %v460 = vld [vmem:[%s383 + $0x258] sm:$0xff]
        %v461 = vld [vmem:[%s383 + $0x260] sm:$0xff]
        %v462 = vld [vmem:[%s383 + $0x268] sm:$0xff]
        %v463 = vld [vmem:[%s383 + $0x270] sm:$0xff]
        %v464 = vld [vmem:[%s383 + $0x278] sm:$0xff]
        %v465 = vld [vmem:[%s383 + $0x280] sm:$0xff]
        %v466 = vld [vmem:[%s383 + $0x288] sm:$0xff]
        %v467 = vld [vmem:[%s383 + $0x290] sm:$0xff]
        %v468 = vld [vmem:[%s383 + $0x298] sm:$0xff]
        %v469 = vld [vmem:[%s383 + $0x2a0] sm:$0xff]
        %v470 = vld [vmem:[%s383 + $0x2a8] sm:$0xff]
        %v471 = vld [vmem:[%s383 + $0x2b0] sm:$0xff]
        %v472 = vld [vmem:[%s383 + $0x2b8] sm:$0xff]
        %v473 = vld [vmem:[%s383 + $0x2c0] sm:$0xff]
        %v474 = vld [vmem:[%s383 + $0x2c8] sm:$0xff]
        %v475 = vld [vmem:[%s383 + $0x2d0] sm:$0xff]
        %v476 = vld [vmem:[%s383 + $0x2d8] sm:$0xff]
        %v477 = vld [vmem:[%s383 + $0x2e0] sm:$0xff]
        %v478 = vld [vmem:[%s383 + $0x2e8] sm:$0xff]
        %v479 = vld [vmem:[%s383 + $0x2f0] sm:$0xff]
        %v480 = vld [vmem:[%s383 + $0x2f8] sm:$0xff]
        %v481 = vld [vmem:[%s383 + $0x300] sm:$0xff]
        %v482 = vld [vmem:[%s383 + $0x308] sm:$0xff]
        %v483 = vld [vmem:[%s383 + $0x310] sm:$0xff]
        %v484 = vld [vmem:[%s383 + $0x318] sm:$0xff]
        %v485 = vld [vmem:[%s383 + $0x320] sm:$0xff]
        %v486 = vld [vmem:[%s383 + $0x328] sm:$0xff]
        %v487 = vld [vmem:[%s383 + $0x330] sm:$0xff]
        %v488 = vld [vmem:[%s383 + $0x338] sm:$0xff]
        %v489 = vld [vmem:[%s383 + $0x340] sm:$0xff]
        %v490 = vld [vmem:[%s383 + $0x348] sm:$0xff]
        %v491 = vld [vmem:[%s383 + $0x350] sm:$0xff]
        %v492 = vld [vmem:[%s383 + $0x358] sm:$0xff]
        %v493 = vld [vmem:[%s383 + $0x360] sm:$0xff]
        %v494 = vld [vmem:[%s383 + $0x368] sm:$0xff]
        %v495 = vld [vmem:[%s383 + $0x370] sm:$0xff]
        %v496 = vld [vmem:[%s383 + $0x378] sm:$0xff]
        %v497 = vld [vmem:[%s383 + $0x380] sm:$0xff]
        %v498 = vld [vmem:[%s383 + $0x388] sm:$0xff]
        %v499 = vld [vmem:[%s383 + $0x390] sm:$0xff]
        %v500 = vld [vmem:[%s383 + $0x398] sm:$0xff]
        %v501 = vld [vmem:[%s383 + $0x3a0] sm:$0xff]
        %v502 = vld [vmem:[%s383 + $0x3a8] sm:$0xff]
        %v503 = vld [vmem:[%s383 + $0x3b0] sm:$0xff]
        %v504 = vld [vmem:[%s383 + $0x3b8] sm:$0xff]
        %v505 = vpack.c.bf16 %v386, %v385
        %v506 = vpack.c.bf16 %v388, %v387
        %v507 = vpack.c.bf16 %v390, %v389
        %v508 = vpack.c.bf16 %v392, %v391
        %v509 = vpack.c.bf16 %v394, %v393
        %v510 = vpack.c.bf16 %v396, %v395
        %v511 = vpack.c.bf16 %v398, %v397
        %v512 = vpack.c.bf16 %v400, %v399
        %v513 = vpack.c.bf16 %v402, %v401
        %v514 = vpack.c.bf16 %v404, %v403
        %v515 = vpack.c.bf16 %v406, %v405
        %v516 = vpack.c.bf16 %v408, %v407
        %v517 = vpack.c.bf16 %v410, %v409
        %v518 = vpack.c.bf16 %v412, %v411
        %v519 = vpack.c.bf16 %v414, %v413
        %v520 = vpack.c.bf16 %v416, %v415
        %v521 = vpack.c.bf16 %v418, %v417
        %v522 = vpack.c.bf16 %v420, %v419
        %v523 = vpack.c.bf16 %v422, %v421
        %v524 = vpack.c.bf16 %v424, %v423
        %v525 = vpack.c.bf16 %v426, %v425
        %v526 = vpack.c.bf16 %v428, %v427
        %v527 = vpack.c.bf16 %v430, %v429
        %v528 = vpack.c.bf16 %v432, %v431
        %v529 = vpack.c.bf16 %v434, %v433
        %v530 = vpack.c.bf16 %v436, %v435
        %v531 = vpack.c.bf16 %v438, %v437
        %v532 = vpack.c.bf16 %v440, %v439
        %v533 = vpack.c.bf16 %v442, %v441
        %v534 = vpack.c.bf16 %v444, %v443
        %v535 = vpack.c.bf16 %v446, %v445
        %v536 = vpack.c.bf16 %v448, %v447
        %v537 = vpack.c.bf16 %v450, %v449
        %v538 = vpack.c.bf16 %v452, %v451
        %v539 = vpack.c.bf16 %v454, %v453
        %v540 = vpack.c.bf16 %v456, %v455
        %v541 = vpack.c.bf16 %v458, %v457
        %v542 = vpack.c.bf16 %v460, %v459
        %v543 = vpack.c.bf16 %v462, %v461
        %v544 = vpack.c.bf16 %v464, %v463
        %v545 = vpack.c.bf16 %v466, %v465
        %v546 = vpack.c.bf16 %v468, %v467
        %v547 = vpack.c.bf16 %v470, %v469
        %v548 = vpack.c.bf16 %v472, %v471
        %v549 = vpack.c.bf16 %v474, %v473
        %v550 = vpack.c.bf16 %v476, %v475
        %v551 = vpack.c.bf16 %v478, %v477
        %v552 = vpack.c.bf16 %v480, %v479
        %v553 = vpack.c.bf16 %v482, %v481
        %v554 = vpack.c.bf16 %v484, %v483
        %v555 = vpack.c.bf16 %v486, %v485
        %v556 = vpack.c.bf16 %v488, %v487
        %v557 = vpack.c.bf16 %v490, %v489
        %v558 = vpack.c.bf16 %v492, %v491
        %v559 = vpack.c.bf16 %v494, %v493
        %v560 = vpack.c.bf16 %v496, %v495
        %v561 = vpack.c.bf16 %v498, %v497
        %v562 = vpack.c.bf16 %v500, %v499
        %v563 = vpack.c.bf16 %v502, %v501
        %v564 = vpack.c.bf16 %v504, %v503
        %vm565 = vcmask 23552
        %566 = vst.msk [vmem:[#allocation2] sm:$0xff] %vm565, %v505
        %567 = vst.msk [vmem:[#allocation2 + $0x8] sm:$0xff] %vm565, %v506
        %568 = vst.msk [vmem:[#allocation2 + $0x10] sm:$0xff] %vm565, %v507
        %569 = vst.msk [vmem:[#allocation2 + $0x18] sm:$0xff] %vm565, %v508
        %570 = vst.msk [vmem:[#allocation2 + $0x20] sm:$0xff] %vm565, %v509
        %571 = vst.msk [vmem:[#allocation2 + $0x28] sm:$0xff] %vm565, %v510
        %572 = vst.msk [vmem:[#allocation2 + $0x30] sm:$0xff] %vm565, %v511
        %573 = vst.msk [vmem:[#allocation2 + $0x38] sm:$0xff] %vm565, %v512
        %574 = vst.msk [vmem:[#allocation2 + $0x40] sm:$0xff] %vm565, %v513
        %575 = vst.msk [vmem:[#allocation2 + $0x48] sm:$0xff] %vm565, %v514
        %576 = vst.msk [vmem:[#allocation2 + $0x50] sm:$0xff] %vm565, %v515
        %577 = vst.msk [vmem:[#allocation2 + $0x58] sm:$0xff] %vm565, %v516
        %578 = vst.msk [vmem:[#allocation2 + $0x60] sm:$0xff] %vm565, %v517
        %579 = vst.msk [vmem:[#allocation2 + $0x68] sm:$0xff] %vm565, %v518
        %580 = vst.msk [vmem:[#allocation2 + $0x70] sm:$0xff] %vm565, %v519
        %581 = vst.msk [vmem:[#allocation2 + $0x78] sm:$0xff] %vm565, %v520
        %582 = vst.msk [vmem:[#allocation2 + $0x80] sm:$0xff] %vm565, %v521
        %583 = vst.msk [vmem:[#allocation2 + $0x88] sm:$0xff] %vm565, %v522
        %584 = vst.msk [vmem:[#allocation2 + $0x90] sm:$0xff] %vm565, %v523
        %585 = vst.msk [vmem:[#allocation2 + $0x98] sm:$0xff] %vm565, %v524
        %586 = vst.msk [vmem:[#allocation2 + $0xa0] sm:$0xff] %vm565, %v525
        %587 = vst.msk [vmem:[#allocation2 + $0xa8] sm:$0xff] %vm565, %v526
        %588 = vst.msk [vmem:[#allocation2 + $0xb0] sm:$0xff] %vm565, %v527
        %589 = vst.msk [vmem:[#allocation2 + $0xb8] sm:$0xff] %vm565, %v528
        %590 = vst.msk [vmem:[#allocation2 + $0xc0] sm:$0xff] %vm565, %v529
        %591 = vst.msk [vmem:[#allocation2 + $0xc8] sm:$0xff] %vm565, %v530
        %592 = vst.msk [vmem:[#allocation2 + $0xd0] sm:$0xff] %vm565, %v531
        %593 = vst.msk [vmem:[#allocation2 + $0xd8] sm:$0xff] %vm565, %v532
        %594 = vst.msk [vmem:[#allocation2 + $0xe0] sm:$0xff] %vm565, %v533
        %595 = vst.msk [vmem:[#allocation2 + $0xe8] sm:$0xff] %vm565, %v534
        %596 = vst.msk [vmem:[#allocation2 + $0xf0] sm:$0xff] %vm565, %v535
        %597 = vst.msk [vmem:[#allocation2 + $0xf8] sm:$0xff] %vm565, %v536
        %598 = vst.msk [vmem:[#allocation2 + $0x100] sm:$0xff] %vm565, %v537
        %599 = vst.msk [vmem:[#allocation2 + $0x108] sm:$0xff] %vm565, %v538
        %600 = vst.msk [vmem:[#allocation2 + $0x110] sm:$0xff] %vm565, %v539
        %601 = vst.msk [vmem:[#allocation2 + $0x118] sm:$0xff] %vm565, %v540
        %602 = vst.msk [vmem:[#allocation2 + $0x120] sm:$0xff] %vm565, %v541
        %603 = vst.msk [vmem:[#allocation2 + $0x128] sm:$0xff] %vm565, %v542
        %604 = vst.msk [vmem:[#allocation2 + $0x130] sm:$0xff] %vm565, %v543
        %605 = vst.msk [vmem:[#allocation2 + $0x138] sm:$0xff] %vm565, %v544
        %606 = vst.msk [vmem:[#allocation2 + $0x140] sm:$0xff] %vm565, %v545
        %607 = vst.msk [vmem:[#allocation2 + $0x148] sm:$0xff] %vm565, %v546
        %608 = vst.msk [vmem:[#allocation2 + $0x150] sm:$0xff] %vm565, %v547
        %609 = vst.msk [vmem:[#allocation2 + $0x158] sm:$0xff] %vm565, %v548
        %610 = vst.msk [vmem:[#allocation2 + $0x160] sm:$0xff] %vm565, %v549
        %611 = vst.msk [vmem:[#allocation2 + $0x168] sm:$0xff] %vm565, %v550
        %612 = vst.msk [vmem:[#allocation2 + $0x170] sm:$0xff] %vm565, %v551
        %613 = vst.msk [vmem:[#allocation2 + $0x178] sm:$0xff] %vm565, %v552
        %614 = vst.msk [vmem:[#allocation2 + $0x180] sm:$0xff] %vm565, %v553
        %615 = vst.msk [vmem:[#allocation2 + $0x188] sm:$0xff] %vm565, %v554
        %616 = vst.msk [vmem:[#allocation2 + $0x190] sm:$0xff] %vm565, %v555
        %617 = vst.msk [vmem:[#allocation2 + $0x198] sm:$0xff] %vm565, %v556
        %618 = vst.msk [vmem:[#allocation2 + $0x1a0] sm:$0xff] %vm565, %v557
        %619 = vst.msk [vmem:[#allocation2 + $0x1a8] sm:$0xff] %vm565, %v558
        %620 = vst.msk [vmem:[#allocation2 + $0x1b0] sm:$0xff] %vm565, %v559
        %621 = vst.msk [vmem:[#allocation2 + $0x1b8] sm:$0xff] %vm565, %v560
        %622 = vst.msk [vmem:[#allocation2 + $0x1c0] sm:$0xff] %vm565, %v561
        %623 = vst.msk [vmem:[#allocation2 + $0x1c8] sm:$0xff] %vm565, %v562
        %624 = vst.msk [vmem:[#allocation2 + $0x1d0] sm:$0xff] %vm565, %v563
        %625 = vst.msk [vmem:[#allocation2 + $0x1d8] sm:$0xff] %vm565, %v564
        %v626 = vld [vmem:[%s383 + $0x1] sm:$0xff]
        %v627 = vld [vmem:[%s383 + $0x9] sm:$0xff]
        %v628 = vld [vmem:[%s383 + $0x11] sm:$0xff]
        %v629 = vld [vmem:[%s383 + $0x19] sm:$0xff]
        %v630 = vld [vmem:[%s383 + $0x21] sm:$0xff]
        %v631 = vld [vmem:[%s383 + $0x29] sm:$0xff]
        %v632 = vld [vmem:[%s383 + $0x31] sm:$0xff]
        %v633 = vld [vmem:[%s383 + $0x39] sm:$0xff]
        %v634 = vld [vmem:[%s383 + $0x41] sm:$0xff]
        %v635 = vld [vmem:[%s383 + $0x49] sm:$0xff]
        %v636 = vld [vmem:[%s383 + $0x51] sm:$0xff]
        %v637 = vld [vmem:[%s383 + $0x59] sm:$0xff]
        %v638 = vld [vmem:[%s383 + $0x61] sm:$0xff]
        %v639 = vld [vmem:[%s383 + $0x69] sm:$0xff]
        %v640 = vld [vmem:[%s383 + $0x71] sm:$0xff]
        %v641 = vld [vmem:[%s383 + $0x79] sm:$0xff]
        %v642 = vld [vmem:[%s383 + $0x81] sm:$0xff]
        %v643 = vld [vmem:[%s383 + $0x89] sm:$0xff]
        %v644 = vld [vmem:[%s383 + $0x91] sm:$0xff]
        %v645 = vld [vmem:[%s383 + $0x99] sm:$0xff]
        %v646 = vld [vmem:[%s383 + $0xa1] sm:$0xff]
        %v647 = vld [vmem:[%s383 + $0xa9] sm:$0xff]
        %v648 = vld [vmem:[%s383 + $0xb1] sm:$0xff]
        %v649 = vld [vmem:[%s383 + $0xb9] sm:$0xff]
        %v650 = vld [vmem:[%s383 + $0xc1] sm:$0xff]
        %v651 = vld [vmem:[%s383 + $0xc9] sm:$0xff]
        %v652 = vld [vmem:[%s383 + $0xd1] sm:$0xff]
        %v653 = vld [vmem:[%s383 + $0xd9] sm:$0xff]
        %v654 = vld [vmem:[%s383 + $0xe1] sm:$0xff]
        %v655 = vld [vmem:[%s383 + $0xe9] sm:$0xff]
        %v656 = vld [vmem:[%s383 + $0xf1] sm:$0xff]
        %v657 = vld [vmem:[%s383 + $0xf9] sm:$0xff]
        %v658 = vld [vmem:[%s383 + $0x101] sm:$0xff]
        %v659 = vld [vmem:[%s383 + $0x109] sm:$0xff]
        %v660 = vld [vmem:[%s383 + $0x111] sm:$0xff]
        %v661 = vld [vmem:[%s383 + $0x119] sm:$0xff]
        %v662 = vld [vmem:[%s383 + $0x121] sm:$0xff]
        %v663 = vld [vmem:[%s383 + $0x129] sm:$0xff]
        %v664 = vld [vmem:[%s383 + $0x131] sm:$0xff]
        %v665 = vld [vmem:[%s383 + $0x139] sm:$0xff]
        %v666 = vld [vmem:[%s383 + $0x141] sm:$0xff]
        %v667 = vld [vmem:[%s383 + $0x149] sm:$0xff]
        %v668 = vld [vmem:[%s383 + $0x151] sm:$0xff]
        %v669 = vld [vmem:[%s383 + $0x159] sm:$0xff]
        %v670 = vld [vmem:[%s383 + $0x161] sm:$0xff]
        %v671 = vld [vmem:[%s383 + $0x169] sm:$0xff]
        %v672 = vld [vmem:[%s383 + $0x171] sm:$0xff]
        %v673 = vld [vmem:[%s383 + $0x179] sm:$0xff]
        %v674 = vld [vmem:[%s383 + $0x181] sm:$0xff]
        %v675 = vld [vmem:[%s383 + $0x189] sm:$0xff]
        %v676 = vld [vmem:[%s383 + $0x191] sm:$0xff]
        %v677 = vld [vmem:[%s383 + $0x199] sm:$0xff]
        %v678 = vld [vmem:[%s383 + $0x1a1] sm:$0xff]
        %v679 = vld [vmem:[%s383 + $0x1a9] sm:$0xff]
        %v680 = vld [vmem:[%s383 + $0x1b1] sm:$0xff]
        %v681 = vld [vmem:[%s383 + $0x1b9] sm:$0xff]
        %v682 = vld [vmem:[%s383 + $0x1c1] sm:$0xff]
        %v683 = vld [vmem:[%s383 + $0x1c9] sm:$0xff]
        %v684 = vld [vmem:[%s383 + $0x1d1] sm:$0xff]
        %v685 = vld [vmem:[%s383 + $0x1d9] sm:$0xff]
        %v686 = vld [vmem:[%s383 + $0x1e1] sm:$0xff]
        %v687 = vld [vmem:[%s383 + $0x1e9] sm:$0xff]
        %v688 = vld [vmem:[%s383 + $0x1f1] sm:$0xff]
        %v689 = vld [vmem:[%s383 + $0x1f9] sm:$0xff]
        %v690 = vld [vmem:[%s383 + $0x201] sm:$0xff]
        %v691 = vld [vmem:[%s383 + $0x209] sm:$0xff]
        %v692 = vld [vmem:[%s383 + $0x211] sm:$0xff]
        %v693 = vld [vmem:[%s383 + $0x219] sm:$0xff]
        %v694 = vld [vmem:[%s383 + $0x221] sm:$0xff]
        %v695 = vld [vmem:[%s383 + $0x229] sm:$0xff]
        %v696 = vld [vmem:[%s383 + $0x231] sm:$0xff]
        %v697 = vld [vmem:[%s383 + $0x239] sm:$0xff]
        %v698 = vld [vmem:[%s383 + $0x241] sm:$0xff]
        %v699 = vld [vmem:[%s383 + $0x249] sm:$0xff]
        %v700 = vld [vmem:[%s383 + $0x251] sm:$0xff]
        %v701 = vld [vmem:[%s383 + $0x259] sm:$0xff]
        %v702 = vld [vmem:[%s383 + $0x261] sm:$0xff]
        %v703 = vld [vmem:[%s383 + $0x269] sm:$0xff]
        %v704 = vld [vmem:[%s383 + $0x271] sm:$0xff]
        %v705 = vld [vmem:[%s383 + $0x279] sm:$0xff]
        %v706 = vld [vmem:[%s383 + $0x281] sm:$0xff]
        %v707 = vld [vmem:[%s383 + $0x289] sm:$0xff]
        %v708 = vld [vmem:[%s383 + $0x291] sm:$0xff]
        %v709 = vld [vmem:[%s383 + $0x299] sm:$0xff]
        %v710 = vld [vmem:[%s383 + $0x2a1] sm:$0xff]
        %v711 = vld [vmem:[%s383 + $0x2a9] sm:$0xff]
        %v712 = vld [vmem:[%s383 + $0x2b1] sm:$0xff]
        %v713 = vld [vmem:[%s383 + $0x2b9] sm:$0xff]
        %v714 = vld [vmem:[%s383 + $0x2c1] sm:$0xff]
        %v715 = vld [vmem:[%s383 + $0x2c9] sm:$0xff]
        %v716 = vld [vmem:[%s383 + $0x2d1] sm:$0xff]
        %v717 = vld [vmem:[%s383 + $0x2d9] sm:$0xff]
        %v718 = vld [vmem:[%s383 + $0x2e1] sm:$0xff]
        %v719 = vld [vmem:[%s383 + $0x2e9] sm:$0xff]
        %v720 = vld [vmem:[%s383 + $0x2f1] sm:$0xff]
        %v721 = vld [vmem:[%s383 + $0x2f9] sm:$0xff]
        %v722 = vld [vmem:[%s383 + $0x301] sm:$0xff]
        %v723 = vld [vmem:[%s383 + $0x309] sm:$0xff]
        %v724 = vld [vmem:[%s383 + $0x311] sm:$0xff]
        %v725 = vld [vmem:[%s383 + $0x319] sm:$0xff]
        %v726 = vld [vmem:[%s383 + $0x321] sm:$0xff]
        %v727 = vld [vmem:[%s383 + $0x329] sm:$0xff]
        %v728 = vld [vmem:[%s383 + $0x331] sm:$0xff]
        %v729 = vld [vmem:[%s383 + $0x339] sm:$0xff]
        %v730 = vld [vmem:[%s383 + $0x341] sm:$0xff]
        %v731 = vld [vmem:[%s383 + $0x349] sm:$0xff]
        %v732 = vld [vmem:[%s383 + $0x351] sm:$0xff]
        %v733 = vld [vmem:[%s383 + $0x359] sm:$0xff]
        %v734 = vld [vmem:[%s383 + $0x361] sm:$0xff]
        %v735 = vld [vmem:[%s383 + $0x369] sm:$0xff]
        %v736 = vld [vmem:[%s383 + $0x371] sm:$0xff]
        %v737 = vld [vmem:[%s383 + $0x379] sm:$0xff]
        %v738 = vld [vmem:[%s383 + $0x381] sm:$0xff]
        %v739 = vld [vmem:[%s383 + $0x389] sm:$0xff]
        %v740 = vld [vmem:[%s383 + $0x391] sm:$0xff]
        %v741 = vld [vmem:[%s383 + $0x399] sm:$0xff]
        %v742 = vld [vmem:[%s383 + $0x3a1] sm:$0xff]
        %v743 = vld [vmem:[%s383 + $0x3a9] sm:$0xff]
        %v744 = vld [vmem:[%s383 + $0x3b1] sm:$0xff]
        %v745 = vld [vmem:[%s383 + $0x3b9] sm:$0xff]
        %v746 = vpack.c.bf16 %v627, %v626
        %v747 = vpack.c.bf16 %v629, %v628
        %v748 = vpack.c.bf16 %v631, %v630
        %v749 = vpack.c.bf16 %v633, %v632
        %v750 = vpack.c.bf16 %v635, %v634
        %v751 = vpack.c.bf16 %v637, %v636
        %v752 = vpack.c.bf16 %v639, %v638
        %v753 = vpack.c.bf16 %v641, %v640
        %v754 = vpack.c.bf16 %v643, %v642
        %v755 = vpack.c.bf16 %v645, %v644
        %v756 = vpack.c.bf16 %v647, %v646
        %v757 = vpack.c.bf16 %v649, %v648
        %v758 = vpack.c.bf16 %v651, %v650
        %v759 = vpack.c.bf16 %v653, %v652
        %v760 = vpack.c.bf16 %v655, %v654
        %v761 = vpack.c.bf16 %v657, %v656
        %v762 = vpack.c.bf16 %v659, %v658
        %v763 = vpack.c.bf16 %v661, %v660
        %v764 = vpack.c.bf16 %v663, %v662
        %v765 = vpack.c.bf16 %v665, %v664
        %v766 = vpack.c.bf16 %v667, %v666
        %v767 = vpack.c.bf16 %v669, %v668
        %v768 = vpack.c.bf16 %v671, %v670
        %v769 = vpack.c.bf16 %v673, %v672
        %v770 = vpack.c.bf16 %v675, %v674
        %v771 = vpack.c.bf16 %v677, %v676
        %v772 = vpack.c.bf16 %v679, %v678
        %v773 = vpack.c.bf16 %v681, %v680
        %v774 = vpack.c.bf16 %v683, %v682
        %v775 = vpack.c.bf16 %v685, %v684
        %v776 = vpack.c.bf16 %v687, %v686
        %v777 = vpack.c.bf16 %v689, %v688
        %v778 = vpack.c.bf16 %v691, %v690
        %v779 = vpack.c.bf16 %v693, %v692
        %v780 = vpack.c.bf16 %v695, %v694
        %v781 = vpack.c.bf16 %v697, %v696
        %v782 = vpack.c.bf16 %v699, %v698
        %v783 = vpack.c.bf16 %v701, %v700
        %v784 = vpack.c.bf16 %v703, %v702
        %v785 = vpack.c.bf16 %v705, %v704
        %v786 = vpack.c.bf16 %v707, %v706
        %v787 = vpack.c.bf16 %v709, %v708
        %v788 = vpack.c.bf16 %v711, %v710
        %v789 = vpack.c.bf16 %v713, %v712
        %v790 = vpack.c.bf16 %v715, %v714
        %v791 = vpack.c.bf16 %v717, %v716
        %v792 = vpack.c.bf16 %v719, %v718
        %v793 = vpack.c.bf16 %v721, %v720
        %v794 = vpack.c.bf16 %v723, %v722
        %v795 = vpack.c.bf16 %v725, %v724
        %v796 = vpack.c.bf16 %v727, %v726
        %v797 = vpack.c.bf16 %v729, %v728
        %v798 = vpack.c.bf16 %v731, %v730
        %v799 = vpack.c.bf16 %v733, %v732
        %v800 = vpack.c.bf16 %v735, %v734
        %v801 = vpack.c.bf16 %v737, %v736
        %v802 = vpack.c.bf16 %v739, %v738
        %v803 = vpack.c.bf16 %v741, %v740
        %v804 = vpack.c.bf16 %v743, %v742
        %v805 = vpack.c.bf16 %v745, %v744
        %866 = vrot.lane.b32.xlu0 %v746, 3
        %v867 = vpop.permute.xlu0 %866
        %868 = vrot.lane.b32.xlu0 %v747, 3
        %v869 = vpop.permute.xlu0 %868
        %870 = vrot.lane.b32.xlu0 %v748, 3
        %v871 = vpop.permute.xlu0 %870
        %872 = vrot.lane.b32.xlu0 %v749, 3
        %v873 = vpop.permute.xlu0 %872
        %874 = vrot.lane.b32.xlu0 %v750, 3
        %v875 = vpop.permute.xlu0 %874
        %876 = vrot.lane.b32.xlu0 %v751, 3
        %v877 = vpop.permute.xlu0 %876
        %878 = vrot.lane.b32.xlu0 %v752, 3
        %v879 = vpop.permute.xlu0 %878
        %880 = vrot.lane.b32.xlu0 %v753, 3
        %v881 = vpop.permute.xlu0 %880
        %882 = vrot.lane.b32.xlu0 %v754, 3
        %v883 = vpop.permute.xlu0 %882
        %884 = vrot.lane.b32.xlu0 %v755, 3
        %v885 = vpop.permute.xlu0 %884
        %886 = vrot.lane.b32.xlu0 %v756, 3
        %v887 = vpop.permute.xlu0 %886
        %888 = vrot.lane.b32.xlu0 %v757, 3
        %v889 = vpop.permute.xlu0 %888
        %890 = vrot.lane.b32.xlu0 %v758, 3
        %v891 = vpop.permute.xlu0 %890
        %892 = vrot.lane.b32.xlu0 %v759, 3
        %v893 = vpop.permute.xlu0 %892
        %894 = vrot.lane.b32.xlu0 %v760, 3
        %v895 = vpop.permute.xlu0 %894
        %896 = vrot.lane.b32.xlu0 %v761, 3
        %v897 = vpop.permute.xlu0 %896
        %898 = vrot.lane.b32.xlu0 %v762, 3
        %v899 = vpop.permute.xlu0 %898
        %900 = vrot.lane.b32.xlu0 %v763, 3
        %v901 = vpop.permute.xlu0 %900
        %902 = vrot.lane.b32.xlu0 %v764, 3
        %v903 = vpop.permute.xlu0 %902
        %904 = vrot.lane.b32.xlu0 %v765, 3
        %v905 = vpop.permute.xlu0 %904
        %906 = vrot.lane.b32.xlu0 %v766, 3
        %v907 = vpop.permute.xlu0 %906
        %908 = vrot.lane.b32.xlu0 %v767, 3
        %v909 = vpop.permute.xlu0 %908
        %910 = vrot.lane.b32.xlu0 %v768, 3
        %v911 = vpop.permute.xlu0 %910
        %912 = vrot.lane.b32.xlu0 %v769, 3
        %v913 = vpop.permute.xlu0 %912
        %914 = vrot.lane.b32.xlu0 %v770, 3
        %v915 = vpop.permute.xlu0 %914
        %916 = vrot.lane.b32.xlu0 %v771, 3
        %v917 = vpop.permute.xlu0 %916
        %918 = vrot.lane.b32.xlu0 %v772, 3
        %v919 = vpop.permute.xlu0 %918
        %920 = vrot.lane.b32.xlu0 %v773, 3
        %v921 = vpop.permute.xlu0 %920
        %922 = vrot.lane.b32.xlu0 %v774, 3
        %v923 = vpop.permute.xlu0 %922
        %924 = vrot.lane.b32.xlu0 %v775, 3
        %v925 = vpop.permute.xlu0 %924
        %926 = vrot.lane.b32.xlu0 %v776, 3
        %v927 = vpop.permute.xlu0 %926
        %928 = vrot.lane.b32.xlu0 %v777, 3
        %v929 = vpop.permute.xlu0 %928
        %930 = vrot.lane.b32.xlu0 %v778, 3
        %v931 = vpop.permute.xlu0 %930
        %932 = vrot.lane.b32.xlu0 %v779, 3
        %v933 = vpop.permute.xlu0 %932
        %934 = vrot.lane.b32.xlu0 %v780, 3
        %v935 = vpop.permute.xlu0 %934
        %936 = vrot.lane.b32.xlu0 %v781, 3
        %v937 = vpop.permute.xlu0 %936
        %938 = vrot.lane.b32.xlu0 %v782, 3
        %v939 = vpop.permute.xlu0 %938
        %940 = vrot.lane.b32.xlu0 %v783, 3
        %v941 = vpop.permute.xlu0 %940
        %942 = vrot.lane.b32.xlu0 %v784, 3
        %v943 = vpop.permute.xlu0 %942
        %944 = vrot.lane.b32.xlu0 %v785, 3
        %v945 = vpop.permute.xlu0 %944
        %946 = vrot.lane.b32.xlu0 %v786, 3
        %v947 = vpop.permute.xlu0 %946
        %948 = vrot.lane.b32.xlu0 %v787, 3
        %v949 = vpop.permute.xlu0 %948
        %950 = vrot.lane.b32.xlu0 %v788, 3
        %v951 = vpop.permute.xlu0 %950
        %952 = vrot.lane.b32.xlu0 %v789, 3
        %v953 = vpop.permute.xlu0 %952
        %954 = vrot.lane.b32.xlu0 %v790, 3
        %v955 = vpop.permute.xlu0 %954
        %956 = vrot.lane.b32.xlu0 %v791, 3
        %v957 = vpop.permute.xlu0 %956
        %958 = vrot.lane.b32.xlu0 %v792, 3
        %v959 = vpop.permute.xlu0 %958
        %960 = vrot.lane.b32.xlu0 %v793, 3
        %v961 = vpop.permute.xlu0 %960
        %962 = vrot.lane.b32.xlu0 %v794, 3
        %v963 = vpop.permute.xlu0 %962
        %964 = vrot.lane.b32.xlu0 %v795, 3
        %v965 = vpop.permute.xlu0 %964
        %966 = vrot.lane.b32.xlu0 %v796, 3
        %v967 = vpop.permute.xlu0 %966
        %968 = vrot.lane.b32.xlu0 %v797, 3
        %v969 = vpop.permute.xlu0 %968
        %970 = vrot.lane.b32.xlu0 %v798, 3
        %v971 = vpop.permute.xlu0 %970
        %972 = vrot.lane.b32.xlu0 %v799, 3
        %v973 = vpop.permute.xlu0 %972
        %974 = vrot.lane.b32.xlu0 %v800, 3
        %v975 = vpop.permute.xlu0 %974
        %976 = vrot.lane.b32.xlu0 %v801, 3
        %v977 = vpop.permute.xlu0 %976
        %978 = vrot.lane.b32.xlu0 %v802, 3
        %v979 = vpop.permute.xlu0 %978
        %980 = vrot.lane.b32.xlu0 %v803, 3
        %v981 = vpop.permute.xlu0 %980
        %982 = vrot.lane.b32.xlu0 %v804, 3
        %v983 = vpop.permute.xlu0 %982
        %984 = vrot.lane.b32.xlu0 %v805, 3
        %v985 = vpop.permute.xlu0 %984
        %vm1046 = vcmask 48152
        %1047 = vst.msk [vmem:[#allocation2] sm:$0xff] %vm1046, %v867
        %1048 = vst.msk [vmem:[#allocation2 + $0x8] sm:$0xff] %vm1046, %v869
        %1049 = vst.msk [vmem:[#allocation2 + $0x10] sm:$0xff] %vm1046, %v871
        %1050 = vst.msk [vmem:[#allocation2 + $0x18] sm:$0xff] %vm1046, %v873
        %1051 = vst.msk [vmem:[#allocation2 + $0x20] sm:$0xff] %vm1046, %v875
        %1052 = vst.msk [vmem:[#allocation2 + $0x28] sm:$0xff] %vm1046, %v877
        %1053 = vst.msk [vmem:[#allocation2 + $0x30] sm:$0xff] %vm1046, %v879
        %1054 = vst.msk [vmem:[#allocation2 + $0x38] sm:$0xff] %vm1046, %v881
        %1055 = vst.msk [vmem:[#allocation2 + $0x40] sm:$0xff] %vm1046, %v883
        %1056 = vst.msk [vmem:[#allocation2 + $0x48] sm:$0xff] %vm1046, %v885
        %1057 = vst.msk [vmem:[#allocation2 + $0x50] sm:$0xff] %vm1046, %v887
        %1058 = vst.msk [vmem:[#allocation2 + $0x58] sm:$0xff] %vm1046, %v889
        %1059 = vst.msk [vmem:[#allocation2 + $0x60] sm:$0xff] %vm1046, %v891
        %1060 = vst.msk [vmem:[#allocation2 + $0x68] sm:$0xff] %vm1046, %v893
        %1061 = vst.msk [vmem:[#allocation2 + $0x70] sm:$0xff] %vm1046, %v895
        %1062 = vst.msk [vmem:[#allocation2 + $0x78] sm:$0xff] %vm1046, %v897
        %1063 = vst.msk [vmem:[#allocation2 + $0x80] sm:$0xff] %vm1046, %v899
        %1064 = vst.msk [vmem:[#allocation2 + $0x88] sm:$0xff] %vm1046, %v901
        %1065 = vst.msk [vmem:[#allocation2 + $0x90] sm:$0xff] %vm1046, %v903
        %1066 = vst.msk [vmem:[#allocation2 + $0x98] sm:$0xff] %vm1046, %v905
        %1067 = vst.msk [vmem:[#allocation2 + $0xa0] sm:$0xff] %vm1046, %v907
        %1068 = vst.msk [vmem:[#allocation2 + $0xa8] sm:$0xff] %vm1046, %v909
        %1069 = vst.msk [vmem:[#allocation2 + $0xb0] sm:$0xff] %vm1046, %v911
        %1070 = vst.msk [vmem:[#allocation2 + $0xb8] sm:$0xff] %vm1046, %v913
        %1071 = vst.msk [vmem:[#allocation2 + $0xc0] sm:$0xff] %vm1046, %v915
        %1072 = vst.msk [vmem:[#allocation2 + $0xc8] sm:$0xff] %vm1046, %v917
        %1073 = vst.msk [vmem:[#allocation2 + $0xd0] sm:$0xff] %vm1046, %v919
        %1074 = vst.msk [vmem:[#allocation2 + $0xd8] sm:$0xff] %vm1046, %v921
        %1075 = vst.msk [vmem:[#allocation2 + $0xe0] sm:$0xff] %vm1046, %v923
        %1076 = vst.msk [vmem:[#allocation2 + $0xe8] sm:$0xff] %vm1046, %v925
        %1077 = vst.msk [vmem:[#allocation2 + $0xf0] sm:$0xff] %vm1046, %v927
        %1078 = vst.msk [vmem:[#allocation2 + $0xf8] sm:$0xff] %vm1046, %v929
        %1079 = vst.msk [vmem:[#allocation2 + $0x100] sm:$0xff] %vm1046, %v931
        %1080 = vst.msk [vmem:[#allocation2 + $0x108] sm:$0xff] %vm1046, %v933
        %1081 = vst.msk [vmem:[#allocation2 + $0x110] sm:$0xff] %vm1046, %v935
        %1082 = vst.msk [vmem:[#allocation2 + $0x118] sm:$0xff] %vm1046, %v937
        %1083 = vst.msk [vmem:[#allocation2 + $0x120] sm:$0xff] %vm1046, %v939
        %1084 = vst.msk [vmem:[#allocation2 + $0x128] sm:$0xff] %vm1046, %v941
        %1085 = vst.msk [vmem:[#allocation2 + $0x130] sm:$0xff] %vm1046, %v943
        %1086 = vst.msk [vmem:[#allocation2 + $0x138] sm:$0xff] %vm1046, %v945
        %1087 = vst.msk [vmem:[#allocation2 + $0x140] sm:$0xff] %vm1046, %v947
        %1088 = vst.msk [vmem:[#allocation2 + $0x148] sm:$0xff] %vm1046, %v949
        %1089 = vst.msk [vmem:[#allocation2 + $0x150] sm:$0xff] %vm1046, %v951
        %1090 = vst.msk [vmem:[#allocation2 + $0x158] sm:$0xff] %vm1046, %v953
        %1091 = vst.msk [vmem:[#allocation2 + $0x160] sm:$0xff] %vm1046, %v955
        %1092 = vst.msk [vmem:[#allocation2 + $0x168] sm:$0xff] %vm1046, %v957
        %1093 = vst.msk [vmem:[#allocation2 + $0x170] sm:$0xff] %vm1046, %v959
        %1094 = vst.msk [vmem:[#allocation2 + $0x178] sm:$0xff] %vm1046, %v961
        %1095 = vst.msk [vmem:[#allocation2 + $0x180] sm:$0xff] %vm1046, %v963
        %1096 = vst.msk [vmem:[#allocation2 + $0x188] sm:$0xff] %vm1046, %v965
        %1097 = vst.msk [vmem:[#allocation2 + $0x190] sm:$0xff] %vm1046, %v967
        %1098 = vst.msk [vmem:[#allocation2 + $0x198] sm:$0xff] %vm1046, %v969
        %1099 = vst.msk [vmem:[#allocation2 + $0x1a0] sm:$0xff] %vm1046, %v971
        %1100 = vst.msk [vmem:[#allocation2 + $0x1a8] sm:$0xff] %vm1046, %v973
        %1101 = vst.msk [vmem:[#allocation2 + $0x1b0] sm:$0xff] %vm1046, %v975
        %1102 = vst.msk [vmem:[#allocation2 + $0x1b8] sm:$0xff] %vm1046, %v977
        %1103 = vst.msk [vmem:[#allocation2 + $0x1c0] sm:$0xff] %vm1046, %v979
        %1104 = vst.msk [vmem:[#allocation2 + $0x1c8] sm:$0xff] %vm1046, %v981
        %1105 = vst.msk [vmem:[#allocation2 + $0x1d0] sm:$0xff] %vm1046, %v983
        %1106 = vst.msk [vmem:[#allocation2 + $0x1d8] sm:$0xff] %vm1046, %v985
        %v1107 = vld [vmem:[%s383 + $0x2] sm:$0xff]
        %v1108 = vld [vmem:[%s383 + $0xa] sm:$0xff]
        %v1109 = vld [vmem:[%s383 + $0x12] sm:$0xff]
        %v1110 = vld [vmem:[%s383 + $0x1a] sm:$0xff]
        %v1111 = vld [vmem:[%s383 + $0x22] sm:$0xff]
        %v1112 = vld [vmem:[%s383 + $0x2a] sm:$0xff]
        %v1113 = vld [vmem:[%s383 + $0x32] sm:$0xff]
        %v1114 = vld [vmem:[%s383 + $0x3a] sm:$0xff]
        %v1115 = vld [vmem:[%s383 + $0x42] sm:$0xff]
        %v1116 = vld [vmem:[%s383 + $0x4a] sm:$0xff]
        %v1117 = vld [vmem:[%s383 + $0x52] sm:$0xff]
        %v1118 = vld [vmem:[%s383 + $0x5a] sm:$0xff]
        %v1119 = vld [vmem:[%s383 + $0x62] sm:$0xff]
        %v1120 = vld [vmem:[%s383 + $0x6a] sm:$0xff]
        %v1121 = vld [vmem:[%s383 + $0x72] sm:$0xff]
        %v1122 = vld [vmem:[%s383 + $0x7a] sm:$0xff]
        %v1123 = vld [vmem:[%s383 + $0x82] sm:$0xff]
        %v1124 = vld [vmem:[%s383 + $0x8a] sm:$0xff]
        %v1125 = vld [vmem:[%s383 + $0x92] sm:$0xff]
        %v1126 = vld [vmem:[%s383 + $0x9a] sm:$0xff]
        %v1127 = vld [vmem:[%s383 + $0xa2] sm:$0xff]
        %v1128 = vld [vmem:[%s383 + $0xaa] sm:$0xff]
        %v1129 = vld [vmem:[%s383 + $0xb2] sm:$0xff]
        %v1130 = vld [vmem:[%s383 + $0xba] sm:$0xff]
        %v1131 = vld [vmem:[%s383 + $0xc2] sm:$0xff]
        %v1132 = vld [vmem:[%s383 + $0xca] sm:$0xff]
        %v1133 = vld [vmem:[%s383 + $0xd2] sm:$0xff]
        %v1134 = vld [vmem:[%s383 + $0xda] sm:$0xff]
        %v1135 = vld [vmem:[%s383 + $0xe2] sm:$0xff]
        %v1136 = vld [vmem:[%s383 + $0xea] sm:$0xff]
        %v1137 = vld [vmem:[%s383 + $0xf2] sm:$0xff]
        %v1138 = vld [vmem:[%s383 + $0xfa] sm:$0xff]
        %v1139 = vld [vmem:[%s383 + $0x102] sm:$0xff]
        %v1140 = vld [vmem:[%s383 + $0x10a] sm:$0xff]
        %v1141 = vld [vmem:[%s383 + $0x112] sm:$0xff]
        %v1142 = vld [vmem:[%s383 + $0x11a] sm:$0xff]
        %v1143 = vld [vmem:[%s383 + $0x122] sm:$0xff]
        %v1144 = vld [vmem:[%s383 + $0x12a] sm:$0xff]
        %v1145 = vld [vmem:[%s383 + $0x132] sm:$0xff]
        %v1146 = vld [vmem:[%s383 + $0x13a] sm:$0xff]
        %v1147 = vld [vmem:[%s383 + $0x142] sm:$0xff]
        %v1148 = vld [vmem:[%s383 + $0x14a] sm:$0xff]
        %v1149 = vld [vmem:[%s383 + $0x152] sm:$0xff]
        %v1150 = vld [vmem:[%s383 + $0x15a] sm:$0xff]
        %v1151 = vld [vmem:[%s383 + $0x162] sm:$0xff]
        %v1152 = vld [vmem:[%s383 + $0x16a] sm:$0xff]
        %v1153 = vld [vmem:[%s383 + $0x172] sm:$0xff]
        %v1154 = vld [vmem:[%s383 + $0x17a] sm:$0xff]
        %v1155 = vld [vmem:[%s383 + $0x182] sm:$0xff]
        %v1156 = vld [vmem:[%s383 + $0x18a] sm:$0xff]
        %v1157 = vld [vmem:[%s383 + $0x192] sm:$0xff]
        %v1158 = vld [vmem:[%s383 + $0x19a] sm:$0xff]
        %v1159 = vld [vmem:[%s383 + $0x1a2] sm:$0xff]
        %v1160 = vld [vmem:[%s383 + $0x1aa] sm:$0xff]
        %v1161 = vld [vmem:[%s383 + $0x1b2] sm:$0xff]
        %v1162 = vld [vmem:[%s383 + $0x1ba] sm:$0xff]
        %v1163 = vld [vmem:[%s383 + $0x1c2] sm:$0xff]
        %v1164 = vld [vmem:[%s383 + $0x1ca] sm:$0xff]
        %v1165 = vld [vmem:[%s383 + $0x1d2] sm:$0xff]
        %v1166 = vld [vmem:[%s383 + $0x1da] sm:$0xff]
        %v1167 = vld [vmem:[%s383 + $0x1e2] sm:$0xff]
        %v1168 = vld [vmem:[%s383 + $0x1ea] sm:$0xff]
        %v1169 = vld [vmem:[%s383 + $0x1f2] sm:$0xff]
        %v1170 = vld [vmem:[%s383 + $0x1fa] sm:$0xff]
        %v1171 = vld [vmem:[%s383 + $0x202] sm:$0xff]
        %v1172 = vld [vmem:[%s383 + $0x20a] sm:$0xff]
        %v1173 = vld [vmem:[%s383 + $0x212] sm:$0xff]
        %v1174 = vld [vmem:[%s383 + $0x21a] sm:$0xff]
        %v1175 = vld [vmem:[%s383 + $0x222] sm:$0xff]
        %v1176 = vld [vmem:[%s383 + $0x22a] sm:$0xff]
        %v1177 = vld [vmem:[%s383 + $0x232] sm:$0xff]
        %v1178 = vld [vmem:[%s383 + $0x23a] sm:$0xff]
        %v1179 = vld [vmem:[%s383 + $0x242] sm:$0xff]
        %v1180 = vld [vmem:[%s383 + $0x24a] sm:$0xff]
        %v1181 = vld [vmem:[%s383 + $0x252] sm:$0xff]
        %v1182 = vld [vmem:[%s383 + $0x25a] sm:$0xff]
        %v1183 = vld [vmem:[%s383 + $0x262] sm:$0xff]
        %v1184 = vld [vmem:[%s383 + $0x26a] sm:$0xff]
        %v1185 = vld [vmem:[%s383 + $0x272] sm:$0xff]
        %v1186 = vld [vmem:[%s383 + $0x27a] sm:$0xff]
        %v1187 = vld [vmem:[%s383 + $0x282] sm:$0xff]
        %v1188 = vld [vmem:[%s383 + $0x28a] sm:$0xff]
        %v1189 = vld [vmem:[%s383 + $0x292] sm:$0xff]
        %v1190 = vld [vmem:[%s383 + $0x29a] sm:$0xff]
        %v1191 = vld [vmem:[%s383 + $0x2a2] sm:$0xff]
        %v1192 = vld [vmem:[%s383 + $0x2aa] sm:$0xff]
        %v1193 = vld [vmem:[%s383 + $0x2b2] sm:$0xff]
        %v1194 = vld [vmem:[%s383 + $0x2ba] sm:$0xff]
        %v1195 = vld [vmem:[%s383 + $0x2c2] sm:$0xff]
        %v1196 = vld [vmem:[%s383 + $0x2ca] sm:$0xff]
        %v1197 = vld [vmem:[%s383 + $0x2d2] sm:$0xff]
        %v1198 = vld [vmem:[%s383 + $0x2da] sm:$0xff]
        %v1199 = vld [vmem:[%s383 + $0x2e2] sm:$0xff]
        %v1200 = vld [vmem:[%s383 + $0x2ea] sm:$0xff]
        %v1201 = vld [vmem:[%s383 + $0x2f2] sm:$0xff]
        %v1202 = vld [vmem:[%s383 + $0x2fa] sm:$0xff]
        %v1203 = vld [vmem:[%s383 + $0x302] sm:$0xff]
        %v1204 = vld [vmem:[%s383 + $0x30a] sm:$0xff]
        %v1205 = vld [vmem:[%s383 + $0x312] sm:$0xff]
        %v1206 = vld [vmem:[%s383 + $0x31a] sm:$0xff]
        %v1207 = vld [vmem:[%s383 + $0x322] sm:$0xff]
        %v1208 = vld [vmem:[%s383 + $0x32a] sm:$0xff]
        %v1209 = vld [vmem:[%s383 + $0x332] sm:$0xff]
        %v1210 = vld [vmem:[%s383 + $0x33a] sm:$0xff]
        %v1211 = vld [vmem:[%s383 + $0x342] sm:$0xff]
        %v1212 = vld [vmem:[%s383 + $0x34a] sm:$0xff]
        %v1213 = vld [vmem:[%s383 + $0x352] sm:$0xff]
        %v1214 = vld [vmem:[%s383 + $0x35a] sm:$0xff]
        %v1215 = vld [vmem:[%s383 + $0x362] sm:$0xff]
        %v1216 = vld [vmem:[%s383 + $0x36a] sm:$0xff]
        %v1217 = vld [vmem:[%s383 + $0x372] sm:$0xff]
        %v1218 = vld [vmem:[%s383 + $0x37a] sm:$0xff]
        %v1219 = vld [vmem:[%s383 + $0x382] sm:$0xff]
        %v1220 = vld [vmem:[%s383 + $0x38a] sm:$0xff]
        %v1221 = vld [vmem:[%s383 + $0x392] sm:$0xff]
        %v1222 = vld [vmem:[%s383 + $0x39a] sm:$0xff]
        %v1223 = vld [vmem:[%s383 + $0x3a2] sm:$0xff]
        %v1224 = vld [vmem:[%s383 + $0x3aa] sm:$0xff]
        %v1225 = vld [vmem:[%s383 + $0x3b2] sm:$0xff]
        %v1226 = vld [vmem:[%s383 + $0x3ba] sm:$0xff]
        %v1227 = vpack.c.bf16 %v1108, %v1107
        %v1228 = vpack.c.bf16 %v1110, %v1109
        %v1229 = vpack.c.bf16 %v1112, %v1111
        %v1230 = vpack.c.bf16 %v1114, %v1113
        %v1231 = vpack.c.bf16 %v1116, %v1115
        %v1232 = vpack.c.bf16 %v1118, %v1117
        %v1233 = vpack.c.bf16 %v1120, %v1119
        %v1234 = vpack.c.bf16 %v1122, %v1121
        %v1235 = vpack.c.bf16 %v1124, %v1123
        %v1236 = vpack.c.bf16 %v1126, %v1125
        %v1237 = vpack.c.bf16 %v1128, %v1127
        %v1238 = vpack.c.bf16 %v1130, %v1129
        %v1239 = vpack.c.bf16 %v1132, %v1131
        %v1240 = vpack.c.bf16 %v1134, %v1133
        %v1241 = vpack.c.bf16 %v1136, %v1135
        %v1242 = vpack.c.bf16 %v1138, %v1137
        %v1243 = vpack.c.bf16 %v1140, %v1139
        %v1244 = vpack.c.bf16 %v1142, %v1141
        %v1245 = vpack.c.bf16 %v1144, %v1143
        %v1246 = vpack.c.bf16 %v1146, %v1145
        %v1247 = vpack.c.bf16 %v1148, %v1147
        %v1248 = vpack.c.bf16 %v1150, %v1149
        %v1249 = vpack.c.bf16 %v1152, %v1151
        %v1250 = vpack.c.bf16 %v1154, %v1153
        %v1251 = vpack.c.bf16 %v1156, %v1155
        %v1252 = vpack.c.bf16 %v1158, %v1157
        %v1253 = vpack.c.bf16 %v1160, %v1159
        %v1254 = vpack.c.bf16 %v1162, %v1161
        %v1255 = vpack.c.bf16 %v1164, %v1163
        %v1256 = vpack.c.bf16 %v1166, %v1165
        %v1257 = vpack.c.bf16 %v1168, %v1167
        %v1258 = vpack.c.bf16 %v1170, %v1169
        %v1259 = vpack.c.bf16 %v1172, %v1171
        %v1260 = vpack.c.bf16 %v1174, %v1173
        %v1261 = vpack.c.bf16 %v1176, %v1175
        %v1262 = vpack.c.bf16 %v1178, %v1177
        %v1263 = vpack.c.bf16 %v1180, %v1179
        %v1264 = vpack.c.bf16 %v1182, %v1181
        %v1265 = vpack.c.bf16 %v1184, %v1183
        %v1266 = vpack.c.bf16 %v1186, %v1185
        %v1267 = vpack.c.bf16 %v1188, %v1187
        %v1268 = vpack.c.bf16 %v1190, %v1189
        %v1269 = vpack.c.bf16 %v1192, %v1191
        %v1270 = vpack.c.bf16 %v1194, %v1193
        %v1271 = vpack.c.bf16 %v1196, %v1195
        %v1272 = vpack.c.bf16 %v1198, %v1197
        %v1273 = vpack.c.bf16 %v1200, %v1199
        %v1274 = vpack.c.bf16 %v1202, %v1201
        %v1275 = vpack.c.bf16 %v1204, %v1203
        %v1276 = vpack.c.bf16 %v1206, %v1205
        %v1277 = vpack.c.bf16 %v1208, %v1207
        %v1278 = vpack.c.bf16 %v1210, %v1209
        %v1279 = vpack.c.bf16 %v1212, %v1211
        %v1280 = vpack.c.bf16 %v1214, %v1213
        %v1281 = vpack.c.bf16 %v1216, %v1215
        %v1282 = vpack.c.bf16 %v1218, %v1217
        %v1283 = vpack.c.bf16 %v1220, %v1219
        %v1284 = vpack.c.bf16 %v1222, %v1221
        %v1285 = vpack.c.bf16 %v1224, %v1223
        %v1286 = vpack.c.bf16 %v1226, %v1225
        %1347 = vrot.lane.b32.xlu0 %v1227, 6
        %v1348 = vpop.permute.xlu0 %1347
        %1349 = vrot.lane.b32.xlu0 %v1228, 6
        %v1350 = vpop.permute.xlu0 %1349
        %1351 = vrot.lane.b32.xlu0 %v1229, 6
        %v1352 = vpop.permute.xlu0 %1351
        %1353 = vrot.lane.b32.xlu0 %v1230, 6
        %v1354 = vpop.permute.xlu0 %1353
        %1355 = vrot.lane.b32.xlu0 %v1231, 6
        %v1356 = vpop.permute.xlu0 %1355
        %1357 = vrot.lane.b32.xlu0 %v1232, 6
        %v1358 = vpop.permute.xlu0 %1357
        %1359 = vrot.lane.b32.xlu0 %v1233, 6
        %v1360 = vpop.permute.xlu0 %1359
        %1361 = vrot.lane.b32.xlu0 %v1234, 6
        %v1362 = vpop.permute.xlu0 %1361
        %1363 = vrot.lane.b32.xlu0 %v1235, 6
        %v1364 = vpop.permute.xlu0 %1363
        %1365 = vrot.lane.b32.xlu0 %v1236, 6
        %v1366 = vpop.permute.xlu0 %1365
        %1367 = vrot.lane.b32.xlu0 %v1237, 6
        %v1368 = vpop.permute.xlu0 %1367
        %1369 = vrot.lane.b32.xlu0 %v1238, 6
        %v1370 = vpop.permute.xlu0 %1369
        %1371 = vrot.lane.b32.xlu0 %v1239, 6
        %v1372 = vpop.permute.xlu0 %1371
        %1373 = vrot.lane.b32.xlu0 %v1240, 6
        %v1374 = vpop.permute.xlu0 %1373
        %1375 = vrot.lane.b32.xlu0 %v1241, 6
        %v1376 = vpop.permute.xlu0 %1375
        %1377 = vrot.lane.b32.xlu0 %v1242, 6
        %v1378 = vpop.permute.xlu0 %1377
        %1379 = vrot.lane.b32.xlu0 %v1243, 6
        %v1380 = vpop.permute.xlu0 %1379
        %1381 = vrot.lane.b32.xlu0 %v1244, 6
        %v1382 = vpop.permute.xlu0 %1381
        %1383 = vrot.lane.b32.xlu0 %v1245, 6
        %v1384 = vpop.permute.xlu0 %1383
        %1385 = vrot.lane.b32.xlu0 %v1246, 6
        %v1386 = vpop.permute.xlu0 %1385
        %1387 = vrot.lane.b32.xlu0 %v1247, 6
        %v1388 = vpop.permute.xlu0 %1387
        %1389 = vrot.lane.b32.xlu0 %v1248, 6
        %v1390 = vpop.permute.xlu0 %1389
        %1391 = vrot.lane.b32.xlu0 %v1249, 6
        %v1392 = vpop.permute.xlu0 %1391
        %1393 = vrot.lane.b32.xlu0 %v1250, 6
        %v1394 = vpop.permute.xlu0 %1393
        %1395 = vrot.lane.b32.xlu0 %v1251, 6
        %v1396 = vpop.permute.xlu0 %1395
        %1397 = vrot.lane.b32.xlu0 %v1252, 6
        %v1398 = vpop.permute.xlu0 %1397
        %1399 = vrot.lane.b32.xlu0 %v1253, 6
        %v1400 = vpop.permute.xlu0 %1399
        %1401 = vrot.lane.b32.xlu0 %v1254, 6
        %v1402 = vpop.permute.xlu0 %1401
        %1403 = vrot.lane.b32.xlu0 %v1255, 6
        %v1404 = vpop.permute.xlu0 %1403
        %1405 = vrot.lane.b32.xlu0 %v1256, 6
        %v1406 = vpop.permute.xlu0 %1405
        %1407 = vrot.lane.b32.xlu0 %v1257, 6
        %v1408 = vpop.permute.xlu0 %1407
        %1409 = vrot.lane.b32.xlu0 %v1258, 6
        %v1410 = vpop.permute.xlu0 %1409
        %1411 = vrot.lane.b32.xlu0 %v1259, 6
        %v1412 = vpop.permute.xlu0 %1411
        %1413 = vrot.lane.b32.xlu0 %v1260, 6
        %v1414 = vpop.permute.xlu0 %1413
        %1415 = vrot.lane.b32.xlu0 %v1261, 6
        %v1416 = vpop.permute.xlu0 %1415
        %1417 = vrot.lane.b32.xlu0 %v1262, 6
        %v1418 = vpop.permute.xlu0 %1417
        %1419 = vrot.lane.b32.xlu0 %v1263, 6
        %v1420 = vpop.permute.xlu0 %1419
        %1421 = vrot.lane.b32.xlu0 %v1264, 6
        %v1422 = vpop.permute.xlu0 %1421
        %1423 = vrot.lane.b32.xlu0 %v1265, 6
        %v1424 = vpop.permute.xlu0 %1423
        %1425 = vrot.lane.b32.xlu0 %v1266, 6
        %v1426 = vpop.permute.xlu0 %1425
        %1427 = vrot.lane.b32.xlu0 %v1267, 6
        %v1428 = vpop.permute.xlu0 %1427
        %1429 = vrot.lane.b32.xlu0 %v1268, 6
        %v1430 = vpop.permute.xlu0 %1429
        %1431 = vrot.lane.b32.xlu0 %v1269, 6
        %v1432 = vpop.permute.xlu0 %1431
        %1433 = vrot.lane.b32.xlu0 %v1270, 6
        %v1434 = vpop.permute.xlu0 %1433
        %1435 = vrot.lane.b32.xlu0 %v1271, 6
        %v1436 = vpop.permute.xlu0 %1435
        %1437 = vrot.lane.b32.xlu0 %v1272, 6
        %v1438 = vpop.permute.xlu0 %1437
        %1439 = vrot.lane.b32.xlu0 %v1273, 6
        %v1440 = vpop.permute.xlu0 %1439
        %1441 = vrot.lane.b32.xlu0 %v1274, 6
        %v1442 = vpop.permute.xlu0 %1441
        %1443 = vrot.lane.b32.xlu0 %v1275, 6
        %v1444 = vpop.permute.xlu0 %1443
        %1445 = vrot.lane.b32.xlu0 %v1276, 6
        %v1446 = vpop.permute.xlu0 %1445
        %1447 = vrot.lane.b32.xlu0 %v1277, 6
        %v1448 = vpop.permute.xlu0 %1447
        %1449 = vrot.lane.b32.xlu0 %v1278, 6
        %v1450 = vpop.permute.xlu0 %1449
        %1451 = vrot.lane.b32.xlu0 %v1279, 6
        %v1452 = vpop.permute.xlu0 %1451
        %1453 = vrot.lane.b32.xlu0 %v1280, 6
        %v1454 = vpop.permute.xlu0 %1453
        %1455 = vrot.lane.b32.xlu0 %v1281, 6
        %v1456 = vpop.permute.xlu0 %1455
        %1457 = vrot.lane.b32.xlu0 %v1282, 6
        %v1458 = vpop.permute.xlu0 %1457
        %1459 = vrot.lane.b32.xlu0 %v1283, 6
        %v1460 = vpop.permute.xlu0 %1459
        %1461 = vrot.lane.b32.xlu0 %v1284, 6
        %v1462 = vpop.permute.xlu0 %1461
        %1463 = vrot.lane.b32.xlu0 %v1285, 6
        %v1464 = vpop.permute.xlu0 %1463
        %1465 = vrot.lane.b32.xlu0 %v1286, 6
        %v1466 = vpop.permute.xlu0 %1465
        %vm1527 = vcmask 72752
        %1528 = vst.msk [vmem:[#allocation2] sm:$0xff] %vm1527, %v1348
        %1529 = vst.msk [vmem:[#allocation2 + $0x8] sm:$0xff] %vm1527, %v1350
        %1530 = vst.msk [vmem:[#allocation2 + $0x10] sm:$0xff] %vm1527, %v1352
        %1531 = vst.msk [vmem:[#allocation2 + $0x18] sm:$0xff] %vm1527, %v1354
        %1532 = vst.msk [vmem:[#allocation2 + $0x20] sm:$0xff] %vm1527, %v1356
        %1533 = vst.msk [vmem:[#allocation2 + $0x28] sm:$0xff] %vm1527, %v1358
        %1534 = vst.msk [vmem:[#allocation2 + $0x30] sm:$0xff] %vm1527, %v1360
        %1535 = vst.msk [vmem:[#allocation2 + $0x38] sm:$0xff] %vm1527, %v1362
        %1536 = vst.msk [vmem:[#allocation2 + $0x40] sm:$0xff] %vm1527, %v1364
        %1537 = vst.msk [vmem:[#allocation2 + $0x48] sm:$0xff] %vm1527, %v1366
        %1538 = vst.msk [vmem:[#allocation2 + $0x50] sm:$0xff] %vm1527, %v1368
        %1539 = vst.msk [vmem:[#allocation2 + $0x58] sm:$0xff] %vm1527, %v1370
        %1540 = vst.msk [vmem:[#allocation2 + $0x60] sm:$0xff] %vm1527, %v1372
        %1541 = vst.msk [vmem:[#allocation2 + $0x68] sm:$0xff] %vm1527, %v1374
        %1542 = vst.msk [vmem:[#allocation2 + $0x70] sm:$0xff] %vm1527, %v1376
        %1543 = vst.msk [vmem:[#allocation2 + $0x78] sm:$0xff] %vm1527, %v1378
        %1544 = vst.msk [vmem:[#allocation2 + $0x80] sm:$0xff] %vm1527, %v1380
        %1545 = vst.msk [vmem:[#allocation2 + $0x88] sm:$0xff] %vm1527, %v1382
        %1546 = vst.msk [vmem:[#allocation2 + $0x90] sm:$0xff] %vm1527, %v1384
        %1547 = vst.msk [vmem:[#allocation2 + $0x98] sm:$0xff] %vm1527, %v1386
        %1548 = vst.msk [vmem:[#allocation2 + $0xa0] sm:$0xff] %vm1527, %v1388
        %1549 = vst.msk [vmem:[#allocation2 + $0xa8] sm:$0xff] %vm1527, %v1390
        %1550 = vst.msk [vmem:[#allocation2 + $0xb0] sm:$0xff] %vm1527, %v1392
        %1551 = vst.msk [vmem:[#allocation2 + $0xb8] sm:$0xff] %vm1527, %v1394
        %1552 = vst.msk [vmem:[#allocation2 + $0xc0] sm:$0xff] %vm1527, %v1396
        %1553 = vst.msk [vmem:[#allocation2 + $0xc8] sm:$0xff] %vm1527, %v1398
        %1554 = vst.msk [vmem:[#allocation2 + $0xd0] sm:$0xff] %vm1527, %v1400
        %1555 = vst.msk [vmem:[#allocation2 + $0xd8] sm:$0xff] %vm1527, %v1402
        %1556 = vst.msk [vmem:[#allocation2 + $0xe0] sm:$0xff] %vm1527, %v1404
        %1557 = vst.msk [vmem:[#allocation2 + $0xe8] sm:$0xff] %vm1527, %v1406
        %1558 = vst.msk [vmem:[#allocation2 + $0xf0] sm:$0xff] %vm1527, %v1408
        %1559 = vst.msk [vmem:[#allocation2 + $0xf8] sm:$0xff] %vm1527, %v1410
        %1560 = vst.msk [vmem:[#allocation2 + $0x100] sm:$0xff] %vm1527, %v1412
        %1561 = vst.msk [vmem:[#allocation2 + $0x108] sm:$0xff] %vm1527, %v1414
        %1562 = vst.msk [vmem:[#allocation2 + $0x110] sm:$0xff] %vm1527, %v1416
        %1563 = vst.msk [vmem:[#allocation2 + $0x118] sm:$0xff] %vm1527, %v1418
        %1564 = vst.msk [vmem:[#allocation2 + $0x120] sm:$0xff] %vm1527, %v1420
        %1565 = vst.msk [vmem:[#allocation2 + $0x128] sm:$0xff] %vm1527, %v1422
        %1566 = vst.msk [vmem:[#allocation2 + $0x130] sm:$0xff] %vm1527, %v1424
        %1567 = vst.msk [vmem:[#allocation2 + $0x138] sm:$0xff] %vm1527, %v1426
        %1568 = vst.msk [vmem:[#allocation2 + $0x140] sm:$0xff] %vm1527, %v1428
        %1569 = vst.msk [vmem:[#allocation2 + $0x148] sm:$0xff] %vm1527, %v1430
        %1570 = vst.msk [vmem:[#allocation2 + $0x150] sm:$0xff] %vm1527, %v1432
        %1571 = vst.msk [vmem:[#allocation2 + $0x158] sm:$0xff] %vm1527, %v1434
        %1572 = vst.msk [vmem:[#allocation2 + $0x160] sm:$0xff] %vm1527, %v1436
        %1573 = vst.msk [vmem:[#allocation2 + $0x168] sm:$0xff] %vm1527, %v1438
        %1574 = vst.msk [vmem:[#allocation2 + $0x170] sm:$0xff] %vm1527, %v1440
        %1575 = vst.msk [vmem:[#allocation2 + $0x178] sm:$0xff] %vm1527, %v1442
        %1576 = vst.msk [vmem:[#allocation2 + $0x180] sm:$0xff] %vm1527, %v1444
        %1577 = vst.msk [vmem:[#allocation2 + $0x188] sm:$0xff] %vm1527, %v1446
        %1578 = vst.msk [vmem:[#allocation2 + $0x190] sm:$0xff] %vm1527, %v1448
        %1579 = vst.msk [vmem:[#allocation2 + $0x198] sm:$0xff] %vm1527, %v1450
        %1580 = vst.msk [vmem:[#allocation2 + $0x1a0] sm:$0xff] %vm1527, %v1452
        %1581 = vst.msk [vmem:[#allocation2 + $0x1a8] sm:$0xff] %vm1527, %v1454
        %1582 = vst.msk [vmem:[#allocation2 + $0x1b0] sm:$0xff] %vm1527, %v1456
        %1583 = vst.msk [vmem:[#allocation2 + $0x1b8] sm:$0xff] %vm1527, %v1458
        %1584 = vst.msk [vmem:[#allocation2 + $0x1c0] sm:$0xff] %vm1527, %v1460
        %1585 = vst.msk [vmem:[#allocation2 + $0x1c8] sm:$0xff] %vm1527, %v1462
        %1586 = vst.msk [vmem:[#allocation2 + $0x1d0] sm:$0xff] %vm1527, %v1464
        %1587 = vst.msk [vmem:[#allocation2 + $0x1d8] sm:$0xff] %vm1527, %v1466
        %v1588 = vld [vmem:[%s383 + $0x20] sm:$0xff]
        %v1589 = vld [vmem:[%s383 + $0x28] sm:$0xff]
        %v1590 = vld [vmem:[%s383 + $0x30] sm:$0xff]
        %v1591 = vld [vmem:[%s383 + $0x38] sm:$0xff]
        %v1592 = vld [vmem:[%s383 + $0x40] sm:$0xff]
        %v1593 = vld [vmem:[%s383 + $0x48] sm:$0xff]
        %v1594 = vld [vmem:[%s383 + $0x50] sm:$0xff]
        %v1595 = vld [vmem:[%s383 + $0x58] sm:$0xff]
        %v1596 = vld [vmem:[%s383 + $0x60] sm:$0xff]
        %v1597 = vld [vmem:[%s383 + $0x68] sm:$0xff]
        %v1598 = vld [vmem:[%s383 + $0x70] sm:$0xff]
        %v1599 = vld [vmem:[%s383 + $0x78] sm:$0xff]
        %v1600 = vld [vmem:[%s383 + $0x80] sm:$0xff]
        %v1601 = vld [vmem:[%s383 + $0x88] sm:$0xff]
        %v1602 = vld [vmem:[%s383 + $0x90] sm:$0xff]
        %v1603 = vld [vmem:[%s383 + $0x98] sm:$0xff]
        %v1604 = vld [vmem:[%s383 + $0xa0] sm:$0xff]
        %v1605 = vld [vmem:[%s383 + $0xa8] sm:$0xff]
        %v1606 = vld [vmem:[%s383 + $0xb0] sm:$0xff]
        %v1607 = vld [vmem:[%s383 + $0xb8] sm:$0xff]
        %v1608 = vld [vmem:[%s383 + $0xc0] sm:$0xff]
        %v1609 = vld [vmem:[%s383 + $0xc8] sm:$0xff]
        %v1610 = vld [vmem:[%s383 + $0xd0] sm:$0xff]
        %v1611 = vld [vmem:[%s383 + $0xd8] sm:$0xff]
        %v1612 = vld [vmem:[%s383 + $0xe0] sm:$0xff]
        %v1613 = vld [vmem:[%s383 + $0xe8] sm:$0xff]
        %v1614 = vld [vmem:[%s383 + $0xf0] sm:$0xff]
        %v1615 = vld [vmem:[%s383 + $0xf8] sm:$0xff]
        %v1616 = vld [vmem:[%s383 + $0x100] sm:$0xff]
        %v1617 = vld [vmem:[%s383 + $0x108] sm:$0xff]
        %v1618 = vld [vmem:[%s383 + $0x110] sm:$0xff]
        %v1619 = vld [vmem:[%s383 + $0x118] sm:$0xff]
        %v1620 = vld [vmem:[%s383 + $0x120] sm:$0xff]
        %v1621 = vld [vmem:[%s383 + $0x128] sm:$0xff]
        %v1622 = vld [vmem:[%s383 + $0x130] sm:$0xff]
        %v1623 = vld [vmem:[%s383 + $0x138] sm:$0xff]
        %v1624 = vld [vmem:[%s383 + $0x140] sm:$0xff]
        %v1625 = vld [vmem:[%s383 + $0x148] sm:$0xff]
        %v1626 = vld [vmem:[%s383 + $0x150] sm:$0xff]
        %v1627 = vld [vmem:[%s383 + $0x158] sm:$0xff]
        %v1628 = vld [vmem:[%s383 + $0x160] sm:$0xff]
        %v1629 = vld [vmem:[%s383 + $0x168] sm:$0xff]
        %v1630 = vld [vmem:[%s383 + $0x170] sm:$0xff]
        %v1631 = vld [vmem:[%s383 + $0x178] sm:$0xff]
        %v1632 = vld [vmem:[%s383 + $0x180] sm:$0xff]
        %v1633 = vld [vmem:[%s383 + $0x188] sm:$0xff]
        %v1634 = vld [vmem:[%s383 + $0x190] sm:$0xff]
        %v1635 = vld [vmem:[%s383 + $0x198] sm:$0xff]
        %v1636 = vld [vmem:[%s383 + $0x1a0] sm:$0xff]
        %v1637 = vld [vmem:[%s383 + $0x1a8] sm:$0xff]
        %v1638 = vld [vmem:[%s383 + $0x1b0] sm:$0xff]
        %v1639 = vld [vmem:[%s383 + $0x1b8] sm:$0xff]
        %v1640 = vld [vmem:[%s383 + $0x1c0] sm:$0xff]
        %v1641 = vld [vmem:[%s383 + $0x1c8] sm:$0xff]
        %v1642 = vld [vmem:[%s383 + $0x1d0] sm:$0xff]
        %v1643 = vld [vmem:[%s383 + $0x1d8] sm:$0xff]
        %v1644 = vld [vmem:[%s383 + $0x1e0] sm:$0xff]
        %v1645 = vld [vmem:[%s383 + $0x1e8] sm:$0xff]
        %v1646 = vld [vmem:[%s383 + $0x1f0] sm:$0xff]
        %v1647 = vld [vmem:[%s383 + $0x1f8] sm:$0xff]
        %v1648 = vld [vmem:[%s383 + $0x200] sm:$0xff]
        %v1649 = vld [vmem:[%s383 + $0x208] sm:$0xff]
        %v1650 = vld [vmem:[%s383 + $0x210] sm:$0xff]
        %v1651 = vld [vmem:[%s383 + $0x218] sm:$0xff]
        %v1652 = vld [vmem:[%s383 + $0x220] sm:$0xff]
        %v1653 = vld [vmem:[%s383 + $0x228] sm:$0xff]
        %v1654 = vld [vmem:[%s383 + $0x230] sm:$0xff]
        %v1655 = vld [vmem:[%s383 + $0x238] sm:$0xff]
        %v1656 = vld [vmem:[%s383 + $0x240] sm:$0xff]
        %v1657 = vld [vmem:[%s383 + $0x248] sm:$0xff]
        %v1658 = vld [vmem:[%s383 + $0x250] sm:$0xff]
        %v1659 = vld [vmem:[%s383 + $0x258] sm:$0xff]
        %v1660 = vld [vmem:[%s383 + $0x260] sm:$0xff]
        %v1661 = vld [vmem:[%s383 + $0x268] sm:$0xff]
        %v1662 = vld [vmem:[%s383 + $0x270] sm:$0xff]
        %v1663 = vld [vmem:[%s383 + $0x278] sm:$0xff]
        %v1664 = vld [vmem:[%s383 + $0x280] sm:$0xff]
        %v1665 = vld [vmem:[%s383 + $0x288] sm:$0xff]
        %v1666 = vld [vmem:[%s383 + $0x290] sm:$0xff]
        %v1667 = vld [vmem:[%s383 + $0x298] sm:$0xff]
        %v1668 = vld [vmem:[%s383 + $0x2a0] sm:$0xff]
        %v1669 = vld [vmem:[%s383 + $0x2a8] sm:$0xff]
        %v1670 = vld [vmem:[%s383 + $0x2b0] sm:$0xff]
        %v1671 = vld [vmem:[%s383 + $0x2b8] sm:$0xff]
        %v1672 = vld [vmem:[%s383 + $0x2c0] sm:$0xff]
        %v1673 = vld [vmem:[%s383 + $0x2c8] sm:$0xff]
        %v1674 = vld [vmem:[%s383 + $0x2d0] sm:$0xff]
        %v1675 = vld [vmem:[%s383 + $0x2d8] sm:$0xff]
        %v1676 = vld [vmem:[%s383 + $0x2e0] sm:$0xff]
        %v1677 = vld [vmem:[%s383 + $0x2e8] sm:$0xff]
        %v1678 = vld [vmem:[%s383 + $0x2f0] sm:$0xff]
        %v1679 = vld [vmem:[%s383 + $0x2f8] sm:$0xff]
        %v1680 = vld [vmem:[%s383 + $0x300] sm:$0xff]
        %v1681 = vld [vmem:[%s383 + $0x308] sm:$0xff]
        %v1682 = vld [vmem:[%s383 + $0x310] sm:$0xff]
        %v1683 = vld [vmem:[%s383 + $0x318] sm:$0xff]
        %v1684 = vld [vmem:[%s383 + $0x320] sm:$0xff]
        %v1685 = vld [vmem:[%s383 + $0x328] sm:$0xff]
        %v1686 = vld [vmem:[%s383 + $0x330] sm:$0xff]
        %v1687 = vld [vmem:[%s383 + $0x338] sm:$0xff]
        %v1688 = vld [vmem:[%s383 + $0x340] sm:$0xff]
        %v1689 = vld [vmem:[%s383 + $0x348] sm:$0xff]
        %v1690 = vld [vmem:[%s383 + $0x350] sm:$0xff]
        %v1691 = vld [vmem:[%s383 + $0x358] sm:$0xff]
        %v1692 = vld [vmem:[%s383 + $0x360] sm:$0xff]
        %v1693 = vld [vmem:[%s383 + $0x368] sm:$0xff]
        %v1694 = vld [vmem:[%s383 + $0x370] sm:$0xff]
        %v1695 = vld [vmem:[%s383 + $0x378] sm:$0xff]
        %v1696 = vld [vmem:[%s383 + $0x380] sm:$0xff]
        %v1697 = vld [vmem:[%s383 + $0x388] sm:$0xff]
        %v1698 = vld [vmem:[%s383 + $0x390] sm:$0xff]
        %v1699 = vld [vmem:[%s383 + $0x398] sm:$0xff]
        %v1700 = vld [vmem:[%s383 + $0x3a0] sm:$0xff]
        %v1701 = vld [vmem:[%s383 + $0x3a8] sm:$0xff]
        %v1702 = vld [vmem:[%s383 + $0x3b0] sm:$0xff]
        %v1703 = vld [vmem:[%s383 + $0x3b8] sm:$0xff]
        %v1704 = vld [vmem:[%s383 + $0x3c0] sm:$0xff]
        %v1705 = vld [vmem:[%s383 + $0x3c8] sm:$0xff]
        %v1706 = vld [vmem:[%s383 + $0x3d0] sm:$0xff]
        %v1707 = vld [vmem:[%s383 + $0x3d8] sm:$0xff]
        %v1708 = vpack.c.bf16 %v1589, %v1588
        %v1709 = vpack.c.bf16 %v1591, %v1590
        %v1710 = vpack.c.bf16 %v1593, %v1592
        %v1711 = vpack.c.bf16 %v1595, %v1594
        %v1712 = vpack.c.bf16 %v1597, %v1596
        %v1713 = vpack.c.bf16 %v1599, %v1598
        %v1714 = vpack.c.bf16 %v1601, %v1600
        %v1715 = vpack.c.bf16 %v1603, %v1602
        %v1716 = vpack.c.bf16 %v1605, %v1604
        %v1717 = vpack.c.bf16 %v1607, %v1606
        %v1718 = vpack.c.bf16 %v1609, %v1608
        %v1719 = vpack.c.bf16 %v1611, %v1610
        %v1720 = vpack.c.bf16 %v1613, %v1612
        %v1721 = vpack.c.bf16 %v1615, %v1614
        %v1722 = vpack.c.bf16 %v1617, %v1616
        %v1723 = vpack.c.bf16 %v1619, %v1618
        %v1724 = vpack.c.bf16 %v1621, %v1620
        %v1725 = vpack.c.bf16 %v1623, %v1622
        %v1726 = vpack.c.bf16 %v1625, %v1624
        %v1727 = vpack.c.bf16 %v1627, %v1626
        %v1728 = vpack.c.bf16 %v1629, %v1628
        %v1729 = vpack.c.bf16 %v1631, %v1630
        %v1730 = vpack.c.bf16 %v1633, %v1632
        %v1731 = vpack.c.bf16 %v1635, %v1634
        %v1732 = vpack.c.bf16 %v1637, %v1636
        %v1733 = vpack.c.bf16 %v1639, %v1638
        %v1734 = vpack.c.bf16 %v1641, %v1640
        %v1735 = vpack.c.bf16 %v1643, %v1642
        %v1736 = vpack.c.bf16 %v1645, %v1644
        %v1737 = vpack.c.bf16 %v1647, %v1646
        %v1738 = vpack.c.bf16 %v1649, %v1648
        %v1739 = vpack.c.bf16 %v1651, %v1650
        %v1740 = vpack.c.bf16 %v1653, %v1652
        %v1741 = vpack.c.bf16 %v1655, %v1654
        %v1742 = vpack.c.bf16 %v1657, %v1656
        %v1743 = vpack.c.bf16 %v1659, %v1658
        %v1744 = vpack.c.bf16 %v1661, %v1660
        %v1745 = vpack.c.bf16 %v1663, %v1662
        %v1746 = vpack.c.bf16 %v1665, %v1664
        %v1747 = vpack.c.bf16 %v1667, %v1666
        %v1748 = vpack.c.bf16 %v1669, %v1668
        %v1749 = vpack.c.bf16 %v1671, %v1670
        %v1750 = vpack.c.bf16 %v1673, %v1672
        %v1751 = vpack.c.bf16 %v1675, %v1674
        %v1752 = vpack.c.bf16 %v1677, %v1676
        %v1753 = vpack.c.bf16 %v1679, %v1678
        %v1754 = vpack.c.bf16 %v1681, %v1680
        %v1755 = vpack.c.bf16 %v1683, %v1682
        %v1756 = vpack.c.bf16 %v1685, %v1684
        %v1757 = vpack.c.bf16 %v1687, %v1686
        %v1758 = vpack.c.bf16 %v1689, %v1688
        %v1759 = vpack.c.bf16 %v1691, %v1690
        %v1760 = vpack.c.bf16 %v1693, %v1692
        %v1761 = vpack.c.bf16 %v1695, %v1694
        %v1762 = vpack.c.bf16 %v1697, %v1696
        %v1763 = vpack.c.bf16 %v1699, %v1698
        %v1764 = vpack.c.bf16 %v1701, %v1700
        %v1765 = vpack.c.bf16 %v1703, %v1702
        %v1766 = vpack.c.bf16 %v1705, %v1704
        %v1767 = vpack.c.bf16 %v1707, %v1706
        %1828 = vrot.lane.b32.xlu0 %v1708, 9
        %v1829 = vpop.permute.xlu0 %1828
        %1830 = vrot.lane.b32.xlu0 %v1709, 9
        %v1831 = vpop.permute.xlu0 %1830
        %1832 = vrot.lane.b32.xlu0 %v1710, 9
        %v1833 = vpop.permute.xlu0 %1832
        %1834 = vrot.lane.b32.xlu0 %v1711, 9
        %v1835 = vpop.permute.xlu0 %1834
        %1836 = vrot.lane.b32.xlu0 %v1712, 9
        %v1837 = vpop.permute.xlu0 %1836
        %1838 = vrot.lane.b32.xlu0 %v1713, 9
        %v1839 = vpop.permute.xlu0 %1838
        %1840 = vrot.lane.b32.xlu0 %v1714, 9
        %v1841 = vpop.permute.xlu0 %1840
        %1842 = vrot.lane.b32.xlu0 %v1715, 9
        %v1843 = vpop.permute.xlu0 %1842
        %1844 = vrot.lane.b32.xlu0 %v1716, 9
        %v1845 = vpop.permute.xlu0 %1844
        %1846 = vrot.lane.b32.xlu0 %v1717, 9
        %v1847 = vpop.permute.xlu0 %1846
        %1848 = vrot.lane.b32.xlu0 %v1718, 9
        %v1849 = vpop.permute.xlu0 %1848
        %1850 = vrot.lane.b32.xlu0 %v1719, 9
        %v1851 = vpop.permute.xlu0 %1850
        %1852 = vrot.lane.b32.xlu0 %v1720, 9
        %v1853 = vpop.permute.xlu0 %1852
        %1854 = vrot.lane.b32.xlu0 %v1721, 9
        %v1855 = vpop.permute.xlu0 %1854
        %1856 = vrot.lane.b32.xlu0 %v1722, 9
        %v1857 = vpop.permute.xlu0 %1856
        %1858 = vrot.lane.b32.xlu0 %v1723, 9
        %v1859 = vpop.permute.xlu0 %1858
        %1860 = vrot.lane.b32.xlu0 %v1724, 9
        %v1861 = vpop.permute.xlu0 %1860
        %1862 = vrot.lane.b32.xlu0 %v1725, 9
        %v1863 = vpop.permute.xlu0 %1862
        %1864 = vrot.lane.b32.xlu0 %v1726, 9
        %v1865 = vpop.permute.xlu0 %1864
        %1866 = vrot.lane.b32.xlu0 %v1727, 9
        %v1867 = vpop.permute.xlu0 %1866
        %1868 = vrot.lane.b32.xlu0 %v1728, 9
        %v1869 = vpop.permute.xlu0 %1868
        %1870 = vrot.lane.b32.xlu0 %v1729, 9
        %v1871 = vpop.permute.xlu0 %1870
        %1872 = vrot.lane.b32.xlu0 %v1730, 9
        %v1873 = vpop.permute.xlu0 %1872
        %1874 = vrot.lane.b32.xlu0 %v1731, 9
        %v1875 = vpop.permute.xlu0 %1874
        %1876 = vrot.lane.b32.xlu0 %v1732, 9
        %v1877 = vpop.permute.xlu0 %1876
        %1878 = vrot.lane.b32.xlu0 %v1733, 9
        %v1879 = vpop.permute.xlu0 %1878
        %1880 = vrot.lane.b32.xlu0 %v1734, 9
        %v1881 = vpop.permute.xlu0 %1880
        %1882 = vrot.lane.b32.xlu0 %v1735, 9
        %v1883 = vpop.permute.xlu0 %1882
        %1884 = vrot.lane.b32.xlu0 %v1736, 9
        %v1885 = vpop.permute.xlu0 %1884
        %1886 = vrot.lane.b32.xlu0 %v1737, 9
        %v1887 = vpop.permute.xlu0 %1886
        %1888 = vrot.lane.b32.xlu0 %v1738, 9
        %v1889 = vpop.permute.xlu0 %1888
        %1890 = vrot.lane.b32.xlu0 %v1739, 9
        %v1891 = vpop.permute.xlu0 %1890
        %1892 = vrot.lane.b32.xlu0 %v1740, 9
        %v1893 = vpop.permute.xlu0 %1892
        %1894 = vrot.lane.b32.xlu0 %v1741, 9
        %v1895 = vpop.permute.xlu0 %1894
        %1896 = vrot.lane.b32.xlu0 %v1742, 9
        %v1897 = vpop.permute.xlu0 %1896
        %1898 = vrot.lane.b32.xlu0 %v1743, 9
        %v1899 = vpop.permute.xlu0 %1898
        %1900 = vrot.lane.b32.xlu0 %v1744, 9
        %v1901 = vpop.permute.xlu0 %1900
        %1902 = vrot.lane.b32.xlu0 %v1745, 9
        %v1903 = vpop.permute.xlu0 %1902
        %1904 = vrot.lane.b32.xlu0 %v1746, 9
        %v1905 = vpop.permute.xlu0 %1904
        %1906 = vrot.lane.b32.xlu0 %v1747, 9
        %v1907 = vpop.permute.xlu0 %1906
        %1908 = vrot.lane.b32.xlu0 %v1748, 9
        %v1909 = vpop.permute.xlu0 %1908
        %1910 = vrot.lane.b32.xlu0 %v1749, 9
        %v1911 = vpop.permute.xlu0 %1910
        %1912 = vrot.lane.b32.xlu0 %v1750, 9
        %v1913 = vpop.permute.xlu0 %1912
        %1914 = vrot.lane.b32.xlu0 %v1751, 9
        %v1915 = vpop.permute.xlu0 %1914
        %1916 = vrot.lane.b32.xlu0 %v1752, 9
        %v1917 = vpop.permute.xlu0 %1916
        %1918 = vrot.lane.b32.xlu0 %v1753, 9
        %v1919 = vpop.permute.xlu0 %1918
        %1920 = vrot.lane.b32.xlu0 %v1754, 9
        %v1921 = vpop.permute.xlu0 %1920
        %1922 = vrot.lane.b32.xlu0 %v1755, 9
        %v1923 = vpop.permute.xlu0 %1922
        %1924 = vrot.lane.b32.xlu0 %v1756, 9
        %v1925 = vpop.permute.xlu0 %1924
        %1926 = vrot.lane.b32.xlu0 %v1757, 9
        %v1927 = vpop.permute.xlu0 %1926
        %1928 = vrot.lane.b32.xlu0 %v1758, 9
        %v1929 = vpop.permute.xlu0 %1928
        %1930 = vrot.lane.b32.xlu0 %v1759, 9
        %v1931 = vpop.permute.xlu0 %1930
        %1932 = vrot.lane.b32.xlu0 %v1760, 9
        %v1933 = vpop.permute.xlu0 %1932
        %1934 = vrot.lane.b32.xlu0 %v1761, 9
        %v1935 = vpop.permute.xlu0 %1934
        %1936 = vrot.lane.b32.xlu0 %v1762, 9
        %v1937 = vpop.permute.xlu0 %1936
        %1938 = vrot.lane.b32.xlu0 %v1763, 9
        %v1939 = vpop.permute.xlu0 %1938
        %1940 = vrot.lane.b32.xlu0 %v1764, 9
        %v1941 = vpop.permute.xlu0 %1940
        %1942 = vrot.lane.b32.xlu0 %v1765, 9
        %v1943 = vpop.permute.xlu0 %1942
        %1944 = vrot.lane.b32.xlu0 %v1766, 9
        %v1945 = vpop.permute.xlu0 %1944
        %1946 = vrot.lane.b32.xlu0 %v1767, 9
        %v1947 = vpop.permute.xlu0 %1946
        %vm2008 = vcmask 97352
        %2009 = vst.msk [vmem:[#allocation2] sm:$0xff] %vm2008, %v1829
        %2010 = vst.msk [vmem:[#allocation2 + $0x8] sm:$0xff] %vm2008, %v1831
        %2011 = vst.msk [vmem:[#allocation2 + $0x10] sm:$0xff] %vm2008, %v1833
        %2012 = vst.msk [vmem:[#allocation2 + $0x18] sm:$0xff] %vm2008, %v1835
        %2013 = vst.msk [vmem:[#allocation2 + $0x20] sm:$0xff] %vm2008, %v1837
        %2014 = vst.msk [vmem:[#allocation2 + $0x28] sm:$0xff] %vm2008, %v1839
        %2015 = vst.msk [vmem:[#allocation2 + $0x30] sm:$0xff] %vm2008, %v1841
        %2016 = vst.msk [vmem:[#allocation2 + $0x38] sm:$0xff] %vm2008, %v1843
        %2017 = vst.msk [vmem:[#allocation2 + $0x40] sm:$0xff] %vm2008, %v1845
        %2018 = vst.msk [vmem:[#allocation2 + $0x48] sm:$0xff] %vm2008, %v1847
        %2019 = vst.msk [vmem:[#allocation2 + $0x50] sm:$0xff] %vm2008, %v1849
        %2020 = vst.msk [vmem:[#allocation2 + $0x58] sm:$0xff] %vm2008, %v1851
        %2021 = vst.msk [vmem:[#allocation2 + $0x60] sm:$0xff] %vm2008, %v1853
        %2022 = vst.msk [vmem:[#allocation2 + $0x68] sm:$0xff] %vm2008, %v1855
        %2023 = vst.msk [vmem:[#allocation2 + $0x70] sm:$0xff] %vm2008, %v1857
        %2024 = vst.msk [vmem:[#allocation2 + $0x78] sm:$0xff] %vm2008, %v1859
        %2025 = vst.msk [vmem:[#allocation2 + $0x80] sm:$0xff] %vm2008, %v1861
        %2026 = vst.msk [vmem:[#allocation2 + $0x88] sm:$0xff] %vm2008, %v1863
        %2027 = vst.msk [vmem:[#allocation2 + $0x90] sm:$0xff] %vm2008, %v1865
        %2028 = vst.msk [vmem:[#allocation2 + $0x98] sm:$0xff] %vm2008, %v1867
        %2029 = vst.msk [vmem:[#allocation2 + $0xa0] sm:$0xff] %vm2008, %v1869
        %2030 = vst.msk [vmem:[#allocation2 + $0xa8] sm:$0xff] %vm2008, %v1871
        %2031 = vst.msk [vmem:[#allocation2 + $0xb0] sm:$0xff] %vm2008, %v1873
        %2032 = vst.msk [vmem:[#allocation2 + $0xb8] sm:$0xff] %vm2008, %v1875
        %2033 = vst.msk [vmem:[#allocation2 + $0xc0] sm:$0xff] %vm2008, %v1877
        %2034 = vst.msk [vmem:[#allocation2 + $0xc8] sm:$0xff] %vm2008, %v1879
        %2035 = vst.msk [vmem:[#allocation2 + $0xd0] sm:$0xff] %vm2008, %v1881
        %2036 = vst.msk [vmem:[#allocation2 + $0xd8] sm:$0xff] %vm2008, %v1883
        %2037 = vst.msk [vmem:[#allocation2 + $0xe0] sm:$0xff] %vm2008, %v1885
        %2038 = vst.msk [vmem:[#allocation2 + $0xe8] sm:$0xff] %vm2008, %v1887
        %2039 = vst.msk [vmem:[#allocation2 + $0xf0] sm:$0xff] %vm2008, %v1889
        %2040 = vst.msk [vmem:[#allocation2 + $0xf8] sm:$0xff] %vm2008, %v1891
        %2041 = vst.msk [vmem:[#allocation2 + $0x100] sm:$0xff] %vm2008, %v1893
        %2042 = vst.msk [vmem:[#allocation2 + $0x108] sm:$0xff] %vm2008, %v1895
        %2043 = vst.msk [vmem:[#allocation2 + $0x110] sm:$0xff] %vm2008, %v1897
        %2044 = vst.msk [vmem:[#allocation2 + $0x118] sm:$0xff] %vm2008, %v1899
        %2045 = vst.msk [vmem:[#allocation2 + $0x120] sm:$0xff] %vm2008, %v1901
        %2046 = vst.msk [vmem:[#allocation2 + $0x128] sm:$0xff] %vm2008, %v1903
        %2047 = vst.msk [vmem:[#allocation2 + $0x130] sm:$0xff] %vm2008, %v1905
        %2048 = vst.msk [vmem:[#allocation2 + $0x138] sm:$0xff] %vm2008, %v1907
        %2049 = vst.msk [vmem:[#allocation2 + $0x140] sm:$0xff] %vm2008, %v1909
        %2050 = vst.msk [vmem:[#allocation2 + $0x148] sm:$0xff] %vm2008, %v1911
        %2051 = vst.msk [vmem:[#allocation2 + $0x150] sm:$0xff] %vm2008, %v1913
        %2052 = vst.msk [vmem:[#allocation2 + $0x158] sm:$0xff] %vm2008, %v1915
        %2053 = vst.msk [vmem:[#allocation2 + $0x160] sm:$0xff] %vm2008, %v1917
        %2054 = vst.msk [vmem:[#allocation2 + $0x168] sm:$0xff] %vm2008, %v1919
        %2055 = vst.msk [vmem:[#allocation2 + $0x170] sm:$0xff] %vm2008, %v1921
        %2056 = vst.msk [vmem:[#allocation2 + $0x178] sm:$0xff] %vm2008, %v1923
        %2057 = vst.msk [vmem:[#allocation2 + $0x180] sm:$0xff] %vm2008, %v1925
        %2058 = vst.msk [vmem:[#allocation2 + $0x188] sm:$0xff] %vm2008, %v1927
        %2059 = vst.msk [vmem:[#allocation2 + $0x190] sm:$0xff] %vm2008, %v1929
        %2060 = vst.msk [vmem:[#allocation2 + $0x198] sm:$0xff] %vm2008, %v1931
        %2061 = vst.msk [vmem:[#allocation2 + $0x1a0] sm:$0xff] %vm2008, %v1933
        %2062 = vst.msk [vmem:[#allocation2 + $0x1a8] sm:$0xff] %vm2008, %v1935
        %2063 = vst.msk [vmem:[#allocation2 + $0x1b0] sm:$0xff] %vm2008, %v1937
        %2064 = vst.msk [vmem:[#allocation2 + $0x1b8] sm:$0xff] %vm2008, %v1939
        %2065 = vst.msk [vmem:[#allocation2 + $0x1c0] sm:$0xff] %vm2008, %v1941
        %2066 = vst.msk [vmem:[#allocation2 + $0x1c8] sm:$0xff] %vm2008, %v1943
        %2067 = vst.msk [vmem:[#allocation2 + $0x1d0] sm:$0xff] %vm2008, %v1945
        %2068 = vst.msk [vmem:[#allocation2 + $0x1d8] sm:$0xff] %vm2008, %v1947
        %v2069 = vld [vmem:[%s383 + $0x21] sm:$0xff]
        %v2070 = vld [vmem:[%s383 + $0x29] sm:$0xff]
        %v2071 = vld [vmem:[%s383 + $0x31] sm:$0xff]
        %v2072 = vld [vmem:[%s383 + $0x39] sm:$0xff]
        %v2073 = vld [vmem:[%s383 + $0x41] sm:$0xff]
        %v2074 = vld [vmem:[%s383 + $0x49] sm:$0xff]
        %v2075 = vld [vmem:[%s383 + $0x51] sm:$0xff]
        %v2076 = vld [vmem:[%s383 + $0x59] sm:$0xff]
        %v2077 = vld [vmem:[%s383 + $0x61] sm:$0xff]
        %v2078 = vld [vmem:[%s383 + $0x69] sm:$0xff]
        %v2079 = vld [vmem:[%s383 + $0x71] sm:$0xff]
        %v2080 = vld [vmem:[%s383 + $0x79] sm:$0xff]
        %v2081 = vld [vmem:[%s383 + $0x81] sm:$0xff]
        %v2082 = vld [vmem:[%s383 + $0x89] sm:$0xff]
        %v2083 = vld [vmem:[%s383 + $0x91] sm:$0xff]
        %v2084 = vld [vmem:[%s383 + $0x99] sm:$0xff]
        %v2085 = vld [vmem:[%s383 + $0xa1] sm:$0xff]
        %v2086 = vld [vmem:[%s383 + $0xa9] sm:$0xff]
        %v2087 = vld [vmem:[%s383 + $0xb1] sm:$0xff]
        %v2088 = vld [vmem:[%s383 + $0xb9] sm:$0xff]
        %v2089 = vld [vmem:[%s383 + $0xc1] sm:$0xff]
        %v2090 = vld [vmem:[%s383 + $0xc9] sm:$0xff]
        %v2091 = vld [vmem:[%s383 + $0xd1] sm:$0xff]
        %v2092 = vld [vmem:[%s383 + $0xd9] sm:$0xff]
        %v2093 = vld [vmem:[%s383 + $0xe1] sm:$0xff]
        %v2094 = vld [vmem:[%s383 + $0xe9] sm:$0xff]
        %v2095 = vld [vmem:[%s383 + $0xf1] sm:$0xff]
        %v2096 = vld [vmem:[%s383 + $0xf9] sm:$0xff]
        %v2097 = vld [vmem:[%s383 + $0x101] sm:$0xff]
        %v2098 = vld [vmem:[%s383 + $0x109] sm:$0xff]
        %v2099 = vld [vmem:[%s383 + $0x111] sm:$0xff]
        %v2100 = vld [vmem:[%s383 + $0x119] sm:$0xff]
        %v2101 = vld [vmem:[%s383 + $0x121] sm:$0xff]
        %v2102 = vld [vmem:[%s383 + $0x129] sm:$0xff]
        %v2103 = vld [vmem:[%s383 + $0x131] sm:$0xff]
        %v2104 = vld [vmem:[%s383 + $0x139] sm:$0xff]
        %v2105 = vld [vmem:[%s383 + $0x141] sm:$0xff]
        %v2106 = vld [vmem:[%s383 + $0x149] sm:$0xff]
        %v2107 = vld [vmem:[%s383 + $0x151] sm:$0xff]
        %v2108 = vld [vmem:[%s383 + $0x159] sm:$0xff]
        %v2109 = vld [vmem:[%s383 + $0x161] sm:$0xff]
        %v2110 = vld [vmem:[%s383 + $0x169] sm:$0xff]
        %v2111 = vld [vmem:[%s383 + $0x171] sm:$0xff]
        %v2112 = vld [vmem:[%s383 + $0x179] sm:$0xff]
        %v2113 = vld [vmem:[%s383 + $0x181] sm:$0xff]
        %v2114 = vld [vmem:[%s383 + $0x189] sm:$0xff]
        %v2115 = vld [vmem:[%s383 + $0x191] sm:$0xff]
        %v2116 = vld [vmem:[%s383 + $0x199] sm:$0xff]
        %v2117 = vld [vmem:[%s383 + $0x1a1] sm:$0xff]
        %v2118 = vld [vmem:[%s383 + $0x1a9] sm:$0xff]
        %v2119 = vld [vmem:[%s383 + $0x1b1] sm:$0xff]
        %v2120 = vld [vmem:[%s383 + $0x1b9] sm:$0xff]
        %v2121 = vld [vmem:[%s383 + $0x1c1] sm:$0xff]
        %v2122 = vld [vmem:[%s383 + $0x1c9] sm:$0xff]
        %v2123 = vld [vmem:[%s383 + $0x1d1] sm:$0xff]
        %v2124 = vld [vmem:[%s383 + $0x1d9] sm:$0xff]
        %v2125 = vld [vmem:[%s383 + $0x1e1] sm:$0xff]
        %v2126 = vld [vmem:[%s383 + $0x1e9] sm:$0xff]
        %v2127 = vld [vmem:[%s383 + $0x1f1] sm:$0xff]
        %v2128 = vld [vmem:[%s383 + $0x1f9] sm:$0xff]
        %v2129 = vld [vmem:[%s383 + $0x201] sm:$0xff]
        %v2130 = vld [vmem:[%s383 + $0x209] sm:$0xff]
        %v2131 = vld [vmem:[%s383 + $0x211] sm:$0xff]
        %v2132 = vld [vmem:[%s383 + $0x219] sm:$0xff]
        %v2133 = vld [vmem:[%s383 + $0x221] sm:$0xff]
        %v2134 = vld [vmem:[%s383 + $0x229] sm:$0xff]
        %v2135 = vld [vmem:[%s383 + $0x231] sm:$0xff]
        %v2136 = vld [vmem:[%s383 + $0x239] sm:$0xff]
        %v2137 = vld [vmem:[%s383 + $0x241] sm:$0xff]
        %v2138 = vld [vmem:[%s383 + $0x249] sm:$0xff]
        %v2139 = vld [vmem:[%s383 + $0x251] sm:$0xff]
        %v2140 = vld [vmem:[%s383 + $0x259] sm:$0xff]
        %v2141 = vld [vmem:[%s383 + $0x261] sm:$0xff]
        %v2142 = vld [vmem:[%s383 + $0x269] sm:$0xff]
        %v2143 = vld [vmem:[%s383 + $0x271] sm:$0xff]
        %v2144 = vld [vmem:[%s383 + $0x279] sm:$0xff]
        %v2145 = vld [vmem:[%s383 + $0x281] sm:$0xff]
        %v2146 = vld [vmem:[%s383 + $0x289] sm:$0xff]
        %v2147 = vld [vmem:[%s383 + $0x291] sm:$0xff]
        %v2148 = vld [vmem:[%s383 + $0x299] sm:$0xff]
        %v2149 = vld [vmem:[%s383 + $0x2a1] sm:$0xff]
        %v2150 = vld [vmem:[%s383 + $0x2a9] sm:$0xff]
        %v2151 = vld [vmem:[%s383 + $0x2b1] sm:$0xff]
        %v2152 = vld [vmem:[%s383 + $0x2b9] sm:$0xff]
        %v2153 = vld [vmem:[%s383 + $0x2c1] sm:$0xff]
        %v2154 = vld [vmem:[%s383 + $0x2c9] sm:$0xff]
        %v2155 = vld [vmem:[%s383 + $0x2d1] sm:$0xff]
        %v2156 = vld [vmem:[%s383 + $0x2d9] sm:$0xff]
        %v2157 = vld [vmem:[%s383 + $0x2e1] sm:$0xff]
        %v2158 = vld [vmem:[%s383 + $0x2e9] sm:$0xff]
        %v2159 = vld [vmem:[%s383 + $0x2f1] sm:$0xff]
        %v2160 = vld [vmem:[%s383 + $0x2f9] sm:$0xff]
        %v2161 = vld [vmem:[%s383 + $0x301] sm:$0xff]
        %v2162 = vld [vmem:[%s383 + $0x309] sm:$0xff]
        %v2163 = vld [vmem:[%s383 + $0x311] sm:$0xff]
        %v2164 = vld [vmem:[%s383 + $0x319] sm:$0xff]
        %v2165 = vld [vmem:[%s383 + $0x321] sm:$0xff]
        %v2166 = vld [vmem:[%s383 + $0x329] sm:$0xff]
        %v2167 = vld [vmem:[%s383 + $0x331] sm:$0xff]
        %v2168 = vld [vmem:[%s383 + $0x339] sm:$0xff]
        %v2169 = vld [vmem:[%s383 + $0x341] sm:$0xff]
        %v2170 = vld [vmem:[%s383 + $0x349] sm:$0xff]
        %v2171 = vld [vmem:[%s383 + $0x351] sm:$0xff]
        %v2172 = vld [vmem:[%s383 + $0x359] sm:$0xff]
        %v2173 = vld [vmem:[%s383 + $0x361] sm:$0xff]
        %v2174 = vld [vmem:[%s383 + $0x369] sm:$0xff]
        %v2175 = vld [vmem:[%s383 + $0x371] sm:$0xff]
        %v2176 = vld [vmem:[%s383 + $0x379] sm:$0xff]
        %v2177 = vld [vmem:[%s383 + $0x381] sm:$0xff]
        %v2178 = vld [vmem:[%s383 + $0x389] sm:$0xff]
        %v2179 = vld [vmem:[%s383 + $0x391] sm:$0xff]
        %v2180 = vld [vmem:[%s383 + $0x399] sm:$0xff]
        %v2181 = vld [vmem:[%s383 + $0x3a1] sm:$0xff]
        %v2182 = vld [vmem:[%s383 + $0x3a9] sm:$0xff]
        %v2183 = vld [vmem:[%s383 + $0x3b1] sm:$0xff]
        %v2184 = vld [vmem:[%s383 + $0x3b9] sm:$0xff]
        %v2185 = vld [vmem:[%s383 + $0x3c1] sm:$0xff]
        %v2186 = vld [vmem:[%s383 + $0x3c9] sm:$0xff]
        %v2187 = vld [vmem:[%s383 + $0x3d1] sm:$0xff]
        %v2188 = vld [vmem:[%s383 + $0x3d9] sm:$0xff]
        %v2189 = vpack.c.bf16 %v2070, %v2069
        %v2190 = vpack.c.bf16 %v2072, %v2071
        %v2191 = vpack.c.bf16 %v2074, %v2073
        %v2192 = vpack.c.bf16 %v2076, %v2075
        %v2193 = vpack.c.bf16 %v2078, %v2077
        %v2194 = vpack.c.bf16 %v2080, %v2079
        %v2195 = vpack.c.bf16 %v2082, %v2081
        %v2196 = vpack.c.bf16 %v2084, %v2083
        %v2197 = vpack.c.bf16 %v2086, %v2085
        %v2198 = vpack.c.bf16 %v2088, %v2087
        %v2199 = vpack.c.bf16 %v2090, %v2089
        %v2200 = vpack.c.bf16 %v2092, %v2091
        %v2201 = vpack.c.bf16 %v2094, %v2093
        %v2202 = vpack.c.bf16 %v2096, %v2095
        %v2203 = vpack.c.bf16 %v2098, %v2097
        %v2204 = vpack.c.bf16 %v2100, %v2099
        %v2205 = vpack.c.bf16 %v2102, %v2101
        %v2206 = vpack.c.bf16 %v2104, %v2103
        %v2207 = vpack.c.bf16 %v2106, %v2105
        %v2208 = vpack.c.bf16 %v2108, %v2107
        %v2209 = vpack.c.bf16 %v2110, %v2109
        %v2210 = vpack.c.bf16 %v2112, %v2111
        %v2211 = vpack.c.bf16 %v2114, %v2113
        %v2212 = vpack.c.bf16 %v2116, %v2115
        %v2213 = vpack.c.bf16 %v2118, %v2117
        %v2214 = vpack.c.bf16 %v2120, %v2119
        %v2215 = vpack.c.bf16 %v2122, %v2121
        %v2216 = vpack.c.bf16 %v2124, %v2123
        %v2217 = vpack.c.bf16 %v2126, %v2125
        %v2218 = vpack.c.bf16 %v2128, %v2127
        %v2219 = vpack.c.bf16 %v2130, %v2129
        %v2220 = vpack.c.bf16 %v2132, %v2131
        %v2221 = vpack.c.bf16 %v2134, %v2133
        %v2222 = vpack.c.bf16 %v2136, %v2135
        %v2223 = vpack.c.bf16 %v2138, %v2137
        %v2224 = vpack.c.bf16 %v2140, %v2139
        %v2225 = vpack.c.bf16 %v2142, %v2141
        %v2226 = vpack.c.bf16 %v2144, %v2143
        %v2227 = vpack.c.bf16 %v2146, %v2145
        %v2228 = vpack.c.bf16 %v2148, %v2147
        %v2229 = vpack.c.bf16 %v2150, %v2149
        %v2230 = vpack.c.bf16 %v2152, %v2151
        %v2231 = vpack.c.bf16 %v2154, %v2153
        %v2232 = vpack.c.bf16 %v2156, %v2155
        %v2233 = vpack.c.bf16 %v2158, %v2157
        %v2234 = vpack.c.bf16 %v2160, %v2159
        %v2235 = vpack.c.bf16 %v2162, %v2161
        %v2236 = vpack.c.bf16 %v2164, %v2163
        %v2237 = vpack.c.bf16 %v2166, %v2165
        %v2238 = vpack.c.bf16 %v2168, %v2167
        %v2239 = vpack.c.bf16 %v2170, %v2169
        %v2240 = vpack.c.bf16 %v2172, %v2171
        %v2241 = vpack.c.bf16 %v2174, %v2173
        %v2242 = vpack.c.bf16 %v2176, %v2175
        %v2243 = vpack.c.bf16 %v2178, %v2177
        %v2244 = vpack.c.bf16 %v2180, %v2179
        %v2245 = vpack.c.bf16 %v2182, %v2181
        %v2246 = vpack.c.bf16 %v2184, %v2183
        %v2247 = vpack.c.bf16 %v2186, %v2185
        %v2248 = vpack.c.bf16 %v2188, %v2187
        %2309 = vrot.lane.b32.xlu0 %v2189, 12
        %v2310 = vpop.permute.xlu0 %2309
        %2311 = vrot.lane.b32.xlu0 %v2190, 12
        %v2312 = vpop.permute.xlu0 %2311
        %2313 = vrot.lane.b32.xlu0 %v2191, 12
        %v2314 = vpop.permute.xlu0 %2313
        %2315 = vrot.lane.b32.xlu0 %v2192, 12
        %v2316 = vpop.permute.xlu0 %2315
        %2317 = vrot.lane.b32.xlu0 %v2193, 12
        %v2318 = vpop.permute.xlu0 %2317
        %2319 = vrot.lane.b32.xlu0 %v2194, 12
        %v2320 = vpop.permute.xlu0 %2319
        %2321 = vrot.lane.b32.xlu0 %v2195, 12
        %v2322 = vpop.permute.xlu0 %2321
        %2323 = vrot.lane.b32.xlu0 %v2196, 12
        %v2324 = vpop.permute.xlu0 %2323
        %2325 = vrot.lane.b32.xlu0 %v2197, 12
        %v2326 = vpop.permute.xlu0 %2325
        %2327 = vrot.lane.b32.xlu0 %v2198, 12
        %v2328 = vpop.permute.xlu0 %2327
        %2329 = vrot.lane.b32.xlu0 %v2199, 12
        %v2330 = vpop.permute.xlu0 %2329
        %2331 = vrot.lane.b32.xlu0 %v2200, 12
        %v2332 = vpop.permute.xlu0 %2331
        %2333 = vrot.lane.b32.xlu0 %v2201, 12
        %v2334 = vpop.permute.xlu0 %2333
        %2335 = vrot.lane.b32.xlu0 %v2202, 12
        %v2336 = vpop.permute.xlu0 %2335
        %2337 = vrot.lane.b32.xlu0 %v2203, 12
        %v2338 = vpop.permute.xlu0 %2337
        %2339 = vrot.lane.b32.xlu0 %v2204, 12
        %v2340 = vpop.permute.xlu0 %2339
        %2341 = vrot.lane.b32.xlu0 %v2205, 12
        %v2342 = vpop.permute.xlu0 %2341
        %2343 = vrot.lane.b32.xlu0 %v2206, 12
        %v2344 = vpop.permute.xlu0 %2343
        %2345 = vrot.lane.b32.xlu0 %v2207, 12
        %v2346 = vpop.permute.xlu0 %2345
        %2347 = vrot.lane.b32.xlu0 %v2208, 12
        %v2348 = vpop.permute.xlu0 %2347
        %2349 = vrot.lane.b32.xlu0 %v2209, 12
        %v2350 = vpop.permute.xlu0 %2349
        %2351 = vrot.lane.b32.xlu0 %v2210, 12
        %v2352 = vpop.permute.xlu0 %2351
        %2353 = vrot.lane.b32.xlu0 %v2211, 12
        %v2354 = vpop.permute.xlu0 %2353
        %2355 = vrot.lane.b32.xlu0 %v2212, 12
        %v2356 = vpop.permute.xlu0 %2355
        %2357 = vrot.lane.b32.xlu0 %v2213, 12
        %v2358 = vpop.permute.xlu0 %2357
        %2359 = vrot.lane.b32.xlu0 %v2214, 12
        %v2360 = vpop.permute.xlu0 %2359
        %2361 = vrot.lane.b32.xlu0 %v2215, 12
        %v2362 = vpop.permute.xlu0 %2361
        %2363 = vrot.lane.b32.xlu0 %v2216, 12
        %v2364 = vpop.permute.xlu0 %2363
        %2365 = vrot.lane.b32.xlu0 %v2217, 12
        %v2366 = vpop.permute.xlu0 %2365
        %2367 = vrot.lane.b32.xlu0 %v2218, 12
        %v2368 = vpop.permute.xlu0 %2367
        %2369 = vrot.lane.b32.xlu0 %v2219, 12
        %v2370 = vpop.permute.xlu0 %2369
        %2371 = vrot.lane.b32.xlu0 %v2220, 12
        %v2372 = vpop.permute.xlu0 %2371
        %2373 = vrot.lane.b32.xlu0 %v2221, 12
        %v2374 = vpop.permute.xlu0 %2373
        %2375 = vrot.lane.b32.xlu0 %v2222, 12
        %v2376 = vpop.permute.xlu0 %2375
        %2377 = vrot.lane.b32.xlu0 %v2223, 12
        %v2378 = vpop.permute.xlu0 %2377
        %2379 = vrot.lane.b32.xlu0 %v2224, 12
        %v2380 = vpop.permute.xlu0 %2379
        %2381 = vrot.lane.b32.xlu0 %v2225, 12
        %v2382 = vpop.permute.xlu0 %2381
        %2383 = vrot.lane.b32.xlu0 %v2226, 12
        %v2384 = vpop.permute.xlu0 %2383
        %2385 = vrot.lane.b32.xlu0 %v2227, 12
        %v2386 = vpop.permute.xlu0 %2385
        %2387 = vrot.lane.b32.xlu0 %v2228, 12
        %v2388 = vpop.permute.xlu0 %2387
        %2389 = vrot.lane.b32.xlu0 %v2229, 12
        %v2390 = vpop.permute.xlu0 %2389
        %2391 = vrot.lane.b32.xlu0 %v2230, 12
        %v2392 = vpop.permute.xlu0 %2391
        %2393 = vrot.lane.b32.xlu0 %v2231, 12
        %v2394 = vpop.permute.xlu0 %2393
        %2395 = vrot.lane.b32.xlu0 %v2232, 12
        %v2396 = vpop.permute.xlu0 %2395
        %2397 = vrot.lane.b32.xlu0 %v2233, 12
        %v2398 = vpop.permute.xlu0 %2397
        %2399 = vrot.lane.b32.xlu0 %v2234, 12
        %v2400 = vpop.permute.xlu0 %2399
        %2401 = vrot.lane.b32.xlu0 %v2235, 12
        %v2402 = vpop.permute.xlu0 %2401
        %2403 = vrot.lane.b32.xlu0 %v2236, 12
        %v2404 = vpop.permute.xlu0 %2403
        %2405 = vrot.lane.b32.xlu0 %v2237, 12
        %v2406 = vpop.permute.xlu0 %2405
        %2407 = vrot.lane.b32.xlu0 %v2238, 12
        %v2408 = vpop.permute.xlu0 %2407
        %2409 = vrot.lane.b32.xlu0 %v2239, 12
        %v2410 = vpop.permute.xlu0 %2409
        %2411 = vrot.lane.b32.xlu0 %v2240, 12
        %v2412 = vpop.permute.xlu0 %2411
        %2413 = vrot.lane.b32.xlu0 %v2241, 12
        %v2414 = vpop.permute.xlu0 %2413
        %2415 = vrot.lane.b32.xlu0 %v2242, 12
        %v2416 = vpop.permute.xlu0 %2415
        %2417 = vrot.lane.b32.xlu0 %v2243, 12
        %v2418 = vpop.permute.xlu0 %2417
        %2419 = vrot.lane.b32.xlu0 %v2244, 12
        %v2420 = vpop.permute.xlu0 %2419
        %2421 = vrot.lane.b32.xlu0 %v2245, 12
        %v2422 = vpop.permute.xlu0 %2421
        %2423 = vrot.lane.b32.xlu0 %v2246, 12
        %v2424 = vpop.permute.xlu0 %2423
        %2425 = vrot.lane.b32.xlu0 %v2247, 12
        %v2426 = vpop.permute.xlu0 %2425
        %2427 = vrot.lane.b32.xlu0 %v2248, 12
        %v2428 = vpop.permute.xlu0 %2427
        %vm2489 = vcmask 121952
        %2490 = vst.msk [vmem:[#allocation2] sm:$0xff] %vm2489, %v2310
        %2491 = vst.msk [vmem:[#allocation2 + $0x8] sm:$0xff] %vm2489, %v2312
        %2492 = vst.msk [vmem:[#allocation2 + $0x10] sm:$0xff] %vm2489, %v2314
        %2493 = vst.msk [vmem:[#allocation2 + $0x18] sm:$0xff] %vm2489, %v2316
        %2494 = vst.msk [vmem:[#allocation2 + $0x20] sm:$0xff] %vm2489, %v2318
        %2495 = vst.msk [vmem:[#allocation2 + $0x28] sm:$0xff] %vm2489, %v2320
        %2496 = vst.msk [vmem:[#allocation2 + $0x30] sm:$0xff] %vm2489, %v2322
        %2497 = vst.msk [vmem:[#allocation2 + $0x38] sm:$0xff] %vm2489, %v2324
        %2498 = vst.msk [vmem:[#allocation2 + $0x40] sm:$0xff] %vm2489, %v2326
        %2499 = vst.msk [vmem:[#allocation2 + $0x48] sm:$0xff] %vm2489, %v2328
        %2500 = vst.msk [vmem:[#allocation2 + $0x50] sm:$0xff] %vm2489, %v2330
        %2501 = vst.msk [vmem:[#allocation2 + $0x58] sm:$0xff] %vm2489, %v2332
        %2502 = vst.msk [vmem:[#allocation2 + $0x60] sm:$0xff] %vm2489, %v2334
        %2503 = vst.msk [vmem:[#allocation2 + $0x68] sm:$0xff] %vm2489, %v2336
        %2504 = vst.msk [vmem:[#allocation2 + $0x70] sm:$0xff] %vm2489, %v2338
        %2505 = vst.msk [vmem:[#allocation2 + $0x78] sm:$0xff] %vm2489, %v2340
        %2506 = vst.msk [vmem:[#allocation2 + $0x80] sm:$0xff] %vm2489, %v2342
        %2507 = vst.msk [vmem:[#allocation2 + $0x88] sm:$0xff] %vm2489, %v2344
        %2508 = vst.msk [vmem:[#allocation2 + $0x90] sm:$0xff] %vm2489, %v2346
        %2509 = vst.msk [vmem:[#allocation2 + $0x98] sm:$0xff] %vm2489, %v2348
        %2510 = vst.msk [vmem:[#allocation2 + $0xa0] sm:$0xff] %vm2489, %v2350
        %2511 = vst.msk [vmem:[#allocation2 + $0xa8] sm:$0xff] %vm2489, %v2352
        %2512 = vst.msk [vmem:[#allocation2 + $0xb0] sm:$0xff] %vm2489, %v2354
        %2513 = vst.msk [vmem:[#allocation2 + $0xb8] sm:$0xff] %vm2489, %v2356
        %2514 = vst.msk [vmem:[#allocation2 + $0xc0] sm:$0xff] %vm2489, %v2358
        %2515 = vst.msk [vmem:[#allocation2 + $0xc8] sm:$0xff] %vm2489, %v2360
        %2516 = vst.msk [vmem:[#allocation2 + $0xd0] sm:$0xff] %vm2489, %v2362
        %2517 = vst.msk [vmem:[#allocation2 + $0xd8] sm:$0xff] %vm2489, %v2364
        %2518 = vst.msk [vmem:[#allocation2 + $0xe0] sm:$0xff] %vm2489, %v2366
        %2519 = vst.msk [vmem:[#allocation2 + $0xe8] sm:$0xff] %vm2489, %v2368
        %2520 = vst.msk [vmem:[#allocation2 + $0xf0] sm:$0xff] %vm2489, %v2370
        %2521 = vst.msk [vmem:[#allocation2 + $0xf8] sm:$0xff] %vm2489, %v2372
        %2522 = vst.msk [vmem:[#allocation2 + $0x100] sm:$0xff] %vm2489, %v2374
        %2523 = vst.msk [vmem:[#allocation2 + $0x108] sm:$0xff] %vm2489, %v2376
        %2524 = vst.msk [vmem:[#allocation2 + $0x110] sm:$0xff] %vm2489, %v2378
        %2525 = vst.msk [vmem:[#allocation2 + $0x118] sm:$0xff] %vm2489, %v2380
        %2526 = vst.msk [vmem:[#allocation2 + $0x120] sm:$0xff] %vm2489, %v2382
        %2527 = vst.msk [vmem:[#allocation2 + $0x128] sm:$0xff] %vm2489, %v2384
        %2528 = vst.msk [vmem:[#allocation2 + $0x130] sm:$0xff] %vm2489, %v2386
        %2529 = vst.msk [vmem:[#allocation2 + $0x138] sm:$0xff] %vm2489, %v2388
        %2530 = vst.msk [vmem:[#allocation2 + $0x140] sm:$0xff] %vm2489, %v2390
        %2531 = vst.msk [vmem:[#allocation2 + $0x148] sm:$0xff] %vm2489, %v2392
        %2532 = vst.msk [vmem:[#allocation2 + $0x150] sm:$0xff] %vm2489, %v2394
        %2533 = vst.msk [vmem:[#allocation2 + $0x158] sm:$0xff] %vm2489, %v2396
        %2534 = vst.msk [vmem:[#allocation2 + $0x160] sm:$0xff] %vm2489, %v2398
        %2535 = vst.msk [vmem:[#allocation2 + $0x168] sm:$0xff] %vm2489, %v2400
        %2536 = vst.msk [vmem:[#allocation2 + $0x170] sm:$0xff] %vm2489, %v2402
        %2537 = vst.msk [vmem:[#allocation2 + $0x178] sm:$0xff] %vm2489, %v2404
        %2538 = vst.msk [vmem:[#allocation2 + $0x180] sm:$0xff] %vm2489, %v2406
        %2539 = vst.msk [vmem:[#allocation2 + $0x188] sm:$0xff] %vm2489, %v2408
        %2540 = vst.msk [vmem:[#allocation2 + $0x190] sm:$0xff] %vm2489, %v2410
        %2541 = vst.msk [vmem:[#allocation2 + $0x198] sm:$0xff] %vm2489, %v2412
        %2542 = vst.msk [vmem:[#allocation2 + $0x1a0] sm:$0xff] %vm2489, %v2414
        %2543 = vst.msk [vmem:[#allocation2 + $0x1a8] sm:$0xff] %vm2489, %v2416
        %2544 = vst.msk [vmem:[#allocation2 + $0x1b0] sm:$0xff] %vm2489, %v2418
        %2545 = vst.msk [vmem:[#allocation2 + $0x1b8] sm:$0xff] %vm2489, %v2420
        %2546 = vst.msk [vmem:[#allocation2 + $0x1c0] sm:$0xff] %vm2489, %v2422
        %2547 = vst.msk [vmem:[#allocation2 + $0x1c8] sm:$0xff] %vm2489, %v2424
        %2548 = vst.msk [vmem:[#allocation2 + $0x1d0] sm:$0xff] %vm2489, %v2426
        %2549 = vst.msk [vmem:[#allocation2 + $0x1d8] sm:$0xff] %vm2489, %v2428
        %v2550 = vld [vmem:[%s383 + $0x22] sm:$0xff]
        %v2551 = vld [vmem:[%s383 + $0x2a] sm:$0xff]
        %v2552 = vld [vmem:[%s383 + $0x32] sm:$0xff]
        %v2553 = vld [vmem:[%s383 + $0x3a] sm:$0xff]
        %v2554 = vld [vmem:[%s383 + $0x42] sm:$0xff]
        %v2555 = vld [vmem:[%s383 + $0x4a] sm:$0xff]
        %v2556 = vld [vmem:[%s383 + $0x52] sm:$0xff]
        %v2557 = vld [vmem:[%s383 + $0x5a] sm:$0xff]
        %v2558 = vld [vmem:[%s383 + $0x62] sm:$0xff]
        %v2559 = vld [vmem:[%s383 + $0x6a] sm:$0xff]
        %v2560 = vld [vmem:[%s383 + $0x72] sm:$0xff]
        %v2561 = vld [vmem:[%s383 + $0x7a] sm:$0xff]
        %v2562 = vld [vmem:[%s383 + $0x82] sm:$0xff]
        %v2563 = vld [vmem:[%s383 + $0x8a] sm:$0xff]
        %v2564 = vld [vmem:[%s383 + $0x92] sm:$0xff]
        %v2565 = vld [vmem:[%s383 + $0x9a] sm:$0xff]
        %v2566 = vld [vmem:[%s383 + $0xa2] sm:$0xff]
        %v2567 = vld [vmem:[%s383 + $0xaa] sm:$0xff]
        %v2568 = vld [vmem:[%s383 + $0xb2] sm:$0xff]
        %v2569 = vld [vmem:[%s383 + $0xba] sm:$0xff]
        %v2570 = vld [vmem:[%s383 + $0xc2] sm:$0xff]
        %v2571 = vld [vmem:[%s383 + $0xca] sm:$0xff]
        %v2572 = vld [vmem:[%s383 + $0xd2] sm:$0xff]
        %v2573 = vld [vmem:[%s383 + $0xda] sm:$0xff]
        %v2574 = vld [vmem:[%s383 + $0xe2] sm:$0xff]
        %v2575 = vld [vmem:[%s383 + $0xea] sm:$0xff]
        %v2576 = vld [vmem:[%s383 + $0xf2] sm:$0xff]
        %v2577 = vld [vmem:[%s383 + $0xfa] sm:$0xff]
        %v2578 = vld [vmem:[%s383 + $0x102] sm:$0xff]
        %v2579 = vld [vmem:[%s383 + $0x10a] sm:$0xff]
        %v2580 = vld [vmem:[%s383 + $0x112] sm:$0xff]
        %v2581 = vld [vmem:[%s383 + $0x11a] sm:$0xff]
        %v2582 = vld [vmem:[%s383 + $0x122] sm:$0xff]
        %v2583 = vld [vmem:[%s383 + $0x12a] sm:$0xff]
        %v2584 = vld [vmem:[%s383 + $0x132] sm:$0xff]
        %v2585 = vld [vmem:[%s383 + $0x13a] sm:$0xff]
        %v2586 = vld [vmem:[%s383 + $0x142] sm:$0xff]
        %v2587 = vld [vmem:[%s383 + $0x14a] sm:$0xff]
        %v2588 = vld [vmem:[%s383 + $0x152] sm:$0xff]
        %v2589 = vld [vmem:[%s383 + $0x15a] sm:$0xff]
        %v2590 = vld [vmem:[%s383 + $0x162] sm:$0xff]
        %v2591 = vld [vmem:[%s383 + $0x16a] sm:$0xff]
        %v2592 = vld [vmem:[%s383 + $0x172] sm:$0xff]
        %v2593 = vld [vmem:[%s383 + $0x17a] sm:$0xff]
        %v2594 = vld [vmem:[%s383 + $0x182] sm:$0xff]
        %v2595 = vld [vmem:[%s383 + $0x18a] sm:$0xff]
        %v2596 = vld [vmem:[%s383 + $0x192] sm:$0xff]
        %v2597 = vld [vmem:[%s383 + $0x19a] sm:$0xff]
        %v2598 = vld [vmem:[%s383 + $0x1a2] sm:$0xff]
        %v2599 = vld [vmem:[%s383 + $0x1aa] sm:$0xff]
        %v2600 = vld [vmem:[%s383 + $0x1b2] sm:$0xff]
        %v2601 = vld [vmem:[%s383 + $0x1ba] sm:$0xff]
        %v2602 = vld [vmem:[%s383 + $0x1c2] sm:$0xff]
        %v2603 = vld [vmem:[%s383 + $0x1ca] sm:$0xff]
        %v2604 = vld [vmem:[%s383 + $0x1d2] sm:$0xff]
        %v2605 = vld [vmem:[%s383 + $0x1da] sm:$0xff]
        %v2606 = vld [vmem:[%s383 + $0x1e2] sm:$0xff]
        %v2607 = vld [vmem:[%s383 + $0x1ea] sm:$0xff]
        %v2608 = vld [vmem:[%s383 + $0x1f2] sm:$0xff]
        %v2609 = vld [vmem:[%s383 + $0x1fa] sm:$0xff]
        %v2610 = vld [vmem:[%s383 + $0x202] sm:$0xff]
        %v2611 = vld [vmem:[%s383 + $0x20a] sm:$0xff]
        %v2612 = vld [vmem:[%s383 + $0x212] sm:$0xff]
        %v2613 = vld [vmem:[%s383 + $0x21a] sm:$0xff]
        %v2614 = vld [vmem:[%s383 + $0x222] sm:$0xff]
        %v2615 = vld [vmem:[%s383 + $0x22a] sm:$0xff]
        %v2616 = vld [vmem:[%s383 + $0x232] sm:$0xff]
        %v2617 = vld [vmem:[%s383 + $0x23a] sm:$0xff]
        %v2618 = vld [vmem:[%s383 + $0x242] sm:$0xff]
        %v2619 = vld [vmem:[%s383 + $0x24a] sm:$0xff]
        %v2620 = vld [vmem:[%s383 + $0x252] sm:$0xff]
        %v2621 = vld [vmem:[%s383 + $0x25a] sm:$0xff]
        %v2622 = vld [vmem:[%s383 + $0x262] sm:$0xff]
        %v2623 = vld [vmem:[%s383 + $0x26a] sm:$0xff]
        %v2624 = vld [vmem:[%s383 + $0x272] sm:$0xff]
        %v2625 = vld [vmem:[%s383 + $0x27a] sm:$0xff]
        %v2626 = vld [vmem:[%s383 + $0x282] sm:$0xff]
        %v2627 = vld [vmem:[%s383 + $0x28a] sm:$0xff]
        %v2628 = vld [vmem:[%s383 + $0x292] sm:$0xff]
        %v2629 = vld [vmem:[%s383 + $0x29a] sm:$0xff]
        %v2630 = vld [vmem:[%s383 + $0x2a2] sm:$0xff]
        %v2631 = vld [vmem:[%s383 + $0x2aa] sm:$0xff]
        %v2632 = vld [vmem:[%s383 + $0x2b2] sm:$0xff]
        %v2633 = vld [vmem:[%s383 + $0x2ba] sm:$0xff]
        %v2634 = vld [vmem:[%s383 + $0x2c2] sm:$0xff]
        %v2635 = vld [vmem:[%s383 + $0x2ca] sm:$0xff]
        %v2636 = vld [vmem:[%s383 + $0x2d2] sm:$0xff]
        %v2637 = vld [vmem:[%s383 + $0x2da] sm:$0xff]
        %v2638 = vld [vmem:[%s383 + $0x2e2] sm:$0xff]
        %v2639 = vld [vmem:[%s383 + $0x2ea] sm:$0xff]
        %v2640 = vld [vmem:[%s383 + $0x2f2] sm:$0xff]
        %v2641 = vld [vmem:[%s383 + $0x2fa] sm:$0xff]
        %v2642 = vld [vmem:[%s383 + $0x302] sm:$0xff]
        %v2643 = vld [vmem:[%s383 + $0x30a] sm:$0xff]
        %v2644 = vld [vmem:[%s383 + $0x312] sm:$0xff]
        %v2645 = vld [vmem:[%s383 + $0x31a] sm:$0xff]
        %v2646 = vld [vmem:[%s383 + $0x322] sm:$0xff]
        %v2647 = vld [vmem:[%s383 + $0x32a] sm:$0xff]
        %v2648 = vld [vmem:[%s383 + $0x332] sm:$0xff]
        %v2649 = vld [vmem:[%s383 + $0x33a] sm:$0xff]
        %v2650 = vld [vmem:[%s383 + $0x342] sm:$0xff]
        %v2651 = vld [vmem:[%s383 + $0x34a] sm:$0xff]
        %v2652 = vld [vmem:[%s383 + $0x352] sm:$0xff]
        %v2653 = vld [vmem:[%s383 + $0x35a] sm:$0xff]
        %v2654 = vld [vmem:[%s383 + $0x362] sm:$0xff]
        %v2655 = vld [vmem:[%s383 + $0x36a] sm:$0xff]
        %v2656 = vld [vmem:[%s383 + $0x372] sm:$0xff]
        %v2657 = vld [vmem:[%s383 + $0x37a] sm:$0xff]
        %v2658 = vld [vmem:[%s383 + $0x382] sm:$0xff]
        %v2659 = vld [vmem:[%s383 + $0x38a] sm:$0xff]
        %v2660 = vld [vmem:[%s383 + $0x392] sm:$0xff]
        %v2661 = vld [vmem:[%s383 + $0x39a] sm:$0xff]
        %v2662 = vld [vmem:[%s383 + $0x3a2] sm:$0xff]
        %v2663 = vld [vmem:[%s383 + $0x3aa] sm:$0xff]
        %v2664 = vld [vmem:[%s383 + $0x3b2] sm:$0xff]
        %v2665 = vld [vmem:[%s383 + $0x3ba] sm:$0xff]
        %v2666 = vld [vmem:[%s383 + $0x3c2] sm:$0xff]
        %v2667 = vld [vmem:[%s383 + $0x3ca] sm:$0xff]
        %v2668 = vld [vmem:[%s383 + $0x3d2] sm:$0xff]
        %v2669 = vld [vmem:[%s383 + $0x3da] sm:$0xff]
        %v2670 = vpack.c.bf16 %v2551, %v2550
        %v2671 = vpack.c.bf16 %v2553, %v2552
        %v2672 = vpack.c.bf16 %v2555, %v2554
        %v2673 = vpack.c.bf16 %v2557, %v2556
        %v2674 = vpack.c.bf16 %v2559, %v2558
        %v2675 = vpack.c.bf16 %v2561, %v2560
        %v2676 = vpack.c.bf16 %v2563, %v2562
        %v2677 = vpack.c.bf16 %v2565, %v2564
        %v2678 = vpack.c.bf16 %v2567, %v2566
        %v2679 = vpack.c.bf16 %v2569, %v2568
        %v2680 = vpack.c.bf16 %v2571, %v2570
        %v2681 = vpack.c.bf16 %v2573, %v2572
        %v2682 = vpack.c.bf16 %v2575, %v2574
        %v2683 = vpack.c.bf16 %v2577, %v2576
        %v2684 = vpack.c.bf16 %v2579, %v2578
        %v2685 = vpack.c.bf16 %v2581, %v2580
        %v2686 = vpack.c.bf16 %v2583, %v2582
        %v2687 = vpack.c.bf16 %v2585, %v2584
        %v2688 = vpack.c.bf16 %v2587, %v2586
        %v2689 = vpack.c.bf16 %v2589, %v2588
        %v2690 = vpack.c.bf16 %v2591, %v2590
        %v2691 = vpack.c.bf16 %v2593, %v2592
        %v2692 = vpack.c.bf16 %v2595, %v2594
        %v2693 = vpack.c.bf16 %v2597, %v2596
        %v2694 = vpack.c.bf16 %v2599, %v2598
        %v2695 = vpack.c.bf16 %v2601, %v2600
        %v2696 = vpack.c.bf16 %v2603, %v2602
        %v2697 = vpack.c.bf16 %v2605, %v2604
        %v2698 = vpack.c.bf16 %v2607, %v2606
        %v2699 = vpack.c.bf16 %v2609, %v2608
        %v2700 = vpack.c.bf16 %v2611, %v2610
        %v2701 = vpack.c.bf16 %v2613, %v2612
        %v2702 = vpack.c.bf16 %v2615, %v2614
        %v2703 = vpack.c.bf16 %v2617, %v2616
        %v2704 = vpack.c.bf16 %v2619, %v2618
        %v2705 = vpack.c.bf16 %v2621, %v2620
        %v2706 = vpack.c.bf16 %v2623, %v2622
        %v2707 = vpack.c.bf16 %v2625, %v2624
        %v2708 = vpack.c.bf16 %v2627, %v2626
        %v2709 = vpack.c.bf16 %v2629, %v2628
        %v2710 = vpack.c.bf16 %v2631, %v2630
        %v2711 = vpack.c.bf16 %v2633, %v2632
        %v2712 = vpack.c.bf16 %v2635, %v2634
        %v2713 = vpack.c.bf16 %v2637, %v2636
        %v2714 = vpack.c.bf16 %v2639, %v2638
        %v2715 = vpack.c.bf16 %v2641, %v2640
        %v2716 = vpack.c.bf16 %v2643, %v2642
        %v2717 = vpack.c.bf16 %v2645, %v2644
        %v2718 = vpack.c.bf16 %v2647, %v2646
        %v2719 = vpack.c.bf16 %v2649, %v2648
        %v2720 = vpack.c.bf16 %v2651, %v2650
        %v2721 = vpack.c.bf16 %v2653, %v2652
        %v2722 = vpack.c.bf16 %v2655, %v2654
        %v2723 = vpack.c.bf16 %v2657, %v2656
        %v2724 = vpack.c.bf16 %v2659, %v2658
        %v2725 = vpack.c.bf16 %v2661, %v2660
        %v2726 = vpack.c.bf16 %v2663, %v2662
        %v2727 = vpack.c.bf16 %v2665, %v2664
        %v2728 = vpack.c.bf16 %v2667, %v2666
        %v2729 = vpack.c.bf16 %v2669, %v2668
        %2790 = vrot.lane.b32.xlu0 %v2670, 15
        %v2791 = vpop.permute.xlu0 %2790
        %2792 = vrot.lane.b32.xlu0 %v2671, 15
        %v2793 = vpop.permute.xlu0 %2792
        %2794 = vrot.lane.b32.xlu0 %v2672, 15
        %v2795 = vpop.permute.xlu0 %2794
        %2796 = vrot.lane.b32.xlu0 %v2673, 15
        %v2797 = vpop.permute.xlu0 %2796
        %2798 = vrot.lane.b32.xlu0 %v2674, 15
        %v2799 = vpop.permute.xlu0 %2798
        %2800 = vrot.lane.b32.xlu0 %v2675, 15
        %v2801 = vpop.permute.xlu0 %2800
        %2802 = vrot.lane.b32.xlu0 %v2676, 15
        %v2803 = vpop.permute.xlu0 %2802
        %2804 = vrot.lane.b32.xlu0 %v2677, 15
        %v2805 = vpop.permute.xlu0 %2804
        %2806 = vrot.lane.b32.xlu0 %v2678, 15
        %v2807 = vpop.permute.xlu0 %2806
        %2808 = vrot.lane.b32.xlu0 %v2679, 15
        %v2809 = vpop.permute.xlu0 %2808
        %2810 = vrot.lane.b32.xlu0 %v2680, 15
        %v2811 = vpop.permute.xlu0 %2810
        %2812 = vrot.lane.b32.xlu0 %v2681, 15
        %v2813 = vpop.permute.xlu0 %2812
        %2814 = vrot.lane.b32.xlu0 %v2682, 15
        %v2815 = vpop.permute.xlu0 %2814
        %2816 = vrot.lane.b32.xlu0 %v2683, 15
        %v2817 = vpop.permute.xlu0 %2816
        %2818 = vrot.lane.b32.xlu0 %v2684, 15
        %v2819 = vpop.permute.xlu0 %2818
        %2820 = vrot.lane.b32.xlu0 %v2685, 15
        %v2821 = vpop.permute.xlu0 %2820
        %2822 = vrot.lane.b32.xlu0 %v2686, 15
        %v2823 = vpop.permute.xlu0 %2822
        %2824 = vrot.lane.b32.xlu0 %v2687, 15
        %v2825 = vpop.permute.xlu0 %2824
        %2826 = vrot.lane.b32.xlu0 %v2688, 15
        %v2827 = vpop.permute.xlu0 %2826
        %2828 = vrot.lane.b32.xlu0 %v2689, 15
        %v2829 = vpop.permute.xlu0 %2828
        %2830 = vrot.lane.b32.xlu0 %v2690, 15
        %v2831 = vpop.permute.xlu0 %2830
        %2832 = vrot.lane.b32.xlu0 %v2691, 15
        %v2833 = vpop.permute.xlu0 %2832
        %2834 = vrot.lane.b32.xlu0 %v2692, 15
        %v2835 = vpop.permute.xlu0 %2834
        %2836 = vrot.lane.b32.xlu0 %v2693, 15
        %v2837 = vpop.permute.xlu0 %2836
        %2838 = vrot.lane.b32.xlu0 %v2694, 15
        %v2839 = vpop.permute.xlu0 %2838
        %2840 = vrot.lane.b32.xlu0 %v2695, 15
        %v2841 = vpop.permute.xlu0 %2840
        %2842 = vrot.lane.b32.xlu0 %v2696, 15
        %v2843 = vpop.permute.xlu0 %2842
        %2844 = vrot.lane.b32.xlu0 %v2697, 15
        %v2845 = vpop.permute.xlu0 %2844
        %2846 = vrot.lane.b32.xlu0 %v2698, 15
        %v2847 = vpop.permute.xlu0 %2846
        %2848 = vrot.lane.b32.xlu0 %v2699, 15
        %v2849 = vpop.permute.xlu0 %2848
        %2850 = vrot.lane.b32.xlu0 %v2700, 15
        %v2851 = vpop.permute.xlu0 %2850
        %2852 = vrot.lane.b32.xlu0 %v2701, 15
        %v2853 = vpop.permute.xlu0 %2852
        %2854 = vrot.lane.b32.xlu0 %v2702, 15
        %v2855 = vpop.permute.xlu0 %2854
        %2856 = vrot.lane.b32.xlu0 %v2703, 15
        %v2857 = vpop.permute.xlu0 %2856
        %2858 = vrot.lane.b32.xlu0 %v2704, 15
        %v2859 = vpop.permute.xlu0 %2858
        %2860 = vrot.lane.b32.xlu0 %v2705, 15
        %v2861 = vpop.permute.xlu0 %2860
        %2862 = vrot.lane.b32.xlu0 %v2706, 15
        %v2863 = vpop.permute.xlu0 %2862
        %2864 = vrot.lane.b32.xlu0 %v2707, 15
        %v2865 = vpop.permute.xlu0 %2864
        %2866 = vrot.lane.b32.xlu0 %v2708, 15
        %v2867 = vpop.permute.xlu0 %2866
        %2868 = vrot.lane.b32.xlu0 %v2709, 15
        %v2869 = vpop.permute.xlu0 %2868
        %2870 = vrot.lane.b32.xlu0 %v2710, 15
        %v2871 = vpop.permute.xlu0 %2870
        %2872 = vrot.lane.b32.xlu0 %v2711, 15
        %v2873 = vpop.permute.xlu0 %2872
        %2874 = vrot.lane.b32.xlu0 %v2712, 15
        %v2875 = vpop.permute.xlu0 %2874
        %2876 = vrot.lane.b32.xlu0 %v2713, 15
        %v2877 = vpop.permute.xlu0 %2876
        %2878 = vrot.lane.b32.xlu0 %v2714, 15
        %v2879 = vpop.permute.xlu0 %2878
        %2880 = vrot.lane.b32.xlu0 %v2715, 15
        %v2881 = vpop.permute.xlu0 %2880
        %2882 = vrot.lane.b32.xlu0 %v2716, 15
        %v2883 = vpop.permute.xlu0 %2882
        %2884 = vrot.lane.b32.xlu0 %v2717, 15
        %v2885 = vpop.permute.xlu0 %2884
        %2886 = vrot.lane.b32.xlu0 %v2718, 15
        %v2887 = vpop.permute.xlu0 %2886
        %2888 = vrot.lane.b32.xlu0 %v2719, 15
        %v2889 = vpop.permute.xlu0 %2888
        %2890 = vrot.lane.b32.xlu0 %v2720, 15
        %v2891 = vpop.permute.xlu0 %2890
        %2892 = vrot.lane.b32.xlu0 %v2721, 15
        %v2893 = vpop.permute.xlu0 %2892
        %2894 = vrot.lane.b32.xlu0 %v2722, 15
        %v2895 = vpop.permute.xlu0 %2894
        %2896 = vrot.lane.b32.xlu0 %v2723, 15
        %v2897 = vpop.permute.xlu0 %2896
        %2898 = vrot.lane.b32.xlu0 %v2724, 15
        %v2899 = vpop.permute.xlu0 %2898
        %2900 = vrot.lane.b32.xlu0 %v2725, 15
        %v2901 = vpop.permute.xlu0 %2900
        %2902 = vrot.lane.b32.xlu0 %v2726, 15
        %v2903 = vpop.permute.xlu0 %2902
        %2904 = vrot.lane.b32.xlu0 %v2727, 15
        %v2905 = vpop.permute.xlu0 %2904
        %2906 = vrot.lane.b32.xlu0 %v2728, 15
        %v2907 = vpop.permute.xlu0 %2906
        %2908 = vrot.lane.b32.xlu0 %v2729, 15
        %v2909 = vpop.permute.xlu0 %2908
        %vm2970 = vcmask 146552
        %2971 = vst.msk [vmem:[#allocation2] sm:$0xff] %vm2970, %v2791
        %2972 = vst.msk [vmem:[#allocation2 + $0x8] sm:$0xff] %vm2970, %v2793
        %2973 = vst.msk [vmem:[#allocation2 + $0x10] sm:$0xff] %vm2970, %v2795
        %2974 = vst.msk [vmem:[#allocation2 + $0x18] sm:$0xff] %vm2970, %v2797
        %2975 = vst.msk [vmem:[#allocation2 + $0x20] sm:$0xff] %vm2970, %v2799
        %2976 = vst.msk [vmem:[#allocation2 + $0x28] sm:$0xff] %vm2970, %v2801
        %2977 = vst.msk [vmem:[#allocation2 + $0x30] sm:$0xff] %vm2970, %v2803
        %2978 = vst.msk [vmem:[#allocation2 + $0x38] sm:$0xff] %vm2970, %v2805
        %2979 = vst.msk [vmem:[#allocation2 + $0x40] sm:$0xff] %vm2970, %v2807
        %2980 = vst.msk [vmem:[#allocation2 + $0x48] sm:$0xff] %vm2970, %v2809
        %2981 = vst.msk [vmem:[#allocation2 + $0x50] sm:$0xff] %vm2970, %v2811
        %2982 = vst.msk [vmem:[#allocation2 + $0x58] sm:$0xff] %vm2970, %v2813
        %2983 = vst.msk [vmem:[#allocation2 + $0x60] sm:$0xff] %vm2970, %v2815
        %2984 = vst.msk [vmem:[#allocation2 + $0x68] sm:$0xff] %vm2970, %v2817
        %2985 = vst.msk [vmem:[#allocation2 + $0x70] sm:$0xff] %vm2970, %v2819
        %2986 = vst.msk [vmem:[#allocation2 + $0x78] sm:$0xff] %vm2970, %v2821
        %2987 = vst.msk [vmem:[#allocation2 + $0x80] sm:$0xff] %vm2970, %v2823
        %2988 = vst.msk [vmem:[#allocation2 + $0x88] sm:$0xff] %vm2970, %v2825
        %2989 = vst.msk [vmem:[#allocation2 + $0x90] sm:$0xff] %vm2970, %v2827
        %2990 = vst.msk [vmem:[#allocation2 + $0x98] sm:$0xff] %vm2970, %v2829
        %2991 = vst.msk [vmem:[#allocation2 + $0xa0] sm:$0xff] %vm2970, %v2831
        %2992 = vst.msk [vmem:[#allocation2 + $0xa8] sm:$0xff] %vm2970, %v2833
        %2993 = vst.msk [vmem:[#allocation2 + $0xb0] sm:$0xff] %vm2970, %v2835
        %2994 = vst.msk [vmem:[#allocation2 + $0xb8] sm:$0xff] %vm2970, %v2837
        %2995 = vst.msk [vmem:[#allocation2 + $0xc0] sm:$0xff] %vm2970, %v2839
        %2996 = vst.msk [vmem:[#allocation2 + $0xc8] sm:$0xff] %vm2970, %v2841
        %2997 = vst.msk [vmem:[#allocation2 + $0xd0] sm:$0xff] %vm2970, %v2843
        %2998 = vst.msk [vmem:[#allocation2 + $0xd8] sm:$0xff] %vm2970, %v2845
        %2999 = vst.msk [vmem:[#allocation2 + $0xe0] sm:$0xff] %vm2970, %v2847
        %3000 = vst.msk [vmem:[#allocation2 + $0xe8] sm:$0xff] %vm2970, %v2849
        %3001 = vst.msk [vmem:[#allocation2 + $0xf0] sm:$0xff] %vm2970, %v2851
        %3002 = vst.msk [vmem:[#allocation2 + $0xf8] sm:$0xff] %vm2970, %v2853
        %3003 = vst.msk [vmem:[#allocation2 + $0x100] sm:$0xff] %vm2970, %v2855
        %3004 = vst.msk [vmem:[#allocation2 + $0x108] sm:$0xff] %vm2970, %v2857
        %3005 = vst.msk [vmem:[#allocation2 + $0x110] sm:$0xff] %vm2970, %v2859
        %3006 = vst.msk [vmem:[#allocation2 + $0x118] sm:$0xff] %vm2970, %v2861
        %3007 = vst.msk [vmem:[#allocation2 + $0x120] sm:$0xff] %vm2970, %v2863
        %3008 = vst.msk [vmem:[#allocation2 + $0x128] sm:$0xff] %vm2970, %v2865
        %3009 = vst.msk [vmem:[#allocation2 + $0x130] sm:$0xff] %vm2970, %v2867
        %3010 = vst.msk [vmem:[#allocation2 + $0x138] sm:$0xff] %vm2970, %v2869
        %3011 = vst.msk [vmem:[#allocation2 + $0x140] sm:$0xff] %vm2970, %v2871
        %3012 = vst.msk [vmem:[#allocation2 + $0x148] sm:$0xff] %vm2970, %v2873
        %3013 = vst.msk [vmem:[#allocation2 + $0x150] sm:$0xff] %vm2970, %v2875
        %3014 = vst.msk [vmem:[#allocation2 + $0x158] sm:$0xff] %vm2970, %v2877
        %3015 = vst.msk [vmem:[#allocation2 + $0x160] sm:$0xff] %vm2970, %v2879
        %3016 = vst.msk [vmem:[#allocation2 + $0x168] sm:$0xff] %vm2970, %v2881
        %3017 = vst.msk [vmem:[#allocation2 + $0x170] sm:$0xff] %vm2970, %v2883
        %3018 = vst.msk [vmem:[#allocation2 + $0x178] sm:$0xff] %vm2970, %v2885
        %3019 = vst.msk [vmem:[#allocation2 + $0x180] sm:$0xff] %vm2970, %v2887
        %3020 = vst.msk [vmem:[#allocation2 + $0x188] sm:$0xff] %vm2970, %v2889
        %3021 = vst.msk [vmem:[#allocation2 + $0x190] sm:$0xff] %vm2970, %v2891
        %3022 = vst.msk [vmem:[#allocation2 + $0x198] sm:$0xff] %vm2970, %v2893
        %3023 = vst.msk [vmem:[#allocation2 + $0x1a0] sm:$0xff] %vm2970, %v2895
        %3024 = vst.msk [vmem:[#allocation2 + $0x1a8] sm:$0xff] %vm2970, %v2897
        %3025 = vst.msk [vmem:[#allocation2 + $0x1b0] sm:$0xff] %vm2970, %v2899
        %3026 = vst.msk [vmem:[#allocation2 + $0x1b8] sm:$0xff] %vm2970, %v2901
        %3027 = vst.msk [vmem:[#allocation2 + $0x1c0] sm:$0xff] %vm2970, %v2903
        %3028 = vst.msk [vmem:[#allocation2 + $0x1c8] sm:$0xff] %vm2970, %v2905
        %3029 = vst.msk [vmem:[#allocation2 + $0x1d0] sm:$0xff] %vm2970, %v2907
        %3030 = vst.msk [vmem:[#allocation2 + $0x1d8] sm:$0xff] %vm2970, %v2909
        %v3031 = vld [vmem:[%s383 + $0x40] sm:$0xff]
        %v3032 = vld [vmem:[%s383 + $0x48] sm:$0xff]
        %v3033 = vld [vmem:[%s383 + $0x50] sm:$0xff]
        %v3034 = vld [vmem:[%s383 + $0x58] sm:$0xff]
        %v3035 = vld [vmem:[%s383 + $0x60] sm:$0xff]
        %v3036 = vld [vmem:[%s383 + $0x68] sm:$0xff]
        %v3037 = vld [vmem:[%s383 + $0x70] sm:$0xff]
        %v3038 = vld [vmem:[%s383 + $0x78] sm:$0xff]
        %v3039 = vld [vmem:[%s383 + $0x80] sm:$0xff]
        %v3040 = vld [vmem:[%s383 + $0x88] sm:$0xff]
        %v3041 = vld [vmem:[%s383 + $0x90] sm:$0xff]
        %v3042 = vld [vmem:[%s383 + $0x98] sm:$0xff]
        %v3043 = vld [vmem:[%s383 + $0xa0] sm:$0xff]
        %v3044 = vld [vmem:[%s383 + $0xa8] sm:$0xff]
        %v3045 = vld [vmem:[%s383 + $0xb0] sm:$0xff]
        %v3046 = vld [vmem:[%s383 + $0xb8] sm:$0xff]
        %v3047 = vld [vmem:[%s383 + $0xc0] sm:$0xff]
        %v3048 = vld [vmem:[%s383 + $0xc8] sm:$0xff]
        %v3049 = vld [vmem:[%s383 + $0xd0] sm:$0xff]
        %v3050 = vld [vmem:[%s383 + $0xd8] sm:$0xff]
        %v3051 = vld [vmem:[%s383 + $0xe0] sm:$0xff]
        %v3052 = vld [vmem:[%s383 + $0xe8] sm:$0xff]
        %v3053 = vld [vmem:[%s383 + $0xf0] sm:$0xff]
        %v3054 = vld [vmem:[%s383 + $0xf8] sm:$0xff]
        %v3055 = vld [vmem:[%s383 + $0x100] sm:$0xff]
        %v3056 = vld [vmem:[%s383 + $0x108] sm:$0xff]
        %v3057 = vld [vmem:[%s383 + $0x110] sm:$0xff]
        %v3058 = vld [vmem:[%s383 + $0x118] sm:$0xff]
        %v3059 = vld [vmem:[%s383 + $0x120] sm:$0xff]
        %v3060 = vld [vmem:[%s383 + $0x128] sm:$0xff]
        %v3061 = vld [vmem:[%s383 + $0x130] sm:$0xff]
        %v3062 = vld [vmem:[%s383 + $0x138] sm:$0xff]
        %v3063 = vld [vmem:[%s383 + $0x140] sm:$0xff]
        %v3064 = vld [vmem:[%s383 + $0x148] sm:$0xff]
        %v3065 = vld [vmem:[%s383 + $0x150] sm:$0xff]
        %v3066 = vld [vmem:[%s383 + $0x158] sm:$0xff]
        %v3067 = vld [vmem:[%s383 + $0x160] sm:$0xff]
        %v3068 = vld [vmem:[%s383 + $0x168] sm:$0xff]
        %v3069 = vld [vmem:[%s383 + $0x170] sm:$0xff]
        %v3070 = vld [vmem:[%s383 + $0x178] sm:$0xff]
        %v3071 = vld [vmem:[%s383 + $0x180] sm:$0xff]
        %v3072 = vld [vmem:[%s383 + $0x188] sm:$0xff]
        %v3073 = vld [vmem:[%s383 + $0x190] sm:$0xff]
        %v3074 = vld [vmem:[%s383 + $0x198] sm:$0xff]
        %v3075 = vld [vmem:[%s383 + $0x1a0] sm:$0xff]
        %v3076 = vld [vmem:[%s383 + $0x1a8] sm:$0xff]
        %v3077 = vld [vmem:[%s383 + $0x1b0] sm:$0xff]
        %v3078 = vld [vmem:[%s383 + $0x1b8] sm:$0xff]
        %v3079 = vld [vmem:[%s383 + $0x1c0] sm:$0xff]
        %v3080 = vld [vmem:[%s383 + $0x1c8] sm:$0xff]
        %v3081 = vld [vmem:[%s383 + $0x1d0] sm:$0xff]
        %v3082 = vld [vmem:[%s383 + $0x1d8] sm:$0xff]
        %v3083 = vld [vmem:[%s383 + $0x1e0] sm:$0xff]
        %v3084 = vld [vmem:[%s383 + $0x1e8] sm:$0xff]
        %v3085 = vld [vmem:[%s383 + $0x1f0] sm:$0xff]
        %v3086 = vld [vmem:[%s383 + $0x1f8] sm:$0xff]
        %v3087 = vld [vmem:[%s383 + $0x200] sm:$0xff]
        %v3088 = vld [vmem:[%s383 + $0x208] sm:$0xff]
        %v3089 = vld [vmem:[%s383 + $0x210] sm:$0xff]
        %v3090 = vld [vmem:[%s383 + $0x218] sm:$0xff]
        %v3091 = vld [vmem:[%s383 + $0x220] sm:$0xff]
        %v3092 = vld [vmem:[%s383 + $0x228] sm:$0xff]
        %v3093 = vld [vmem:[%s383 + $0x230] sm:$0xff]
        %v3094 = vld [vmem:[%s383 + $0x238] sm:$0xff]
        %v3095 = vld [vmem:[%s383 + $0x240] sm:$0xff]
        %v3096 = vld [vmem:[%s383 + $0x248] sm:$0xff]
        %v3097 = vld [vmem:[%s383 + $0x250] sm:$0xff]
        %v3098 = vld [vmem:[%s383 + $0x258] sm:$0xff]
        %v3099 = vld [vmem:[%s383 + $0x260] sm:$0xff]
        %v3100 = vld [vmem:[%s383 + $0x268] sm:$0xff]
        %v3101 = vld [vmem:[%s383 + $0x270] sm:$0xff]
        %v3102 = vld [vmem:[%s383 + $0x278] sm:$0xff]
        %v3103 = vld [vmem:[%s383 + $0x280] sm:$0xff]
        %v3104 = vld [vmem:[%s383 + $0x288] sm:$0xff]
        %v3105 = vld [vmem:[%s383 + $0x290] sm:$0xff]
        %v3106 = vld [vmem:[%s383 + $0x298] sm:$0xff]
        %v3107 = vld [vmem:[%s383 + $0x2a0] sm:$0xff]
        %v3108 = vld [vmem:[%s383 + $0x2a8] sm:$0xff]
        %v3109 = vld [vmem:[%s383 + $0x2b0] sm:$0xff]
        %v3110 = vld [vmem:[%s383 + $0x2b8] sm:$0xff]
        %v3111 = vld [vmem:[%s383 + $0x2c0] sm:$0xff]
        %v3112 = vld [vmem:[%s383 + $0x2c8] sm:$0xff]
        %v3113 = vld [vmem:[%s383 + $0x2d0] sm:$0xff]
        %v3114 = vld [vmem:[%s383 + $0x2d8] sm:$0xff]
        %v3115 = vld [vmem:[%s383 + $0x2e0] sm:$0xff]
        %v3116 = vld [vmem:[%s383 + $0x2e8] sm:$0xff]
        %v3117 = vld [vmem:[%s383 + $0x2f0] sm:$0xff]
        %v3118 = vld [vmem:[%s383 + $0x2f8] sm:$0xff]
        %v3119 = vld [vmem:[%s383 + $0x300] sm:$0xff]
        %v3120 = vld [vmem:[%s383 + $0x308] sm:$0xff]
        %v3121 = vld [vmem:[%s383 + $0x310] sm:$0xff]
        %v3122 = vld [vmem:[%s383 + $0x318] sm:$0xff]
        %v3123 = vld [vmem:[%s383 + $0x320] sm:$0xff]
        %v3124 = vld [vmem:[%s383 + $0x328] sm:$0xff]
        %v3125 = vld [vmem:[%s383 + $0x330] sm:$0xff]
        %v3126 = vld [vmem:[%s383 + $0x338] sm:$0xff]
        %v3127 = vld [vmem:[%s383 + $0x340] sm:$0xff]
        %v3128 = vld [vmem:[%s383 + $0x348] sm:$0xff]
        %v3129 = vld [vmem:[%s383 + $0x350] sm:$0xff]
        %v3130 = vld [vmem:[%s383 + $0x358] sm:$0xff]
        %v3131 = vld [vmem:[%s383 + $0x360] sm:$0xff]
        %v3132 = vld [vmem:[%s383 + $0x368] sm:$0xff]
        %v3133 = vld [vmem:[%s383 + $0x370] sm:$0xff]
        %v3134 = vld [vmem:[%s383 + $0x378] sm:$0xff]
        %v3135 = vld [vmem:[%s383 + $0x380] sm:$0xff]
        %v3136 = vld [vmem:[%s383 + $0x388] sm:$0xff]
        %v3137 = vld [vmem:[%s383 + $0x390] sm:$0xff]
        %v3138 = vld [vmem:[%s383 + $0x398] sm:$0xff]
        %v3139 = vld [vmem:[%s383 + $0x3a0] sm:$0xff]
        %v3140 = vld [vmem:[%s383 + $0x3a8] sm:$0xff]
        %v3141 = vld [vmem:[%s383 + $0x3b0] sm:$0xff]
        %v3142 = vld [vmem:[%s383 + $0x3b8] sm:$0xff]
        %v3143 = vld [vmem:[%s383 + $0x3c0] sm:$0xff]
        %v3144 = vld [vmem:[%s383 + $0x3c8] sm:$0xff]
        %v3145 = vld [vmem:[%s383 + $0x3d0] sm:$0xff]
        %v3146 = vld [vmem:[%s383 + $0x3d8] sm:$0xff]
        %v3147 = vld [vmem:[%s383 + $0x3e0] sm:$0xff]
        %v3148 = vld [vmem:[%s383 + $0x3e8] sm:$0xff]
        %v3149 = vld [vmem:[%s383 + $0x3f0] sm:$0xff]
        %v3150 = vld [vmem:[%s383 + $0x3f8] sm:$0xff]
        %v3151 = vpack.c.bf16 %v3032, %v3031
        %v3152 = vpack.c.bf16 %v3034, %v3033
        %v3153 = vpack.c.bf16 %v3036, %v3035
        %v3154 = vpack.c.bf16 %v3038, %v3037
        %v3155 = vpack.c.bf16 %v3040, %v3039
        %v3156 = vpack.c.bf16 %v3042, %v3041
        %v3157 = vpack.c.bf16 %v3044, %v3043
        %v3158 = vpack.c.bf16 %v3046, %v3045
        %v3159 = vpack.c.bf16 %v3048, %v3047
        %v3160 = vpack.c.bf16 %v3050, %v3049
        %v3161 = vpack.c.bf16 %v3052, %v3051
        %v3162 = vpack.c.bf16 %v3054, %v3053
        %v3163 = vpack.c.bf16 %v3056, %v3055
        %v3164 = vpack.c.bf16 %v3058, %v3057
        %v3165 = vpack.c.bf16 %v3060, %v3059
        %v3166 = vpack.c.bf16 %v3062, %v3061
        %v3167 = vpack.c.bf16 %v3064, %v3063
        %v3168 = vpack.c.bf16 %v3066, %v3065
        %v3169 = vpack.c.bf16 %v3068, %v3067
        %v3170 = vpack.c.bf16 %v3070, %v3069
        %v3171 = vpack.c.bf16 %v3072, %v3071
        %v3172 = vpack.c.bf16 %v3074, %v3073
        %v3173 = vpack.c.bf16 %v3076, %v3075
        %v3174 = vpack.c.bf16 %v3078, %v3077
        %v3175 = vpack.c.bf16 %v3080, %v3079
        %v3176 = vpack.c.bf16 %v3082, %v3081
        %v3177 = vpack.c.bf16 %v3084, %v3083
        %v3178 = vpack.c.bf16 %v3086, %v3085
        %v3179 = vpack.c.bf16 %v3088, %v3087
        %v3180 = vpack.c.bf16 %v3090, %v3089
        %v3181 = vpack.c.bf16 %v3092, %v3091
        %v3182 = vpack.c.bf16 %v3094, %v3093
        %v3183 = vpack.c.bf16 %v3096, %v3095
        %v3184 = vpack.c.bf16 %v3098, %v3097
        %v3185 = vpack.c.bf16 %v3100, %v3099
        %v3186 = vpack.c.bf16 %v3102, %v3101
        %v3187 = vpack.c.bf16 %v3104, %v3103
        %v3188 = vpack.c.bf16 %v3106, %v3105
        %v3189 = vpack.c.bf16 %v3108, %v3107
        %v3190 = vpack.c.bf16 %v3110, %v3109
        %v3191 = vpack.c.bf16 %v3112, %v3111
        %v3192 = vpack.c.bf16 %v3114, %v3113
        %v3193 = vpack.c.bf16 %v3116, %v3115
        %v3194 = vpack.c.bf16 %v3118, %v3117
        %v3195 = vpack.c.bf16 %v3120, %v3119
        %v3196 = vpack.c.bf16 %v3122, %v3121
        %v3197 = vpack.c.bf16 %v3124, %v3123
        %v3198 = vpack.c.bf16 %v3126, %v3125
        %v3199 = vpack.c.bf16 %v3128, %v3127
        %v3200 = vpack.c.bf16 %v3130, %v3129
        %v3201 = vpack.c.bf16 %v3132, %v3131
        %v3202 = vpack.c.bf16 %v3134, %v3133
        %v3203 = vpack.c.bf16 %v3136, %v3135
        %v3204 = vpack.c.bf16 %v3138, %v3137
        %v3205 = vpack.c.bf16 %v3140, %v3139
        %v3206 = vpack.c.bf16 %v3142, %v3141
        %v3207 = vpack.c.bf16 %v3144, %v3143
        %v3208 = vpack.c.bf16 %v3146, %v3145
        %v3209 = vpack.c.bf16 %v3148, %v3147
        %v3210 = vpack.c.bf16 %v3150, %v3149
        %3271 = vrot.lane.b32.xlu0 %v3151, 18
        %v3272 = vpop.permute.xlu0 %3271
        %3273 = vrot.lane.b32.xlu0 %v3152, 18
        %v3274 = vpop.permute.xlu0 %3273
        %3275 = vrot.lane.b32.xlu0 %v3153, 18
        %v3276 = vpop.permute.xlu0 %3275
        %3277 = vrot.lane.b32.xlu0 %v3154, 18
        %v3278 = vpop.permute.xlu0 %3277
        %3279 = vrot.lane.b32.xlu0 %v3155, 18
        %v3280 = vpop.permute.xlu0 %3279
        %3281 = vrot.lane.b32.xlu0 %v3156, 18
        %v3282 = vpop.permute.xlu0 %3281
        %3283 = vrot.lane.b32.xlu0 %v3157, 18
        %v3284 = vpop.permute.xlu0 %3283
        %3285 = vrot.lane.b32.xlu0 %v3158, 18
        %v3286 = vpop.permute.xlu0 %3285
        %3287 = vrot.lane.b32.xlu0 %v3159, 18
        %v3288 = vpop.permute.xlu0 %3287
        %3289 = vrot.lane.b32.xlu0 %v3160, 18
        %v3290 = vpop.permute.xlu0 %3289
        %3291 = vrot.lane.b32.xlu0 %v3161, 18
        %v3292 = vpop.permute.xlu0 %3291
        %3293 = vrot.lane.b32.xlu0 %v3162, 18
        %v3294 = vpop.permute.xlu0 %3293
        %3295 = vrot.lane.b32.xlu0 %v3163, 18
        %v3296 = vpop.permute.xlu0 %3295
        %3297 = vrot.lane.b32.xlu0 %v3164, 18
        %v3298 = vpop.permute.xlu0 %3297
        %3299 = vrot.lane.b32.xlu0 %v3165, 18
        %v3300 = vpop.permute.xlu0 %3299
        %3301 = vrot.lane.b32.xlu0 %v3166, 18
        %v3302 = vpop.permute.xlu0 %3301
        %3303 = vrot.lane.b32.xlu0 %v3167, 18
        %v3304 = vpop.permute.xlu0 %3303
        %3305 = vrot.lane.b32.xlu0 %v3168, 18
        %v3306 = vpop.permute.xlu0 %3305
        %3307 = vrot.lane.b32.xlu0 %v3169, 18
        %v3308 = vpop.permute.xlu0 %3307
        %3309 = vrot.lane.b32.xlu0 %v3170, 18
        %v3310 = vpop.permute.xlu0 %3309
        %3311 = vrot.lane.b32.xlu0 %v3171, 18
        %v3312 = vpop.permute.xlu0 %3311
        %3313 = vrot.lane.b32.xlu0 %v3172, 18
        %v3314 = vpop.permute.xlu0 %3313
        %3315 = vrot.lane.b32.xlu0 %v3173, 18
        %v3316 = vpop.permute.xlu0 %3315
        %3317 = vrot.lane.b32.xlu0 %v3174, 18
        %v3318 = vpop.permute.xlu0 %3317
        %3319 = vrot.lane.b32.xlu0 %v3175, 18
        %v3320 = vpop.permute.xlu0 %3319
        %3321 = vrot.lane.b32.xlu0 %v3176, 18
        %v3322 = vpop.permute.xlu0 %3321
        %3323 = vrot.lane.b32.xlu0 %v3177, 18
        %v3324 = vpop.permute.xlu0 %3323
        %3325 = vrot.lane.b32.xlu0 %v3178, 18
        %v3326 = vpop.permute.xlu0 %3325
        %3327 = vrot.lane.b32.xlu0 %v3179, 18
        %v3328 = vpop.permute.xlu0 %3327
        %3329 = vrot.lane.b32.xlu0 %v3180, 18
        %v3330 = vpop.permute.xlu0 %3329
        %3331 = vrot.lane.b32.xlu0 %v3181, 18
        %v3332 = vpop.permute.xlu0 %3331
        %3333 = vrot.lane.b32.xlu0 %v3182, 18
        %v3334 = vpop.permute.xlu0 %3333
        %3335 = vrot.lane.b32.xlu0 %v3183, 18
        %v3336 = vpop.permute.xlu0 %3335
        %3337 = vrot.lane.b32.xlu0 %v3184, 18
        %v3338 = vpop.permute.xlu0 %3337
        %3339 = vrot.lane.b32.xlu0 %v3185, 18
        %v3340 = vpop.permute.xlu0 %3339
        %3341 = vrot.lane.b32.xlu0 %v3186, 18
        %v3342 = vpop.permute.xlu0 %3341
        %3343 = vrot.lane.b32.xlu0 %v3187, 18
        %v3344 = vpop.permute.xlu0 %3343
        %3345 = vrot.lane.b32.xlu0 %v3188, 18
        %v3346 = vpop.permute.xlu0 %3345
        %3347 = vrot.lane.b32.xlu0 %v3189, 18
        %v3348 = vpop.permute.xlu0 %3347
        %3349 = vrot.lane.b32.xlu0 %v3190, 18
        %v3350 = vpop.permute.xlu0 %3349
        %3351 = vrot.lane.b32.xlu0 %v3191, 18
        %v3352 = vpop.permute.xlu0 %3351
        %3353 = vrot.lane.b32.xlu0 %v3192, 18
        %v3354 = vpop.permute.xlu0 %3353
        %3355 = vrot.lane.b32.xlu0 %v3193, 18
        %v3356 = vpop.permute.xlu0 %3355
        %3357 = vrot.lane.b32.xlu0 %v3194, 18
        %v3358 = vpop.permute.xlu0 %3357
        %3359 = vrot.lane.b32.xlu0 %v3195, 18
        %v3360 = vpop.permute.xlu0 %3359
        %3361 = vrot.lane.b32.xlu0 %v3196, 18
        %v3362 = vpop.permute.xlu0 %3361
        %3363 = vrot.lane.b32.xlu0 %v3197, 18
        %v3364 = vpop.permute.xlu0 %3363
        %3365 = vrot.lane.b32.xlu0 %v3198, 18
        %v3366 = vpop.permute.xlu0 %3365
        %3367 = vrot.lane.b32.xlu0 %v3199, 18
        %v3368 = vpop.permute.xlu0 %3367
        %3369 = vrot.lane.b32.xlu0 %v3200, 18
        %v3370 = vpop.permute.xlu0 %3369
        %3371 = vrot.lane.b32.xlu0 %v3201, 18
        %v3372 = vpop.permute.xlu0 %3371
        %3373 = vrot.lane.b32.xlu0 %v3202, 18
        %v3374 = vpop.permute.xlu0 %3373
        %3375 = vrot.lane.b32.xlu0 %v3203, 18
        %v3376 = vpop.permute.xlu0 %3375
        %3377 = vrot.lane.b32.xlu0 %v3204, 18
        %v3378 = vpop.permute.xlu0 %3377
        %3379 = vrot.lane.b32.xlu0 %v3205, 18
        %v3380 = vpop.permute.xlu0 %3379
        %3381 = vrot.lane.b32.xlu0 %v3206, 18
        %v3382 = vpop.permute.xlu0 %3381
        %3383 = vrot.lane.b32.xlu0 %v3207, 18
        %v3384 = vpop.permute.xlu0 %3383
        %3385 = vrot.lane.b32.xlu0 %v3208, 18
        %v3386 = vpop.permute.xlu0 %3385
        %3387 = vrot.lane.b32.xlu0 %v3209, 18
        %v3388 = vpop.permute.xlu0 %3387
        %3389 = vrot.lane.b32.xlu0 %v3210, 18
        %v3390 = vpop.permute.xlu0 %3389
        %vm3451 = vcmask 171152
        %3452 = vst.msk [vmem:[#allocation2] sm:$0xff] %vm3451, %v3272
        %3453 = vst.msk [vmem:[#allocation2 + $0x8] sm:$0xff] %vm3451, %v3274
        %3454 = vst.msk [vmem:[#allocation2 + $0x10] sm:$0xff] %vm3451, %v3276
        %3455 = vst.msk [vmem:[#allocation2 + $0x18] sm:$0xff] %vm3451, %v3278
        %3456 = vst.msk [vmem:[#allocation2 + $0x20] sm:$0xff] %vm3451, %v3280
        %3457 = vst.msk [vmem:[#allocation2 + $0x28] sm:$0xff] %vm3451, %v3282
        %3458 = vst.msk [vmem:[#allocation2 + $0x30] sm:$0xff] %vm3451, %v3284
        %3459 = vst.msk [vmem:[#allocation2 + $0x38] sm:$0xff] %vm3451, %v3286
        %3460 = vst.msk [vmem:[#allocation2 + $0x40] sm:$0xff] %vm3451, %v3288
        %3461 = vst.msk [vmem:[#allocation2 + $0x48] sm:$0xff] %vm3451, %v3290
        %3462 = vst.msk [vmem:[#allocation2 + $0x50] sm:$0xff] %vm3451, %v3292
        %3463 = vst.msk [vmem:[#allocation2 + $0x58] sm:$0xff] %vm3451, %v3294
        %3464 = vst.msk [vmem:[#allocation2 + $0x60] sm:$0xff] %vm3451, %v3296
        %3465 = vst.msk [vmem:[#allocation2 + $0x68] sm:$0xff] %vm3451, %v3298
        %3466 = vst.msk [vmem:[#allocation2 + $0x70] sm:$0xff] %vm3451, %v3300
        %3467 = vst.msk [vmem:[#allocation2 + $0x78] sm:$0xff] %vm3451, %v3302
        %3468 = vst.msk [vmem:[#allocation2 + $0x80] sm:$0xff] %vm3451, %v3304
        %3469 = vst.msk [vmem:[#allocation2 + $0x88] sm:$0xff] %vm3451, %v3306
        %3470 = vst.msk [vmem:[#allocation2 + $0x90] sm:$0xff] %vm3451, %v3308
        %3471 = vst.msk [vmem:[#allocation2 + $0x98] sm:$0xff] %vm3451, %v3310
        %3472 = vst.msk [vmem:[#allocation2 + $0xa0] sm:$0xff] %vm3451, %v3312
        %3473 = vst.msk [vmem:[#allocation2 + $0xa8] sm:$0xff] %vm3451, %v3314
        %3474 = vst.msk [vmem:[#allocation2 + $0xb0] sm:$0xff] %vm3451, %v3316
        %3475 = vst.msk [vmem:[#allocation2 + $0xb8] sm:$0xff] %vm3451, %v3318
        %3476 = vst.msk [vmem:[#allocation2 + $0xc0] sm:$0xff] %vm3451, %v3320
        %3477 = vst.msk [vmem:[#allocation2 + $0xc8] sm:$0xff] %vm3451, %v3322
        %3478 = vst.msk [vmem:[#allocation2 + $0xd0] sm:$0xff] %vm3451, %v3324
        %3479 = vst.msk [vmem:[#allocation2 + $0xd8] sm:$0xff] %vm3451, %v3326
        %3480 = vst.msk [vmem:[#allocation2 + $0xe0] sm:$0xff] %vm3451, %v3328
        %3481 = vst.msk [vmem:[#allocation2 + $0xe8] sm:$0xff] %vm3451, %v3330
        %3482 = vst.msk [vmem:[#allocation2 + $0xf0] sm:$0xff] %vm3451, %v3332
        %3483 = vst.msk [vmem:[#allocation2 + $0xf8] sm:$0xff] %vm3451, %v3334
        %3484 = vst.msk [vmem:[#allocation2 + $0x100] sm:$0xff] %vm3451, %v3336
        %3485 = vst.msk [vmem:[#allocation2 + $0x108] sm:$0xff] %vm3451, %v3338
        %3486 = vst.msk [vmem:[#allocation2 + $0x110] sm:$0xff] %vm3451, %v3340
        %3487 = vst.msk [vmem:[#allocation2 + $0x118] sm:$0xff] %vm3451, %v3342
        %3488 = vst.msk [vmem:[#allocation2 + $0x120] sm:$0xff] %vm3451, %v3344
        %3489 = vst.msk [vmem:[#allocation2 + $0x128] sm:$0xff] %vm3451, %v3346
        %3490 = vst.msk [vmem:[#allocation2 + $0x130] sm:$0xff] %vm3451, %v3348
        %3491 = vst.msk [vmem:[#allocation2 + $0x138] sm:$0xff] %vm3451, %v3350
        %3492 = vst.msk [vmem:[#allocation2 + $0x140] sm:$0xff] %vm3451, %v3352
        %3493 = vst.msk [vmem:[#allocation2 + $0x148] sm:$0xff] %vm3451, %v3354
        %3494 = vst.msk [vmem:[#allocation2 + $0x150] sm:$0xff] %vm3451, %v3356
        %3495 = vst.msk [vmem:[#allocation2 + $0x158] sm:$0xff] %vm3451, %v3358
        %3496 = vst.msk [vmem:[#allocation2 + $0x160] sm:$0xff] %vm3451, %v3360
        %3497 = vst.msk [vmem:[#allocation2 + $0x168] sm:$0xff] %vm3451, %v3362
        %3498 = vst.msk [vmem:[#allocation2 + $0x170] sm:$0xff] %vm3451, %v3364
        %3499 = vst.msk [vmem:[#allocation2 + $0x178] sm:$0xff] %vm3451, %v3366
        %3500 = vst.msk [vmem:[#allocation2 + $0x180] sm:$0xff] %vm3451, %v3368
        %3501 = vst.msk [vmem:[#allocation2 + $0x188] sm:$0xff] %vm3451, %v3370
        %3502 = vst.msk [vmem:[#allocation2 + $0x190] sm:$0xff] %vm3451, %v3372
        %3503 = vst.msk [vmem:[#allocation2 + $0x198] sm:$0xff] %vm3451, %v3374
        %3504 = vst.msk [vmem:[#allocation2 + $0x1a0] sm:$0xff] %vm3451, %v3376
        %3505 = vst.msk [vmem:[#allocation2 + $0x1a8] sm:$0xff] %vm3451, %v3378
        %3506 = vst.msk [vmem:[#allocation2 + $0x1b0] sm:$0xff] %vm3451, %v3380
        %3507 = vst.msk [vmem:[#allocation2 + $0x1b8] sm:$0xff] %vm3451, %v3382
        %3508 = vst.msk [vmem:[#allocation2 + $0x1c0] sm:$0xff] %vm3451, %v3384
        %3509 = vst.msk [vmem:[#allocation2 + $0x1c8] sm:$0xff] %vm3451, %v3386
        %3510 = vst.msk [vmem:[#allocation2 + $0x1d0] sm:$0xff] %vm3451, %v3388
        %3511 = vst.msk [vmem:[#allocation2 + $0x1d8] sm:$0xff] %vm3451, %v3390
        %v3512 = vld [vmem:[%s383 + $0x41] sm:$0xff]
        %v3513 = vld [vmem:[%s383 + $0x49] sm:$0xff]
        %v3514 = vld [vmem:[%s383 + $0x51] sm:$0xff]
        %v3515 = vld [vmem:[%s383 + $0x59] sm:$0xff]
        %v3516 = vld [vmem:[%s383 + $0x61] sm:$0xff]
        %v3517 = vld [vmem:[%s383 + $0x69] sm:$0xff]
        %v3518 = vld [vmem:[%s383 + $0x71] sm:$0xff]
        %v3519 = vld [vmem:[%s383 + $0x79] sm:$0xff]
        %v3520 = vld [vmem:[%s383 + $0x81] sm:$0xff]
        %v3521 = vld [vmem:[%s383 + $0x89] sm:$0xff]
        %v3522 = vld [vmem:[%s383 + $0x91] sm:$0xff]
        %v3523 = vld [vmem:[%s383 + $0x99] sm:$0xff]
        %v3524 = vld [vmem:[%s383 + $0xa1] sm:$0xff]
        %v3525 = vld [vmem:[%s383 + $0xa9] sm:$0xff]
        %v3526 = vld [vmem:[%s383 + $0xb1] sm:$0xff]
        %v3527 = vld [vmem:[%s383 + $0xb9] sm:$0xff]
        %v3528 = vld [vmem:[%s383 + $0xc1] sm:$0xff]
        %v3529 = vld [vmem:[%s383 + $0xc9] sm:$0xff]
        %v3530 = vld [vmem:[%s383 + $0xd1] sm:$0xff]
        %v3531 = vld [vmem:[%s383 + $0xd9] sm:$0xff]
        %v3532 = vld [vmem:[%s383 + $0xe1] sm:$0xff]
        %v3533 = vld [vmem:[%s383 + $0xe9] sm:$0xff]
        %v3534 = vld [vmem:[%s383 + $0xf1] sm:$0xff]
        %v3535 = vld [vmem:[%s383 + $0xf9] sm:$0xff]
        %v3536 = vld [vmem:[%s383 + $0x101] sm:$0xff]
        %v3537 = vld [vmem:[%s383 + $0x109] sm:$0xff]
        %v3538 = vld [vmem:[%s383 + $0x111] sm:$0xff]
        %v3539 = vld [vmem:[%s383 + $0x119] sm:$0xff]
        %v3540 = vld [vmem:[%s383 + $0x121] sm:$0xff]
        %v3541 = vld [vmem:[%s383 + $0x129] sm:$0xff]
        %v3542 = vld [vmem:[%s383 + $0x131] sm:$0xff]
        %v3543 = vld [vmem:[%s383 + $0x139] sm:$0xff]
        %v3544 = vld [vmem:[%s383 + $0x141] sm:$0xff]
        %v3545 = vld [vmem:[%s383 + $0x149] sm:$0xff]
        %v3546 = vld [vmem:[%s383 + $0x151] sm:$0xff]
        %v3547 = vld [vmem:[%s383 + $0x159] sm:$0xff]
        %v3548 = vld [vmem:[%s383 + $0x161] sm:$0xff]
        %v3549 = vld [vmem:[%s383 + $0x169] sm:$0xff]
        %v3550 = vld [vmem:[%s383 + $0x171] sm:$0xff]
        %v3551 = vld [vmem:[%s383 + $0x179] sm:$0xff]
        %v3552 = vld [vmem:[%s383 + $0x181] sm:$0xff]
        %v3553 = vld [vmem:[%s383 + $0x189] sm:$0xff]
        %v3554 = vld [vmem:[%s383 + $0x191] sm:$0xff]
        %v3555 = vld [vmem:[%s383 + $0x199] sm:$0xff]
        %v3556 = vld [vmem:[%s383 + $0x1a1] sm:$0xff]
        %v3557 = vld [vmem:[%s383 + $0x1a9] sm:$0xff]
        %v3558 = vld [vmem:[%s383 + $0x1b1] sm:$0xff]
        %v3559 = vld [vmem:[%s383 + $0x1b9] sm:$0xff]
        %v3560 = vld [vmem:[%s383 + $0x1c1] sm:$0xff]
        %v3561 = vld [vmem:[%s383 + $0x1c9] sm:$0xff]
        %v3562 = vld [vmem:[%s383 + $0x1d1] sm:$0xff]
        %v3563 = vld [vmem:[%s383 + $0x1d9] sm:$0xff]
        %v3564 = vld [vmem:[%s383 + $0x1e1] sm:$0xff]
        %v3565 = vld [vmem:[%s383 + $0x1e9] sm:$0xff]
        %v3566 = vld [vmem:[%s383 + $0x1f1] sm:$0xff]
        %v3567 = vld [vmem:[%s383 + $0x1f9] sm:$0xff]
        %v3568 = vld [vmem:[%s383 + $0x201] sm:$0xff]
        %v3569 = vld [vmem:[%s383 + $0x209] sm:$0xff]
        %v3570 = vld [vmem:[%s383 + $0x211] sm:$0xff]
        %v3571 = vld [vmem:[%s383 + $0x219] sm:$0xff]
        %v3572 = vld [vmem:[%s383 + $0x221] sm:$0xff]
        %v3573 = vld [vmem:[%s383 + $0x229] sm:$0xff]
        %v3574 = vld [vmem:[%s383 + $0x231] sm:$0xff]
        %v3575 = vld [vmem:[%s383 + $0x239] sm:$0xff]
        %v3576 = vld [vmem:[%s383 + $0x241] sm:$0xff]
        %v3577 = vld [vmem:[%s383 + $0x249] sm:$0xff]
        %v3578 = vld [vmem:[%s383 + $0x251] sm:$0xff]
        %v3579 = vld [vmem:[%s383 + $0x259] sm:$0xff]
        %v3580 = vld [vmem:[%s383 + $0x261] sm:$0xff]
        %v3581 = vld [vmem:[%s383 + $0x269] sm:$0xff]
        %v3582 = vld [vmem:[%s383 + $0x271] sm:$0xff]
        %v3583 = vld [vmem:[%s383 + $0x279] sm:$0xff]
        %v3584 = vld [vmem:[%s383 + $0x281] sm:$0xff]
        %v3585 = vld [vmem:[%s383 + $0x289] sm:$0xff]
        %v3586 = vld [vmem:[%s383 + $0x291] sm:$0xff]
        %v3587 = vld [vmem:[%s383 + $0x299] sm:$0xff]
        %v3588 = vld [vmem:[%s383 + $0x2a1] sm:$0xff]
        %v3589 = vld [vmem:[%s383 + $0x2a9] sm:$0xff]
        %v3590 = vld [vmem:[%s383 + $0x2b1] sm:$0xff]
        %v3591 = vld [vmem:[%s383 + $0x2b9] sm:$0xff]
        %v3592 = vld [vmem:[%s383 + $0x2c1] sm:$0xff]
        %v3593 = vld [vmem:[%s383 + $0x2c9] sm:$0xff]
        %v3594 = vld [vmem:[%s383 + $0x2d1] sm:$0xff]
        %v3595 = vld [vmem:[%s383 + $0x2d9] sm:$0xff]
        %v3596 = vld [vmem:[%s383 + $0x2e1] sm:$0xff]
        %v3597 = vld [vmem:[%s383 + $0x2e9] sm:$0xff]
        %v3598 = vld [vmem:[%s383 + $0x2f1] sm:$0xff]
        %v3599 = vld [vmem:[%s383 + $0x2f9] sm:$0xff]
        %v3600 = vld [vmem:[%s383 + $0x301] sm:$0xff]
        %v3601 = vld [vmem:[%s383 + $0x309] sm:$0xff]
        %v3602 = vld [vmem:[%s383 + $0x311] sm:$0xff]
        %v3603 = vld [vmem:[%s383 + $0x319] sm:$0xff]
        %v3604 = vld [vmem:[%s383 + $0x321] sm:$0xff]
        %v3605 = vld [vmem:[%s383 + $0x329] sm:$0xff]
        %v3606 = vld [vmem:[%s383 + $0x331] sm:$0xff]
        %v3607 = vld [vmem:[%s383 + $0x339] sm:$0xff]
        %v3608 = vld [vmem:[%s383 + $0x341] sm:$0xff]
        %v3609 = vld [vmem:[%s383 + $0x349] sm:$0xff]
        %v3610 = vld [vmem:[%s383 + $0x351] sm:$0xff]
        %v3611 = vld [vmem:[%s383 + $0x359] sm:$0xff]
        %v3612 = vld [vmem:[%s383 + $0x361] sm:$0xff]
        %v3613 = vld [vmem:[%s383 + $0x369] sm:$0xff]
        %v3614 = vld [vmem:[%s383 + $0x371] sm:$0xff]
        %v3615 = vld [vmem:[%s383 + $0x379] sm:$0xff]
        %v3616 = vld [vmem:[%s383 + $0x381] sm:$0xff]
        %v3617 = vld [vmem:[%s383 + $0x389] sm:$0xff]
        %v3618 = vld [vmem:[%s383 + $0x391] sm:$0xff]
        %v3619 = vld [vmem:[%s383 + $0x399] sm:$0xff]
        %v3620 = vld [vmem:[%s383 + $0x3a1] sm:$0xff]
        %v3621 = vld [vmem:[%s383 + $0x3a9] sm:$0xff]
        %v3622 = vld [vmem:[%s383 + $0x3b1] sm:$0xff]
        %v3623 = vld [vmem:[%s383 + $0x3b9] sm:$0xff]
        %v3624 = vld [vmem:[%s383 + $0x3c1] sm:$0xff]
        %v3625 = vld [vmem:[%s383 + $0x3c9] sm:$0xff]
        %v3626 = vld [vmem:[%s383 + $0x3d1] sm:$0xff]
        %v3627 = vld [vmem:[%s383 + $0x3d9] sm:$0xff]
        %v3628 = vld [vmem:[%s383 + $0x3e1] sm:$0xff]
        %v3629 = vld [vmem:[%s383 + $0x3e9] sm:$0xff]
        %v3630 = vld [vmem:[%s383 + $0x3f1] sm:$0xff]
        %v3631 = vld [vmem:[%s383 + $0x3f9] sm:$0xff]
        %v3632 = vpack.c.bf16 %v3513, %v3512
        %v3633 = vpack.c.bf16 %v3515, %v3514
        %v3634 = vpack.c.bf16 %v3517, %v3516
        %v3635 = vpack.c.bf16 %v3519, %v3518
        %v3636 = vpack.c.bf16 %v3521, %v3520
        %v3637 = vpack.c.bf16 %v3523, %v3522
        %v3638 = vpack.c.bf16 %v3525, %v3524
        %v3639 = vpack.c.bf16 %v3527, %v3526
        %v3640 = vpack.c.bf16 %v3529, %v3528
        %v3641 = vpack.c.bf16 %v3531, %v3530
        %v3642 = vpack.c.bf16 %v3533, %v3532
        %v3643 = vpack.c.bf16 %v3535, %v3534
        %v3644 = vpack.c.bf16 %v3537, %v3536
        %v3645 = vpack.c.bf16 %v3539, %v3538
        %v3646 = vpack.c.bf16 %v3541, %v3540
        %v3647 = vpack.c.bf16 %v3543, %v3542
        %v3648 = vpack.c.bf16 %v3545, %v3544
        %v3649 = vpack.c.bf16 %v3547, %v3546
        %v3650 = vpack.c.bf16 %v3549, %v3548
        %v3651 = vpack.c.bf16 %v3551, %v3550
        %v3652 = vpack.c.bf16 %v3553, %v3552
        %v3653 = vpack.c.bf16 %v3555, %v3554
        %v3654 = vpack.c.bf16 %v3557, %v3556
        %v3655 = vpack.c.bf16 %v3559, %v3558
        %v3656 = vpack.c.bf16 %v3561, %v3560
        %v3657 = vpack.c.bf16 %v3563, %v3562
        %v3658 = vpack.c.bf16 %v3565, %v3564
        %v3659 = vpack.c.bf16 %v3567, %v3566
        %v3660 = vpack.c.bf16 %v3569, %v3568
        %v3661 = vpack.c.bf16 %v3571, %v3570
        %v3662 = vpack.c.bf16 %v3573, %v3572
        %v3663 = vpack.c.bf16 %v3575, %v3574
        %v3664 = vpack.c.bf16 %v3577, %v3576
        %v3665 = vpack.c.bf16 %v3579, %v3578
        %v3666 = vpack.c.bf16 %v3581, %v3580
        %v3667 = vpack.c.bf16 %v3583, %v3582
        %v3668 = vpack.c.bf16 %v3585, %v3584
        %v3669 = vpack.c.bf16 %v3587, %v3586
        %v3670 = vpack.c.bf16 %v3589, %v3588
        %v3671 = vpack.c.bf16 %v3591, %v3590
        %v3672 = vpack.c.bf16 %v3593, %v3592
        %v3673 = vpack.c.bf16 %v3595, %v3594
        %v3674 = vpack.c.bf16 %v3597, %v3596
        %v3675 = vpack.c.bf16 %v3599, %v3598
        %v3676 = vpack.c.bf16 %v3601, %v3600
        %v3677 = vpack.c.bf16 %v3603, %v3602
        %v3678 = vpack.c.bf16 %v3605, %v3604
        %v3679 = vpack.c.bf16 %v3607, %v3606
        %v3680 = vpack.c.bf16 %v3609, %v3608
        %v3681 = vpack.c.bf16 %v3611, %v3610
        %v3682 = vpack.c.bf16 %v3613, %v3612
        %v3683 = vpack.c.bf16 %v3615, %v3614
        %v3684 = vpack.c.bf16 %v3617, %v3616
        %v3685 = vpack.c.bf16 %v3619, %v3618
        %v3686 = vpack.c.bf16 %v3621, %v3620
        %v3687 = vpack.c.bf16 %v3623, %v3622
        %v3688 = vpack.c.bf16 %v3625, %v3624
        %v3689 = vpack.c.bf16 %v3627, %v3626
        %v3690 = vpack.c.bf16 %v3629, %v3628
        %v3691 = vpack.c.bf16 %v3631, %v3630
        %3752 = vrot.lane.b32.xlu0 %v3632, 21
        %v3753 = vpop.permute.xlu0 %3752
        %3754 = vrot.lane.b32.xlu0 %v3633, 21
        %v3755 = vpop.permute.xlu0 %3754
        %3756 = vrot.lane.b32.xlu0 %v3634, 21
        %v3757 = vpop.permute.xlu0 %3756
        %3758 = vrot.lane.b32.xlu0 %v3635, 21
        %v3759 = vpop.permute.xlu0 %3758
        %3760 = vrot.lane.b32.xlu0 %v3636, 21
        %v3761 = vpop.permute.xlu0 %3760
        %3762 = vrot.lane.b32.xlu0 %v3637, 21
        %v3763 = vpop.permute.xlu0 %3762
        %3764 = vrot.lane.b32.xlu0 %v3638, 21
        %v3765 = vpop.permute.xlu0 %3764
        %3766 = vrot.lane.b32.xlu0 %v3639, 21
        %v3767 = vpop.permute.xlu0 %3766
        %3768 = vrot.lane.b32.xlu0 %v3640, 21
        %v3769 = vpop.permute.xlu0 %3768
        %3770 = vrot.lane.b32.xlu0 %v3641, 21
        %v3771 = vpop.permute.xlu0 %3770
        %3772 = vrot.lane.b32.xlu0 %v3642, 21
        %v3773 = vpop.permute.xlu0 %3772
        %3774 = vrot.lane.b32.xlu0 %v3643, 21
        %v3775 = vpop.permute.xlu0 %3774
        %3776 = vrot.lane.b32.xlu0 %v3644, 21
        %v3777 = vpop.permute.xlu0 %3776
        %3778 = vrot.lane.b32.xlu0 %v3645, 21
        %v3779 = vpop.permute.xlu0 %3778
        %3780 = vrot.lane.b32.xlu0 %v3646, 21
        %v3781 = vpop.permute.xlu0 %3780
        %3782 = vrot.lane.b32.xlu0 %v3647, 21
        %v3783 = vpop.permute.xlu0 %3782
        %3784 = vrot.lane.b32.xlu0 %v3648, 21
        %v3785 = vpop.permute.xlu0 %3784
        %3786 = vrot.lane.b32.xlu0 %v3649, 21
        %v3787 = vpop.permute.xlu0 %3786
        %3788 = vrot.lane.b32.xlu0 %v3650, 21
        %v3789 = vpop.permute.xlu0 %3788
        %3790 = vrot.lane.b32.xlu0 %v3651, 21
        %v3791 = vpop.permute.xlu0 %3790
        %3792 = vrot.lane.b32.xlu0 %v3652, 21
        %v3793 = vpop.permute.xlu0 %3792
        %3794 = vrot.lane.b32.xlu0 %v3653, 21
        %v3795 = vpop.permute.xlu0 %3794
        %3796 = vrot.lane.b32.xlu0 %v3654, 21
        %v3797 = vpop.permute.xlu0 %3796
        %3798 = vrot.lane.b32.xlu0 %v3655, 21
        %v3799 = vpop.permute.xlu0 %3798
        %3800 = vrot.lane.b32.xlu0 %v3656, 21
        %v3801 = vpop.permute.xlu0 %3800
        %3802 = vrot.lane.b32.xlu0 %v3657, 21
        %v3803 = vpop.permute.xlu0 %3802
        %3804 = vrot.lane.b32.xlu0 %v3658, 21
        %v3805 = vpop.permute.xlu0 %3804
        %3806 = vrot.lane.b32.xlu0 %v3659, 21
        %v3807 = vpop.permute.xlu0 %3806
        %3808 = vrot.lane.b32.xlu0 %v3660, 21
        %v3809 = vpop.permute.xlu0 %3808
        %3810 = vrot.lane.b32.xlu0 %v3661, 21
        %v3811 = vpop.permute.xlu0 %3810
        %3812 = vrot.lane.b32.xlu0 %v3662, 21
        %v3813 = vpop.permute.xlu0 %3812
        %3814 = vrot.lane.b32.xlu0 %v3663, 21
        %v3815 = vpop.permute.xlu0 %3814
        %3816 = vrot.lane.b32.xlu0 %v3664, 21
        %v3817 = vpop.permute.xlu0 %3816
        %3818 = vrot.lane.b32.xlu0 %v3665, 21
        %v3819 = vpop.permute.xlu0 %3818
        %3820 = vrot.lane.b32.xlu0 %v3666, 21
        %v3821 = vpop.permute.xlu0 %3820
        %3822 = vrot.lane.b32.xlu0 %v3667, 21
        %v3823 = vpop.permute.xlu0 %3822
        %3824 = vrot.lane.b32.xlu0 %v3668, 21
        %v3825 = vpop.permute.xlu0 %3824
        %3826 = vrot.lane.b32.xlu0 %v3669, 21
        %v3827 = vpop.permute.xlu0 %3826
        %3828 = vrot.lane.b32.xlu0 %v3670, 21
        %v3829 = vpop.permute.xlu0 %3828
        %3830 = vrot.lane.b32.xlu0 %v3671, 21
        %v3831 = vpop.permute.xlu0 %3830
        %3832 = vrot.lane.b32.xlu0 %v3672, 21
        %v3833 = vpop.permute.xlu0 %3832
        %3834 = vrot.lane.b32.xlu0 %v3673, 21
        %v3835 = vpop.permute.xlu0 %3834
        %3836 = vrot.lane.b32.xlu0 %v3674, 21
        %v3837 = vpop.permute.xlu0 %3836
        %3838 = vrot.lane.b32.xlu0 %v3675, 21
        %v3839 = vpop.permute.xlu0 %3838
        %3840 = vrot.lane.b32.xlu0 %v3676, 21
        %v3841 = vpop.permute.xlu0 %3840
        %3842 = vrot.lane.b32.xlu0 %v3677, 21
        %v3843 = vpop.permute.xlu0 %3842
        %3844 = vrot.lane.b32.xlu0 %v3678, 21
        %v3845 = vpop.permute.xlu0 %3844
        %3846 = vrot.lane.b32.xlu0 %v3679, 21
        %v3847 = vpop.permute.xlu0 %3846
        %3848 = vrot.lane.b32.xlu0 %v3680, 21
        %v3849 = vpop.permute.xlu0 %3848
        %3850 = vrot.lane.b32.xlu0 %v3681, 21
        %v3851 = vpop.permute.xlu0 %3850
        %3852 = vrot.lane.b32.xlu0 %v3682, 21
        %v3853 = vpop.permute.xlu0 %3852
        %3854 = vrot.lane.b32.xlu0 %v3683, 21
        %v3855 = vpop.permute.xlu0 %3854
        %3856 = vrot.lane.b32.xlu0 %v3684, 21
        %v3857 = vpop.permute.xlu0 %3856
        %3858 = vrot.lane.b32.xlu0 %v3685, 21
        %v3859 = vpop.permute.xlu0 %3858
        %3860 = vrot.lane.b32.xlu0 %v3686, 21
        %v3861 = vpop.permute.xlu0 %3860
        %3862 = vrot.lane.b32.xlu0 %v3687, 21
        %v3863 = vpop.permute.xlu0 %3862
        %3864 = vrot.lane.b32.xlu0 %v3688, 21
        %v3865 = vpop.permute.xlu0 %3864
        %3866 = vrot.lane.b32.xlu0 %v3689, 21
        %v3867 = vpop.permute.xlu0 %3866
        %3868 = vrot.lane.b32.xlu0 %v3690, 21
        %v3869 = vpop.permute.xlu0 %3868
        %3870 = vrot.lane.b32.xlu0 %v3691, 21
        %v3871 = vpop.permute.xlu0 %3870
        %vm3932 = vcmask 195752
        %3933 = vst.msk [vmem:[#allocation2] sm:$0xff] %vm3932, %v3753
        %3934 = vst.msk [vmem:[#allocation2 + $0x8] sm:$0xff] %vm3932, %v3755
        %3935 = vst.msk [vmem:[#allocation2 + $0x10] sm:$0xff] %vm3932, %v3757
        %3936 = vst.msk [vmem:[#allocation2 + $0x18] sm:$0xff] %vm3932, %v3759
        %3937 = vst.msk [vmem:[#allocation2 + $0x20] sm:$0xff] %vm3932, %v3761
        %3938 = vst.msk [vmem:[#allocation2 + $0x28] sm:$0xff] %vm3932, %v3763
        %3939 = vst.msk [vmem:[#allocation2 + $0x30] sm:$0xff] %vm3932, %v3765
        %3940 = vst.msk [vmem:[#allocation2 + $0x38] sm:$0xff] %vm3932, %v3767
        %3941 = vst.msk [vmem:[#allocation2 + $0x40] sm:$0xff] %vm3932, %v3769
        %3942 = vst.msk [vmem:[#allocation2 + $0x48] sm:$0xff] %vm3932, %v3771
        %3943 = vst.msk [vmem:[#allocation2 + $0x50] sm:$0xff] %vm3932, %v3773
        %3944 = vst.msk [vmem:[#allocation2 + $0x58] sm:$0xff] %vm3932, %v3775
        %3945 = vst.msk [vmem:[#allocation2 + $0x60] sm:$0xff] %vm3932, %v3777
        %3946 = vst.msk [vmem:[#allocation2 + $0x68] sm:$0xff] %vm3932, %v3779
        %3947 = vst.msk [vmem:[#allocation2 + $0x70] sm:$0xff] %vm3932, %v3781
        %3948 = vst.msk [vmem:[#allocation2 + $0x78] sm:$0xff] %vm3932, %v3783
        %3949 = vst.msk [vmem:[#allocation2 + $0x80] sm:$0xff] %vm3932, %v3785
        %3950 = vst.msk [vmem:[#allocation2 + $0x88] sm:$0xff] %vm3932, %v3787
        %3951 = vst.msk [vmem:[#allocation2 + $0x90] sm:$0xff] %vm3932, %v3789
        %3952 = vst.msk [vmem:[#allocation2 + $0x98] sm:$0xff] %vm3932, %v3791
        %3953 = vst.msk [vmem:[#allocation2 + $0xa0] sm:$0xff] %vm3932, %v3793
        %3954 = vst.msk [vmem:[#allocation2 + $0xa8] sm:$0xff] %vm3932, %v3795
        %3955 = vst.msk [vmem:[#allocation2 + $0xb0] sm:$0xff] %vm3932, %v3797
        %3956 = vst.msk [vmem:[#allocation2 + $0xb8] sm:$0xff] %vm3932, %v3799
        %3957 = vst.msk [vmem:[#allocation2 + $0xc0] sm:$0xff] %vm3932, %v3801
        %3958 = vst.msk [vmem:[#allocation2 + $0xc8] sm:$0xff] %vm3932, %v3803
        %3959 = vst.msk [vmem:[#allocation2 + $0xd0] sm:$0xff] %vm3932, %v3805
        %3960 = vst.msk [vmem:[#allocation2 + $0xd8] sm:$0xff] %vm3932, %v3807
        %3961 = vst.msk [vmem:[#allocation2 + $0xe0] sm:$0xff] %vm3932, %v3809
        %3962 = vst.msk [vmem:[#allocation2 + $0xe8] sm:$0xff] %vm3932, %v3811
        %3963 = vst.msk [vmem:[#allocation2 + $0xf0] sm:$0xff] %vm3932, %v3813
        %3964 = vst.msk [vmem:[#allocation2 + $0xf8] sm:$0xff] %vm3932, %v3815
        %3965 = vst.msk [vmem:[#allocation2 + $0x100] sm:$0xff] %vm3932, %v3817
        %3966 = vst.msk [vmem:[#allocation2 + $0x108] sm:$0xff] %vm3932, %v3819
        %3967 = vst.msk [vmem:[#allocation2 + $0x110] sm:$0xff] %vm3932, %v3821
        %3968 = vst.msk [vmem:[#allocation2 + $0x118] sm:$0xff] %vm3932, %v3823
        %3969 = vst.msk [vmem:[#allocation2 + $0x120] sm:$0xff] %vm3932, %v3825
        %3970 = vst.msk [vmem:[#allocation2 + $0x128] sm:$0xff] %vm3932, %v3827
        %3971 = vst.msk [vmem:[#allocation2 + $0x130] sm:$0xff] %vm3932, %v3829
        %3972 = vst.msk [vmem:[#allocation2 + $0x138] sm:$0xff] %vm3932, %v3831
        %3973 = vst.msk [vmem:[#allocation2 + $0x140] sm:$0xff] %vm3932, %v3833
        %3974 = vst.msk [vmem:[#allocation2 + $0x148] sm:$0xff] %vm3932, %v3835
        %3975 = vst.msk [vmem:[#allocation2 + $0x150] sm:$0xff] %vm3932, %v3837
        %3976 = vst.msk [vmem:[#allocation2 + $0x158] sm:$0xff] %vm3932, %v3839
        %3977 = vst.msk [vmem:[#allocation2 + $0x160] sm:$0xff] %vm3932, %v3841
        %3978 = vst.msk [vmem:[#allocation2 + $0x168] sm:$0xff] %vm3932, %v3843
        %3979 = vst.msk [vmem:[#allocation2 + $0x170] sm:$0xff] %vm3932, %v3845
        %3980 = vst.msk [vmem:[#allocation2 + $0x178] sm:$0xff] %vm3932, %v3847
        %3981 = vst.msk [vmem:[#allocation2 + $0x180] sm:$0xff] %vm3932, %v3849
        %3982 = vst.msk [vmem:[#allocation2 + $0x188] sm:$0xff] %vm3932, %v3851
        %3983 = vst.msk [vmem:[#allocation2 + $0x190] sm:$0xff] %vm3932, %v3853
        %3984 = vst.msk [vmem:[#allocation2 + $0x198] sm:$0xff] %vm3932, %v3855
        %3985 = vst.msk [vmem:[#allocation2 + $0x1a0] sm:$0xff] %vm3932, %v3857
        %3986 = vst.msk [vmem:[#allocation2 + $0x1a8] sm:$0xff] %vm3932, %v3859
        %3987 = vst.msk [vmem:[#allocation2 + $0x1b0] sm:$0xff] %vm3932, %v3861
        %3988 = vst.msk [vmem:[#allocation2 + $0x1b8] sm:$0xff] %vm3932, %v3863
        %3989 = vst.msk [vmem:[#allocation2 + $0x1c0] sm:$0xff] %vm3932, %v3865
        %3990 = vst.msk [vmem:[#allocation2 + $0x1c8] sm:$0xff] %vm3932, %v3867
        %3991 = vst.msk [vmem:[#allocation2 + $0x1d0] sm:$0xff] %vm3932, %v3869
        %3992 = vst.msk [vmem:[#allocation2 + $0x1d8] sm:$0xff] %vm3932, %v3871
        %v3993 = vld [vmem:[%s383 + $0x42] sm:$0xff]
        %v3994 = vld [vmem:[%s383 + $0x4a] sm:$0xff]
        %v3995 = vld [vmem:[%s383 + $0x52] sm:$0xff]
        %v3996 = vld [vmem:[%s383 + $0x5a] sm:$0xff]
        %v3997 = vld [vmem:[%s383 + $0x62] sm:$0xff]
        %v3998 = vld [vmem:[%s383 + $0x6a] sm:$0xff]
        %v3999 = vld [vmem:[%s383 + $0x72] sm:$0xff]
        %v4000 = vld [vmem:[%s383 + $0x7a] sm:$0xff]
        %v4001 = vld [vmem:[%s383 + $0x82] sm:$0xff]
        %v4002 = vld [vmem:[%s383 + $0x8a] sm:$0xff]
        %v4003 = vld [vmem:[%s383 + $0x92] sm:$0xff]
        %v4004 = vld [vmem:[%s383 + $0x9a] sm:$0xff]
        %v4005 = vld [vmem:[%s383 + $0xa2] sm:$0xff]
        %v4006 = vld [vmem:[%s383 + $0xaa] sm:$0xff]
        %v4007 = vld [vmem:[%s383 + $0xb2] sm:$0xff]
        %v4008 = vld [vmem:[%s383 + $0xba] sm:$0xff]
        %v4009 = vld [vmem:[%s383 + $0xc2] sm:$0xff]
        %v4010 = vld [vmem:[%s383 + $0xca] sm:$0xff]
        %v4011 = vld [vmem:[%s383 + $0xd2] sm:$0xff]
        %v4012 = vld [vmem:[%s383 + $0xda] sm:$0xff]
        %v4013 = vld [vmem:[%s383 + $0xe2] sm:$0xff]
        %v4014 = vld [vmem:[%s383 + $0xea] sm:$0xff]
        %v4015 = vld [vmem:[%s383 + $0xf2] sm:$0xff]
        %v4016 = vld [vmem:[%s383 + $0xfa] sm:$0xff]
        %v4017 = vld [vmem:[%s383 + $0x102] sm:$0xff]
        %v4018 = vld [vmem:[%s383 + $0x10a] sm:$0xff]
        %v4019 = vld [vmem:[%s383 + $0x112] sm:$0xff]
        %v4020 = vld [vmem:[%s383 + $0x11a] sm:$0xff]
        %v4021 = vld [vmem:[%s383 + $0x122] sm:$0xff]
        %v4022 = vld [vmem:[%s383 + $0x12a] sm:$0xff]
        %v4023 = vld [vmem:[%s383 + $0x132] sm:$0xff]
        %v4024 = vld [vmem:[%s383 + $0x13a] sm:$0xff]
        %v4025 = vld [vmem:[%s383 + $0x142] sm:$0xff]
        %v4026 = vld [vmem:[%s383 + $0x14a] sm:$0xff]
        %v4027 = vld [vmem:[%s383 + $0x152] sm:$0xff]
        %v4028 = vld [vmem:[%s383 + $0x15a] sm:$0xff]
        %v4029 = vld [vmem:[%s383 + $0x162] sm:$0xff]
        %v4030 = vld [vmem:[%s383 + $0x16a] sm:$0xff]
        %v4031 = vld [vmem:[%s383 + $0x172] sm:$0xff]
        %v4032 = vld [vmem:[%s383 + $0x17a] sm:$0xff]
        %v4033 = vld [vmem:[%s383 + $0x182] sm:$0xff]
        %v4034 = vld [vmem:[%s383 + $0x18a] sm:$0xff]
        %v4035 = vld [vmem:[%s383 + $0x192] sm:$0xff]
        %v4036 = vld [vmem:[%s383 + $0x19a] sm:$0xff]
        %v4037 = vld [vmem:[%s383 + $0x1a2] sm:$0xff]
        %v4038 = vld [vmem:[%s383 + $0x1aa] sm:$0xff]
        %v4039 = vld [vmem:[%s383 + $0x1b2] sm:$0xff]
        %v4040 = vld [vmem:[%s383 + $0x1ba] sm:$0xff]
        %v4041 = vld [vmem:[%s383 + $0x1c2] sm:$0xff]
        %v4042 = vld [vmem:[%s383 + $0x1ca] sm:$0xff]
        %v4043 = vld [vmem:[%s383 + $0x1d2] sm:$0xff]
        %v4044 = vld [vmem:[%s383 + $0x1da] sm:$0xff]
        %v4045 = vld [vmem:[%s383 + $0x1e2] sm:$0xff]
        %v4046 = vld [vmem:[%s383 + $0x1ea] sm:$0xff]
        %v4047 = vld [vmem:[%s383 + $0x1f2] sm:$0xff]
        %v4048 = vld [vmem:[%s383 + $0x1fa] sm:$0xff]
        %v4049 = vld [vmem:[%s383 + $0x202] sm:$0xff]
        %v4050 = vld [vmem:[%s383 + $0x20a] sm:$0xff]
        %v4051 = vld [vmem:[%s383 + $0x212] sm:$0xff]
        %v4052 = vld [vmem:[%s383 + $0x21a] sm:$0xff]
        %v4053 = vld [vmem:[%s383 + $0x222] sm:$0xff]
        %v4054 = vld [vmem:[%s383 + $0x22a] sm:$0xff]
        %v4055 = vld [vmem:[%s383 + $0x232] sm:$0xff]
        %v4056 = vld [vmem:[%s383 + $0x23a] sm:$0xff]
        %v4057 = vld [vmem:[%s383 + $0x242] sm:$0xff]
        %v4058 = vld [vmem:[%s383 + $0x24a] sm:$0xff]
        %v4059 = vld [vmem:[%s383 + $0x252] sm:$0xff]
        %v4060 = vld [vmem:[%s383 + $0x25a] sm:$0xff]
        %v4061 = vld [vmem:[%s383 + $0x262] sm:$0xff]
        %v4062 = vld [vmem:[%s383 + $0x26a] sm:$0xff]
        %v4063 = vld [vmem:[%s383 + $0x272] sm:$0xff]
        %v4064 = vld [vmem:[%s383 + $0x27a] sm:$0xff]
        %v4065 = vld [vmem:[%s383 + $0x282] sm:$0xff]
        %v4066 = vld [vmem:[%s383 + $0x28a] sm:$0xff]
        %v4067 = vld [vmem:[%s383 + $0x292] sm:$0xff]
        %v4068 = vld [vmem:[%s383 + $0x29a] sm:$0xff]
        %v4069 = vld [vmem:[%s383 + $0x2a2] sm:$0xff]
        %v4070 = vld [vmem:[%s383 + $0x2aa] sm:$0xff]
        %v4071 = vld [vmem:[%s383 + $0x2b2] sm:$0xff]
        %v4072 = vld [vmem:[%s383 + $0x2ba] sm:$0xff]
        %v4073 = vld [vmem:[%s383 + $0x2c2] sm:$0xff]
        %v4074 = vld [vmem:[%s383 + $0x2ca] sm:$0xff]
        %v4075 = vld [vmem:[%s383 + $0x2d2] sm:$0xff]
        %v4076 = vld [vmem:[%s383 + $0x2da] sm:$0xff]
        %v4077 = vld [vmem:[%s383 + $0x2e2] sm:$0xff]
        %v4078 = vld [vmem:[%s383 + $0x2ea] sm:$0xff]
        %v4079 = vld [vmem:[%s383 + $0x2f2] sm:$0xff]
        %v4080 = vld [vmem:[%s383 + $0x2fa] sm:$0xff]
        %v4081 = vld [vmem:[%s383 + $0x302] sm:$0xff]
        %v4082 = vld [vmem:[%s383 + $0x30a] sm:$0xff]
        %v4083 = vld [vmem:[%s383 + $0x312] sm:$0xff]
        %v4084 = vld [vmem:[%s383 + $0x31a] sm:$0xff]
        %v4085 = vld [vmem:[%s383 + $0x322] sm:$0xff]
        %v4086 = vld [vmem:[%s383 + $0x32a] sm:$0xff]
        %v4087 = vld [vmem:[%s383 + $0x332] sm:$0xff]
        %v4088 = vld [vmem:[%s383 + $0x33a] sm:$0xff]
        %v4089 = vld [vmem:[%s383 + $0x342] sm:$0xff]
        %v4090 = vld [vmem:[%s383 + $0x34a] sm:$0xff]
        %v4091 = vld [vmem:[%s383 + $0x352] sm:$0xff]
        %v4092 = vld [vmem:[%s383 + $0x35a] sm:$0xff]
        %v4093 = vld [vmem:[%s383 + $0x362] sm:$0xff]
        %v4094 = vld [vmem:[%s383 + $0x36a] sm:$0xff]
        %v4095 = vld [vmem:[%s383 + $0x372] sm:$0xff]
        %v4096 = vld [vmem:[%s383 + $0x37a] sm:$0xff]
        %v4097 = vld [vmem:[%s383 + $0x382] sm:$0xff]
        %v4098 = vld [vmem:[%s383 + $0x38a] sm:$0xff]
        %v4099 = vld [vmem:[%s383 + $0x392] sm:$0xff]
        %v4100 = vld [vmem:[%s383 + $0x39a] sm:$0xff]
        %v4101 = vld [vmem:[%s383 + $0x3a2] sm:$0xff]
        %v4102 = vld [vmem:[%s383 + $0x3aa] sm:$0xff]
        %v4103 = vld [vmem:[%s383 + $0x3b2] sm:$0xff]
        %v4104 = vld [vmem:[%s383 + $0x3ba] sm:$0xff]
        %v4105 = vld [vmem:[%s383 + $0x3c2] sm:$0xff]
        %v4106 = vld [vmem:[%s383 + $0x3ca] sm:$0xff]
        %v4107 = vld [vmem:[%s383 + $0x3d2] sm:$0xff]
        %v4108 = vld [vmem:[%s383 + $0x3da] sm:$0xff]
        %v4109 = vld [vmem:[%s383 + $0x3e2] sm:$0xff]
        %v4110 = vld [vmem:[%s383 + $0x3ea] sm:$0xff]
        %v4111 = vld [vmem:[%s383 + $0x3f2] sm:$0xff]
        %v4112 = vld [vmem:[%s383 + $0x3fa] sm:$0xff]
        %v4113 = vpack.c.bf16 %v3994, %v3993
        %v4114 = vpack.c.bf16 %v3996, %v3995
        %v4115 = vpack.c.bf16 %v3998, %v3997
        %v4116 = vpack.c.bf16 %v4000, %v3999
        %v4117 = vpack.c.bf16 %v4002, %v4001
        %v4118 = vpack.c.bf16 %v4004, %v4003
        %v4119 = vpack.c.bf16 %v4006, %v4005
        %v4120 = vpack.c.bf16 %v4008, %v4007
        %v4121 = vpack.c.bf16 %v4010, %v4009
        %v4122 = vpack.c.bf16 %v4012, %v4011
        %v4123 = vpack.c.bf16 %v4014, %v4013
        %v4124 = vpack.c.bf16 %v4016, %v4015
        %v4125 = vpack.c.bf16 %v4018, %v4017
        %v4126 = vpack.c.bf16 %v4020, %v4019
        %v4127 = vpack.c.bf16 %v4022, %v4021
        %v4128 = vpack.c.bf16 %v4024, %v4023
        %v4129 = vpack.c.bf16 %v4026, %v4025
        %v4130 = vpack.c.bf16 %v4028, %v4027
        %v4131 = vpack.c.bf16 %v4030, %v4029
        %v4132 = vpack.c.bf16 %v4032, %v4031
        %v4133 = vpack.c.bf16 %v4034, %v4033
        %v4134 = vpack.c.bf16 %v4036, %v4035
        %v4135 = vpack.c.bf16 %v4038, %v4037
        %v4136 = vpack.c.bf16 %v4040, %v4039
        %v4137 = vpack.c.bf16 %v4042, %v4041
        %v4138 = vpack.c.bf16 %v4044, %v4043
        %v4139 = vpack.c.bf16 %v4046, %v4045
        %v4140 = vpack.c.bf16 %v4048, %v4047
        %v4141 = vpack.c.bf16 %v4050, %v4049
        %v4142 = vpack.c.bf16 %v4052, %v4051
        %v4143 = vpack.c.bf16 %v4054, %v4053
        %v4144 = vpack.c.bf16 %v4056, %v4055
        %v4145 = vpack.c.bf16 %v4058, %v4057
        %v4146 = vpack.c.bf16 %v4060, %v4059
        %v4147 = vpack.c.bf16 %v4062, %v4061
        %v4148 = vpack.c.bf16 %v4064, %v4063
        %v4149 = vpack.c.bf16 %v4066, %v4065
        %v4150 = vpack.c.bf16 %v4068, %v4067
        %v4151 = vpack.c.bf16 %v4070, %v4069
        %v4152 = vpack.c.bf16 %v4072, %v4071
        %v4153 = vpack.c.bf16 %v4074, %v4073
        %v4154 = vpack.c.bf16 %v4076, %v4075
        %v4155 = vpack.c.bf16 %v4078, %v4077
        %v4156 = vpack.c.bf16 %v4080, %v4079
        %v4157 = vpack.c.bf16 %v4082, %v4081
        %v4158 = vpack.c.bf16 %v4084, %v4083
        %v4159 = vpack.c.bf16 %v4086, %v4085
        %v4160 = vpack.c.bf16 %v4088, %v4087
        %v4161 = vpack.c.bf16 %v4090, %v4089
        %v4162 = vpack.c.bf16 %v4092, %v4091
        %v4163 = vpack.c.bf16 %v4094, %v4093
        %v4164 = vpack.c.bf16 %v4096, %v4095
        %v4165 = vpack.c.bf16 %v4098, %v4097
        %v4166 = vpack.c.bf16 %v4100, %v4099
        %v4167 = vpack.c.bf16 %v4102, %v4101
        %v4168 = vpack.c.bf16 %v4104, %v4103
        %v4169 = vpack.c.bf16 %v4106, %v4105
        %v4170 = vpack.c.bf16 %v4108, %v4107
        %v4171 = vpack.c.bf16 %v4110, %v4109
        %v4172 = vpack.c.bf16 %v4112, %v4111
        %4233 = vrot.lane.b32.xlu0 %v4113, 24
        %v4234 = vpop.permute.xlu0 %4233
        %4235 = vrot.lane.b32.xlu0 %v4114, 24
        %v4236 = vpop.permute.xlu0 %4235
        %4237 = vrot.lane.b32.xlu0 %v4115, 24
        %v4238 = vpop.permute.xlu0 %4237
        %4239 = vrot.lane.b32.xlu0 %v4116, 24
        %v4240 = vpop.permute.xlu0 %4239
        %4241 = vrot.lane.b32.xlu0 %v4117, 24
        %v4242 = vpop.permute.xlu0 %4241
        %4243 = vrot.lane.b32.xlu0 %v4118, 24
        %v4244 = vpop.permute.xlu0 %4243
        %4245 = vrot.lane.b32.xlu0 %v4119, 24
        %v4246 = vpop.permute.xlu0 %4245
        %4247 = vrot.lane.b32.xlu0 %v4120, 24
        %v4248 = vpop.permute.xlu0 %4247
        %4249 = vrot.lane.b32.xlu0 %v4121, 24
        %v4250 = vpop.permute.xlu0 %4249
        %4251 = vrot.lane.b32.xlu0 %v4122, 24
        %v4252 = vpop.permute.xlu0 %4251
        %4253 = vrot.lane.b32.xlu0 %v4123, 24
        %v4254 = vpop.permute.xlu0 %4253
        %4255 = vrot.lane.b32.xlu0 %v4124, 24
        %v4256 = vpop.permute.xlu0 %4255
        %4257 = vrot.lane.b32.xlu0 %v4125, 24
        %v4258 = vpop.permute.xlu0 %4257
        %4259 = vrot.lane.b32.xlu0 %v4126, 24
        %v4260 = vpop.permute.xlu0 %4259
        %4261 = vrot.lane.b32.xlu0 %v4127, 24
        %v4262 = vpop.permute.xlu0 %4261
        %4263 = vrot.lane.b32.xlu0 %v4128, 24
        %v4264 = vpop.permute.xlu0 %4263
        %4265 = vrot.lane.b32.xlu0 %v4129, 24
        %v4266 = vpop.permute.xlu0 %4265
        %4267 = vrot.lane.b32.xlu0 %v4130, 24
        %v4268 = vpop.permute.xlu0 %4267
        %4269 = vrot.lane.b32.xlu0 %v4131, 24
        %v4270 = vpop.permute.xlu0 %4269
        %4271 = vrot.lane.b32.xlu0 %v4132, 24
        %v4272 = vpop.permute.xlu0 %4271
        %4273 = vrot.lane.b32.xlu0 %v4133, 24
        %v4274 = vpop.permute.xlu0 %4273
        %4275 = vrot.lane.b32.xlu0 %v4134, 24
        %v4276 = vpop.permute.xlu0 %4275
        %4277 = vrot.lane.b32.xlu0 %v4135, 24
        %v4278 = vpop.permute.xlu0 %4277
        %4279 = vrot.lane.b32.xlu0 %v4136, 24
        %v4280 = vpop.permute.xlu0 %4279
        %4281 = vrot.lane.b32.xlu0 %v4137, 24
        %v4282 = vpop.permute.xlu0 %4281
        %4283 = vrot.lane.b32.xlu0 %v4138, 24
        %v4284 = vpop.permute.xlu0 %4283
        %4285 = vrot.lane.b32.xlu0 %v4139, 24
        %v4286 = vpop.permute.xlu0 %4285
        %4287 = vrot.lane.b32.xlu0 %v4140, 24
        %v4288 = vpop.permute.xlu0 %4287
        %4289 = vrot.lane.b32.xlu0 %v4141, 24
        %v4290 = vpop.permute.xlu0 %4289
        %4291 = vrot.lane.b32.xlu0 %v4142, 24
        %v4292 = vpop.permute.xlu0 %4291
        %4293 = vrot.lane.b32.xlu0 %v4143, 24
        %v4294 = vpop.permute.xlu0 %4293
        %4295 = vrot.lane.b32.xlu0 %v4144, 24
        %v4296 = vpop.permute.xlu0 %4295
        %4297 = vrot.lane.b32.xlu0 %v4145, 24
        %v4298 = vpop.permute.xlu0 %4297
        %4299 = vrot.lane.b32.xlu0 %v4146, 24
        %v4300 = vpop.permute.xlu0 %4299
        %4301 = vrot.lane.b32.xlu0 %v4147, 24
        %v4302 = vpop.permute.xlu0 %4301
        %4303 = vrot.lane.b32.xlu0 %v4148, 24
        %v4304 = vpop.permute.xlu0 %4303
        %4305 = vrot.lane.b32.xlu0 %v4149, 24
        %v4306 = vpop.permute.xlu0 %4305
        %4307 = vrot.lane.b32.xlu0 %v4150, 24
        %v4308 = vpop.permute.xlu0 %4307
        %4309 = vrot.lane.b32.xlu0 %v4151, 24
        %v4310 = vpop.permute.xlu0 %4309
        %4311 = vrot.lane.b32.xlu0 %v4152, 24
        %v4312 = vpop.permute.xlu0 %4311
        %4313 = vrot.lane.b32.xlu0 %v4153, 24
        %v4314 = vpop.permute.xlu0 %4313
        %4315 = vrot.lane.b32.xlu0 %v4154, 24
        %v4316 = vpop.permute.xlu0 %4315
        %4317 = vrot.lane.b32.xlu0 %v4155, 24
        %v4318 = vpop.permute.xlu0 %4317
        %4319 = vrot.lane.b32.xlu0 %v4156, 24
        %v4320 = vpop.permute.xlu0 %4319
        %4321 = vrot.lane.b32.xlu0 %v4157, 24
        %v4322 = vpop.permute.xlu0 %4321
        %4323 = vrot.lane.b32.xlu0 %v4158, 24
        %v4324 = vpop.permute.xlu0 %4323
        %4325 = vrot.lane.b32.xlu0 %v4159, 24
        %v4326 = vpop.permute.xlu0 %4325
        %4327 = vrot.lane.b32.xlu0 %v4160, 24
        %v4328 = vpop.permute.xlu0 %4327
        %4329 = vrot.lane.b32.xlu0 %v4161, 24
        %v4330 = vpop.permute.xlu0 %4329
        %4331 = vrot.lane.b32.xlu0 %v4162, 24
        %v4332 = vpop.permute.xlu0 %4331
        %4333 = vrot.lane.b32.xlu0 %v4163, 24
        %v4334 = vpop.permute.xlu0 %4333
        %4335 = vrot.lane.b32.xlu0 %v4164, 24
        %v4336 = vpop.permute.xlu0 %4335
        %4337 = vrot.lane.b32.xlu0 %v4165, 24
        %v4338 = vpop.permute.xlu0 %4337
        %4339 = vrot.lane.b32.xlu0 %v4166, 24
        %v4340 = vpop.permute.xlu0 %4339
        %4341 = vrot.lane.b32.xlu0 %v4167, 24
        %v4342 = vpop.permute.xlu0 %4341
        %4343 = vrot.lane.b32.xlu0 %v4168, 24
        %v4344 = vpop.permute.xlu0 %4343
        %4345 = vrot.lane.b32.xlu0 %v4169, 24
        %v4346 = vpop.permute.xlu0 %4345
        %4347 = vrot.lane.b32.xlu0 %v4170, 24
        %v4348 = vpop.permute.xlu0 %4347
        %4349 = vrot.lane.b32.xlu0 %v4171, 24
        %v4350 = vpop.permute.xlu0 %4349
        %4351 = vrot.lane.b32.xlu0 %v4172, 24
        %v4352 = vpop.permute.xlu0 %4351
        %vm4413 = vcmask 220352
        %4414 = vst.msk [vmem:[#allocation2] sm:$0xff] %vm4413, %v4234
        %4415 = vst.msk [vmem:[#allocation2 + $0x8] sm:$0xff] %vm4413, %v4236
        %4416 = vst.msk [vmem:[#allocation2 + $0x10] sm:$0xff] %vm4413, %v4238
        %4417 = vst.msk [vmem:[#allocation2 + $0x18] sm:$0xff] %vm4413, %v4240
        %4418 = vst.msk [vmem:[#allocation2 + $0x20] sm:$0xff] %vm4413, %v4242
        %4419 = vst.msk [vmem:[#allocation2 + $0x28] sm:$0xff] %vm4413, %v4244
        %4420 = vst.msk [vmem:[#allocation2 + $0x30] sm:$0xff] %vm4413, %v4246
        %4421 = vst.msk [vmem:[#allocation2 + $0x38] sm:$0xff] %vm4413, %v4248
        %4422 = vst.msk [vmem:[#allocation2 + $0x40] sm:$0xff] %vm4413, %v4250
        %4423 = vst.msk [vmem:[#allocation2 + $0x48] sm:$0xff] %vm4413, %v4252
        %4424 = vst.msk [vmem:[#allocation2 + $0x50] sm:$0xff] %vm4413, %v4254
        %4425 = vst.msk [vmem:[#allocation2 + $0x58] sm:$0xff] %vm4413, %v4256
        %4426 = vst.msk [vmem:[#allocation2 + $0x60] sm:$0xff] %vm4413, %v4258
        %4427 = vst.msk [vmem:[#allocation2 + $0x68] sm:$0xff] %vm4413, %v4260
        %4428 = vst.msk [vmem:[#allocation2 + $0x70] sm:$0xff] %vm4413, %v4262
        %4429 = vst.msk [vmem:[#allocation2 + $0x78] sm:$0xff] %vm4413, %v4264
        %4430 = vst.msk [vmem:[#allocation2 + $0x80] sm:$0xff] %vm4413, %v4266
        %4431 = vst.msk [vmem:[#allocation2 + $0x88] sm:$0xff] %vm4413, %v4268
        %4432 = vst.msk [vmem:[#allocation2 + $0x90] sm:$0xff] %vm4413, %v4270
        %4433 = vst.msk [vmem:[#allocation2 + $0x98] sm:$0xff] %vm4413, %v4272
        %4434 = vst.msk [vmem:[#allocation2 + $0xa0] sm:$0xff] %vm4413, %v4274
        %4435 = vst.msk [vmem:[#allocation2 + $0xa8] sm:$0xff] %vm4413, %v4276
        %4436 = vst.msk [vmem:[#allocation2 + $0xb0] sm:$0xff] %vm4413, %v4278
        %4437 = vst.msk [vmem:[#allocation2 + $0xb8] sm:$0xff] %vm4413, %v4280
        %4438 = vst.msk [vmem:[#allocation2 + $0xc0] sm:$0xff] %vm4413, %v4282
        %4439 = vst.msk [vmem:[#allocation2 + $0xc8] sm:$0xff] %vm4413, %v4284
        %4440 = vst.msk [vmem:[#allocation2 + $0xd0] sm:$0xff] %vm4413, %v4286
        %4441 = vst.msk [vmem:[#allocation2 + $0xd8] sm:$0xff] %vm4413, %v4288
        %4442 = vst.msk [vmem:[#allocation2 + $0xe0] sm:$0xff] %vm4413, %v4290
        %4443 = vst.msk [vmem:[#allocation2 + $0xe8] sm:$0xff] %vm4413, %v4292
        %4444 = vst.msk [vmem:[#allocation2 + $0xf0] sm:$0xff] %vm4413, %v4294
        %4445 = vst.msk [vmem:[#allocation2 + $0xf8] sm:$0xff] %vm4413, %v4296
        %4446 = vst.msk [vmem:[#allocation2 + $0x100] sm:$0xff] %vm4413, %v4298
        %4447 = vst.msk [vmem:[#allocation2 + $0x108] sm:$0xff] %vm4413, %v4300
        %4448 = vst.msk [vmem:[#allocation2 + $0x110] sm:$0xff] %vm4413, %v4302
        %4449 = vst.msk [vmem:[#allocation2 + $0x118] sm:$0xff] %vm4413, %v4304
        %4450 = vst.msk [vmem:[#allocation2 + $0x120] sm:$0xff] %vm4413, %v4306
        %4451 = vst.msk [vmem:[#allocation2 + $0x128] sm:$0xff] %vm4413, %v4308
        %4452 = vst.msk [vmem:[#allocation2 + $0x130] sm:$0xff] %vm4413, %v4310
        %4453 = vst.msk [vmem:[#allocation2 + $0x138] sm:$0xff] %vm4413, %v4312
        %4454 = vst.msk [vmem:[#allocation2 + $0x140] sm:$0xff] %vm4413, %v4314
        %4455 = vst.msk [vmem:[#allocation2 + $0x148] sm:$0xff] %vm4413, %v4316
        %4456 = vst.msk [vmem:[#allocation2 + $0x150] sm:$0xff] %vm4413, %v4318
        %4457 = vst.msk [vmem:[#allocation2 + $0x158] sm:$0xff] %vm4413, %v4320
        %4458 = vst.msk [vmem:[#allocation2 + $0x160] sm:$0xff] %vm4413, %v4322
        %4459 = vst.msk [vmem:[#allocation2 + $0x168] sm:$0xff] %vm4413, %v4324
        %4460 = vst.msk [vmem:[#allocation2 + $0x170] sm:$0xff] %vm4413, %v4326
        %4461 = vst.msk [vmem:[#allocation2 + $0x178] sm:$0xff] %vm4413, %v4328
        %4462 = vst.msk [vmem:[#allocation2 + $0x180] sm:$0xff] %vm4413, %v4330
        %4463 = vst.msk [vmem:[#allocation2 + $0x188] sm:$0xff] %vm4413, %v4332
        %4464 = vst.msk [vmem:[#allocation2 + $0x190] sm:$0xff] %vm4413, %v4334
        %4465 = vst.msk [vmem:[#allocation2 + $0x198] sm:$0xff] %vm4413, %v4336
        %4466 = vst.msk [vmem:[#allocation2 + $0x1a0] sm:$0xff] %vm4413, %v4338
        %4467 = vst.msk [vmem:[#allocation2 + $0x1a8] sm:$0xff] %vm4413, %v4340
        %4468 = vst.msk [vmem:[#allocation2 + $0x1b0] sm:$0xff] %vm4413, %v4342
        %4469 = vst.msk [vmem:[#allocation2 + $0x1b8] sm:$0xff] %vm4413, %v4344
        %4470 = vst.msk [vmem:[#allocation2 + $0x1c0] sm:$0xff] %vm4413, %v4346
        %4471 = vst.msk [vmem:[#allocation2 + $0x1c8] sm:$0xff] %vm4413, %v4348
        %4472 = vst.msk [vmem:[#allocation2 + $0x1d0] sm:$0xff] %vm4413, %v4350
        %4473 = vst.msk [vmem:[#allocation2 + $0x1d8] sm:$0xff] %vm4413, %v4352
        %v4474 = vld [vmem:[#allocation2] sm:$0xff]
        %v4475 = vld [vmem:[#allocation2 + $0x8] sm:$0xff]
        %v4476 = vld [vmem:[#allocation2 + $0x10] sm:$0xff]
        %v4477 = vld [vmem:[#allocation2 + $0x18] sm:$0xff]
        %v4478 = vld [vmem:[#allocation2 + $0x20] sm:$0xff]
        %v4479 = vld [vmem:[#allocation2 + $0x28] sm:$0xff]
        %v4480 = vld [vmem:[#allocation2 + $0x30] sm:$0xff]
        %v4481 = vld [vmem:[#allocation2 + $0x38] sm:$0xff]
        %v4482 = vld [vmem:[#allocation2 + $0x40] sm:$0xff]
        %v4483 = vld [vmem:[#allocation2 + $0x48] sm:$0xff]
        %v4484 = vld [vmem:[#allocation2 + $0x50] sm:$0xff]
        %v4485 = vld [vmem:[#allocation2 + $0x58] sm:$0xff]
        %v4486 = vld [vmem:[#allocation2 + $0x60] sm:$0xff]
        %v4487 = vld [vmem:[#allocation2 + $0x68] sm:$0xff]
        %v4488 = vld [vmem:[#allocation2 + $0x70] sm:$0xff]
        %v4489 = vld [vmem:[#allocation2 + $0x78] sm:$0xff]
        %v4490 = vld [vmem:[#allocation2 + $0x80] sm:$0xff]
        %v4491 = vld [vmem:[#allocation2 + $0x88] sm:$0xff]
        %v4492 = vld [vmem:[#allocation2 + $0x90] sm:$0xff]
        %v4493 = vld [vmem:[#allocation2 + $0x98] sm:$0xff]
        %v4494 = vld [vmem:[#allocation2 + $0xa0] sm:$0xff]
        %v4495 = vld [vmem:[#allocation2 + $0xa8] sm:$0xff]
        %v4496 = vld [vmem:[#allocation2 + $0xb0] sm:$0xff]
        %v4497 = vld [vmem:[#allocation2 + $0xb8] sm:$0xff]
        %v4498 = vld [vmem:[#allocation2 + $0xc0] sm:$0xff]
        %v4499 = vld [vmem:[#allocation2 + $0xc8] sm:$0xff]
        %v4500 = vld [vmem:[#allocation2 + $0xd0] sm:$0xff]
        %v4501 = vld [vmem:[#allocation2 + $0xd8] sm:$0xff]
        %v4502 = vld [vmem:[#allocation2 + $0xe0] sm:$0xff]
        %v4503 = vld [vmem:[#allocation2 + $0xe8] sm:$0xff]
        %v4504 = vld [vmem:[#allocation2 + $0xf0] sm:$0xff]
        %v4505 = vld [vmem:[#allocation2 + $0xf8] sm:$0xff]
        %v4506 = vld [vmem:[#allocation2 + $0x100] sm:$0xff]
        %v4507 = vld [vmem:[#allocation2 + $0x108] sm:$0xff]
        %v4508 = vld [vmem:[#allocation2 + $0x110] sm:$0xff]
        %v4509 = vld [vmem:[#allocation2 + $0x118] sm:$0xff]
        %v4510 = vld [vmem:[#allocation2 + $0x120] sm:$0xff]
        %v4511 = vld [vmem:[#allocation2 + $0x128] sm:$0xff]
        %v4512 = vld [vmem:[#allocation2 + $0x130] sm:$0xff]
        %v4513 = vld [vmem:[#allocation2 + $0x138] sm:$0xff]
        %v4514 = vld [vmem:[#allocation2 + $0x140] sm:$0xff]
        %v4515 = vld [vmem:[#allocation2 + $0x148] sm:$0xff]
        %v4516 = vld [vmem:[#allocation2 + $0x150] sm:$0xff]
        %v4517 = vld [vmem:[#allocation2 + $0x158] sm:$0xff]
        %v4518 = vld [vmem:[#allocation2 + $0x160] sm:$0xff]
        %v4519 = vld [vmem:[#allocation2 + $0x168] sm:$0xff]
        %v4520 = vld [vmem:[#allocation2 + $0x170] sm:$0xff]
        %v4521 = vld [vmem:[#allocation2 + $0x178] sm:$0xff]
        %v4522 = vld [vmem:[#allocation2 + $0x180] sm:$0xff]
        %v4523 = vld [vmem:[#allocation2 + $0x188] sm:$0xff]
        %v4524 = vld [vmem:[#allocation2 + $0x190] sm:$0xff]
        %v4525 = vld [vmem:[#allocation2 + $0x198] sm:$0xff]
        %v4526 = vld [vmem:[#allocation2 + $0x1a0] sm:$0xff]
        %v4527 = vld [vmem:[#allocation2 + $0x1a8] sm:$0xff]
        %v4528 = vld [vmem:[#allocation2 + $0x1b0] sm:$0xff]
        %v4529 = vld [vmem:[#allocation2 + $0x1b8] sm:$0xff]
        %v4530 = vld [vmem:[#allocation2 + $0x1c0] sm:$0xff]
        %v4531 = vld [vmem:[#allocation2 + $0x1c8] sm:$0xff]
        %v4532 = vld [vmem:[#allocation2 + $0x1d0] sm:$0xff]
        %v4533 = vld [vmem:[#allocation2 + $0x1d8] sm:$0xff]
        %v4534 = vld [vmem:[%s1] sm:$0xf]
        %v4535 = vld [vmem:[%s1 + $0x4] sm:$0xf]
        %v4536 = vld [vmem:[%s1 + $0x8] sm:$0xf]
        %v4537 = vld [vmem:[%s1 + $0xc] sm:$0x3]
        %v4542 = vunpack.c.l.b16 %v4534
        %v4543 = vunpack.c.l.b16 %v4535
        %v4544 = vunpack.c.l.b16 %v4536
        %v4545 = vunpack.c.l.b16 %v4537
        %v4546 = vpack.c.b16 %v4543, %v4542
        %v4547 = vpack.c.b16 %v4545, %v4544
        %vm4549 = vcmask 220160
        %v4551 = vsel %vm4549, %v4474, 0
        %v4554 = vsel %vm4549, %v4475, 0
        %v4557 = vsel %vm4549, %v4476, 0
        %v4560 = vsel %vm4549, %v4477, 0
        %v4563 = vsel %vm4549, %v4478, 0
        %v4566 = vsel %vm4549, %v4479, 0
        %v4569 = vsel %vm4549, %v4480, 0
        %v4572 = vsel %vm4549, %v4481, 0
        %v4575 = vsel %vm4549, %v4482, 0
        %v4578 = vsel %vm4549, %v4483, 0
        %v4581 = vsel %vm4549, %v4484, 0
        %v4584 = vsel %vm4549, %v4485, 0
        %v4587 = vsel %vm4549, %v4486, 0
        %v4590 = vsel %vm4549, %v4487, 0
        %v4593 = vsel %vm4549, %v4488, 0
        %v4596 = vsel %vm4549, %v4489, 0
        %v4599 = vsel %vm4549, %v4490, 0
        %v4602 = vsel %vm4549, %v4491, 0
        %v4605 = vsel %vm4549, %v4492, 0
        %v4608 = vsel %vm4549, %v4493, 0
        %v4611 = vsel %vm4549, %v4494, 0
        %v4614 = vsel %vm4549, %v4495, 0
        %v4617 = vsel %vm4549, %v4496, 0
        %v4620 = vsel %vm4549, %v4497, 0
        %v4623 = vsel %vm4549, %v4498, 0
        %v4626 = vsel %vm4549, %v4499, 0
        %v4629 = vsel %vm4549, %v4500, 0
        %v4632 = vsel %vm4549, %v4501, 0
        %v4635 = vsel %vm4549, %v4502, 0
        %v4638 = vsel %vm4549, %v4503, 0
        %v4641 = vsel %vm4549, %v4504, 0
        %v4644 = vsel %vm4549, %v4505, 0
        %v4647 = vsel %vm4549, %v4506, 0
        %v4650 = vsel %vm4549, %v4507, 0
        %v4653 = vsel %vm4549, %v4508, 0
        %v4656 = vsel %vm4549, %v4509, 0
        %v4659 = vsel %vm4549, %v4510, 0
        %v4662 = vsel %vm4549, %v4511, 0
        %v4665 = vsel %vm4549, %v4512, 0
        %v4668 = vsel %vm4549, %v4513, 0
        %v4671 = vsel %vm4549, %v4514, 0
        %v4674 = vsel %vm4549, %v4515, 0
        %v4677 = vsel %vm4549, %v4516, 0
        %v4680 = vsel %vm4549, %v4517, 0
        %v4683 = vsel %vm4549, %v4518, 0
        %v4686 = vsel %vm4549, %v4519, 0
        %v4689 = vsel %vm4549, %v4520, 0
        %v4692 = vsel %vm4549, %v4521, 0
        %v4695 = vsel %vm4549, %v4522, 0
        %v4698 = vsel %vm4549, %v4523, 0
        %v4701 = vsel %vm4549, %v4524, 0
        %v4704 = vsel %vm4549, %v4525, 0
        %v4707 = vsel %vm4549, %v4526, 0
        %v4710 = vsel %vm4549, %v4527, 0
        %v4713 = vsel %vm4549, %v4528, 0
        %v4716 = vsel %vm4549, %v4529, 0
        %v4719 = vsel %vm4549, %v4530, 0
        %v4722 = vsel %vm4549, %v4531, 0
        %v4725 = vsel %vm4549, %v4532, 0
        %v4728 = vsel %vm4549, %v4533, 0
        %vm4730 = vcmask 1044480
        %vm4731 = vcmask 1045504
        %v4732 = vsel %vm4730, 4294967295, 65535
        %v4733 = vsel %vm4731, %v4732, 0
        %v4735 = vand.u32 %v4547, %v4733
        %4737 = vmatprep.subr.bf16.mxu0 0
        %4738 = vmatpush1.bf16.msra.mxu0 %v4546
        %4739 = vmatprep.subr.bf16.mxu0 0
        %4740 = vmatpush1.bf16.msra.mxu0 %v4735
        %4741 = vmatprep.subr.bf16.mxu0 0
        %4742 = vmatpush1.bf16.msra.mxu0 0
        %4743 = vmatprep.subr.bf16.mxu0 0
        %4744 = vmatpush1.bf16.msra.mxu0 0
        %4745 = vmatprep.subr.bf16.mxu0 0
        %4746 = vmatpush1.bf16.msra.mxu0 0
        %4747 = vmatprep.subr.bf16.mxu0 0
        %4748 = vmatpush1.bf16.msra.mxu0 0
        %4749 = vmatprep.subr.bf16.mxu0 0
        %4750 = vmatpush1.bf16.msra.mxu0 0
        %4751 = vmatprep.subr.bf16.mxu0 0
        %4752 = vmatpush1.bf16.msra.mxu0 0
        %4753 = vmatprep.subr.bf16.mxu0 0
        %4754 = vmatpush1.bf16.msra.mxu0 0
        %4755 = vmatprep.subr.bf16.mxu0 0
        %4756 = vmatpush1.bf16.msra.mxu0 0
        %4757 = vmatprep.subr.bf16.mxu0 0
        %4758 = vmatpush1.bf16.msra.mxu0 0
        %4759 = vmatprep.subr.bf16.mxu0 0
        %4760 = vmatpush1.bf16.msra.mxu0 0
        %4761 = vmatprep.subr.bf16.mxu0 0
        %4762 = vmatpush1.bf16.msra.mxu0 0
        %4763 = vmatprep.subr.bf16.mxu0 0
        %4764 = vmatpush1.bf16.msra.mxu0 0
        %4765 = vmatprep.subr.bf16.mxu0 0
        %4766 = vmatpush1.bf16.msra.mxu0 0
        %4767 = vmatprep.subr.bf16.mxu0 0
        %4768 = vmatpush1.bf16.msra.mxu0 0
        %4769 = vmatprep.mubr.bf16.mxu0 0
        %4770 = vmatmul.mubr.bf16.gmra.mrb[0].mxu0 %v4551
        %v4771 = vpop.f32.mrb[0].mxu0
        %v4772 = vadd.f32 0.0, %v4771
        %v4773 = vpop.f32.mrb[0].mxu0
        %v4774 = vpop.f32.mrb[0].mxu0
        %v4775 = vadd.f32 0.0, %v4774
        %v4776 = vpop.f32.mrb[0].mxu0
        %4777 = vmatprep.mubr.bf16.mxu0 0
        %4778 = vmatmul.mubr.bf16.gmra.mrb[0].mxu0 %v4554
        %v4779 = vpop.f32.mrb[0].mxu0
        %v4780 = vadd.f32 0.0, %v4779
        %v4781 = vpop.f32.mrb[0].mxu0
        %v4782 = vpop.f32.mrb[0].mxu0
        %v4783 = vadd.f32 0.0, %v4782
        %v4784 = vpop.f32.mrb[0].mxu0
        %4785 = vmatprep.mubr.bf16.mxu0 0
        %4786 = vmatmul.mubr.bf16.gmra.mrb[0].mxu0 %v4557
        %v4787 = vpop.f32.mrb[0].mxu0
        %v4788 = vadd.f32 0.0, %v4787
        %v4789 = vpop.f32.mrb[0].mxu0
        %v4790 = vpop.f32.mrb[0].mxu0
        %v4791 = vadd.f32 0.0, %v4790
        %v4792 = vpop.f32.mrb[0].mxu0
        %4793 = vmatprep.mubr.bf16.mxu0 0
        %4794 = vmatmul.mubr.bf16.gmra.mrb[0].mxu0 %v4560
        %v4795 = vpop.f32.mrb[0].mxu0
        %v4796 = vadd.f32 0.0, %v4795
        %v4797 = vpop.f32.mrb[0].mxu0
        %v4798 = vpop.f32.mrb[0].mxu0
        %v4799 = vadd.f32 0.0, %v4798
        %v4800 = vpop.f32.mrb[0].mxu0
        %4801 = vmatprep.mubr.bf16.mxu0 0
        %4802 = vmatmul.mubr.bf16.gmra.mrb[0].mxu0 %v4563
        %v4803 = vpop.f32.mrb[0].mxu0
        %v4804 = vadd.f32 0.0, %v4803
        %v4805 = vpop.f32.mrb[0].mxu0
        %v4806 = vpop.f32.mrb[0].mxu0
        %v4807 = vadd.f32 0.0, %v4806
        %v4808 = vpop.f32.mrb[0].mxu0
        %4809 = vmatprep.mubr.bf16.mxu0 0
        %4810 = vmatmul.mubr.bf16.gmra.mrb[0].mxu0 %v4566
        %v4811 = vpop.f32.mrb[0].mxu0
        %v4812 = vadd.f32 0.0, %v4811
        %v4813 = vpop.f32.mrb[0].mxu0
        %v4814 = vpop.f32.mrb[0].mxu0
        %v4815 = vadd.f32 0.0, %v4814
        %v4816 = vpop.f32.mrb[0].mxu0
        %4817 = vmatprep.mubr.bf16.mxu0 0
        %4818 = vmatmul.mubr.bf16.gmra.mrb[0].mxu0 %v4569
        %v4819 = vpop.f32.mrb[0].mxu0
        %v4820 = vadd.f32 0.0, %v4819
        %v4821 = vpop.f32.mrb[0].mxu0
        %v4822 = vpop.f32.mrb[0].mxu0
        %v4823 = vadd.f32 0.0, %v4822
        %v4824 = vpop.f32.mrb[0].mxu0
        %4825 = vmatprep.mubr.bf16.mxu0 0
        %4826 = vmatmul.mubr.bf16.gmra.mrb[0].mxu0 %v4572
        %v4827 = vpop.f32.mrb[0].mxu0
        %v4828 = vadd.f32 0.0, %v4827
        %v4829 = vpop.f32.mrb[0].mxu0
        %v4830 = vpop.f32.mrb[0].mxu0
        %v4831 = vadd.f32 0.0, %v4830
        %v4832 = vpop.f32.mrb[0].mxu0
        %4833 = vmatprep.mubr.bf16.mxu0 0
        %4834 = vmatmul.mubr.bf16.gmra.mrb[0].mxu0 %v4575
        %v4835 = vpop.f32.mrb[0].mxu0
        %v4836 = vadd.f32 0.0, %v4835
        %v4837 = vpop.f32.mrb[0].mxu0
        %v4838 = vpop.f32.mrb[0].mxu0
        %v4839 = vadd.f32 0.0, %v4838
        %v4840 = vpop.f32.mrb[0].mxu0
        %4841 = vmatprep.mubr.bf16.mxu0 0
        %4842 = vmatmul.mubr.bf16.gmra.mrb[0].mxu0 %v4578
        %v4843 = vpop.f32.mrb[0].mxu0
        %v4844 = vadd.f32 0.0, %v4843
        %v4845 = vpop.f32.mrb[0].mxu0
        %v4846 = vpop.f32.mrb[0].mxu0
        %v4847 = vadd.f32 0.0, %v4846
        %v4848 = vpop.f32.mrb[0].mxu0
        %4849 = vmatprep.mubr.bf16.mxu0 0
        %4850 = vmatmul.mubr.bf16.gmra.mrb[0].mxu0 %v4581
        %v4851 = vpop.f32.mrb[0].mxu0
        %v4852 = vadd.f32 0.0, %v4851
        %v4853 = vpop.f32.mrb[0].mxu0
        %v4854 = vpop.f32.mrb[0].mxu0
        %v4855 = vadd.f32 0.0, %v4854
        %v4856 = vpop.f32.mrb[0].mxu0
        %4857 = vmatprep.mubr.bf16.mxu0 0
        %4858 = vmatmul.mubr.bf16.gmra.mrb[0].mxu0 %v4584
        %v4859 = vpop.f32.mrb[0].mxu0
        %v4860 = vadd.f32 0.0, %v4859
        %v4861 = vpop.f32.mrb[0].mxu0
        %v4862 = vpop.f32.mrb[0].mxu0
        %v4863 = vadd.f32 0.0, %v4862
        %v4864 = vpop.f32.mrb[0].mxu0
        %4865 = vmatprep.mubr.bf16.mxu0 0
        %4866 = vmatmul.mubr.bf16.gmra.mrb[0].mxu0 %v4587
        %v4867 = vpop.f32.mrb[0].mxu0
        %v4868 = vadd.f32 0.0, %v4867
        %v4869 = vpop.f32.mrb[0].mxu0
        %v4870 = vpop.f32.mrb[0].mxu0
        %v4871 = vadd.f32 0.0, %v4870
        %v4872 = vpop.f32.mrb[0].mxu0
        %4873 = vmatprep.mubr.bf16.mxu0 0
        %4874 = vmatmul.mubr.bf16.gmra.mrb[0].mxu0 %v4590
        %v4875 = vpop.f32.mrb[0].mxu0
        %v4876 = vadd.f32 0.0, %v4875
        %v4877 = vpop.f32.mrb[0].mxu0
        %v4878 = vpop.f32.mrb[0].mxu0
        %v4879 = vadd.f32 0.0, %v4878
        %v4880 = vpop.f32.mrb[0].mxu0
        %4881 = vmatprep.mubr.bf16.mxu0 0
        %4882 = vmatmul.mubr.bf16.gmra.mrb[0].mxu0 %v4593
        %v4883 = vpop.f32.mrb[0].mxu0
        %v4884 = vadd.f32 0.0, %v4883
        %v4885 = vpop.f32.mrb[0].mxu0
        %v4886 = vpop.f32.mrb[0].mxu0
        %v4887 = vadd.f32 0.0, %v4886
        %v4888 = vpop.f32.mrb[0].mxu0
        %4889 = vmatprep.mubr.bf16.mxu0 0
        %4890 = vmatmul.mubr.bf16.gmra.mrb[0].mxu0 %v4596
        %v4891 = vpop.f32.mrb[0].mxu0
        %v4892 = vadd.f32 0.0, %v4891
        %v4893 = vpop.f32.mrb[0].mxu0
        %v4894 = vpop.f32.mrb[0].mxu0
        %v4895 = vadd.f32 0.0, %v4894
        %v4896 = vpop.f32.mrb[0].mxu0
        %4897 = vmatprep.mubr.bf16.mxu0 0
        %4898 = vmatmul.mubr.bf16.gmra.mrb[0].mxu0 %v4599
        %v4899 = vpop.f32.mrb[0].mxu0
        %v4900 = vadd.f32 0.0, %v4899
        %v4901 = vpop.f32.mrb[0].mxu0
        %v4902 = vpop.f32.mrb[0].mxu0
        %v4903 = vadd.f32 0.0, %v4902
        %v4904 = vpop.f32.mrb[0].mxu0
        %4905 = vmatprep.mubr.bf16.mxu0 0
        %4906 = vmatmul.mubr.bf16.gmra.mrb[0].mxu0 %v4602
        %v4907 = vpop.f32.mrb[0].mxu0
        %v4908 = vadd.f32 0.0, %v4907
        %v4909 = vpop.f32.mrb[0].mxu0
        %v4910 = vpop.f32.mrb[0].mxu0
        %v4911 = vadd.f32 0.0, %v4910
        %v4912 = vpop.f32.mrb[0].mxu0
        %4913 = vmatprep.mubr.bf16.mxu0 0
        %4914 = vmatmul.mubr.bf16.gmra.mrb[0].mxu0 %v4605
        %v4915 = vpop.f32.mrb[0].mxu0
        %v4916 = vadd.f32 0.0, %v4915
        %v4917 = vpop.f32.mrb[0].mxu0
        %v4918 = vpop.f32.mrb[0].mxu0
        %v4919 = vadd.f32 0.0, %v4918
        %v4920 = vpop.f32.mrb[0].mxu0
        %4921 = vmatprep.mubr.bf16.mxu0 0
        %4922 = vmatmul.mubr.bf16.gmra.mrb[0].mxu0 %v4608
        %v4923 = vpop.f32.mrb[0].mxu0
        %v4924 = vadd.f32 0.0, %v4923
        %v4925 = vpop.f32.mrb[0].mxu0
        %v4926 = vpop.f32.mrb[0].mxu0
        %v4927 = vadd.f32 0.0, %v4926
        %v4928 = vpop.f32.mrb[0].mxu0
        %4929 = vmatprep.mubr.bf16.mxu0 0
        %4930 = vmatmul.mubr.bf16.gmra.mrb[0].mxu0 %v4611
        %v4931 = vpop.f32.mrb[0].mxu0
        %v4932 = vadd.f32 0.0, %v4931
        %v4933 = vpop.f32.mrb[0].mxu0
        %v4934 = vpop.f32.mrb[0].mxu0
        %v4935 = vadd.f32 0.0, %v4934
        %v4936 = vpop.f32.mrb[0].mxu0
        %4937 = vmatprep.mubr.bf16.mxu0 0
        %4938 = vmatmul.mubr.bf16.gmra.mrb[0].mxu0 %v4614
        %v4939 = vpop.f32.mrb[0].mxu0
        %v4940 = vadd.f32 0.0, %v4939
        %v4941 = vpop.f32.mrb[0].mxu0
        %v4942 = vpop.f32.mrb[0].mxu0
        %v4943 = vadd.f32 0.0, %v4942
        %v4944 = vpop.f32.mrb[0].mxu0
        %4945 = vmatprep.mubr.bf16.mxu0 0
        %4946 = vmatmul.mubr.bf16.gmra.mrb[0].mxu0 %v4617
        %v4947 = vpop.f32.mrb[0].mxu0
        %v4948 = vadd.f32 0.0, %v4947
        %v4949 = vpop.f32.mrb[0].mxu0
        %v4950 = vpop.f32.mrb[0].mxu0
        %v4951 = vadd.f32 0.0, %v4950
        %v4952 = vpop.f32.mrb[0].mxu0
        %4953 = vmatprep.mubr.bf16.mxu0 0
        %4954 = vmatmul.mubr.bf16.gmra.mrb[0].mxu0 %v4620
        %v4955 = vpop.f32.mrb[0].mxu0
        %v4956 = vadd.f32 0.0, %v4955
        %v4957 = vpop.f32.mrb[0].mxu0
        %v4958 = vpop.f32.mrb[0].mxu0
        %v4959 = vadd.f32 0.0, %v4958
        %v4960 = vpop.f32.mrb[0].mxu0
        %4961 = vmatprep.mubr.bf16.mxu0 0
        %4962 = vmatmul.mubr.bf16.gmra.mrb[0].mxu0 %v4623
        %v4963 = vpop.f32.mrb[0].mxu0
        %v4964 = vadd.f32 0.0, %v4963
        %v4965 = vpop.f32.mrb[0].mxu0
        %v4966 = vpop.f32.mrb[0].mxu0
        %v4967 = vadd.f32 0.0, %v4966
        %v4968 = vpop.f32.mrb[0].mxu0
        %4969 = vmatprep.mubr.bf16.mxu0 0
        %4970 = vmatmul.mubr.bf16.gmra.mrb[0].mxu0 %v4626
        %v4971 = vpop.f32.mrb[0].mxu0
        %v4972 = vadd.f32 0.0, %v4971
        %v4973 = vpop.f32.mrb[0].mxu0
        %v4974 = vpop.f32.mrb[0].mxu0
        %v4975 = vadd.f32 0.0, %v4974
        %v4976 = vpop.f32.mrb[0].mxu0
        %4977 = vmatprep.mubr.bf16.mxu0 0
        %4978 = vmatmul.mubr.bf16.gmra.mrb[0].mxu0 %v4629
        %v4979 = vpop.f32.mrb[0].mxu0
        %v4980 = vadd.f32 0.0, %v4979
        %v4981 = vpop.f32.mrb[0].mxu0
        %v4982 = vpop.f32.mrb[0].mxu0
        %v4983 = vadd.f32 0.0, %v4982
        %v4984 = vpop.f32.mrb[0].mxu0
        %4985 = vmatprep.mubr.bf16.mxu0 0
        %4986 = vmatmul.mubr.bf16.gmra.mrb[0].mxu0 %v4632
        %v4987 = vpop.f32.mrb[0].mxu0
        %v4988 = vadd.f32 0.0, %v4987
        %v4989 = vpop.f32.mrb[0].mxu0
        %v4990 = vpop.f32.mrb[0].mxu0
        %v4991 = vadd.f32 0.0, %v4990
        %v4992 = vpop.f32.mrb[0].mxu0
        %4993 = vmatprep.mubr.bf16.mxu0 0
        %4994 = vmatmul.mubr.bf16.gmra.mrb[0].mxu0 %v4635
        %v4995 = vpop.f32.mrb[0].mxu0
        %v4996 = vadd.f32 0.0, %v4995
        %v4997 = vpop.f32.mrb[0].mxu0
        %v4998 = vpop.f32.mrb[0].mxu0
        %v4999 = vadd.f32 0.0, %v4998
        %v5000 = vpop.f32.mrb[0].mxu0
        %5001 = vmatprep.mubr.bf16.mxu0 0
        %5002 = vmatmul.mubr.bf16.gmra.mrb[0].mxu0 %v4638
        %v5003 = vpop.f32.mrb[0].mxu0
        %v5004 = vadd.f32 0.0, %v5003
        %v5005 = vpop.f32.mrb[0].mxu0
        %v5006 = vpop.f32.mrb[0].mxu0
        %v5007 = vadd.f32 0.0, %v5006
        %v5008 = vpop.f32.mrb[0].mxu0
        %5009 = vmatprep.mubr.bf16.mxu0 0
        %5010 = vmatmul.mubr.bf16.gmra.mrb[0].mxu0 %v4641
        %v5011 = vpop.f32.mrb[0].mxu0
        %v5012 = vadd.f32 0.0, %v5011
        %v5013 = vpop.f32.mrb[0].mxu0
        %v5014 = vpop.f32.mrb[0].mxu0
        %v5015 = vadd.f32 0.0, %v5014
        %v5016 = vpop.f32.mrb[0].mxu0
        %5017 = vmatprep.mubr.bf16.mxu0 0
        %5018 = vmatmul.mubr.bf16.gmra.mrb[0].mxu0 %v4644
        %v5019 = vpop.f32.mrb[0].mxu0
        %v5020 = vadd.f32 0.0, %v5019
        %v5021 = vpop.f32.mrb[0].mxu0
        %v5022 = vpop.f32.mrb[0].mxu0
        %v5023 = vadd.f32 0.0, %v5022
        %v5024 = vpop.f32.mrb[0].mxu0
        %5025 = vmatprep.mubr.bf16.mxu0 0
        %5026 = vmatmul.mubr.bf16.gmra.mrb[0].mxu0 %v4647
        %v5027 = vpop.f32.mrb[0].mxu0
        %v5028 = vadd.f32 0.0, %v5027
        %v5029 = vpop.f32.mrb[0].mxu0
        %v5030 = vpop.f32.mrb[0].mxu0
        %v5031 = vadd.f32 0.0, %v5030
        %v5032 = vpop.f32.mrb[0].mxu0
        %5033 = vmatprep.mubr.bf16.mxu0 0
        %5034 = vmatmul.mubr.bf16.gmra.mrb[0].mxu0 %v4650
        %v5035 = vpop.f32.mrb[0].mxu0
        %v5036 = vadd.f32 0.0, %v5035
        %v5037 = vpop.f32.mrb[0].mxu0
        %v5038 = vpop.f32.mrb[0].mxu0
        %v5039 = vadd.f32 0.0, %v5038
        %v5040 = vpop.f32.mrb[0].mxu0
        %5041 = vmatprep.mubr.bf16.mxu0 0
        %5042 = vmatmul.mubr.bf16.gmra.mrb[0].mxu0 %v4653
        %v5043 = vpop.f32.mrb[0].mxu0
        %v5044 = vadd.f32 0.0, %v5043
        %v5045 = vpop.f32.mrb[0].mxu0
        %v5046 = vpop.f32.mrb[0].mxu0
        %v5047 = vadd.f32 0.0, %v5046
        %v5048 = vpop.f32.mrb[0].mxu0
        %5049 = vmatprep.mubr.bf16.mxu0 0
        %5050 = vmatmul.mubr.bf16.gmra.mrb[0].mxu0 %v4656
        %v5051 = vpop.f32.mrb[0].mxu0
        %v5052 = vadd.f32 0.0, %v5051
        %v5053 = vpop.f32.mrb[0].mxu0
        %v5054 = vpop.f32.mrb[0].mxu0
        %v5055 = vadd.f32 0.0, %v5054
        %v5056 = vpop.f32.mrb[0].mxu0
        %5057 = vmatprep.mubr.bf16.mxu0 0
        %5058 = vmatmul.mubr.bf16.gmra.mrb[0].mxu0 %v4659
        %v5059 = vpop.f32.mrb[0].mxu0
        %v5060 = vadd.f32 0.0, %v5059
        %v5061 = vpop.f32.mrb[0].mxu0
        %v5062 = vpop.f32.mrb[0].mxu0
        %v5063 = vadd.f32 0.0, %v5062
        %v5064 = vpop.f32.mrb[0].mxu0
        %5065 = vmatprep.mubr.bf16.mxu0 0
        %5066 = vmatmul.mubr.bf16.gmra.mrb[0].mxu0 %v4662
        %v5067 = vpop.f32.mrb[0].mxu0
        %v5068 = vadd.f32 0.0, %v5067
        %v5069 = vpop.f32.mrb[0].mxu0
        %v5070 = vpop.f32.mrb[0].mxu0
        %v5071 = vadd.f32 0.0, %v5070
        %v5072 = vpop.f32.mrb[0].mxu0
        %5073 = vmatprep.mubr.bf16.mxu0 0
        %5074 = vmatmul.mubr.bf16.gmra.mrb[0].mxu0 %v4665
        %v5075 = vpop.f32.mrb[0].mxu0
        %v5076 = vadd.f32 0.0, %v5075
        %v5077 = vpop.f32.mrb[0].mxu0
        %v5078 = vpop.f32.mrb[0].mxu0
        %v5079 = vadd.f32 0.0, %v5078
        %v5080 = vpop.f32.mrb[0].mxu0
        %5081 = vmatprep.mubr.bf16.mxu0 0
        %5082 = vmatmul.mubr.bf16.gmra.mrb[0].mxu0 %v4668
        %v5083 = vpop.f32.mrb[0].mxu0
        %v5084 = vadd.f32 0.0, %v5083
        %v5085 = vpop.f32.mrb[0].mxu0
        %v5086 = vpop.f32.mrb[0].mxu0
        %v5087 = vadd.f32 0.0, %v5086
        %v5088 = vpop.f32.mrb[0].mxu0
        %5089 = vmatprep.mubr.bf16.mxu0 0
        %5090 = vmatmul.mubr.bf16.gmra.mrb[0].mxu0 %v4671
        %v5091 = vpop.f32.mrb[0].mxu0
        %v5092 = vadd.f32 0.0, %v5091
        %v5093 = vpop.f32.mrb[0].mxu0
        %v5094 = vpop.f32.mrb[0].mxu0
        %v5095 = vadd.f32 0.0, %v5094
        %v5096 = vpop.f32.mrb[0].mxu0
        %5097 = vmatprep.mubr.bf16.mxu0 0
        %5098 = vmatmul.mubr.bf16.gmra.mrb[0].mxu0 %v4674
        %v5099 = vpop.f32.mrb[0].mxu0
        %v5100 = vadd.f32 0.0, %v5099
        %v5101 = vpop.f32.mrb[0].mxu0
        %v5102 = vpop.f32.mrb[0].mxu0
        %v5103 = vadd.f32 0.0, %v5102
        %v5104 = vpop.f32.mrb[0].mxu0
        %5105 = vmatprep.mubr.bf16.mxu0 0
        %5106 = vmatmul.mubr.bf16.gmra.mrb[0].mxu0 %v4677
        %v5107 = vpop.f32.mrb[0].mxu0
        %v5108 = vadd.f32 0.0, %v5107
        %v5109 = vpop.f32.mrb[0].mxu0
        %v5110 = vpop.f32.mrb[0].mxu0
        %v5111 = vadd.f32 0.0, %v5110
        %v5112 = vpop.f32.mrb[0].mxu0
        %5113 = vmatprep.mubr.bf16.mxu0 0
        %5114 = vmatmul.mubr.bf16.gmra.mrb[0].mxu0 %v4680
        %v5115 = vpop.f32.mrb[0].mxu0
        %v5116 = vadd.f32 0.0, %v5115
        %v5117 = vpop.f32.mrb[0].mxu0
        %v5118 = vpop.f32.mrb[0].mxu0
        %v5119 = vadd.f32 0.0, %v5118
        %v5120 = vpop.f32.mrb[0].mxu0
        %5121 = vmatprep.mubr.bf16.mxu0 0
        %5122 = vmatmul.mubr.bf16.gmra.mrb[0].mxu0 %v4683
        %v5123 = vpop.f32.mrb[0].mxu0
        %v5124 = vadd.f32 0.0, %v5123
        %v5125 = vpop.f32.mrb[0].mxu0
        %v5126 = vpop.f32.mrb[0].mxu0
        %v5127 = vadd.f32 0.0, %v5126
        %v5128 = vpop.f32.mrb[0].mxu0
        %5129 = vmatprep.mubr.bf16.mxu0 0
        %5130 = vmatmul.mubr.bf16.gmra.mrb[0].mxu0 %v4686
        %v5131 = vpop.f32.mrb[0].mxu0
        %v5132 = vadd.f32 0.0, %v5131
        %v5133 = vpop.f32.mrb[0].mxu0
        %v5134 = vpop.f32.mrb[0].mxu0
        %v5135 = vadd.f32 0.0, %v5134
        %v5136 = vpop.f32.mrb[0].mxu0
        %5137 = vmatprep.mubr.bf16.mxu0 0
        %5138 = vmatmul.mubr.bf16.gmra.mrb[0].mxu0 %v4689
        %v5139 = vpop.f32.mrb[0].mxu0
        %v5140 = vadd.f32 0.0, %v5139
        %v5141 = vpop.f32.mrb[0].mxu0
        %v5142 = vpop.f32.mrb[0].mxu0
        %v5143 = vadd.f32 0.0, %v5142
        %v5144 = vpop.f32.mrb[0].mxu0
        %5145 = vmatprep.mubr.bf16.mxu0 0
        %5146 = vmatmul.mubr.bf16.gmra.mrb[0].mxu0 %v4692
        %v5147 = vpop.f32.mrb[0].mxu0
        %v5148 = vadd.f32 0.0, %v5147
        %v5149 = vpop.f32.mrb[0].mxu0
        %v5150 = vpop.f32.mrb[0].mxu0
        %v5151 = vadd.f32 0.0, %v5150
        %v5152 = vpop.f32.mrb[0].mxu0
        %5153 = vmatprep.mubr.bf16.mxu0 0
        %5154 = vmatmul.mubr.bf16.gmra.mrb[0].mxu0 %v4695
        %v5155 = vpop.f32.mrb[0].mxu0
        %v5156 = vadd.f32 0.0, %v5155
        %v5157 = vpop.f32.mrb[0].mxu0
        %v5158 = vpop.f32.mrb[0].mxu0
        %v5159 = vadd.f32 0.0, %v5158
        %v5160 = vpop.f32.mrb[0].mxu0
        %5161 = vmatprep.mubr.bf16.mxu0 0
        %5162 = vmatmul.mubr.bf16.gmra.mrb[0].mxu0 %v4698
        %v5163 = vpop.f32.mrb[0].mxu0
        %v5164 = vadd.f32 0.0, %v5163
        %v5165 = vpop.f32.mrb[0].mxu0
        %v5166 = vpop.f32.mrb[0].mxu0
        %v5167 = vadd.f32 0.0, %v5166
        %v5168 = vpop.f32.mrb[0].mxu0
        %5169 = vmatprep.mubr.bf16.mxu0 0
        %5170 = vmatmul.mubr.bf16.gmra.mrb[0].mxu0 %v4701
        %v5171 = vpop.f32.mrb[0].mxu0
        %v5172 = vadd.f32 0.0, %v5171
        %v5173 = vpop.f32.mrb[0].mxu0
        %v5174 = vpop.f32.mrb[0].mxu0
        %v5175 = vadd.f32 0.0, %v5174
        %v5176 = vpop.f32.mrb[0].mxu0
        %5177 = vmatprep.mubr.bf16.mxu0 0
        %5178 = vmatmul.mubr.bf16.gmra.mrb[0].mxu0 %v4704
        %v5179 = vpop.f32.mrb[0].mxu0
        %v5180 = vadd.f32 0.0, %v5179
        %v5181 = vpop.f32.mrb[0].mxu0
        %v5182 = vpop.f32.mrb[0].mxu0
        %v5183 = vadd.f32 0.0, %v5182
        %v5184 = vpop.f32.mrb[0].mxu0
        %5185 = vmatprep.mubr.bf16.mxu0 0
        %5186 = vmatmul.mubr.bf16.gmra.mrb[0].mxu0 %v4707
        %v5187 = vpop.f32.mrb[0].mxu0
        %v5188 = vadd.f32 0.0, %v5187
        %v5189 = vpop.f32.mrb[0].mxu0
        %v5190 = vpop.f32.mrb[0].mxu0
        %v5191 = vadd.f32 0.0, %v5190
        %v5192 = vpop.f32.mrb[0].mxu0
        %5193 = vmatprep.mubr.bf16.mxu0 0
        %5194 = vmatmul.mubr.bf16.gmra.mrb[0].mxu0 %v4710
        %v5195 = vpop.f32.mrb[0].mxu0
        %v5196 = vadd.f32 0.0, %v5195
        %v5197 = vpop.f32.mrb[0].mxu0
        %v5198 = vpop.f32.mrb[0].mxu0
        %v5199 = vadd.f32 0.0, %v5198
        %v5200 = vpop.f32.mrb[0].mxu0
        %5201 = vmatprep.mubr.bf16.mxu0 0
        %5202 = vmatmul.mubr.bf16.gmra.mrb[0].mxu0 %v4713
        %v5203 = vpop.f32.mrb[0].mxu0
        %v5204 = vadd.f32 0.0, %v5203
        %v5205 = vpop.f32.mrb[0].mxu0
        %v5206 = vpop.f32.mrb[0].mxu0
        %v5207 = vadd.f32 0.0, %v5206
        %v5208 = vpop.f32.mrb[0].mxu0
        %5209 = vmatprep.mubr.bf16.mxu0 0
        %5210 = vmatmul.mubr.bf16.gmra.mrb[0].mxu0 %v4716
        %v5211 = vpop.f32.mrb[0].mxu0
        %v5212 = vadd.f32 0.0, %v5211
        %v5213 = vpop.f32.mrb[0].mxu0
        %v5214 = vpop.f32.mrb[0].mxu0
        %v5215 = vadd.f32 0.0, %v5214
        %v5216 = vpop.f32.mrb[0].mxu0
        %5217 = vmatprep.mubr.bf16.mxu0 0
        %5218 = vmatmul.mubr.bf16.gmra.mrb[0].mxu0 %v4719
        %v5219 = vpop.f32.mrb[0].mxu0
        %v5220 = vadd.f32 0.0, %v5219
        %v5221 = vpop.f32.mrb[0].mxu0
        %v5222 = vpop.f32.mrb[0].mxu0
        %v5223 = vadd.f32 0.0, %v5222
        %v5224 = vpop.f32.mrb[0].mxu0
        %5225 = vmatprep.mubr.bf16.mxu0 0
        %5226 = vmatmul.mubr.bf16.gmra.mrb[0].mxu0 %v4722
        %v5227 = vpop.f32.mrb[0].mxu0
        %v5228 = vadd.f32 0.0, %v5227
        %v5229 = vpop.f32.mrb[0].mxu0
        %v5230 = vpop.f32.mrb[0].mxu0
        %v5231 = vadd.f32 0.0, %v5230
        %v5232 = vpop.f32.mrb[0].mxu0
        %5233 = vmatprep.mubr.bf16.mxu0 0
        %5234 = vmatmul.mubr.bf16.gmra.mrb[0].mxu0 %v4725
        %v5235 = vpop.f32.mrb[0].mxu0
        %v5236 = vadd.f32 0.0, %v5235
        %v5237 = vpop.f32.mrb[0].mxu0
        %v5238 = vpop.f32.mrb[0].mxu0
        %v5239 = vadd.f32 0.0, %v5238
        %v5240 = vpop.f32.mrb[0].mxu0
        %5241 = vmatprep.mubr.bf16.mxu0 0
        %5242 = vmatmul.mubr.bf16.gmra.mrb[0].mxu0 %v4728
        %v5243 = vpop.f32.mrb[0].mxu0
        %v5244 = vadd.f32 0.0, %v5243
        %v5245 = vpop.f32.mrb[0].mxu0
        %v5246 = vpop.f32.mrb[0].mxu0
        %v5247 = vadd.f32 0.0, %v5246
        %v5248 = vpop.f32.mrb[0].mxu0
        %5249 = vdwg.mxu0
        %vm5250 = vcmask 261120
        %5251 = vst.msk [vmem:[#allocation3] sm:$0xff] %vm5250, %v4772
        %5252 = vst.msk [vmem:[#allocation3 + $0x8] sm:$0xff] %vm5250, %v4775
        %5253 = vst.msk [vmem:[#allocation3 + $0x10] sm:$0xff] %vm5250, %v4780
        %5254 = vst.msk [vmem:[#allocation3 + $0x18] sm:$0xff] %vm5250, %v4783
        %5255 = vst.msk [vmem:[#allocation3 + $0x20] sm:$0xff] %vm5250, %v4788
        %5256 = vst.msk [vmem:[#allocation3 + $0x28] sm:$0xff] %vm5250, %v4791
        %5257 = vst.msk [vmem:[#allocation3 + $0x30] sm:$0xff] %vm5250, %v4796
        %5258 = vst.msk [vmem:[#allocation3 + $0x38] sm:$0xff] %vm5250, %v4799
        %5259 = vst.msk [vmem:[#allocation3 + $0x40] sm:$0xff] %vm5250, %v4804
        %5260 = vst.msk [vmem:[#allocation3 + $0x48] sm:$0xff] %vm5250, %v4807
        %5261 = vst.msk [vmem:[#allocation3 + $0x50] sm:$0xff] %vm5250, %v4812
        %5262 = vst.msk [vmem:[#allocation3 + $0x58] sm:$0xff] %vm5250, %v4815
        %5263 = vst.msk [vmem:[#allocation3 + $0x60] sm:$0xff] %vm5250, %v4820
        %5264 = vst.msk [vmem:[#allocation3 + $0x68] sm:$0xff] %vm5250, %v4823
        %5265 = vst.msk [vmem:[#allocation3 + $0x70] sm:$0xff] %vm5250, %v4828
        %5266 = vst.msk [vmem:[#allocation3 + $0x78] sm:$0xff] %vm5250, %v4831
        %5267 = vst.msk [vmem:[#allocation3 + $0x80] sm:$0xff] %vm5250, %v4836
        %5268 = vst.msk [vmem:[#allocation3 + $0x88] sm:$0xff] %vm5250, %v4839
        %5269 = vst.msk [vmem:[#allocation3 + $0x90] sm:$0xff] %vm5250, %v4844
        %5270 = vst.msk [vmem:[#allocation3 + $0x98] sm:$0xff] %vm5250, %v4847
        %5271 = vst.msk [vmem:[#allocation3 + $0xa0] sm:$0xff] %vm5250, %v4852
        %5272 = vst.msk [vmem:[#allocation3 + $0xa8] sm:$0xff] %vm5250, %v4855
        %5273 = vst.msk [vmem:[#allocation3 + $0xb0] sm:$0xff] %vm5250, %v4860
        %5274 = vst.msk [vmem:[#allocation3 + $0xb8] sm:$0xff] %vm5250, %v4863
        %5275 = vst.msk [vmem:[#allocation3 + $0xc0] sm:$0xff] %vm5250, %v4868
        %5276 = vst.msk [vmem:[#allocation3 + $0xc8] sm:$0xff] %vm5250, %v4871
        %5277 = vst.msk [vmem:[#allocation3 + $0xd0] sm:$0xff] %vm5250, %v4876
        %5278 = vst.msk [vmem:[#allocation3 + $0xd8] sm:$0xff] %vm5250, %v4879
        %5279 = vst.msk [vmem:[#allocation3 + $0xe0] sm:$0xff] %vm5250, %v4884
        %5280 = vst.msk [vmem:[#allocation3 + $0xe8] sm:$0xff] %vm5250, %v4887
        %5281 = vst.msk [vmem:[#allocation3 + $0xf0] sm:$0xff] %vm5250, %v4892
        %5282 = vst.msk [vmem:[#allocation3 + $0xf8] sm:$0xff] %vm5250, %v4895
        %5283 = vst.msk [vmem:[#allocation3 + $0x100] sm:$0xff] %vm5250, %v4900
        %5284 = vst.msk [vmem:[#allocation3 + $0x108] sm:$0xff] %vm5250, %v4903
        %5285 = vst.msk [vmem:[#allocation3 + $0x110] sm:$0xff] %vm5250, %v4908
        %5286 = vst.msk [vmem:[#allocation3 + $0x118] sm:$0xff] %vm5250, %v4911
        %5287 = vst.msk [vmem:[#allocation3 + $0x120] sm:$0xff] %vm5250, %v4916
        %5288 = vst.msk [vmem:[#allocation3 + $0x128] sm:$0xff] %vm5250, %v4919
        %5289 = vst.msk [vmem:[#allocation3 + $0x130] sm:$0xff] %vm5250, %v4924
        %5290 = vst.msk [vmem:[#allocation3 + $0x138] sm:$0xff] %vm5250, %v4927
        %5291 = vst.msk [vmem:[#allocation3 + $0x140] sm:$0xff] %vm5250, %v4932
        %5292 = vst.msk [vmem:[#allocation3 + $0x148] sm:$0xff] %vm5250, %v4935
        %5293 = vst.msk [vmem:[#allocation3 + $0x150] sm:$0xff] %vm5250, %v4940
        %5294 = vst.msk [vmem:[#allocation3 + $0x158] sm:$0xff] %vm5250, %v4943
        %5295 = vst.msk [vmem:[#allocation3 + $0x160] sm:$0xff] %vm5250, %v4948
        %5296 = vst.msk [vmem:[#allocation3 + $0x168] sm:$0xff] %vm5250, %v4951
        %5297 = vst.msk [vmem:[#allocation3 + $0x170] sm:$0xff] %vm5250, %v4956
        %5298 = vst.msk [vmem:[#allocation3 + $0x178] sm:$0xff] %vm5250, %v4959
        %5299 = vst.msk [vmem:[#allocation3 + $0x180] sm:$0xff] %vm5250, %v4964
        %5300 = vst.msk [vmem:[#allocation3 + $0x188] sm:$0xff] %vm5250, %v4967
        %5301 = vst.msk [vmem:[#allocation3 + $0x190] sm:$0xff] %vm5250, %v4972
        %5302 = vst.msk [vmem:[#allocation3 + $0x198] sm:$0xff] %vm5250, %v4975
        %5303 = vst.msk [vmem:[#allocation3 + $0x1a0] sm:$0xff] %vm5250, %v4980
        %5304 = vst.msk [vmem:[#allocation3 + $0x1a8] sm:$0xff] %vm5250, %v4983
        %5305 = vst.msk [vmem:[#allocation3 + $0x1b0] sm:$0xff] %vm5250, %v4988
        %5306 = vst.msk [vmem:[#allocation3 + $0x1b8] sm:$0xff] %vm5250, %v4991
        %5307 = vst.msk [vmem:[#allocation3 + $0x1c0] sm:$0xff] %vm5250, %v4996
        %5308 = vst.msk [vmem:[#allocation3 + $0x1c8] sm:$0xff] %vm5250, %v4999
        %5309 = vst.msk [vmem:[#allocation3 + $0x1d0] sm:$0xff] %vm5250, %v5004
        %5310 = vst.msk [vmem:[#allocation3 + $0x1d8] sm:$0xff] %vm5250, %v5007
        %5311 = vst.msk [vmem:[#allocation3 + $0x1e0] sm:$0xff] %vm5250, %v5012
        %5312 = vst.msk [vmem:[#allocation3 + $0x1e8] sm:$0xff] %vm5250, %v5015
        %5313 = vst.msk [vmem:[#allocation3 + $0x1f0] sm:$0xff] %vm5250, %v5020
        %5314 = vst.msk [vmem:[#allocation3 + $0x1f8] sm:$0xff] %vm5250, %v5023
        %5315 = vst.msk [vmem:[#allocation3 + $0x200] sm:$0xff] %vm5250, %v5028
        %5316 = vst.msk [vmem:[#allocation3 + $0x208] sm:$0xff] %vm5250, %v5031
        %5317 = vst.msk [vmem:[#allocation3 + $0x210] sm:$0xff] %vm5250, %v5036
        %5318 = vst.msk [vmem:[#allocation3 + $0x218] sm:$0xff] %vm5250, %v5039
        %5319 = vst.msk [vmem:[#allocation3 + $0x220] sm:$0xff] %vm5250, %v5044
        %5320 = vst.msk [vmem:[#allocation3 + $0x228] sm:$0xff] %vm5250, %v5047
        %5321 = vst.msk [vmem:[#allocation3 + $0x230] sm:$0xff] %vm5250, %v5052
        %5322 = vst.msk [vmem:[#allocation3 + $0x238] sm:$0xff] %vm5250, %v5055
        %5323 = vst.msk [vmem:[#allocation3 + $0x240] sm:$0xff] %vm5250, %v5060
        %5324 = vst.msk [vmem:[#allocation3 + $0x248] sm:$0xff] %vm5250, %v5063
        %5325 = vst.msk [vmem:[#allocation3 + $0x250] sm:$0xff] %vm5250, %v5068
        %5326 = vst.msk [vmem:[#allocation3 + $0x258] sm:$0xff] %vm5250, %v5071
        %5327 = vst.msk [vmem:[#allocation3 + $0x260] sm:$0xff] %vm5250, %v5076
        %5328 = vst.msk [vmem:[#allocation3 + $0x268] sm:$0xff] %vm5250, %v5079
        %5329 = vst.msk [vmem:[#allocation3 + $0x270] sm:$0xff] %vm5250, %v5084
        %5330 = vst.msk [vmem:[#allocation3 + $0x278] sm:$0xff] %vm5250, %v5087
        %5331 = vst.msk [vmem:[#allocation3 + $0x280] sm:$0xff] %vm5250, %v5092
        %5332 = vst.msk [vmem:[#allocation3 + $0x288] sm:$0xff] %vm5250, %v5095
        %5333 = vst.msk [vmem:[#allocation3 + $0x290] sm:$0xff] %vm5250, %v5100
        %5334 = vst.msk [vmem:[#allocation3 + $0x298] sm:$0xff] %vm5250, %v5103
        %5335 = vst.msk [vmem:[#allocation3 + $0x2a0] sm:$0xff] %vm5250, %v5108
        %5336 = vst.msk [vmem:[#allocation3 + $0x2a8] sm:$0xff] %vm5250, %v5111
        %5337 = vst.msk [vmem:[#allocation3 + $0x2b0] sm:$0xff] %vm5250, %v5116
        %5338 = vst.msk [vmem:[#allocation3 + $0x2b8] sm:$0xff] %vm5250, %v5119
        %5339 = vst.msk [vmem:[#allocation3 + $0x2c0] sm:$0xff] %vm5250, %v5124
        %5340 = vst.msk [vmem:[#allocation3 + $0x2c8] sm:$0xff] %vm5250, %v5127
        %5341 = vst.msk [vmem:[#allocation3 + $0x2d0] sm:$0xff] %vm5250, %v5132
        %5342 = vst.msk [vmem:[#allocation3 + $0x2d8] sm:$0xff] %vm5250, %v5135
        %5343 = vst.msk [vmem:[#allocation3 + $0x2e0] sm:$0xff] %vm5250, %v5140
        %5344 = vst.msk [vmem:[#allocation3 + $0x2e8] sm:$0xff] %vm5250, %v5143
        %5345 = vst.msk [vmem:[#allocation3 + $0x2f0] sm:$0xff] %vm5250, %v5148
        %5346 = vst.msk [vmem:[#allocation3 + $0x2f8] sm:$0xff] %vm5250, %v5151
        %5347 = vst.msk [vmem:[#allocation3 + $0x300] sm:$0xff] %vm5250, %v5156
        %5348 = vst.msk [vmem:[#allocation3 + $0x308] sm:$0xff] %vm5250, %v5159
        %5349 = vst.msk [vmem:[#allocation3 + $0x310] sm:$0xff] %vm5250, %v5164
        %5350 = vst.msk [vmem:[#allocation3 + $0x318] sm:$0xff] %vm5250, %v5167
        %5351 = vst.msk [vmem:[#allocation3 + $0x320] sm:$0xff] %vm5250, %v5172
        %5352 = vst.msk [vmem:[#allocation3 + $0x328] sm:$0xff] %vm5250, %v5175
        %5353 = vst.msk [vmem:[#allocation3 + $0x330] sm:$0xff] %vm5250, %v5180
        %5354 = vst.msk [vmem:[#allocation3 + $0x338] sm:$0xff] %vm5250, %v5183
        %5355 = vst.msk [vmem:[#allocation3 + $0x340] sm:$0xff] %vm5250, %v5188
        %5356 = vst.msk [vmem:[#allocation3 + $0x348] sm:$0xff] %vm5250, %v5191
        %5357 = vst.msk [vmem:[#allocation3 + $0x350] sm:$0xff] %vm5250, %v5196
        %5358 = vst.msk [vmem:[#allocation3 + $0x358] sm:$0xff] %vm5250, %v5199
        %5359 = vst.msk [vmem:[#allocation3 + $0x360] sm:$0xff] %vm5250, %v5204
        %5360 = vst.msk [vmem:[#allocation3 + $0x368] sm:$0xff] %vm5250, %v5207
        %5361 = vst.msk [vmem:[#allocation3 + $0x370] sm:$0xff] %vm5250, %v5212
        %5362 = vst.msk [vmem:[#allocation3 + $0x378] sm:$0xff] %vm5250, %v5215
        %5363 = vst.msk [vmem:[#allocation3 + $0x380] sm:$0xff] %vm5250, %v5220
        %5364 = vst.msk [vmem:[#allocation3 + $0x388] sm:$0xff] %vm5250, %v5223
        %5365 = vst.msk [vmem:[#allocation3 + $0x390] sm:$0xff] %vm5250, %v5228
        %5366 = vst.msk [vmem:[#allocation3 + $0x398] sm:$0xff] %vm5250, %v5231
        %5367 = vst.msk [vmem:[#allocation3 + $0x3a0] sm:$0xff] %vm5250, %v5236
        %5368 = vst.msk [vmem:[#allocation3 + $0x3a8] sm:$0xff] %vm5250, %v5239
        %5369 = vst.msk [vmem:[#allocation3 + $0x3b0] sm:$0xff] %vm5250, %v5244
        %5370 = vst.msk [vmem:[#allocation3 + $0x3b8] sm:$0xff] %vm5250, %v5247
        %v5371 = vld [vmem:[#allocation3] ss:$2 sm:$0xff]
        %s5372 = scalar_lea.vmem [#allocation3], 16
        %v5373 = vld [vmem:[%s5372] ss:$2 sm:$0x7f]
        %s5374 = scalar_lea.vmem [#allocation3], 1
        %v5375 = vld [vmem:[%s5374] ss:$2 sm:$0xff]
        %s5376 = scalar_lea.vmem [#allocation3], 17
        %v5377 = vld [vmem:[%s5376] ss:$2 sm:$0x7f]
        %v5378 = vmax.f32 %v5371, %v5375
        %v5379 = vmax.f32 %v5373, %v5377
        %s5380 = scalar_lea.vmem [#allocation3], 32
        %v5381 = vld [vmem:[%s5380] ss:$2 sm:$0xff]
        %s5382 = scalar_lea.vmem [#allocation3], 48
        %v5383 = vld [vmem:[%s5382] ss:$2 sm:$0x7f]
        %s5384 = scalar_lea.vmem [#allocation3], 33
        %v5385 = vld [vmem:[%s5384] ss:$2 sm:$0xff]
        %s5386 = scalar_lea.vmem [#allocation3], 49
        %v5387 = vld [vmem:[%s5386] ss:$2 sm:$0x7f]
        %v5388 = vmax.f32 %v5381, %v5385
        %v5389 = vmax.f32 %v5383, %v5387
        %v5390 = vmax.f32 %v5378, %v5388
        %v5391 = vmax.f32 %v5379, %v5389
        %v5392 = vld [vmem:[%s2] sm:$0x1]
        %v5394 = vlaneseq
        %v5395 = vshrl.u32 %v5394, 7
        %v5396 = vsub.s32 0, %v5395
        %v5397 = vrot.slane %v5392, %v5396
        %v5399 = vadd.f32 %v5390, %v5397
        %v5400 = vadd.f32 %v5391, %v5397
        %v5401 = vmax.f32 %v5399, 0.0
        %v5402 = vmax.f32 %v5400, 0.0
        %5403 = vst.msk [vmem:[#allocation4] sm:$0xff] %vm5250, %v5401
        %vm5404 = vcmask 260096
        %5405 = vst.msk [vmem:[#allocation4 + $0x8] sm:$0x7f] %vm5404, %v5402
        %s5406 = scalar_lea.vmem [#allocation3], 64
        %v5407 = vld [vmem:[%s5406] ss:$2 sm:$0xff]
        %s5408 = scalar_lea.vmem [#allocation3], 80
        %v5409 = vld [vmem:[%s5408] ss:$2 sm:$0x7f]
        %s5410 = scalar_lea.vmem [#allocation3], 65
        %v5411 = vld [vmem:[%s5410] ss:$2 sm:$0xff]
        %s5412 = scalar_lea.vmem [#allocation3], 81
        %v5413 = vld [vmem:[%s5412] ss:$2 sm:$0x7f]
        %v5414 = vmax.f32 %v5407, %v5411
        %v5415 = vmax.f32 %v5409, %v5413
        %s5416 = scalar_lea.vmem [#allocation3], 96
        %v5417 = vld [vmem:[%s5416] ss:$2 sm:$0xff]
        %s5418 = scalar_lea.vmem [#allocation3], 112
        %v5419 = vld [vmem:[%s5418] ss:$2 sm:$0x7f]
        %s5420 = scalar_lea.vmem [#allocation3], 97
        %v5421 = vld [vmem:[%s5420] ss:$2 sm:$0xff]
        %s5422 = scalar_lea.vmem [#allocation3], 113
        %v5423 = vld [vmem:[%s5422] ss:$2 sm:$0x7f]
        %v5424 = vmax.f32 %v5417, %v5421
        %v5425 = vmax.f32 %v5419, %v5423
        %v5426 = vmax.f32 %v5414, %v5424
        %v5427 = vmax.f32 %v5415, %v5425
        %v5428 = vld [vmem:[%s2] sm:$0x1]
        %v5430 = vlaneseq
        %v5431 = vshrl.u32 %v5430, 7
        %v5432 = vsub.s32 0, %v5431
        %v5433 = vrot.slane %v5428, %v5432
        %v5435 = vadd.f32 %v5426, %v5433
        %v5436 = vadd.f32 %v5427, %v5433
        %v5437 = vmax.f32 %v5435, 0.0
        %v5438 = vmax.f32 %v5436, 0.0
        %5439 = vst.msk [vmem:[#allocation4 + $0xf] sm:$0xff] %vm5250, %v5437
        %5440 = vst.msk [vmem:[#allocation4 + $0x17] sm:$0x7f] %vm5404, %v5438
        %s5441 = scalar_lea.vmem [#allocation3], 128
        %v5442 = vld [vmem:[%s5441] ss:$2 sm:$0xff]
        %s5443 = scalar_lea.vmem [#allocation3], 144
        %v5444 = vld [vmem:[%s5443] ss:$2 sm:$0x7f]
        %s5445 = scalar_lea.vmem [#allocation3], 129
        %v5446 = vld [vmem:[%s5445] ss:$2 sm:$0xff]
        %s5447 = scalar_lea.vmem [#allocation3], 145
        %v5448 = vld [vmem:[%s5447] ss:$2 sm:$0x7f]
        %v5449 = vmax.f32 %v5442, %v5446
        %v5450 = vmax.f32 %v5444, %v5448
        %s5451 = scalar_lea.vmem [#allocation3], 160
        %v5452 = vld [vmem:[%s5451] ss:$2 sm:$0xff]
        %s5453 = scalar_lea.vmem [#allocation3], 176
        %v5454 = vld [vmem:[%s5453] ss:$2 sm:$0x7f]
        %s5455 = scalar_lea.vmem [#allocation3], 161
        %v5456 = vld [vmem:[%s5455] ss:$2 sm:$0xff]
        %s5457 = scalar_lea.vmem [#allocation3], 177
        %v5458 = vld [vmem:[%s5457] ss:$2 sm:$0x7f]
        %v5459 = vmax.f32 %v5452, %v5456
        %v5460 = vmax.f32 %v5454, %v5458
        %v5461 = vmax.f32 %v5449, %v5459
        %v5462 = vmax.f32 %v5450, %v5460
        %v5463 = vld [vmem:[%s2] sm:$0x1]
        %v5465 = vlaneseq
        %v5466 = vshrl.u32 %v5465, 7
        %v5467 = vsub.s32 0, %v5466
        %v5468 = vrot.slane %v5463, %v5467
        %v5470 = vadd.f32 %v5461, %v5468
        %v5471 = vadd.f32 %v5462, %v5468
        %v5472 = vmax.f32 %v5470, 0.0
        %v5473 = vmax.f32 %v5471, 0.0
        %5474 = vst.msk [vmem:[#allocation4 + $0x1e] sm:$0xff] %vm5250, %v5472
        %5475 = vst.msk [vmem:[#allocation4 + $0x26] sm:$0x7f] %vm5404, %v5473
        %s5476 = scalar_lea.vmem [#allocation3], 192
        %v5477 = vld [vmem:[%s5476] ss:$2 sm:$0xff]
        %s5478 = scalar_lea.vmem [#allocation3], 208
        %v5479 = vld [vmem:[%s5478] ss:$2 sm:$0x7f]
        %s5480 = scalar_lea.vmem [#allocation3], 193
        %v5481 = vld [vmem:[%s5480] ss:$2 sm:$0xff]
        %s5482 = scalar_lea.vmem [#allocation3], 209
        %v5483 = vld [vmem:[%s5482] ss:$2 sm:$0x7f]
        %v5484 = vmax.f32 %v5477, %v5481
        %v5485 = vmax.f32 %v5479, %v5483
        %s5486 = scalar_lea.vmem [#allocation3], 224
        %v5487 = vld [vmem:[%s5486] ss:$2 sm:$0xff]
        %s5488 = scalar_lea.vmem [#allocation3], 240
        %v5489 = vld [vmem:[%s5488] ss:$2 sm:$0x7f]
        %s5490 = scalar_lea.vmem [#allocation3], 225
        %v5491 = vld [vmem:[%s5490] ss:$2 sm:$0xff]
        %s5492 = scalar_lea.vmem [#allocation3], 241
        %v5493 = vld [vmem:[%s5492] ss:$2 sm:$0x7f]
        %v5494 = vmax.f32 %v5487, %v5491
        %v5495 = vmax.f32 %v5489, %v5493
        %v5496 = vmax.f32 %v5484, %v5494
        %v5497 = vmax.f32 %v5485, %v5495
        %v5498 = vld [vmem:[%s2] sm:$0x1]
        %v5500 = vlaneseq
        %v5501 = vshrl.u32 %v5500, 7
        %v5502 = vsub.s32 0, %v5501
        %v5503 = vrot.slane %v5498, %v5502
        %v5505 = vadd.f32 %v5496, %v5503
        %v5506 = vadd.f32 %v5497, %v5503
        %v5507 = vmax.f32 %v5505, 0.0
        %v5508 = vmax.f32 %v5506, 0.0
        %5509 = vst.msk [vmem:[#allocation4 + $0x2d] sm:$0xff] %vm5250, %v5507
        %5510 = vst.msk [vmem:[#allocation4 + $0x35] sm:$0x7f] %vm5404, %v5508
        %s5511 = scalar_lea.vmem [#allocation3], 256
        %v5512 = vld [vmem:[%s5511] ss:$2 sm:$0xff]
        %s5513 = scalar_lea.vmem [#allocation3], 272
        %v5514 = vld [vmem:[%s5513] ss:$2 sm:$0x7f]
        %s5515 = scalar_lea.vmem [#allocation3], 257
        %v5516 = vld [vmem:[%s5515] ss:$2 sm:$0xff]
        %s5517 = scalar_lea.vmem [#allocation3], 273
        %v5518 = vld [vmem:[%s5517] ss:$2 sm:$0x7f]
        %v5519 = vmax.f32 %v5512, %v5516
        %v5520 = vmax.f32 %v5514, %v5518
        %s5521 = scalar_lea.vmem [#allocation3], 288
        %v5522 = vld [vmem:[%s5521] ss:$2 sm:$0xff]
        %s5523 = scalar_lea.vmem [#allocation3], 304
        %v5524 = vld [vmem:[%s5523] ss:$2 sm:$0x7f]
        %s5525 = scalar_lea.vmem [#allocation3], 289
        %v5526 = vld [vmem:[%s5525] ss:$2 sm:$0xff]
        %s5527 = scalar_lea.vmem [#allocation3], 305
        %v5528 = vld [vmem:[%s5527] ss:$2 sm:$0x7f]
        %v5529 = vmax.f32 %v5522, %v5526
        %v5530 = vmax.f32 %v5524, %v5528
        %v5531 = vmax.f32 %v5519, %v5529
        %v5532 = vmax.f32 %v5520, %v5530
        %v5533 = vld [vmem:[%s2] sm:$0x1]
        %v5535 = vlaneseq
        %v5536 = vshrl.u32 %v5535, 7
        %v5537 = vsub.s32 0, %v5536
        %v5538 = vrot.slane %v5533, %v5537
        %v5540 = vadd.f32 %v5531, %v5538
        %v5541 = vadd.f32 %v5532, %v5538
        %v5542 = vmax.f32 %v5540, 0.0
        %v5543 = vmax.f32 %v5541, 0.0
        %5544 = vst.msk [vmem:[#allocation4 + $0x3c] sm:$0xff] %vm5250, %v5542
        %5545 = vst.msk [vmem:[#allocation4 + $0x44] sm:$0x7f] %vm5404, %v5543
        %s5546 = scalar_lea.vmem [#allocation3], 320
        %v5547 = vld [vmem:[%s5546] ss:$2 sm:$0xff]
        %s5548 = scalar_lea.vmem [#allocation3], 336
        %v5549 = vld [vmem:[%s5548] ss:$2 sm:$0x7f]
        %s5550 = scalar_lea.vmem [#allocation3], 321
        %v5551 = vld [vmem:[%s5550] ss:$2 sm:$0xff]
        %s5552 = scalar_lea.vmem [#allocation3], 337
        %v5553 = vld [vmem:[%s5552] ss:$2 sm:$0x7f]
        %v5554 = vmax.f32 %v5547, %v5551
        %v5555 = vmax.f32 %v5549, %v5553
        %s5556 = scalar_lea.vmem [#allocation3], 352
        %v5557 = vld [vmem:[%s5556] ss:$2 sm:$0xff]
        %s5558 = scalar_lea.vmem [#allocation3], 368
        %v5559 = vld [vmem:[%s5558] ss:$2 sm:$0x7f]
        %s5560 = scalar_lea.vmem [#allocation3], 353
        %v5561 = vld [vmem:[%s5560] ss:$2 sm:$0xff]
        %s5562 = scalar_lea.vmem [#allocation3], 369
        %v5563 = vld [vmem:[%s5562] ss:$2 sm:$0x7f]
        %v5564 = vmax.f32 %v5557, %v5561
        %v5565 = vmax.f32 %v5559, %v5563
        %v5566 = vmax.f32 %v5554, %v5564
        %v5567 = vmax.f32 %v5555, %v5565
        %v5568 = vld [vmem:[%s2] sm:$0x1]
        %v5570 = vlaneseq
        %v5571 = vshrl.u32 %v5570, 7
        %v5572 = vsub.s32 0, %v5571
        %v5573 = vrot.slane %v5568, %v5572
        %v5575 = vadd.f32 %v5566, %v5573
        %v5576 = vadd.f32 %v5567, %v5573
        %v5577 = vmax.f32 %v5575, 0.0
        %v5578 = vmax.f32 %v5576, 0.0
        %5579 = vst.msk [vmem:[#allocation4 + $0x4b] sm:$0xff] %vm5250, %v5577
        %5580 = vst.msk [vmem:[#allocation4 + $0x53] sm:$0x7f] %vm5404, %v5578
        %s5581 = scalar_lea.vmem [#allocation3], 384
        %v5582 = vld [vmem:[%s5581] ss:$2 sm:$0xff]
        %s5583 = scalar_lea.vmem [#allocation3], 400
        %v5584 = vld [vmem:[%s5583] ss:$2 sm:$0x7f]
        %s5585 = scalar_lea.vmem [#allocation3], 385
        %v5586 = vld [vmem:[%s5585] ss:$2 sm:$0xff]
        %s5587 = scalar_lea.vmem [#allocation3], 401
        %v5588 = vld [vmem:[%s5587] ss:$2 sm:$0x7f]
        %v5589 = vmax.f32 %v5582, %v5586
        %v5590 = vmax.f32 %v5584, %v5588
        %s5591 = scalar_lea.vmem [#allocation3], 416
        %v5592 = vld [vmem:[%s5591] ss:$2 sm:$0xff]
        %s5593 = scalar_lea.vmem [#allocation3], 432
        %v5594 = vld [vmem:[%s5593] ss:$2 sm:$0x7f]
        %s5595 = scalar_lea.vmem [#allocation3], 417
        %v5596 = vld [vmem:[%s5595] ss:$2 sm:$0xff]
        %s5597 = scalar_lea.vmem [#allocation3], 433
        %v5598 = vld [vmem:[%s5597] ss:$2 sm:$0x7f]
        %v5599 = vmax.f32 %v5592, %v5596
        %v5600 = vmax.f32 %v5594, %v5598
        %v5601 = vmax.f32 %v5589, %v5599
        %v5602 = vmax.f32 %v5590, %v5600
        %v5603 = vld [vmem:[%s2] sm:$0x1]
        %v5605 = vlaneseq
        %v5606 = vshrl.u32 %v5605, 7
        %v5607 = vsub.s32 0, %v5606
        %v5608 = vrot.slane %v5603, %v5607
        %v5610 = vadd.f32 %v5601, %v5608
        %v5611 = vadd.f32 %v5602, %v5608
        %v5612 = vmax.f32 %v5610, 0.0
        %v5613 = vmax.f32 %v5611, 0.0
        %5614 = vst.msk [vmem:[#allocation4 + $0x5a] sm:$0xff] %vm5250, %v5612
        %5615 = vst.msk [vmem:[#allocation4 + $0x62] sm:$0x7f] %vm5404, %v5613
        %s5616 = scalar_lea.vmem [#allocation3], 448
        %v5617 = vld [vmem:[%s5616] ss:$2 sm:$0xff]
        %s5618 = scalar_lea.vmem [#allocation3], 464
        %v5619 = vld [vmem:[%s5618] ss:$2 sm:$0x7f]
        %s5620 = scalar_lea.vmem [#allocation3], 449
        %v5621 = vld [vmem:[%s5620] ss:$2 sm:$0xff]
        %s5622 = scalar_lea.vmem [#allocation3], 465
        %v5623 = vld [vmem:[%s5622] ss:$2 sm:$0x7f]
        %v5624 = vmax.f32 %v5617, %v5621
        %v5625 = vmax.f32 %v5619, %v5623
        %s5626 = scalar_lea.vmem [#allocation3], 480
        %v5627 = vld [vmem:[%s5626] ss:$2 sm:$0xff]
        %s5628 = scalar_lea.vmem [#allocation3], 496
        %v5629 = vld [vmem:[%s5628] ss:$2 sm:$0x7f]
        %s5630 = scalar_lea.vmem [#allocation3], 481
        %v5631 = vld [vmem:[%s5630] ss:$2 sm:$0xff]
        %s5632 = scalar_lea.vmem [#allocation3], 497
        %v5633 = vld [vmem:[%s5632] ss:$2 sm:$0x7f]
        %v5634 = vmax.f32 %v5627, %v5631
        %v5635 = vmax.f32 %v5629, %v5633
        %v5636 = vmax.f32 %v5624, %v5634
        %v5637 = vmax.f32 %v5625, %v5635
        %v5638 = vld [vmem:[%s2] sm:$0x1]
        %v5640 = vlaneseq
        %v5641 = vshrl.u32 %v5640, 7
        %v5642 = vsub.s32 0, %v5641
        %v5643 = vrot.slane %v5638, %v5642
        %v5645 = vadd.f32 %v5636, %v5643
        %v5646 = vadd.f32 %v5637, %v5643
        %v5647 = vmax.f32 %v5645, 0.0
        %v5648 = vmax.f32 %v5646, 0.0
        %5649 = vst.msk [vmem:[#allocation4 + $0x69] sm:$0xff] %vm5250, %v5647
        %5650 = vst.msk [vmem:[#allocation4 + $0x71] sm:$0x7f] %vm5404, %v5648
        %s5651 = scalar_lea.vmem [#allocation3], 512
        %v5652 = vld [vmem:[%s5651] ss:$2 sm:$0xff]
        %s5653 = scalar_lea.vmem [#allocation3], 528
        %v5654 = vld [vmem:[%s5653] ss:$2 sm:$0x7f]
        %s5655 = scalar_lea.vmem [#allocation3], 513
        %v5656 = vld [vmem:[%s5655] ss:$2 sm:$0xff]
        %s5657 = scalar_lea.vmem [#allocation3], 529
        %v5658 = vld [vmem:[%s5657] ss:$2 sm:$0x7f]
        %v5659 = vmax.f32 %v5652, %v5656
        %v5660 = vmax.f32 %v5654, %v5658
        %s5661 = scalar_lea.vmem [#allocation3], 544
        %v5662 = vld [vmem:[%s5661] ss:$2 sm:$0xff]
        %s5663 = scalar_lea.vmem [#allocation3], 560
        %v5664 = vld [vmem:[%s5663] ss:$2 sm:$0x7f]
        %s5665 = scalar_lea.vmem [#allocation3], 545
        %v5666 = vld [vmem:[%s5665] ss:$2 sm:$0xff]
        %s5667 = scalar_lea.vmem [#allocation3], 561
        %v5668 = vld [vmem:[%s5667] ss:$2 sm:$0x7f]
        %v5669 = vmax.f32 %v5662, %v5666
        %v5670 = vmax.f32 %v5664, %v5668
        %v5671 = vmax.f32 %v5659, %v5669
        %v5672 = vmax.f32 %v5660, %v5670
        %v5673 = vld [vmem:[%s2] sm:$0x1]
        %v5675 = vlaneseq
        %v5676 = vshrl.u32 %v5675, 7
        %v5677 = vsub.s32 0, %v5676
        %v5678 = vrot.slane %v5673, %v5677
        %v5680 = vadd.f32 %v5671, %v5678
        %v5681 = vadd.f32 %v5672, %v5678
        %v5682 = vmax.f32 %v5680, 0.0
        %v5683 = vmax.f32 %v5681, 0.0
        %5684 = vst.msk [vmem:[#allocation4 + $0x78] sm:$0xff] %vm5250, %v5682
        %5685 = vst.msk [vmem:[#allocation4 + $0x80] sm:$0x7f] %vm5404, %v5683
        %s5686 = scalar_lea.vmem [#allocation3], 576
        %v5687 = vld [vmem:[%s5686] ss:$2 sm:$0xff]
        %s5688 = scalar_lea.vmem [#allocation3], 592
        %v5689 = vld [vmem:[%s5688] ss:$2 sm:$0x7f]
        %s5690 = scalar_lea.vmem [#allocation3], 577
        %v5691 = vld [vmem:[%s5690] ss:$2 sm:$0xff]
        %s5692 = scalar_lea.vmem [#allocation3], 593
        %v5693 = vld [vmem:[%s5692] ss:$2 sm:$0x7f]
        %v5694 = vmax.f32 %v5687, %v5691
        %v5695 = vmax.f32 %v5689, %v5693
        %s5696 = scalar_lea.vmem [#allocation3], 608
        %v5697 = vld [vmem:[%s5696] ss:$2 sm:$0xff]
        %s5698 = scalar_lea.vmem [#allocation3], 624
        %v5699 = vld [vmem:[%s5698] ss:$2 sm:$0x7f]
        %s5700 = scalar_lea.vmem [#allocation3], 609
        %v5701 = vld [vmem:[%s5700] ss:$2 sm:$0xff]
        %s5702 = scalar_lea.vmem [#allocation3], 625
        %v5703 = vld [vmem:[%s5702] ss:$2 sm:$0x7f]
        %v5704 = vmax.f32 %v5697, %v5701
        %v5705 = vmax.f32 %v5699, %v5703
        %v5706 = vmax.f32 %v5694, %v5704
        %v5707 = vmax.f32 %v5695, %v5705
        %v5708 = vld [vmem:[%s2] sm:$0x1]
        %v5710 = vlaneseq
        %v5711 = vshrl.u32 %v5710, 7
        %v5712 = vsub.s32 0, %v5711
        %v5713 = vrot.slane %v5708, %v5712
        %v5715 = vadd.f32 %v5706, %v5713
        %v5716 = vadd.f32 %v5707, %v5713
        %v5717 = vmax.f32 %v5715, 0.0
        %v5718 = vmax.f32 %v5716, 0.0
        %5719 = vst.msk [vmem:[#allocation4 + $0x87] sm:$0xff] %vm5250, %v5717
        %5720 = vst.msk [vmem:[#allocation4 + $0x8f] sm:$0x7f] %vm5404, %v5718
        %s5721 = scalar_lea.vmem [#allocation3], 640
        %v5722 = vld [vmem:[%s5721] ss:$2 sm:$0xff]
        %s5723 = scalar_lea.vmem [#allocation3], 656
        %v5724 = vld [vmem:[%s5723] ss:$2 sm:$0x7f]
        %s5725 = scalar_lea.vmem [#allocation3], 641
        %v5726 = vld [vmem:[%s5725] ss:$2 sm:$0xff]
        %s5727 = scalar_lea.vmem [#allocation3], 657
        %v5728 = vld [vmem:[%s5727] ss:$2 sm:$0x7f]
        %v5729 = vmax.f32 %v5722, %v5726
        %v5730 = vmax.f32 %v5724, %v5728
        %s5731 = scalar_lea.vmem [#allocation3], 672
        %v5732 = vld [vmem:[%s5731] ss:$2 sm:$0xff]
        %s5733 = scalar_lea.vmem [#allocation3], 688
        %v5734 = vld [vmem:[%s5733] ss:$2 sm:$0x7f]
        %s5735 = scalar_lea.vmem [#allocation3], 673
        %v5736 = vld [vmem:[%s5735] ss:$2 sm:$0xff]
        %s5737 = scalar_lea.vmem [#allocation3], 689
        %v5738 = vld [vmem:[%s5737] ss:$2 sm:$0x7f]
        %v5739 = vmax.f32 %v5732, %v5736
        %v5740 = vmax.f32 %v5734, %v5738
        %v5741 = vmax.f32 %v5729, %v5739
        %v5742 = vmax.f32 %v5730, %v5740
        %v5743 = vld [vmem:[%s2] sm:$0x1]
        %v5745 = vlaneseq
        %v5746 = vshrl.u32 %v5745, 7
        %v5747 = vsub.s32 0, %v5746
        %v5748 = vrot.slane %v5743, %v5747
        %v5750 = vadd.f32 %v5741, %v5748
        %v5751 = vadd.f32 %v5742, %v5748
        %v5752 = vmax.f32 %v5750, 0.0
        %v5753 = vmax.f32 %v5751, 0.0
        %5754 = vst.msk [vmem:[#allocation4 + $0x96] sm:$0xff] %vm5250, %v5752
        %5755 = vst.msk [vmem:[#allocation4 + $0x9e] sm:$0x7f] %vm5404, %v5753
        %s5756 = scalar_lea.vmem [#allocation3], 704
        %v5757 = vld [vmem:[%s5756] ss:$2 sm:$0xff]
        %s5758 = scalar_lea.vmem [#allocation3], 720
        %v5759 = vld [vmem:[%s5758] ss:$2 sm:$0x7f]
        %s5760 = scalar_lea.vmem [#allocation3], 705
        %v5761 = vld [vmem:[%s5760] ss:$2 sm:$0xff]
        %s5762 = scalar_lea.vmem [#allocation3], 721
        %v5763 = vld [vmem:[%s5762] ss:$2 sm:$0x7f]
        %v5764 = vmax.f32 %v5757, %v5761
        %v5765 = vmax.f32 %v5759, %v5763
        %s5766 = scalar_lea.vmem [#allocation3], 736
        %v5767 = vld [vmem:[%s5766] ss:$2 sm:$0xff]
        %s5768 = scalar_lea.vmem [#allocation3], 752
        %v5769 = vld [vmem:[%s5768] ss:$2 sm:$0x7f]
        %s5770 = scalar_lea.vmem [#allocation3], 737
        %v5771 = vld [vmem:[%s5770] ss:$2 sm:$0xff]
        %s5772 = scalar_lea.vmem [#allocation3], 753
        %v5773 = vld [vmem:[%s5772] ss:$2 sm:$0x7f]
        %v5774 = vmax.f32 %v5767, %v5771
        %v5775 = vmax.f32 %v5769, %v5773
        %v5776 = vmax.f32 %v5764, %v5774
        %v5777 = vmax.f32 %v5765, %v5775
        %v5778 = vld [vmem:[%s2] sm:$0x1]
        %v5780 = vlaneseq
        %v5781 = vshrl.u32 %v5780, 7
        %v5782 = vsub.s32 0, %v5781
        %v5783 = vrot.slane %v5778, %v5782
        %v5785 = vadd.f32 %v5776, %v5783
        %v5786 = vadd.f32 %v5777, %v5783
        %v5787 = vmax.f32 %v5785, 0.0
        %v5788 = vmax.f32 %v5786, 0.0
        %5789 = vst.msk [vmem:[#allocation4 + $0xa5] sm:$0xff] %vm5250, %v5787
        %5790 = vst.msk [vmem:[#allocation4 + $0xad] sm:$0x7f] %vm5404, %v5788
        %s5791 = scalar_lea.vmem [#allocation3], 768
        %v5792 = vld [vmem:[%s5791] ss:$2 sm:$0xff]
        %s5793 = scalar_lea.vmem [#allocation3], 784
        %v5794 = vld [vmem:[%s5793] ss:$2 sm:$0x7f]
        %s5795 = scalar_lea.vmem [#allocation3], 769
        %v5796 = vld [vmem:[%s5795] ss:$2 sm:$0xff]
        %s5797 = scalar_lea.vmem [#allocation3], 785
        %v5798 = vld [vmem:[%s5797] ss:$2 sm:$0x7f]
        %v5799 = vmax.f32 %v5792, %v5796
        %v5800 = vmax.f32 %v5794, %v5798
        %s5801 = scalar_lea.vmem [#allocation3], 800
        %v5802 = vld [vmem:[%s5801] ss:$2 sm:$0xff]
        %s5803 = scalar_lea.vmem [#allocation3], 816
        %v5804 = vld [vmem:[%s5803] ss:$2 sm:$0x7f]
        %s5805 = scalar_lea.vmem [#allocation3], 801
        %v5806 = vld [vmem:[%s5805] ss:$2 sm:$0xff]
        %s5807 = scalar_lea.vmem [#allocation3], 817
        %v5808 = vld [vmem:[%s5807] ss:$2 sm:$0x7f]
        %v5809 = vmax.f32 %v5802, %v5806
        %v5810 = vmax.f32 %v5804, %v5808
        %v5811 = vmax.f32 %v5799, %v5809
        %v5812 = vmax.f32 %v5800, %v5810
        %v5813 = vld [vmem:[%s2] sm:$0x1]
        %v5815 = vlaneseq
        %v5816 = vshrl.u32 %v5815, 7
        %v5817 = vsub.s32 0, %v5816
        %v5818 = vrot.slane %v5813, %v5817
        %v5820 = vadd.f32 %v5811, %v5818
        %v5821 = vadd.f32 %v5812, %v5818
        %v5822 = vmax.f32 %v5820, 0.0
        %v5823 = vmax.f32 %v5821, 0.0
        %5824 = vst.msk [vmem:[#allocation4 + $0xb4] sm:$0xff] %vm5250, %v5822
        %5825 = vst.msk [vmem:[#allocation4 + $0xbc] sm:$0x7f] %vm5404, %v5823
        %s5826 = scalar_lea.vmem [#allocation3], 832
        %v5827 = vld [vmem:[%s5826] ss:$2 sm:$0xff]
        %s5828 = scalar_lea.vmem [#allocation3], 848
        %v5829 = vld [vmem:[%s5828] ss:$2 sm:$0x7f]
        %s5830 = scalar_lea.vmem [#allocation3], 833
        %v5831 = vld [vmem:[%s5830] ss:$2 sm:$0xff]
        %s5832 = scalar_lea.vmem [#allocation3], 849
        %v5833 = vld [vmem:[%s5832] ss:$2 sm:$0x7f]
        %v5834 = vmax.f32 %v5827, %v5831
        %v5835 = vmax.f32 %v5829, %v5833
        %s5836 = scalar_lea.vmem [#allocation3], 864
        %v5837 = vld [vmem:[%s5836] ss:$2 sm:$0xff]
        %s5838 = scalar_lea.vmem [#allocation3], 880
        %v5839 = vld [vmem:[%s5838] ss:$2 sm:$0x7f]
        %s5840 = scalar_lea.vmem [#allocation3], 865
        %v5841 = vld [vmem:[%s5840] ss:$2 sm:$0xff]
        %s5842 = scalar_lea.vmem [#allocation3], 881
        %v5843 = vld [vmem:[%s5842] ss:$2 sm:$0x7f]
        %v5844 = vmax.f32 %v5837, %v5841
        %v5845 = vmax.f32 %v5839, %v5843
        %v5846 = vmax.f32 %v5834, %v5844
        %v5847 = vmax.f32 %v5835, %v5845
        %v5848 = vld [vmem:[%s2] sm:$0x1]
        %v5850 = vlaneseq
        %v5851 = vshrl.u32 %v5850, 7
        %v5852 = vsub.s32 0, %v5851
        %v5853 = vrot.slane %v5848, %v5852
        %v5855 = vadd.f32 %v5846, %v5853
        %v5856 = vadd.f32 %v5847, %v5853
        %v5857 = vmax.f32 %v5855, 0.0
        %v5858 = vmax.f32 %v5856, 0.0
        %5859 = vst.msk [vmem:[#allocation4 + $0xc3] sm:$0xff] %vm5250, %v5857
        %5860 = vst.msk [vmem:[#allocation4 + $0xcb] sm:$0x7f] %vm5404, %v5858
        %s5861 = scalar_lea.vmem [#allocation3], 896
        %v5862 = vld [vmem:[%s5861] ss:$2 sm:$0xff]
        %s5863 = scalar_lea.vmem [#allocation3], 912
        %v5864 = vld [vmem:[%s5863] ss:$2 sm:$0x7f]
        %s5865 = scalar_lea.vmem [#allocation3], 897
        %v5866 = vld [vmem:[%s5865] ss:$2 sm:$0xff]
        %s5867 = scalar_lea.vmem [#allocation3], 913
        %v5868 = vld [vmem:[%s5867] ss:$2 sm:$0x7f]
        %v5869 = vmax.f32 %v5862, %v5866
        %v5870 = vmax.f32 %v5864, %v5868
        %s5871 = scalar_lea.vmem [#allocation3], 928
        %v5872 = vld [vmem:[%s5871] ss:$2 sm:$0xff]
        %s5873 = scalar_lea.vmem [#allocation3], 944
        %v5874 = vld [vmem:[%s5873] ss:$2 sm:$0x7f]
        %s5875 = scalar_lea.vmem [#allocation3], 929
        %v5876 = vld [vmem:[%s5875] ss:$2 sm:$0xff]
        %s5877 = scalar_lea.vmem [#allocation3], 945
        %v5878 = vld [vmem:[%s5877] ss:$2 sm:$0x7f]
        %v5879 = vmax.f32 %v5872, %v5876
        %v5880 = vmax.f32 %v5874, %v5878
        %v5881 = vmax.f32 %v5869, %v5879
        %v5882 = vmax.f32 %v5870, %v5880
        %v5883 = vld [vmem:[%s2] sm:$0x1]
        %v5885 = vlaneseq
        %v5886 = vshrl.u32 %v5885, 7
        %v5887 = vsub.s32 0, %v5886
        %v5888 = vrot.slane %v5883, %v5887
        %v5890 = vadd.f32 %v5881, %v5888
        %v5891 = vadd.f32 %v5882, %v5888
        %v5892 = vmax.f32 %v5890, 0.0
        %v5893 = vmax.f32 %v5891, 0.0
        %5894 = vst.msk [vmem:[#allocation4 + $0xd2] sm:$0xff] %vm5250, %v5892
        %5895 = vst.msk [vmem:[#allocation4 + $0xda] sm:$0x7f] %vm5404, %v5893
        %5896 = vst.msk [vmem:[#allocation4 + $0xe1] sm:$0x7f] %vm5404, 0.0
        %v5897 = vld [vmem:[#allocation4] sm:$0xff]
        %v5898 = vld [vmem:[#allocation4 + $0x8] sm:$0xff]
        %v5899 = vld [vmem:[#allocation4 + $0x10] sm:$0xff]
        %v5900 = vld [vmem:[#allocation4 + $0x18] sm:$0xff]
        %v5901 = vld [vmem:[#allocation4 + $0x20] sm:$0xff]
        %v5902 = vld [vmem:[#allocation4 + $0x28] sm:$0xff]
        %v5903 = vld [vmem:[#allocation4 + $0x30] sm:$0xff]
        %v5904 = vld [vmem:[#allocation4 + $0x38] sm:$0xff]
        %v5905 = vld [vmem:[#allocation4 + $0x40] sm:$0xff]
        %v5906 = vld [vmem:[#allocation4 + $0x48] sm:$0xff]
        %v5907 = vld [vmem:[#allocation4 + $0x50] sm:$0xff]
        %v5908 = vld [vmem:[#allocation4 + $0x58] sm:$0xff]
        %v5909 = vld [vmem:[#allocation4 + $0x60] sm:$0xff]
        %v5910 = vld [vmem:[#allocation4 + $0x68] sm:$0xff]
        %v5911 = vld [vmem:[#allocation4 + $0x70] sm:$0xff]
        %v5912 = vld [vmem:[#allocation4 + $0x78] sm:$0xff]
        %v5913 = vld [vmem:[#allocation4 + $0x80] sm:$0xff]
        %v5914 = vld [vmem:[#allocation4 + $0x88] sm:$0xff]
        %v5915 = vld [vmem:[#allocation4 + $0x90] sm:$0xff]
        %v5916 = vld [vmem:[#allocation4 + $0x98] sm:$0xff]
        %v5917 = vld [vmem:[#allocation4 + $0xa0] sm:$0xff]
        %v5918 = vld [vmem:[#allocation4 + $0xa8] sm:$0xff]
        %v5919 = vld [vmem:[#allocation4 + $0xb0] sm:$0xff]
        %v5920 = vld [vmem:[#allocation4 + $0xb8] sm:$0xff]
        %v5921 = vld [vmem:[#allocation4 + $0xc0] sm:$0x7]
        %v5922 = vpack.c.bf16 %v5898, %v5897
        %v5923 = vpack.c.bf16 %v5900, %v5899
        %v5924 = vpack.c.bf16 %v5902, %v5901
        %v5925 = vpack.c.bf16 %v5904, %v5903
        %v5926 = vpack.c.bf16 %v5906, %v5905
        %v5927 = vpack.c.bf16 %v5908, %v5907
        %v5928 = vpack.c.bf16 %v5910, %v5909
        %v5929 = vpack.c.bf16 %v5912, %v5911
        %v5930 = vpack.c.bf16 %v5914, %v5913
        %v5931 = vpack.c.bf16 %v5916, %v5915
        %v5932 = vpack.c.bf16 %v5918, %v5917
        %v5933 = vpack.c.bf16 %v5920, %v5919
        %v5934 = vpack.c.bf16 %v5921, %v5921
        %v5948 = vunpack.c.l.b16 %v5922
        %v5949 = vunpack.c.h.b16 %v5922
        %v5950 = vunpack.c.l.b16 %v5923
        %v5951 = vunpack.c.h.b16 %v5923
        %v5952 = vunpack.c.l.b16 %v5924
        %v5953 = vunpack.c.h.b16 %v5924
        %v5954 = vunpack.c.l.b16 %v5925
        %v5955 = vunpack.c.h.b16 %v5925
        %v5956 = vunpack.c.l.b16 %v5926
        %v5957 = vunpack.c.h.b16 %v5926
        %v5958 = vunpack.c.l.b16 %v5927
        %v5959 = vunpack.c.h.b16 %v5927
        %v5960 = vunpack.c.l.b16 %v5928
        %v5961 = vunpack.c.h.b16 %v5928
        %v5962 = vunpack.c.l.b16 %v5929
        %v5963 = vunpack.c.h.b16 %v5929
        %v5964 = vunpack.c.l.b16 %v5930
        %v5965 = vunpack.c.h.b16 %v5930
        %v5966 = vunpack.c.l.b16 %v5931
        %v5967 = vunpack.c.h.b16 %v5931
        %v5968 = vunpack.c.l.b16 %v5932
        %v5969 = vunpack.c.h.b16 %v5932
        %v5970 = vunpack.c.l.b16 %v5933
        %v5971 = vunpack.c.h.b16 %v5933
        %v5972 = vunpack.c.l.b16 %v5934
        %v5973 = vpack.c.b16 %v5948, %v5948
        %v5974 = vpack.c.b16 %v5949, %v5949
        %v5975 = vpack.c.b16 %v5950, %v5950
        %v5976 = vpack.c.b16 %v5951, %v5951
        %v5977 = vpack.c.b16 %v5952, %v5952
        %v5978 = vpack.c.b16 %v5953, %v5953
        %v5979 = vpack.c.b16 %v5954, %v5954
        %v5980 = vpack.c.b16 %v5955, %v5955
        %v5981 = vpack.c.b16 %v5956, %v5956
        %v5982 = vpack.c.b16 %v5957, %v5957
        %v5983 = vpack.c.b16 %v5958, %v5958
        %v5984 = vpack.c.b16 %v5959, %v5959
        %v5985 = vpack.c.b16 %v5960, %v5960
        %v5986 = vpack.c.b16 %v5961, %v5961
        %v5987 = vpack.c.b16 %v5962, %v5962
        %v5988 = vpack.c.b16 %v5963, %v5963
        %v5989 = vpack.c.b16 %v5964, %v5964
        %v5990 = vpack.c.b16 %v5965, %v5965
        %v5991 = vpack.c.b16 %v5966, %v5966
        %v5992 = vpack.c.b16 %v5967, %v5967
        %v5993 = vpack.c.b16 %v5968, %v5968
        %v5994 = vpack.c.b16 %v5969, %v5969
        %v5995 = vpack.c.b16 %v5970, %v5970
        %v5996 = vpack.c.b16 %v5971, %v5971
        %v5997 = vpack.c.b16 %v5972, %v5972
        %vm6023 = vcmask 257024
        %6024 = vst.msk [vmem:[#allocation5] sm:$0xf] %vm6023, %v5973
        %6025 = vst.msk [vmem:[#allocation5 + $0xc] sm:$0xf] %vm6023, %v5974
        %6026 = vst.msk [vmem:[#allocation5 + $0x18] sm:$0xf] %vm6023, %v5975
        %6027 = vst.msk [vmem:[#allocation5 + $0x24] sm:$0xf] %vm6023, %v5976
        %6028 = vst.msk [vmem:[#allocation5 + $0x30] sm:$0xf] %vm6023, %v5977
        %6029 = vst.msk [vmem:[#allocation5 + $0x3c] sm:$0xf] %vm6023, %v5978
        %6030 = vst.msk [vmem:[#allocation5 + $0x48] sm:$0xf] %vm6023, %v5979
        %6031 = vst.msk [vmem:[#allocation5 + $0x54] sm:$0xf] %vm6023, %v5980
        %6032 = vst.msk [vmem:[#allocation5 + $0x60] sm:$0xf] %vm6023, %v5981
        %6033 = vst.msk [vmem:[#allocation5 + $0x6c] sm:$0xf] %vm6023, %v5982
        %6034 = vst.msk [vmem:[#allocation5 + $0x78] sm:$0xf] %vm6023, %v5983
        %6035 = vst.msk [vmem:[#allocation5 + $0x84] sm:$0xf] %vm6023, %v5984
        %6036 = vst.msk [vmem:[#allocation5 + $0x90] sm:$0xf] %vm6023, %v5985
        %6037 = vst.msk [vmem:[#allocation5 + $0x9c] sm:$0xf] %vm6023, %v5986
        %6038 = vst.msk [vmem:[#allocation5 + $0xa8] sm:$0xf] %vm6023, %v5987
        %6039 = vst.msk [vmem:[#allocation5 + $0xb4] sm:$0xf] %vm6023, %v5988
        %6040 = vst.msk [vmem:[#allocation5 + $0xc0] sm:$0xf] %vm6023, %v5989
        %6041 = vst.msk [vmem:[#allocation5 + $0xcc] sm:$0xf] %vm6023, %v5990
        %6042 = vst.msk [vmem:[#allocation5 + $0xd8] sm:$0xf] %vm6023, %v5991
        %6043 = vst.msk [vmem:[#allocation5 + $0xe4] sm:$0xf] %vm6023, %v5992
        %6044 = vst.msk [vmem:[#allocation5 + $0xf0] sm:$0xf] %vm6023, %v5993
        %6045 = vst.msk [vmem:[#allocation5 + $0xfc] sm:$0xf] %vm6023, %v5994
        %6046 = vst.msk [vmem:[#allocation5 + $0x108] sm:$0xf] %vm6023, %v5995
        %6047 = vst.msk [vmem:[#allocation5 + $0x114] sm:$0xf] %vm6023, %v5996
        %vm6048 = vcmask 254976
        %vm6049 = vsmask.f32 1280
        %vm6050 = vmand %vm6048, %vm6049
        %v6051 = vld [vmem:[#allocation5 + $0x120] sm:$0x3]
        %v6052 = vsel %vm6050, %v5997, %v6051
        %6053 = vst [vmem:[#allocation5 + $0x120] sm:$0x3] %v6052
        %v6054 = vld [vmem:[#allocation4 + $0x1] sm:$0xff]
        %v6055 = vld [vmem:[#allocation4 + $0x9] sm:$0xff]
        %v6056 = vld [vmem:[#allocation4 + $0x11] sm:$0xff]
        %v6057 = vld [vmem:[#allocation4 + $0x19] sm:$0xff]
        %v6058 = vld [vmem:[#allocation4 + $0x21] sm:$0xff]
        %v6059 = vld [vmem:[#allocation4 + $0x29] sm:$0xff]
        %v6060 = vld [vmem:[#allocation4 + $0x31] sm:$0xff]
        %v6061 = vld [vmem:[#allocation4 + $0x39] sm:$0xff]
        %v6062 = vld [vmem:[#allocation4 + $0x41] sm:$0xff]
        %v6063 = vld [vmem:[#allocation4 + $0x49] sm:$0xff]
        %v6064 = vld [vmem:[#allocation4 + $0x51] sm:$0xff]
        %v6065 = vld [vmem:[#allocation4 + $0x59] sm:$0xff]
        %v6066 = vld [vmem:[#allocation4 + $0x61] sm:$0xff]
        %v6067 = vld [vmem:[#allocation4 + $0x69] sm:$0xff]
        %v6068 = vld [vmem:[#allocation4 + $0x71] sm:$0xff]
        %v6069 = vld [vmem:[#allocation4 + $0x79] sm:$0xff]
        %v6070 = vld [vmem:[#allocation4 + $0x81] sm:$0xff]
        %v6071 = vld [vmem:[#allocation4 + $0x89] sm:$0xff]
        %v6072 = vld [vmem:[#allocation4 + $0x91] sm:$0xff]
        %v6073 = vld [vmem:[#allocation4 + $0x99] sm:$0xff]
        %v6074 = vld [vmem:[#allocation4 + $0xa1] sm:$0xff]
        %v6075 = vld [vmem:[#allocation4 + $0xa9] sm:$0xff]
        %v6076 = vld [vmem:[#allocation4 + $0xb1] sm:$0xff]
        %v6077 = vld [vmem:[#allocation4 + $0xb9] sm:$0xff]
        %v6078 = vld [vmem:[#allocation4 + $0xc1] sm:$0x7]
        %v6079 = vpack.c.bf16 %v6055, %v6054
        %v6080 = vpack.c.bf16 %v6057, %v6056
        %v6081 = vpack.c.bf16 %v6059, %v6058
        %v6082 = vpack.c.bf16 %v6061, %v6060
        %v6083 = vpack.c.bf16 %v6063, %v6062
        %v6084 = vpack.c.bf16 %v6065, %v6064
        %v6085 = vpack.c.bf16 %v6067, %v6066
        %v6086 = vpack.c.bf16 %v6069, %v6068
        %v6087 = vpack.c.bf16 %v6071, %v6070
        %v6088 = vpack.c.bf16 %v6073, %v6072
        %v6089 = vpack.c.bf16 %v6075, %v6074
        %v6090 = vpack.c.bf16 %v6077, %v6076
        %v6091 = vpack.c.bf16 %v6078, %v6078
        %v6105 = vunpack.c.l.b16 %v6079
        %v6106 = vunpack.c.h.b16 %v6079
        %v6107 = vunpack.c.l.b16 %v6080
        %v6108 = vunpack.c.h.b16 %v6080
        %v6109 = vunpack.c.l.b16 %v6081
        %v6110 = vunpack.c.h.b16 %v6081
        %v6111 = vunpack.c.l.b16 %v6082
        %v6112 = vunpack.c.h.b16 %v6082
        %v6113 = vunpack.c.l.b16 %v6083
        %v6114 = vunpack.c.h.b16 %v6083
        %v6115 = vunpack.c.l.b16 %v6084
        %v6116 = vunpack.c.h.b16 %v6084
        %v6117 = vunpack.c.l.b16 %v6085
        %v6118 = vunpack.c.h.b16 %v6085
        %v6119 = vunpack.c.l.b16 %v6086
        %v6120 = vunpack.c.h.b16 %v6086
        %v6121 = vunpack.c.l.b16 %v6087
        %v6122 = vunpack.c.h.b16 %v6087
        %v6123 = vunpack.c.l.b16 %v6088
        %v6124 = vunpack.c.h.b16 %v6088
        %v6125 = vunpack.c.l.b16 %v6089
        %v6126 = vunpack.c.h.b16 %v6089
        %v6127 = vunpack.c.l.b16 %v6090
        %v6128 = vunpack.c.h.b16 %v6090
        %v6129 = vunpack.c.l.b16 %v6091
        %v6130 = vpack.c.b16 %v6105, %v6105
        %v6131 = vpack.c.b16 %v6106, %v6106
        %v6132 = vpack.c.b16 %v6107, %v6107
        %v6133 = vpack.c.b16 %v6108, %v6108
        %v6134 = vpack.c.b16 %v6109, %v6109
        %v6135 = vpack.c.b16 %v6110, %v6110
        %v6136 = vpack.c.b16 %v6111, %v6111
        %v6137 = vpack.c.b16 %v6112, %v6112
        %v6138 = vpack.c.b16 %v6113, %v6113
        %v6139 = vpack.c.b16 %v6114, %v6114
        %v6140 = vpack.c.b16 %v6115, %v6115
        %v6141 = vpack.c.b16 %v6116, %v6116
        %v6142 = vpack.c.b16 %v6117, %v6117
        %v6143 = vpack.c.b16 %v6118, %v6118
        %v6144 = vpack.c.b16 %v6119, %v6119
        %v6145 = vpack.c.b16 %v6120, %v6120
        %v6146 = vpack.c.b16 %v6121, %v6121
        %v6147 = vpack.c.b16 %v6122, %v6122
        %v6148 = vpack.c.b16 %v6123, %v6123
        %v6149 = vpack.c.b16 %v6124, %v6124
        %v6150 = vpack.c.b16 %v6125, %v6125
        %v6151 = vpack.c.b16 %v6126, %v6126
        %v6152 = vpack.c.b16 %v6127, %v6127
        %v6153 = vpack.c.b16 %v6128, %v6128
        %v6154 = vpack.c.b16 %v6129, %v6129
        %6155 = vrot.lane.b32.xlu0 %v6130, 32
        %v6156 = vpop.permute.xlu0 %6155
        %6157 = vrot.lane.b32.xlu0 %v6131, 32
        %v6158 = vpop.permute.xlu0 %6157
        %6159 = vrot.lane.b32.xlu0 %v6132, 32
        %v6160 = vpop.permute.xlu0 %6159
        %6161 = vrot.lane.b32.xlu0 %v6133, 32
        %v6162 = vpop.permute.xlu0 %6161
        %6163 = vrot.lane.b32.xlu0 %v6134, 32
        %v6164 = vpop.permute.xlu0 %6163
        %6165 = vrot.lane.b32.xlu0 %v6135, 32
        %v6166 = vpop.permute.xlu0 %6165
        %6167 = vrot.lane.b32.xlu0 %v6136, 32
        %v6168 = vpop.permute.xlu0 %6167
        %6169 = vrot.lane.b32.xlu0 %v6137, 32
        %v6170 = vpop.permute.xlu0 %6169
        %6171 = vrot.lane.b32.xlu0 %v6138, 32
        %v6172 = vpop.permute.xlu0 %6171
        %6173 = vrot.lane.b32.xlu0 %v6139, 32
        %v6174 = vpop.permute.xlu0 %6173
        %6175 = vrot.lane.b32.xlu0 %v6140, 32
        %v6176 = vpop.permute.xlu0 %6175
        %6177 = vrot.lane.b32.xlu0 %v6141, 32
        %v6178 = vpop.permute.xlu0 %6177
        %6179 = vrot.lane.b32.xlu0 %v6142, 32
        %v6180 = vpop.permute.xlu0 %6179
        %6181 = vrot.lane.b32.xlu0 %v6143, 32
        %v6182 = vpop.permute.xlu0 %6181
        %6183 = vrot.lane.b32.xlu0 %v6144, 32
        %v6184 = vpop.permute.xlu0 %6183
        %6185 = vrot.lane.b32.xlu0 %v6145, 32
        %v6186 = vpop.permute.xlu0 %6185
        %6187 = vrot.lane.b32.xlu0 %v6146, 32
        %v6188 = vpop.permute.xlu0 %6187
        %6189 = vrot.lane.b32.xlu0 %v6147, 32
        %v6190 = vpop.permute.xlu0 %6189
        %6191 = vrot.lane.b32.xlu0 %v6148, 32
        %v6192 = vpop.permute.xlu0 %6191
        %6193 = vrot.lane.b32.xlu0 %v6149, 32
        %v6194 = vpop.permute.xlu0 %6193
        %6195 = vrot.lane.b32.xlu0 %v6150, 32
        %v6196 = vpop.permute.xlu0 %6195
        %6197 = vrot.lane.b32.xlu0 %v6151, 32
        %v6198 = vpop.permute.xlu0 %6197
        %6199 = vrot.lane.b32.xlu0 %v6152, 32
        %v6200 = vpop.permute.xlu0 %6199
        %6201 = vrot.lane.b32.xlu0 %v6153, 32
        %v6202 = vpop.permute.xlu0 %6201
        %6203 = vrot.lane.b32.xlu0 %v6154, 32
        %v6204 = vpop.permute.xlu0 %6203
        %vm6230 = vcmask 519424
        %6231 = vst.msk [vmem:[#allocation5] sm:$0xf] %vm6230, %v6156
        %6232 = vst.msk [vmem:[#allocation5 + $0xc] sm:$0xf] %vm6230, %v6158
        %6233 = vst.msk [vmem:[#allocation5 + $0x18] sm:$0xf] %vm6230, %v6160
        %6234 = vst.msk [vmem:[#allocation5 + $0x24] sm:$0xf] %vm6230, %v6162
        %6235 = vst.msk [vmem:[#allocation5 + $0x30] sm:$0xf] %vm6230, %v6164
        %6236 = vst.msk [vmem:[#allocation5 + $0x3c] sm:$0xf] %vm6230, %v6166
        %6237 = vst.msk [vmem:[#allocation5 + $0x48] sm:$0xf] %vm6230, %v6168
        %6238 = vst.msk [vmem:[#allocation5 + $0x54] sm:$0xf] %vm6230, %v6170
        %6239 = vst.msk [vmem:[#allocation5 + $0x60] sm:$0xf] %vm6230, %v6172
        %6240 = vst.msk [vmem:[#allocation5 + $0x6c] sm:$0xf] %vm6230, %v6174
        %6241 = vst.msk [vmem:[#allocation5 + $0x78] sm:$0xf] %vm6230, %v6176
        %6242 = vst.msk [vmem:[#allocation5 + $0x84] sm:$0xf] %vm6230, %v6178
        %6243 = vst.msk [vmem:[#allocation5 + $0x90] sm:$0xf] %vm6230, %v6180
        %6244 = vst.msk [vmem:[#allocation5 + $0x9c] sm:$0xf] %vm6230, %v6182
        %6245 = vst.msk [vmem:[#allocation5 + $0xa8] sm:$0xf] %vm6230, %v6184
        %6246 = vst.msk [vmem:[#allocation5 + $0xb4] sm:$0xf] %vm6230, %v6186
        %6247 = vst.msk [vmem:[#allocation5 + $0xc0] sm:$0xf] %vm6230, %v6188
        %6248 = vst.msk [vmem:[#allocation5 + $0xcc] sm:$0xf] %vm6230, %v6190
        %6249 = vst.msk [vmem:[#allocation5 + $0xd8] sm:$0xf] %vm6230, %v6192
        %6250 = vst.msk [vmem:[#allocation5 + $0xe4] sm:$0xf] %vm6230, %v6194
        %6251 = vst.msk [vmem:[#allocation5 + $0xf0] sm:$0xf] %vm6230, %v6196
        %6252 = vst.msk [vmem:[#allocation5 + $0xfc] sm:$0xf] %vm6230, %v6198
        %6253 = vst.msk [vmem:[#allocation5 + $0x108] sm:$0xf] %vm6230, %v6200
        %6254 = vst.msk [vmem:[#allocation5 + $0x114] sm:$0xf] %vm6230, %v6202
        %vm6255 = vcmask 517376
        %vm6256 = vmand %vm6255, %vm6049
        %v6257 = vld [vmem:[#allocation5 + $0x120] sm:$0x3]
        %v6258 = vsel %vm6256, %v6204, %v6257
        %6259 = vst [vmem:[#allocation5 + $0x120] sm:$0x3] %v6258
        %v6260 = vld [vmem:[#allocation4 + $0x2] sm:$0xff]
        %v6261 = vld [vmem:[#allocation4 + $0xa] sm:$0xff]
        %v6262 = vld [vmem:[#allocation4 + $0x12] sm:$0xff]
        %v6263 = vld [vmem:[#allocation4 + $0x1a] sm:$0xff]
        %v6264 = vld [vmem:[#allocation4 + $0x22] sm:$0xff]
        %v6265 = vld [vmem:[#allocation4 + $0x2a] sm:$0xff]
        %v6266 = vld [vmem:[#allocation4 + $0x32] sm:$0xff]
        %v6267 = vld [vmem:[#allocation4 + $0x3a] sm:$0xff]
        %v6268 = vld [vmem:[#allocation4 + $0x42] sm:$0xff]
        %v6269 = vld [vmem:[#allocation4 + $0x4a] sm:$0xff]
        %v6270 = vld [vmem:[#allocation4 + $0x52] sm:$0xff]
        %v6271 = vld [vmem:[#allocation4 + $0x5a] sm:$0xff]
        %v6272 = vld [vmem:[#allocation4 + $0x62] sm:$0xff]
        %v6273 = vld [vmem:[#allocation4 + $0x6a] sm:$0xff]
        %v6274 = vld [vmem:[#allocation4 + $0x72] sm:$0xff]
        %v6275 = vld [vmem:[#allocation4 + $0x7a] sm:$0xff]
        %v6276 = vld [vmem:[#allocation4 + $0x82] sm:$0xff]
        %v6277 = vld [vmem:[#allocation4 + $0x8a] sm:$0xff]
        %v6278 = vld [vmem:[#allocation4 + $0x92] sm:$0xff]
        %v6279 = vld [vmem:[#allocation4 + $0x9a] sm:$0xff]
        %v6280 = vld [vmem:[#allocation4 + $0xa2] sm:$0xff]
        %v6281 = vld [vmem:[#allocation4 + $0xaa] sm:$0xff]
        %v6282 = vld [vmem:[#allocation4 + $0xb2] sm:$0xff]
        %v6283 = vld [vmem:[#allocation4 + $0xba] sm:$0xff]
        %v6284 = vld [vmem:[#allocation4 + $0xc2] sm:$0x7]
        %v6285 = vpack.c.bf16 %v6261, %v6260
        %v6286 = vpack.c.bf16 %v6263, %v6262
        %v6287 = vpack.c.bf16 %v6265, %v6264
        %v6288 = vpack.c.bf16 %v6267, %v6266
        %v6289 = vpack.c.bf16 %v6269, %v6268
        %v6290 = vpack.c.bf16 %v6271, %v6270
        %v6291 = vpack.c.bf16 %v6273, %v6272
        %v6292 = vpack.c.bf16 %v6275, %v6274
        %v6293 = vpack.c.bf16 %v6277, %v6276
        %v6294 = vpack.c.bf16 %v6279, %v6278
        %v6295 = vpack.c.bf16 %v6281, %v6280
        %v6296 = vpack.c.bf16 %v6283, %v6282
        %v6297 = vpack.c.bf16 %v6284, %v6284
        %v6311 = vunpack.c.l.b16 %v6285
        %v6312 = vunpack.c.h.b16 %v6285
        %v6313 = vunpack.c.l.b16 %v6286
        %v6314 = vunpack.c.h.b16 %v6286
        %v6315 = vunpack.c.l.b16 %v6287
        %v6316 = vunpack.c.h.b16 %v6287
        %v6317 = vunpack.c.l.b16 %v6288
        %v6318 = vunpack.c.h.b16 %v6288
        %v6319 = vunpack.c.l.b16 %v6289
        %v6320 = vunpack.c.h.b16 %v6289
        %v6321 = vunpack.c.l.b16 %v6290
        %v6322 = vunpack.c.h.b16 %v6290
        %v6323 = vunpack.c.l.b16 %v6291
        %v6324 = vunpack.c.h.b16 %v6291
        %v6325 = vunpack.c.l.b16 %v6292
        %v6326 = vunpack.c.h.b16 %v6292
        %v6327 = vunpack.c.l.b16 %v6293
        %v6328 = vunpack.c.h.b16 %v6293
        %v6329 = vunpack.c.l.b16 %v6294
        %v6330 = vunpack.c.h.b16 %v6294
        %v6331 = vunpack.c.l.b16 %v6295
        %v6332 = vunpack.c.h.b16 %v6295
        %v6333 = vunpack.c.l.b16 %v6296
        %v6334 = vunpack.c.h.b16 %v6296
        %v6335 = vunpack.c.l.b16 %v6297
        %v6336 = vpack.c.b16 %v6311, %v6311
        %v6337 = vpack.c.b16 %v6312, %v6312
        %v6338 = vpack.c.b16 %v6313, %v6313
        %v6339 = vpack.c.b16 %v6314, %v6314
        %v6340 = vpack.c.b16 %v6315, %v6315
        %v6341 = vpack.c.b16 %v6316, %v6316
        %v6342 = vpack.c.b16 %v6317, %v6317
        %v6343 = vpack.c.b16 %v6318, %v6318
        %v6344 = vpack.c.b16 %v6319, %v6319
        %v6345 = vpack.c.b16 %v6320, %v6320
        %v6346 = vpack.c.b16 %v6321, %v6321
        %v6347 = vpack.c.b16 %v6322, %v6322
        %v6348 = vpack.c.b16 %v6323, %v6323
        %v6349 = vpack.c.b16 %v6324, %v6324
        %v6350 = vpack.c.b16 %v6325, %v6325
        %v6351 = vpack.c.b16 %v6326, %v6326
        %v6352 = vpack.c.b16 %v6327, %v6327
        %v6353 = vpack.c.b16 %v6328, %v6328
        %v6354 = vpack.c.b16 %v6329, %v6329
        %v6355 = vpack.c.b16 %v6330, %v6330
        %v6356 = vpack.c.b16 %v6331, %v6331
        %v6357 = vpack.c.b16 %v6332, %v6332
        %v6358 = vpack.c.b16 %v6333, %v6333
        %v6359 = vpack.c.b16 %v6334, %v6334
        %v6360 = vpack.c.b16 %v6335, %v6335
        %6361 = vrot.lane.b32.xlu0 %v6336, 64
        %v6362 = vpop.permute.xlu0 %6361
        %6363 = vrot.lane.b32.xlu0 %v6337, 64
        %v6364 = vpop.permute.xlu0 %6363
        %6365 = vrot.lane.b32.xlu0 %v6338, 64
        %v6366 = vpop.permute.xlu0 %6365
        %6367 = vrot.lane.b32.xlu0 %v6339, 64
        %v6368 = vpop.permute.xlu0 %6367
        %6369 = vrot.lane.b32.xlu0 %v6340, 64
        %v6370 = vpop.permute.xlu0 %6369
        %6371 = vrot.lane.b32.xlu0 %v6341, 64
        %v6372 = vpop.permute.xlu0 %6371
        %6373 = vrot.lane.b32.xlu0 %v6342, 64
        %v6374 = vpop.permute.xlu0 %6373
        %6375 = vrot.lane.b32.xlu0 %v6343, 64
        %v6376 = vpop.permute.xlu0 %6375
        %6377 = vrot.lane.b32.xlu0 %v6344, 64
        %v6378 = vpop.permute.xlu0 %6377
        %6379 = vrot.lane.b32.xlu0 %v6345, 64
        %v6380 = vpop.permute.xlu0 %6379
        %6381 = vrot.lane.b32.xlu0 %v6346, 64
        %v6382 = vpop.permute.xlu0 %6381
        %6383 = vrot.lane.b32.xlu0 %v6347, 64
        %v6384 = vpop.permute.xlu0 %6383
        %6385 = vrot.lane.b32.xlu0 %v6348, 64
        %v6386 = vpop.permute.xlu0 %6385
        %6387 = vrot.lane.b32.xlu0 %v6349, 64
        %v6388 = vpop.permute.xlu0 %6387
        %6389 = vrot.lane.b32.xlu0 %v6350, 64
        %v6390 = vpop.permute.xlu0 %6389
        %6391 = vrot.lane.b32.xlu0 %v6351, 64
        %v6392 = vpop.permute.xlu0 %6391
        %6393 = vrot.lane.b32.xlu0 %v6352, 64
        %v6394 = vpop.permute.xlu0 %6393
        %6395 = vrot.lane.b32.xlu0 %v6353, 64
        %v6396 = vpop.permute.xlu0 %6395
        %6397 = vrot.lane.b32.xlu0 %v6354, 64
        %v6398 = vpop.permute.xlu0 %6397
        %6399 = vrot.lane.b32.xlu0 %v6355, 64
        %v6400 = vpop.permute.xlu0 %6399
        %6401 = vrot.lane.b32.xlu0 %v6356, 64
        %v6402 = vpop.permute.xlu0 %6401
        %6403 = vrot.lane.b32.xlu0 %v6357, 64
        %v6404 = vpop.permute.xlu0 %6403
        %6405 = vrot.lane.b32.xlu0 %v6358, 64
        %v6406 = vpop.permute.xlu0 %6405
        %6407 = vrot.lane.b32.xlu0 %v6359, 64
        %v6408 = vpop.permute.xlu0 %6407
        %6409 = vrot.lane.b32.xlu0 %v6360, 64
        %v6410 = vpop.permute.xlu0 %6409
        %vm6436 = vcmask 781824
        %6437 = vst.msk [vmem:[#allocation5] sm:$0xf] %vm6436, %v6362
        %6438 = vst.msk [vmem:[#allocation5 + $0xc] sm:$0xf] %vm6436, %v6364
        %6439 = vst.msk [vmem:[#allocation5 + $0x18] sm:$0xf] %vm6436, %v6366
        %6440 = vst.msk [vmem:[#allocation5 + $0x24] sm:$0xf] %vm6436, %v6368
        %6441 = vst.msk [vmem:[#allocation5 + $0x30] sm:$0xf] %vm6436, %v6370
        %6442 = vst.msk [vmem:[#allocation5 + $0x3c] sm:$0xf] %vm6436, %v6372
        %6443 = vst.msk [vmem:[#allocation5 + $0x48] sm:$0xf] %vm6436, %v6374
        %6444 = vst.msk [vmem:[#allocation5 + $0x54] sm:$0xf] %vm6436, %v6376
        %6445 = vst.msk [vmem:[#allocation5 + $0x60] sm:$0xf] %vm6436, %v6378
        %6446 = vst.msk [vmem:[#allocation5 + $0x6c] sm:$0xf] %vm6436, %v6380
        %6447 = vst.msk [vmem:[#allocation5 + $0x78] sm:$0xf] %vm6436, %v6382
        %6448 = vst.msk [vmem:[#allocation5 + $0x84] sm:$0xf] %vm6436, %v6384
        %6449 = vst.msk [vmem:[#allocation5 + $0x90] sm:$0xf] %vm6436, %v6386
        %6450 = vst.msk [vmem:[#allocation5 + $0x9c] sm:$0xf] %vm6436, %v6388
        %6451 = vst.msk [vmem:[#allocation5 + $0xa8] sm:$0xf] %vm6436, %v6390
        %6452 = vst.msk [vmem:[#allocation5 + $0xb4] sm:$0xf] %vm6436, %v6392
        %6453 = vst.msk [vmem:[#allocation5 + $0xc0] sm:$0xf] %vm6436, %v6394
        %6454 = vst.msk [vmem:[#allocation5 + $0xcc] sm:$0xf] %vm6436, %v6396
        %6455 = vst.msk [vmem:[#allocation5 + $0xd8] sm:$0xf] %vm6436, %v6398
        %6456 = vst.msk [vmem:[#allocation5 + $0xe4] sm:$0xf] %vm6436, %v6400
        %6457 = vst.msk [vmem:[#allocation5 + $0xf0] sm:$0xf] %vm6436, %v6402
        %6458 = vst.msk [vmem:[#allocation5 + $0xfc] sm:$0xf] %vm6436, %v6404
        %6459 = vst.msk [vmem:[#allocation5 + $0x108] sm:$0xf] %vm6436, %v6406
        %6460 = vst.msk [vmem:[#allocation5 + $0x114] sm:$0xf] %vm6436, %v6408
        %vm6461 = vcmask 779776
        %vm6462 = vmand %vm6461, %vm6049
        %v6463 = vld [vmem:[#allocation5 + $0x120] sm:$0x3]
        %v6464 = vsel %vm6462, %v6410, %v6463
        %6465 = vst [vmem:[#allocation5 + $0x120] sm:$0x3] %v6464
        %v6466 = vld [vmem:[#allocation4 + $0xf] sm:$0xff]
        %v6467 = vld [vmem:[#allocation4 + $0x17] sm:$0xff]
        %v6468 = vld [vmem:[#allocation4 + $0x1f] sm:$0xff]
        %v6469 = vld [vmem:[#allocation4 + $0x27] sm:$0xff]
        %v6470 = vld [vmem:[#allocation4 + $0x2f] sm:$0xff]
        %v6471 = vld [vmem:[#allocation4 + $0x37] sm:$0xff]
        %v6472 = vld [vmem:[#allocation4 + $0x3f] sm:$0xff]
        %v6473 = vld [vmem:[#allocation4 + $0x47] sm:$0xff]
        %v6474 = vld [vmem:[#allocation4 + $0x4f] sm:$0xff]
        %v6475 = vld [vmem:[#allocation4 + $0x57] sm:$0xff]
        %v6476 = vld [vmem:[#allocation4 + $0x5f] sm:$0xff]
        %v6477 = vld [vmem:[#allocation4 + $0x67] sm:$0xff]
        %v6478 = vld [vmem:[#allocation4 + $0x6f] sm:$0xff]
        %v6479 = vld [vmem:[#allocation4 + $0x77] sm:$0xff]
        %v6480 = vld [vmem:[#allocation4 + $0x7f] sm:$0xff]
        %v6481 = vld [vmem:[#allocation4 + $0x87] sm:$0xff]
        %v6482 = vld [vmem:[#allocation4 + $0x8f] sm:$0xff]
        %v6483 = vld [vmem:[#allocation4 + $0x97] sm:$0xff]
        %v6484 = vld [vmem:[#allocation4 + $0x9f] sm:$0xff]
        %v6485 = vld [vmem:[#allocation4 + $0xa7] sm:$0xff]
        %v6486 = vld [vmem:[#allocation4 + $0xaf] sm:$0xff]
        %v6487 = vld [vmem:[#allocation4 + $0xb7] sm:$0xff]
        %v6488 = vld [vmem:[#allocation4 + $0xbf] sm:$0xff]
        %v6489 = vld [vmem:[#allocation4 + $0xc7] sm:$0xff]
        %v6490 = vld [vmem:[#allocation4 + $0xcf] sm:$0x7]
        %v6491 = vpack.c.bf16 %v6467, %v6466
        %v6492 = vpack.c.bf16 %v6469, %v6468
        %v6493 = vpack.c.bf16 %v6471, %v6470
        %v6494 = vpack.c.bf16 %v6473, %v6472
        %v6495 = vpack.c.bf16 %v6475, %v6474
        %v6496 = vpack.c.bf16 %v6477, %v6476
        %v6497 = vpack.c.bf16 %v6479, %v6478
        %v6498 = vpack.c.bf16 %v6481, %v6480
        %v6499 = vpack.c.bf16 %v6483, %v6482
        %v6500 = vpack.c.bf16 %v6485, %v6484
        %v6501 = vpack.c.bf16 %v6487, %v6486
        %v6502 = vpack.c.bf16 %v6489, %v6488
        %v6503 = vpack.c.bf16 %v6490, %v6490
        %v6517 = vunpack.c.l.b16 %v6491
        %v6518 = vunpack.c.h.b16 %v6491
        %v6519 = vunpack.c.l.b16 %v6492
        %v6520 = vunpack.c.h.b16 %v6492
        %v6521 = vunpack.c.l.b16 %v6493
        %v6522 = vunpack.c.h.b16 %v6493
        %v6523 = vunpack.c.l.b16 %v6494
        %v6524 = vunpack.c.h.b16 %v6494
        %v6525 = vunpack.c.l.b16 %v6495
        %v6526 = vunpack.c.h.b16 %v6495
        %v6527 = vunpack.c.l.b16 %v6496
        %v6528 = vunpack.c.h.b16 %v6496
        %v6529 = vunpack.c.l.b16 %v6497
        %v6530 = vunpack.c.h.b16 %v6497
        %v6531 = vunpack.c.l.b16 %v6498
        %v6532 = vunpack.c.h.b16 %v6498
        %v6533 = vunpack.c.l.b16 %v6499
        %v6534 = vunpack.c.h.b16 %v6499
        %v6535 = vunpack.c.l.b16 %v6500
        %v6536 = vunpack.c.h.b16 %v6500
        %v6537 = vunpack.c.l.b16 %v6501
        %v6538 = vunpack.c.h.b16 %v6501
        %v6539 = vunpack.c.l.b16 %v6502
        %v6540 = vunpack.c.h.b16 %v6502
        %v6541 = vunpack.c.l.b16 %v6503
        %v6542 = vpack.c.b16 %v6517, %v6517
        %v6543 = vpack.c.b16 %v6518, %v6518
        %v6544 = vpack.c.b16 %v6519, %v6519
        %v6545 = vpack.c.b16 %v6520, %v6520
        %v6546 = vpack.c.b16 %v6521, %v6521
        %v6547 = vpack.c.b16 %v6522, %v6522
        %v6548 = vpack.c.b16 %v6523, %v6523
        %v6549 = vpack.c.b16 %v6524, %v6524
        %v6550 = vpack.c.b16 %v6525, %v6525
        %v6551 = vpack.c.b16 %v6526, %v6526
        %v6552 = vpack.c.b16 %v6527, %v6527
        %v6553 = vpack.c.b16 %v6528, %v6528
        %v6554 = vpack.c.b16 %v6529, %v6529
        %v6555 = vpack.c.b16 %v6530, %v6530
        %v6556 = vpack.c.b16 %v6531, %v6531
        %v6557 = vpack.c.b16 %v6532, %v6532
        %v6558 = vpack.c.b16 %v6533, %v6533
        %v6559 = vpack.c.b16 %v6534, %v6534
        %v6560 = vpack.c.b16 %v6535, %v6535
        %v6561 = vpack.c.b16 %v6536, %v6536
        %v6562 = vpack.c.b16 %v6537, %v6537
        %v6563 = vpack.c.b16 %v6538, %v6538
        %v6564 = vpack.c.b16 %v6539, %v6539
        %v6565 = vpack.c.b16 %v6540, %v6540
        %v6566 = vpack.c.b16 %v6541, %v6541
        %6567 = vrot.lane.b32.xlu0 %v6542, 96
        %v6568 = vpop.permute.xlu0 %6567
        %6569 = vrot.lane.b32.xlu0 %v6543, 96
        %v6570 = vpop.permute.xlu0 %6569
        %6571 = vrot.lane.b32.xlu0 %v6544, 96
        %v6572 = vpop.permute.xlu0 %6571
        %6573 = vrot.lane.b32.xlu0 %v6545, 96
        %v6574 = vpop.permute.xlu0 %6573
        %6575 = vrot.lane.b32.xlu0 %v6546, 96
        %v6576 = vpop.permute.xlu0 %6575
        %6577 = vrot.lane.b32.xlu0 %v6547, 96
        %v6578 = vpop.permute.xlu0 %6577
        %6579 = vrot.lane.b32.xlu0 %v6548, 96
        %v6580 = vpop.permute.xlu0 %6579
        %6581 = vrot.lane.b32.xlu0 %v6549, 96
        %v6582 = vpop.permute.xlu0 %6581
        %6583 = vrot.lane.b32.xlu0 %v6550, 96
        %v6584 = vpop.permute.xlu0 %6583
        %6585 = vrot.lane.b32.xlu0 %v6551, 96
        %v6586 = vpop.permute.xlu0 %6585
        %6587 = vrot.lane.b32.xlu0 %v6552, 96
        %v6588 = vpop.permute.xlu0 %6587
        %6589 = vrot.lane.b32.xlu0 %v6553, 96
        %v6590 = vpop.permute.xlu0 %6589
        %6591 = vrot.lane.b32.xlu0 %v6554, 96
        %v6592 = vpop.permute.xlu0 %6591
        %6593 = vrot.lane.b32.xlu0 %v6555, 96
        %v6594 = vpop.permute.xlu0 %6593
        %6595 = vrot.lane.b32.xlu0 %v6556, 96
        %v6596 = vpop.permute.xlu0 %6595
        %6597 = vrot.lane.b32.xlu0 %v6557, 96
        %v6598 = vpop.permute.xlu0 %6597
        %6599 = vrot.lane.b32.xlu0 %v6558, 96
        %v6600 = vpop.permute.xlu0 %6599
        %6601 = vrot.lane.b32.xlu0 %v6559, 96
        %v6602 = vpop.permute.xlu0 %6601
        %6603 = vrot.lane.b32.xlu0 %v6560, 96
        %v6604 = vpop.permute.xlu0 %6603
        %6605 = vrot.lane.b32.xlu0 %v6561, 96
        %v6606 = vpop.permute.xlu0 %6605
        %6607 = vrot.lane.b32.xlu0 %v6562, 96
        %v6608 = vpop.permute.xlu0 %6607
        %6609 = vrot.lane.b32.xlu0 %v6563, 96
        %v6610 = vpop.permute.xlu0 %6609
        %6611 = vrot.lane.b32.xlu0 %v6564, 96
        %v6612 = vpop.permute.xlu0 %6611
        %6613 = vrot.lane.b32.xlu0 %v6565, 96
        %v6614 = vpop.permute.xlu0 %6613
        %6615 = vrot.lane.b32.xlu0 %v6566, 96
        %v6616 = vpop.permute.xlu0 %6615
        %vm6642 = vcmask 1044224
        %6643 = vst.msk [vmem:[#allocation5] sm:$0xf] %vm6642, %v6568
        %6644 = vst.msk [vmem:[#allocation5 + $0xc] sm:$0xf] %vm6642, %v6570
        %6645 = vst.msk [vmem:[#allocation5 + $0x18] sm:$0xf] %vm6642, %v6572
        %6646 = vst.msk [vmem:[#allocation5 + $0x24] sm:$0xf] %vm6642, %v6574
        %6647 = vst.msk [vmem:[#allocation5 + $0x30] sm:$0xf] %vm6642, %v6576
        %6648 = vst.msk [vmem:[#allocation5 + $0x3c] sm:$0xf] %vm6642, %v6578
        %6649 = vst.msk [vmem:[#allocation5 + $0x48] sm:$0xf] %vm6642, %v6580
        %6650 = vst.msk [vmem:[#allocation5 + $0x54] sm:$0xf] %vm6642, %v6582
        %6651 = vst.msk [vmem:[#allocation5 + $0x60] sm:$0xf] %vm6642, %v6584
        %6652 = vst.msk [vmem:[#allocation5 + $0x6c] sm:$0xf] %vm6642, %v6586
        %6653 = vst.msk [vmem:[#allocation5 + $0x78] sm:$0xf] %vm6642, %v6588
        %6654 = vst.msk [vmem:[#allocation5 + $0x84] sm:$0xf] %vm6642, %v6590
        %6655 = vst.msk [vmem:[#allocation5 + $0x90] sm:$0xf] %vm6642, %v6592
        %6656 = vst.msk [vmem:[#allocation5 + $0x9c] sm:$0xf] %vm6642, %v6594
        %6657 = vst.msk [vmem:[#allocation5 + $0xa8] sm:$0xf] %vm6642, %v6596
        %6658 = vst.msk [vmem:[#allocation5 + $0xb4] sm:$0xf] %vm6642, %v6598
        %6659 = vst.msk [vmem:[#allocation5 + $0xc0] sm:$0xf] %vm6642, %v6600
        %6660 = vst.msk [vmem:[#allocation5 + $0xcc] sm:$0xf] %vm6642, %v6602
        %6661 = vst.msk [vmem:[#allocation5 + $0xd8] sm:$0xf] %vm6642, %v6604
        %6662 = vst.msk [vmem:[#allocation5 + $0xe4] sm:$0xf] %vm6642, %v6606
        %6663 = vst.msk [vmem:[#allocation5 + $0xf0] sm:$0xf] %vm6642, %v6608
        %6664 = vst.msk [vmem:[#allocation5 + $0xfc] sm:$0xf] %vm6642, %v6610
        %6665 = vst.msk [vmem:[#allocation5 + $0x108] sm:$0xf] %vm6642, %v6612
        %6666 = vst.msk [vmem:[#allocation5 + $0x114] sm:$0xf] %vm6642, %v6614
        %vm6667 = vcmask 1042176
        %vm6668 = vmand %vm6667, %vm6049
        %v6669 = vld [vmem:[#allocation5 + $0x120] sm:$0x3]
        %v6670 = vsel %vm6668, %v6616, %v6669
        %6671 = vst [vmem:[#allocation5 + $0x120] sm:$0x3] %v6670
        %v6672 = vld [vmem:[#allocation4 + $0x10] sm:$0xff]
        %v6673 = vld [vmem:[#allocation4 + $0x18] sm:$0xff]
        %v6674 = vld [vmem:[#allocation4 + $0x20] sm:$0xff]
        %v6675 = vld [vmem:[#allocation4 + $0x28] sm:$0xff]
        %v6676 = vld [vmem:[#allocation4 + $0x30] sm:$0xff]
        %v6677 = vld [vmem:[#allocation4 + $0x38] sm:$0xff]
        %v6678 = vld [vmem:[#allocation4 + $0x40] sm:$0xff]
        %v6679 = vld [vmem:[#allocation4 + $0x48] sm:$0xff]
        %v6680 = vld [vmem:[#allocation4 + $0x50] sm:$0xff]
        %v6681 = vld [vmem:[#allocation4 + $0x58] sm:$0xff]
        %v6682 = vld [vmem:[#allocation4 + $0x60] sm:$0xff]
        %v6683 = vld [vmem:[#allocation4 + $0x68] sm:$0xff]
        %v6684 = vld [vmem:[#allocation4 + $0x70] sm:$0xff]
        %v6685 = vld [vmem:[#allocation4 + $0x78] sm:$0xff]
        %v6686 = vld [vmem:[#allocation4 + $0x80] sm:$0xff]
        %v6687 = vld [vmem:[#allocation4 + $0x88] sm:$0xff]
        %v6688 = vld [vmem:[#allocation4 + $0x90] sm:$0xff]
        %v6689 = vld [vmem:[#allocation4 + $0x98] sm:$0xff]
        %v6690 = vld [vmem:[#allocation4 + $0xa0] sm:$0xff]
        %v6691 = vld [vmem:[#allocation4 + $0xa8] sm:$0xff]
        %v6692 = vld [vmem:[#allocation4 + $0xb0] sm:$0xff]
        %v6693 = vld [vmem:[#allocation4 + $0xb8] sm:$0xff]
        %v6694 = vld [vmem:[#allocation4 + $0xc0] sm:$0xff]
        %v6695 = vld [vmem:[#allocation4 + $0xc8] sm:$0xff]
        %v6696 = vld [vmem:[#allocation4 + $0xd0] sm:$0x7]
        %v6697 = vpack.c.bf16 %v6673, %v6672
        %v6698 = vpack.c.bf16 %v6675, %v6674
        %v6699 = vpack.c.bf16 %v6677, %v6676
        %v6700 = vpack.c.bf16 %v6679, %v6678
        %v6701 = vpack.c.bf16 %v6681, %v6680
        %v6702 = vpack.c.bf16 %v6683, %v6682
        %v6703 = vpack.c.bf16 %v6685, %v6684
        %v6704 = vpack.c.bf16 %v6687, %v6686
        %v6705 = vpack.c.bf16 %v6689, %v6688
        %v6706 = vpack.c.bf16 %v6691, %v6690
        %v6707 = vpack.c.bf16 %v6693, %v6692
        %v6708 = vpack.c.bf16 %v6695, %v6694
        %v6709 = vpack.c.bf16 %v6696, %v6696
        %v6723 = vunpack.c.l.b16 %v6697
        %v6724 = vunpack.c.h.b16 %v6697
        %v6725 = vunpack.c.l.b16 %v6698
        %v6726 = vunpack.c.h.b16 %v6698
        %v6727 = vunpack.c.l.b16 %v6699
        %v6728 = vunpack.c.h.b16 %v6699
        %v6729 = vunpack.c.l.b16 %v6700
        %v6730 = vunpack.c.h.b16 %v6700
        %v6731 = vunpack.c.l.b16 %v6701
        %v6732 = vunpack.c.h.b16 %v6701
        %v6733 = vunpack.c.l.b16 %v6702
        %v6734 = vunpack.c.h.b16 %v6702
        %v6735 = vunpack.c.l.b16 %v6703
        %v6736 = vunpack.c.h.b16 %v6703
        %v6737 = vunpack.c.l.b16 %v6704
        %v6738 = vunpack.c.h.b16 %v6704
        %v6739 = vunpack.c.l.b16 %v6705
        %v6740 = vunpack.c.h.b16 %v6705
        %v6741 = vunpack.c.l.b16 %v6706
        %v6742 = vunpack.c.h.b16 %v6706
        %v6743 = vunpack.c.l.b16 %v6707
        %v6744 = vunpack.c.h.b16 %v6707
        %v6745 = vunpack.c.l.b16 %v6708
        %v6746 = vunpack.c.h.b16 %v6708
        %v6747 = vunpack.c.l.b16 %v6709
        %v6748 = vpack.c.b16 %v6723, %v6723
        %v6749 = vpack.c.b16 %v6724, %v6724
        %v6750 = vpack.c.b16 %v6725, %v6725
        %v6751 = vpack.c.b16 %v6726, %v6726
        %v6752 = vpack.c.b16 %v6727, %v6727
        %v6753 = vpack.c.b16 %v6728, %v6728
        %v6754 = vpack.c.b16 %v6729, %v6729
        %v6755 = vpack.c.b16 %v6730, %v6730
        %v6756 = vpack.c.b16 %v6731, %v6731
        %v6757 = vpack.c.b16 %v6732, %v6732
        %v6758 = vpack.c.b16 %v6733, %v6733
        %v6759 = vpack.c.b16 %v6734, %v6734
        %v6760 = vpack.c.b16 %v6735, %v6735
        %v6761 = vpack.c.b16 %v6736, %v6736
        %v6762 = vpack.c.b16 %v6737, %v6737
        %v6763 = vpack.c.b16 %v6738, %v6738
        %v6764 = vpack.c.b16 %v6739, %v6739
        %v6765 = vpack.c.b16 %v6740, %v6740
        %v6766 = vpack.c.b16 %v6741, %v6741
        %v6767 = vpack.c.b16 %v6742, %v6742
        %v6768 = vpack.c.b16 %v6743, %v6743
        %v6769 = vpack.c.b16 %v6744, %v6744
        %v6770 = vpack.c.b16 %v6745, %v6745
        %v6771 = vpack.c.b16 %v6746, %v6746
        %v6772 = vpack.c.b16 %v6747, %v6747
        %6798 = vst.msk [vmem:[#allocation5 + $0x4] sm:$0xf] %vm6023, %v6748
        %6799 = vst.msk [vmem:[#allocation5 + $0x10] sm:$0xf] %vm6023, %v6749
        %6800 = vst.msk [vmem:[#allocation5 + $0x1c] sm:$0xf] %vm6023, %v6750
        %6801 = vst.msk [vmem:[#allocation5 + $0x28] sm:$0xf] %vm6023, %v6751
        %6802 = vst.msk [vmem:[#allocation5 + $0x34] sm:$0xf] %vm6023, %v6752
        %6803 = vst.msk [vmem:[#allocation5 + $0x40] sm:$0xf] %vm6023, %v6753
        %6804 = vst.msk [vmem:[#allocation5 + $0x4c] sm:$0xf] %vm6023, %v6754
        %6805 = vst.msk [vmem:[#allocation5 + $0x58] sm:$0xf] %vm6023, %v6755
        %6806 = vst.msk [vmem:[#allocation5 + $0x64] sm:$0xf] %vm6023, %v6756
        %6807 = vst.msk [vmem:[#allocation5 + $0x70] sm:$0xf] %vm6023, %v6757
        %6808 = vst.msk [vmem:[#allocation5 + $0x7c] sm:$0xf] %vm6023, %v6758
        %6809 = vst.msk [vmem:[#allocation5 + $0x88] sm:$0xf] %vm6023, %v6759
        %6810 = vst.msk [vmem:[#allocation5 + $0x94] sm:$0xf] %vm6023, %v6760
        %6811 = vst.msk [vmem:[#allocation5 + $0xa0] sm:$0xf] %vm6023, %v6761
        %6812 = vst.msk [vmem:[#allocation5 + $0xac] sm:$0xf] %vm6023, %v6762
        %6813 = vst.msk [vmem:[#allocation5 + $0xb8] sm:$0xf] %vm6023, %v6763
        %6814 = vst.msk [vmem:[#allocation5 + $0xc4] sm:$0xf] %vm6023, %v6764
        %6815 = vst.msk [vmem:[#allocation5 + $0xd0] sm:$0xf] %vm6023, %v6765
        %6816 = vst.msk [vmem:[#allocation5 + $0xdc] sm:$0xf] %vm6023, %v6766
        %6817 = vst.msk [vmem:[#allocation5 + $0xe8] sm:$0xf] %vm6023, %v6767
        %6818 = vst.msk [vmem:[#allocation5 + $0xf4] sm:$0xf] %vm6023, %v6768
        %6819 = vst.msk [vmem:[#allocation5 + $0x100] sm:$0xf] %vm6023, %v6769
        %6820 = vst.msk [vmem:[#allocation5 + $0x10c] sm:$0xf] %vm6023, %v6770
        %6821 = vst.msk [vmem:[#allocation5 + $0x118] sm:$0xf] %vm6023, %v6771
        %v6822 = vld [vmem:[#allocation5 + $0x124] sm:$0x3]
        %v6823 = vsel %vm6050, %v6772, %v6822
        %6824 = vst [vmem:[#allocation5 + $0x124] sm:$0x3] %v6823
        %v6825 = vld [vmem:[#allocation4 + $0x11] sm:$0xff]
        %v6826 = vld [vmem:[#allocation4 + $0x19] sm:$0xff]
        %v6827 = vld [vmem:[#allocation4 + $0x21] sm:$0xff]
        %v6828 = vld [vmem:[#allocation4 + $0x29] sm:$0xff]
        %v6829 = vld [vmem:[#allocation4 + $0x31] sm:$0xff]
        %v6830 = vld [vmem:[#allocation4 + $0x39] sm:$0xff]
        %v6831 = vld [vmem:[#allocation4 + $0x41] sm:$0xff]
        %v6832 = vld [vmem:[#allocation4 + $0x49] sm:$0xff]
        %v6833 = vld [vmem:[#allocation4 + $0x51] sm:$0xff]
        %v6834 = vld [vmem:[#allocation4 + $0x59] sm:$0xff]
        %v6835 = vld [vmem:[#allocation4 + $0x61] sm:$0xff]
        %v6836 = vld [vmem:[#allocation4 + $0x69] sm:$0xff]
        %v6837 = vld [vmem:[#allocation4 + $0x71] sm:$0xff]
        %v6838 = vld [vmem:[#allocation4 + $0x79] sm:$0xff]
        %v6839 = vld [vmem:[#allocation4 + $0x81] sm:$0xff]
        %v6840 = vld [vmem:[#allocation4 + $0x89] sm:$0xff]
        %v6841 = vld [vmem:[#allocation4 + $0x91] sm:$0xff]
        %v6842 = vld [vmem:[#allocation4 + $0x99] sm:$0xff]
        %v6843 = vld [vmem:[#allocation4 + $0xa1] sm:$0xff]
        %v6844 = vld [vmem:[#allocation4 + $0xa9] sm:$0xff]
        %v6845 = vld [vmem:[#allocation4 + $0xb1] sm:$0xff]
        %v6846 = vld [vmem:[#allocation4 + $0xb9] sm:$0xff]
        %v6847 = vld [vmem:[#allocation4 + $0xc1] sm:$0xff]
        %v6848 = vld [vmem:[#allocation4 + $0xc9] sm:$0xff]
        %v6849 = vld [vmem:[#allocation4 + $0xd1] sm:$0x7]
        %v6850 = vpack.c.bf16 %v6826, %v6825
        %v6851 = vpack.c.bf16 %v6828, %v6827
        %v6852 = vpack.c.bf16 %v6830, %v6829
        %v6853 = vpack.c.bf16 %v6832, %v6831
        %v6854 = vpack.c.bf16 %v6834, %v6833
        %v6855 = vpack.c.bf16 %v6836, %v6835
        %v6856 = vpack.c.bf16 %v6838, %v6837
        %v6857 = vpack.c.bf16 %v6840, %v6839
        %v6858 = vpack.c.bf16 %v6842, %v6841
        %v6859 = vpack.c.bf16 %v6844, %v6843
        %v6860 = vpack.c.bf16 %v6846, %v6845
        %v6861 = vpack.c.bf16 %v6848, %v6847
        %v6862 = vpack.c.bf16 %v6849, %v6849
        %v6876 = vunpack.c.l.b16 %v6850
        %v6877 = vunpack.c.h.b16 %v6850
        %v6878 = vunpack.c.l.b16 %v6851
        %v6879 = vunpack.c.h.b16 %v6851
        %v6880 = vunpack.c.l.b16 %v6852
        %v6881 = vunpack.c.h.b16 %v6852
        %v6882 = vunpack.c.l.b16 %v6853
        %v6883 = vunpack.c.h.b16 %v6853
        %v6884 = vunpack.c.l.b16 %v6854
        %v6885 = vunpack.c.h.b16 %v6854
        %v6886 = vunpack.c.l.b16 %v6855
        %v6887 = vunpack.c.h.b16 %v6855
        %v6888 = vunpack.c.l.b16 %v6856
        %v6889 = vunpack.c.h.b16 %v6856
        %v6890 = vunpack.c.l.b16 %v6857
        %v6891 = vunpack.c.h.b16 %v6857
        %v6892 = vunpack.c.l.b16 %v6858
        %v6893 = vunpack.c.h.b16 %v6858
        %v6894 = vunpack.c.l.b16 %v6859
        %v6895 = vunpack.c.h.b16 %v6859
        %v6896 = vunpack.c.l.b16 %v6860
        %v6897 = vunpack.c.h.b16 %v6860
        %v6898 = vunpack.c.l.b16 %v6861
        %v6899 = vunpack.c.h.b16 %v6861
        %v6900 = vunpack.c.l.b16 %v6862
        %v6901 = vpack.c.b16 %v6876, %v6876
        %v6902 = vpack.c.b16 %v6877, %v6877
        %v6903 = vpack.c.b16 %v6878, %v6878
        %v6904 = vpack.c.b16 %v6879, %v6879
        %v6905 = vpack.c.b16 %v6880, %v6880
        %v6906 = vpack.c.b16 %v6881, %v6881
        %v6907 = vpack.c.b16 %v6882, %v6882
        %v6908 = vpack.c.b16 %v6883, %v6883
        %v6909 = vpack.c.b16 %v6884, %v6884
        %v6910 = vpack.c.b16 %v6885, %v6885
        %v6911 = vpack.c.b16 %v6886, %v6886
        %v6912 = vpack.c.b16 %v6887, %v6887
        %v6913 = vpack.c.b16 %v6888, %v6888
        %v6914 = vpack.c.b16 %v6889, %v6889
        %v6915 = vpack.c.b16 %v6890, %v6890
        %v6916 = vpack.c.b16 %v6891, %v6891
        %v6917 = vpack.c.b16 %v6892, %v6892
        %v6918 = vpack.c.b16 %v6893, %v6893
        %v6919 = vpack.c.b16 %v6894, %v6894
        %v6920 = vpack.c.b16 %v6895, %v6895
        %v6921 = vpack.c.b16 %v6896, %v6896
        %v6922 = vpack.c.b16 %v6897, %v6897
        %v6923 = vpack.c.b16 %v6898, %v6898
        %v6924 = vpack.c.b16 %v6899, %v6899
        %v6925 = vpack.c.b16 %v6900, %v6900
        %6926 = vrot.lane.b32.xlu0 %v6901, 32
        %v6927 = vpop.permute.xlu0 %6926
        %6928 = vrot.lane.b32.xlu0 %v6902, 32
        %v6929 = vpop.permute.xlu0 %6928
        %6930 = vrot.lane.b32.xlu0 %v6903, 32
        %v6931 = vpop.permute.xlu0 %6930
        %6932 = vrot.lane.b32.xlu0 %v6904, 32
        %v6933 = vpop.permute.xlu0 %6932
        %6934 = vrot.lane.b32.xlu0 %v6905, 32
        %v6935 = vpop.permute.xlu0 %6934
        %6936 = vrot.lane.b32.xlu0 %v6906, 32
        %v6937 = vpop.permute.xlu0 %6936
        %6938 = vrot.lane.b32.xlu0 %v6907, 32
        %v6939 = vpop.permute.xlu0 %6938
        %6940 = vrot.lane.b32.xlu0 %v6908, 32
        %v6941 = vpop.permute.xlu0 %6940
        %6942 = vrot.lane.b32.xlu0 %v6909, 32
        %v6943 = vpop.permute.xlu0 %6942
        %6944 = vrot.lane.b32.xlu0 %v6910, 32
        %v6945 = vpop.permute.xlu0 %6944
        %6946 = vrot.lane.b32.xlu0 %v6911, 32
        %v6947 = vpop.permute.xlu0 %6946
        %6948 = vrot.lane.b32.xlu0 %v6912, 32
        %v6949 = vpop.permute.xlu0 %6948
        %6950 = vrot.lane.b32.xlu0 %v6913, 32
        %v6951 = vpop.permute.xlu0 %6950
        %6952 = vrot.lane.b32.xlu0 %v6914, 32
        %v6953 = vpop.permute.xlu0 %6952
        %6954 = vrot.lane.b32.xlu0 %v6915, 32
        %v6955 = vpop.permute.xlu0 %6954
        %6956 = vrot.lane.b32.xlu0 %v6916, 32
        %v6957 = vpop.permute.xlu0 %6956
        %6958 = vrot.lane.b32.xlu0 %v6917, 32
        %v6959 = vpop.permute.xlu0 %6958
        %6960 = vrot.lane.b32.xlu0 %v6918, 32
        %v6961 = vpop.permute.xlu0 %6960
        %6962 = vrot.lane.b32.xlu0 %v6919, 32
        %v6963 = vpop.permute.xlu0 %6962
        %6964 = vrot.lane.b32.xlu0 %v6920, 32
        %v6965 = vpop.permute.xlu0 %6964
        %6966 = vrot.lane.b32.xlu0 %v6921, 32
        %v6967 = vpop.permute.xlu0 %6966
        %6968 = vrot.lane.b32.xlu0 %v6922, 32
        %v6969 = vpop.permute.xlu0 %6968
        %6970 = vrot.lane.b32.xlu0 %v6923, 32
        %v6971 = vpop.permute.xlu0 %6970
        %6972 = vrot.lane.b32.xlu0 %v6924, 32
        %v6973 = vpop.permute.xlu0 %6972
        %6974 = vrot.lane.b32.xlu0 %v6925, 32
        %v6975 = vpop.permute.xlu0 %6974
        %7001 = vst.msk [vmem:[#allocation5 + $0x4] sm:$0xf] %vm6230, %v6927
        %7002 = vst.msk [vmem:[#allocation5 + $0x10] sm:$0xf] %vm6230, %v6929
        %7003 = vst.msk [vmem:[#allocation5 + $0x1c] sm:$0xf] %vm6230, %v6931
        %7004 = vst.msk [vmem:[#allocation5 + $0x28] sm:$0xf] %vm6230, %v6933
        %7005 = vst.msk [vmem:[#allocation5 + $0x34] sm:$0xf] %vm6230, %v6935
        %7006 = vst.msk [vmem:[#allocation5 + $0x40] sm:$0xf] %vm6230, %v6937
        %7007 = vst.msk [vmem:[#allocation5 + $0x4c] sm:$0xf] %vm6230, %v6939
        %7008 = vst.msk [vmem:[#allocation5 + $0x58] sm:$0xf] %vm6230, %v6941
        %7009 = vst.msk [vmem:[#allocation5 + $0x64] sm:$0xf] %vm6230, %v6943
        %7010 = vst.msk [vmem:[#allocation5 + $0x70] sm:$0xf] %vm6230, %v6945
        %7011 = vst.msk [vmem:[#allocation5 + $0x7c] sm:$0xf] %vm6230, %v6947
        %7012 = vst.msk [vmem:[#allocation5 + $0x88] sm:$0xf] %vm6230, %v6949
        %7013 = vst.msk [vmem:[#allocation5 + $0x94] sm:$0xf] %vm6230, %v6951
        %7014 = vst.msk [vmem:[#allocation5 + $0xa0] sm:$0xf] %vm6230, %v6953
        %7015 = vst.msk [vmem:[#allocation5 + $0xac] sm:$0xf] %vm6230, %v6955
        %7016 = vst.msk [vmem:[#allocation5 + $0xb8] sm:$0xf] %vm6230, %v6957
        %7017 = vst.msk [vmem:[#allocation5 + $0xc4] sm:$0xf] %vm6230, %v6959
        %7018 = vst.msk [vmem:[#allocation5 + $0xd0] sm:$0xf] %vm6230, %v6961
        %7019 = vst.msk [vmem:[#allocation5 + $0xdc] sm:$0xf] %vm6230, %v6963
        %7020 = vst.msk [vmem:[#allocation5 + $0xe8] sm:$0xf] %vm6230, %v6965
        %7021 = vst.msk [vmem:[#allocation5 + $0xf4] sm:$0xf] %vm6230, %v6967
        %7022 = vst.msk [vmem:[#allocation5 + $0x100] sm:$0xf] %vm6230, %v6969
        %7023 = vst.msk [vmem:[#allocation5 + $0x10c] sm:$0xf] %vm6230, %v6971
        %7024 = vst.msk [vmem:[#allocation5 + $0x118] sm:$0xf] %vm6230, %v6973
        %v7025 = vld [vmem:[#allocation5 + $0x124] sm:$0x3]
        %v7026 = vsel %vm6256, %v6975, %v7025
        %7027 = vst [vmem:[#allocation5 + $0x124] sm:$0x3] %v7026
        %v7028 = vld [vmem:[#allocation4 + $0x1e] sm:$0xff]
        %v7029 = vld [vmem:[#allocation4 + $0x26] sm:$0xff]
        %v7030 = vld [vmem:[#allocation4 + $0x2e] sm:$0xff]
        %v7031 = vld [vmem:[#allocation4 + $0x36] sm:$0xff]
        %v7032 = vld [vmem:[#allocation4 + $0x3e] sm:$0xff]
        %v7033 = vld [vmem:[#allocation4 + $0x46] sm:$0xff]
        %v7034 = vld [vmem:[#allocation4 + $0x4e] sm:$0xff]
        %v7035 = vld [vmem:[#allocation4 + $0x56] sm:$0xff]
        %v7036 = vld [vmem:[#allocation4 + $0x5e] sm:$0xff]
        %v7037 = vld [vmem:[#allocation4 + $0x66] sm:$0xff]
        %v7038 = vld [vmem:[#allocation4 + $0x6e] sm:$0xff]
        %v7039 = vld [vmem:[#allocation4 + $0x76] sm:$0xff]
        %v7040 = vld [vmem:[#allocation4 + $0x7e] sm:$0xff]
        %v7041 = vld [vmem:[#allocation4 + $0x86] sm:$0xff]
        %v7042 = vld [vmem:[#allocation4 + $0x8e] sm:$0xff]
        %v7043 = vld [vmem:[#allocation4 + $0x96] sm:$0xff]
        %v7044 = vld [vmem:[#allocation4 + $0x9e] sm:$0xff]
        %v7045 = vld [vmem:[#allocation4 + $0xa6] sm:$0xff]
        %v7046 = vld [vmem:[#allocation4 + $0xae] sm:$0xff]
        %v7047 = vld [vmem:[#allocation4 + $0xb6] sm:$0xff]
        %v7048 = vld [vmem:[#allocation4 + $0xbe] sm:$0xff]
        %v7049 = vld [vmem:[#allocation4 + $0xc6] sm:$0xff]
        %v7050 = vld [vmem:[#allocation4 + $0xce] sm:$0xff]
        %v7051 = vld [vmem:[#allocation4 + $0xd6] sm:$0xff]
        %v7052 = vld [vmem:[#allocation4 + $0xde] sm:$0x7]
        %v7053 = vpack.c.bf16 %v7029, %v7028
        %v7054 = vpack.c.bf16 %v7031, %v7030
        %v7055 = vpack.c.bf16 %v7033, %v7032
        %v7056 = vpack.c.bf16 %v7035, %v7034
        %v7057 = vpack.c.bf16 %v7037, %v7036
        %v7058 = vpack.c.bf16 %v7039, %v7038
        %v7059 = vpack.c.bf16 %v7041, %v7040
        %v7060 = vpack.c.bf16 %v7043, %v7042
        %v7061 = vpack.c.bf16 %v7045, %v7044
        %v7062 = vpack.c.bf16 %v7047, %v7046
        %v7063 = vpack.c.bf16 %v7049, %v7048
        %v7064 = vpack.c.bf16 %v7051, %v7050
        %v7065 = vpack.c.bf16 %v7052, %v7052
        %v7079 = vunpack.c.l.b16 %v7053
        %v7080 = vunpack.c.h.b16 %v7053
        %v7081 = vunpack.c.l.b16 %v7054
        %v7082 = vunpack.c.h.b16 %v7054
        %v7083 = vunpack.c.l.b16 %v7055
        %v7084 = vunpack.c.h.b16 %v7055
        %v7085 = vunpack.c.l.b16 %v7056
        %v7086 = vunpack.c.h.b16 %v7056
        %v7087 = vunpack.c.l.b16 %v7057
        %v7088 = vunpack.c.h.b16 %v7057
        %v7089 = vunpack.c.l.b16 %v7058
        %v7090 = vunpack.c.h.b16 %v7058
        %v7091 = vunpack.c.l.b16 %v7059
        %v7092 = vunpack.c.h.b16 %v7059
        %v7093 = vunpack.c.l.b16 %v7060
        %v7094 = vunpack.c.h.b16 %v7060
        %v7095 = vunpack.c.l.b16 %v7061
        %v7096 = vunpack.c.h.b16 %v7061
        %v7097 = vunpack.c.l.b16 %v7062
        %v7098 = vunpack.c.h.b16 %v7062
        %v7099 = vunpack.c.l.b16 %v7063
        %v7100 = vunpack.c.h.b16 %v7063
        %v7101 = vunpack.c.l.b16 %v7064
        %v7102 = vunpack.c.h.b16 %v7064
        %v7103 = vunpack.c.l.b16 %v7065
        %v7104 = vpack.c.b16 %v7079, %v7079
        %v7105 = vpack.c.b16 %v7080, %v7080
        %v7106 = vpack.c.b16 %v7081, %v7081
        %v7107 = vpack.c.b16 %v7082, %v7082
        %v7108 = vpack.c.b16 %v7083, %v7083
        %v7109 = vpack.c.b16 %v7084, %v7084
        %v7110 = vpack.c.b16 %v7085, %v7085
        %v7111 = vpack.c.b16 %v7086, %v7086
        %v7112 = vpack.c.b16 %v7087, %v7087
        %v7113 = vpack.c.b16 %v7088, %v7088
        %v7114 = vpack.c.b16 %v7089, %v7089
        %v7115 = vpack.c.b16 %v7090, %v7090
        %v7116 = vpack.c.b16 %v7091, %v7091
        %v7117 = vpack.c.b16 %v7092, %v7092
        %v7118 = vpack.c.b16 %v7093, %v7093
        %v7119 = vpack.c.b16 %v7094, %v7094
        %v7120 = vpack.c.b16 %v7095, %v7095
        %v7121 = vpack.c.b16 %v7096, %v7096
        %v7122 = vpack.c.b16 %v7097, %v7097
        %v7123 = vpack.c.b16 %v7098, %v7098
        %v7124 = vpack.c.b16 %v7099, %v7099
        %v7125 = vpack.c.b16 %v7100, %v7100
        %v7126 = vpack.c.b16 %v7101, %v7101
        %v7127 = vpack.c.b16 %v7102, %v7102
        %v7128 = vpack.c.b16 %v7103, %v7103
        %7129 = vrot.lane.b32.xlu0 %v7104, 64
        %v7130 = vpop.permute.xlu0 %7129
        %7131 = vrot.lane.b32.xlu0 %v7105, 64
        %v7132 = vpop.permute.xlu0 %7131
        %7133 = vrot.lane.b32.xlu0 %v7106, 64
        %v7134 = vpop.permute.xlu0 %7133
        %7135 = vrot.lane.b32.xlu0 %v7107, 64
        %v7136 = vpop.permute.xlu0 %7135
        %7137 = vrot.lane.b32.xlu0 %v7108, 64
        %v7138 = vpop.permute.xlu0 %7137
        %7139 = vrot.lane.b32.xlu0 %v7109, 64
        %v7140 = vpop.permute.xlu0 %7139
        %7141 = vrot.lane.b32.xlu0 %v7110, 64
        %v7142 = vpop.permute.xlu0 %7141
        %7143 = vrot.lane.b32.xlu0 %v7111, 64
        %v7144 = vpop.permute.xlu0 %7143
        %7145 = vrot.lane.b32.xlu0 %v7112, 64
        %v7146 = vpop.permute.xlu0 %7145
        %7147 = vrot.lane.b32.xlu0 %v7113, 64
        %v7148 = vpop.permute.xlu0 %7147
        %7149 = vrot.lane.b32.xlu0 %v7114, 64
        %v7150 = vpop.permute.xlu0 %7149
        %7151 = vrot.lane.b32.xlu0 %v7115, 64
        %v7152 = vpop.permute.xlu0 %7151
        %7153 = vrot.lane.b32.xlu0 %v7116, 64
        %v7154 = vpop.permute.xlu0 %7153
        %7155 = vrot.lane.b32.xlu0 %v7117, 64
        %v7156 = vpop.permute.xlu0 %7155
        %7157 = vrot.lane.b32.xlu0 %v7118, 64
        %v7158 = vpop.permute.xlu0 %7157
        %7159 = vrot.lane.b32.xlu0 %v7119, 64
        %v7160 = vpop.permute.xlu0 %7159
        %7161 = vrot.lane.b32.xlu0 %v7120, 64
        %v7162 = vpop.permute.xlu0 %7161
        %7163 = vrot.lane.b32.xlu0 %v7121, 64
        %v7164 = vpop.permute.xlu0 %7163
        %7165 = vrot.lane.b32.xlu0 %v7122, 64
        %v7166 = vpop.permute.xlu0 %7165
        %7167 = vrot.lane.b32.xlu0 %v7123, 64
        %v7168 = vpop.permute.xlu0 %7167
        %7169 = vrot.lane.b32.xlu0 %v7124, 64
        %v7170 = vpop.permute.xlu0 %7169
        %7171 = vrot.lane.b32.xlu0 %v7125, 64
        %v7172 = vpop.permute.xlu0 %7171
        %7173 = vrot.lane.b32.xlu0 %v7126, 64
        %v7174 = vpop.permute.xlu0 %7173
        %7175 = vrot.lane.b32.xlu0 %v7127, 64
        %v7176 = vpop.permute.xlu0 %7175
        %7177 = vrot.lane.b32.xlu0 %v7128, 64
        %v7178 = vpop.permute.xlu0 %7177
        %7204 = vst.msk [vmem:[#allocation5 + $0x4] sm:$0xf] %vm6436, %v7130
        %7205 = vst.msk [vmem:[#allocation5 + $0x10] sm:$0xf] %vm6436, %v7132
        %7206 = vst.msk [vmem:[#allocation5 + $0x1c] sm:$0xf] %vm6436, %v7134
        %7207 = vst.msk [vmem:[#allocation5 + $0x28] sm:$0xf] %vm6436, %v7136
        %7208 = vst.msk [vmem:[#allocation5 + $0x34] sm:$0xf] %vm6436, %v7138
        %7209 = vst.msk [vmem:[#allocation5 + $0x40] sm:$0xf] %vm6436, %v7140
        %7210 = vst.msk [vmem:[#allocation5 + $0x4c] sm:$0xf] %vm6436, %v7142
        %7211 = vst.msk [vmem:[#allocation5 + $0x58] sm:$0xf] %vm6436, %v7144
        %7212 = vst.msk [vmem:[#allocation5 + $0x64] sm:$0xf] %vm6436, %v7146
        %7213 = vst.msk [vmem:[#allocation5 + $0x70] sm:$0xf] %vm6436, %v7148
        %7214 = vst.msk [vmem:[#allocation5 + $0x7c] sm:$0xf] %vm6436, %v7150
        %7215 = vst.msk [vmem:[#allocation5 + $0x88] sm:$0xf] %vm6436, %v7152
        %7216 = vst.msk [vmem:[#allocation5 + $0x94] sm:$0xf] %vm6436, %v7154
        %7217 = vst.msk [vmem:[#allocation5 + $0xa0] sm:$0xf] %vm6436, %v7156
        %7218 = vst.msk [vmem:[#allocation5 + $0xac] sm:$0xf] %vm6436, %v7158
        %7219 = vst.msk [vmem:[#allocation5 + $0xb8] sm:$0xf] %vm6436, %v7160
        %7220 = vst.msk [vmem:[#allocation5 + $0xc4] sm:$0xf] %vm6436, %v7162
        %7221 = vst.msk [vmem:[#allocation5 + $0xd0] sm:$0xf] %vm6436, %v7164
        %7222 = vst.msk [vmem:[#allocation5 + $0xdc] sm:$0xf] %vm6436, %v7166
        %7223 = vst.msk [vmem:[#allocation5 + $0xe8] sm:$0xf] %vm6436, %v7168
        %7224 = vst.msk [vmem:[#allocation5 + $0xf4] sm:$0xf] %vm6436, %v7170
        %7225 = vst.msk [vmem:[#allocation5 + $0x100] sm:$0xf] %vm6436, %v7172
        %7226 = vst.msk [vmem:[#allocation5 + $0x10c] sm:$0xf] %vm6436, %v7174
        %7227 = vst.msk [vmem:[#allocation5 + $0x118] sm:$0xf] %vm6436, %v7176
        %v7228 = vld [vmem:[#allocation5 + $0x124] sm:$0x3]
        %v7229 = vsel %vm6462, %v7178, %v7228
        %7230 = vst [vmem:[#allocation5 + $0x124] sm:$0x3] %v7229
        %v7231 = vld [vmem:[#allocation4 + $0x1f] sm:$0xff]
        %v7232 = vld [vmem:[#allocation4 + $0x27] sm:$0xff]
        %v7233 = vld [vmem:[#allocation4 + $0x2f] sm:$0xff]
        %v7234 = vld [vmem:[#allocation4 + $0x37] sm:$0xff]
        %v7235 = vld [vmem:[#allocation4 + $0x3f] sm:$0xff]
        %v7236 = vld [vmem:[#allocation4 + $0x47] sm:$0xff]
        %v7237 = vld [vmem:[#allocation4 + $0x4f] sm:$0xff]
        %v7238 = vld [vmem:[#allocation4 + $0x57] sm:$0xff]
        %v7239 = vld [vmem:[#allocation4 + $0x5f] sm:$0xff]
        %v7240 = vld [vmem:[#allocation4 + $0x67] sm:$0xff]
        %v7241 = vld [vmem:[#allocation4 + $0x6f] sm:$0xff]
        %v7242 = vld [vmem:[#allocation4 + $0x77] sm:$0xff]
        %v7243 = vld [vmem:[#allocation4 + $0x7f] sm:$0xff]
        %v7244 = vld [vmem:[#allocation4 + $0x87] sm:$0xff]
        %v7245 = vld [vmem:[#allocation4 + $0x8f] sm:$0xff]
        %v7246 = vld [vmem:[#allocation4 + $0x97] sm:$0xff]
        %v7247 = vld [vmem:[#allocation4 + $0x9f] sm:$0xff]
        %v7248 = vld [vmem:[#allocation4 + $0xa7] sm:$0xff]
        %v7249 = vld [vmem:[#allocation4 + $0xaf] sm:$0xff]
        %v7250 = vld [vmem:[#allocation4 + $0xb7] sm:$0xff]
        %v7251 = vld [vmem:[#allocation4 + $0xbf] sm:$0xff]
        %v7252 = vld [vmem:[#allocation4 + $0xc7] sm:$0xff]
        %v7253 = vld [vmem:[#allocation4 + $0xcf] sm:$0xff]
        %v7254 = vld [vmem:[#allocation4 + $0xd7] sm:$0xff]
        %v7255 = vld [vmem:[#allocation4 + $0xdf] sm:$0x7]
        %v7256 = vpack.c.bf16 %v7232, %v7231
        %v7257 = vpack.c.bf16 %v7234, %v7233
        %v7258 = vpack.c.bf16 %v7236, %v7235
        %v7259 = vpack.c.bf16 %v7238, %v7237
        %v7260 = vpack.c.bf16 %v7240, %v7239
        %v7261 = vpack.c.bf16 %v7242, %v7241
        %v7262 = vpack.c.bf16 %v7244, %v7243
        %v7263 = vpack.c.bf16 %v7246, %v7245
        %v7264 = vpack.c.bf16 %v7248, %v7247
        %v7265 = vpack.c.bf16 %v7250, %v7249
        %v7266 = vpack.c.bf16 %v7252, %v7251
        %v7267 = vpack.c.bf16 %v7254, %v7253
        %v7268 = vpack.c.bf16 %v7255, %v7255
        %v7282 = vunpack.c.l.b16 %v7256
        %v7283 = vunpack.c.h.b16 %v7256
        %v7284 = vunpack.c.l.b16 %v7257
        %v7285 = vunpack.c.h.b16 %v7257
        %v7286 = vunpack.c.l.b16 %v7258
        %v7287 = vunpack.c.h.b16 %v7258
        %v7288 = vunpack.c.l.b16 %v7259
        %v7289 = vunpack.c.h.b16 %v7259
        %v7290 = vunpack.c.l.b16 %v7260
        %v7291 = vunpack.c.h.b16 %v7260
        %v7292 = vunpack.c.l.b16 %v7261
        %v7293 = vunpack.c.h.b16 %v7261
        %v7294 = vunpack.c.l.b16 %v7262
        %v7295 = vunpack.c.h.b16 %v7262
        %v7296 = vunpack.c.l.b16 %v7263
        %v7297 = vunpack.c.h.b16 %v7263
        %v7298 = vunpack.c.l.b16 %v7264
        %v7299 = vunpack.c.h.b16 %v7264
        %v7300 = vunpack.c.l.b16 %v7265
        %v7301 = vunpack.c.h.b16 %v7265
        %v7302 = vunpack.c.l.b16 %v7266
        %v7303 = vunpack.c.h.b16 %v7266
        %v7304 = vunpack.c.l.b16 %v7267
        %v7305 = vunpack.c.h.b16 %v7267
        %v7306 = vunpack.c.l.b16 %v7268
        %v7307 = vpack.c.b16 %v7282, %v7282
        %v7308 = vpack.c.b16 %v7283, %v7283
        %v7309 = vpack.c.b16 %v7284, %v7284
        %v7310 = vpack.c.b16 %v7285, %v7285
        %v7311 = vpack.c.b16 %v7286, %v7286
        %v7312 = vpack.c.b16 %v7287, %v7287
        %v7313 = vpack.c.b16 %v7288, %v7288
        %v7314 = vpack.c.b16 %v7289, %v7289
        %v7315 = vpack.c.b16 %v7290, %v7290
        %v7316 = vpack.c.b16 %v7291, %v7291
        %v7317 = vpack.c.b16 %v7292, %v7292
        %v7318 = vpack.c.b16 %v7293, %v7293
        %v7319 = vpack.c.b16 %v7294, %v7294
        %v7320 = vpack.c.b16 %v7295, %v7295
        %v7321 = vpack.c.b16 %v7296, %v7296
        %v7322 = vpack.c.b16 %v7297, %v7297
        %v7323 = vpack.c.b16 %v7298, %v7298
        %v7324 = vpack.c.b16 %v7299, %v7299
        %v7325 = vpack.c.b16 %v7300, %v7300
        %v7326 = vpack.c.b16 %v7301, %v7301
        %v7327 = vpack.c.b16 %v7302, %v7302
        %v7328 = vpack.c.b16 %v7303, %v7303
        %v7329 = vpack.c.b16 %v7304, %v7304
        %v7330 = vpack.c.b16 %v7305, %v7305
        %v7331 = vpack.c.b16 %v7306, %v7306
        %7332 = vrot.lane.b32.xlu0 %v7307, 96
        %v7333 = vpop.permute.xlu0 %7332
        %7334 = vrot.lane.b32.xlu0 %v7308, 96
        %v7335 = vpop.permute.xlu0 %7334
        %7336 = vrot.lane.b32.xlu0 %v7309, 96
        %v7337 = vpop.permute.xlu0 %7336
        %7338 = vrot.lane.b32.xlu0 %v7310, 96
        %v7339 = vpop.permute.xlu0 %7338
        %7340 = vrot.lane.b32.xlu0 %v7311, 96
        %v7341 = vpop.permute.xlu0 %7340
        %7342 = vrot.lane.b32.xlu0 %v7312, 96
        %v7343 = vpop.permute.xlu0 %7342
        %7344 = vrot.lane.b32.xlu0 %v7313, 96
        %v7345 = vpop.permute.xlu0 %7344
        %7346 = vrot.lane.b32.xlu0 %v7314, 96
        %v7347 = vpop.permute.xlu0 %7346
        %7348 = vrot.lane.b32.xlu0 %v7315, 96
        %v7349 = vpop.permute.xlu0 %7348
        %7350 = vrot.lane.b32.xlu0 %v7316, 96
        %v7351 = vpop.permute.xlu0 %7350
        %7352 = vrot.lane.b32.xlu0 %v7317, 96
        %v7353 = vpop.permute.xlu0 %7352
        %7354 = vrot.lane.b32.xlu0 %v7318, 96
        %v7355 = vpop.permute.xlu0 %7354
        %7356 = vrot.lane.b32.xlu0 %v7319, 96
        %v7357 = vpop.permute.xlu0 %7356
        %7358 = vrot.lane.b32.xlu0 %v7320, 96
        %v7359 = vpop.permute.xlu0 %7358
        %7360 = vrot.lane.b32.xlu0 %v7321, 96
        %v7361 = vpop.permute.xlu0 %7360
        %7362 = vrot.lane.b32.xlu0 %v7322, 96
        %v7363 = vpop.permute.xlu0 %7362
        %7364 = vrot.lane.b32.xlu0 %v7323, 96
        %v7365 = vpop.permute.xlu0 %7364
        %7366 = vrot.lane.b32.xlu0 %v7324, 96
        %v7367 = vpop.permute.xlu0 %7366
        %7368 = vrot.lane.b32.xlu0 %v7325, 96
        %v7369 = vpop.permute.xlu0 %7368
        %7370 = vrot.lane.b32.xlu0 %v7326, 96
        %v7371 = vpop.permute.xlu0 %7370
        %7372 = vrot.lane.b32.xlu0 %v7327, 96
        %v7373 = vpop.permute.xlu0 %7372
        %7374 = vrot.lane.b32.xlu0 %v7328, 96
        %v7375 = vpop.permute.xlu0 %7374
        %7376 = vrot.lane.b32.xlu0 %v7329, 96
        %v7377 = vpop.permute.xlu0 %7376
        %7378 = vrot.lane.b32.xlu0 %v7330, 96
        %v7379 = vpop.permute.xlu0 %7378
        %7380 = vrot.lane.b32.xlu0 %v7331, 96
        %v7381 = vpop.permute.xlu0 %7380
        %7407 = vst.msk [vmem:[#allocation5 + $0x4] sm:$0xf] %vm6642, %v7333
        %7408 = vst.msk [vmem:[#allocation5 + $0x10] sm:$0xf] %vm6642, %v7335
        %7409 = vst.msk [vmem:[#allocation5 + $0x1c] sm:$0xf] %vm6642, %v7337
        %7410 = vst.msk [vmem:[#allocation5 + $0x28] sm:$0xf] %vm6642, %v7339
        %7411 = vst.msk [vmem:[#allocation5 + $0x34] sm:$0xf] %vm6642, %v7341
        %7412 = vst.msk [vmem:[#allocation5 + $0x40] sm:$0xf] %vm6642, %v7343
        %7413 = vst.msk [vmem:[#allocation5 + $0x4c] sm:$0xf] %vm6642, %v7345
        %7414 = vst.msk [vmem:[#allocation5 + $0x58] sm:$0xf] %vm6642, %v7347
        %7415 = vst.msk [vmem:[#allocation5 + $0x64] sm:$0xf] %vm6642, %v7349
        %7416 = vst.msk [vmem:[#allocation5 + $0x70] sm:$0xf] %vm6642, %v7351
        %7417 = vst.msk [vmem:[#allocation5 + $0x7c] sm:$0xf] %vm6642, %v7353
        %7418 = vst.msk [vmem:[#allocation5 + $0x88] sm:$0xf] %vm6642, %v7355
        %7419 = vst.msk [vmem:[#allocation5 + $0x94] sm:$0xf] %vm6642, %v7357
        %7420 = vst.msk [vmem:[#allocation5 + $0xa0] sm:$0xf] %vm6642, %v7359
        %7421 = vst.msk [vmem:[#allocation5 + $0xac] sm:$0xf] %vm6642, %v7361
        %7422 = vst.msk [vmem:[#allocation5 + $0xb8] sm:$0xf] %vm6642, %v7363
        %7423 = vst.msk [vmem:[#allocation5 + $0xc4] sm:$0xf] %vm6642, %v7365
        %7424 = vst.msk [vmem:[#allocation5 + $0xd0] sm:$0xf] %vm6642, %v7367
        %7425 = vst.msk [vmem:[#allocation5 + $0xdc] sm:$0xf] %vm6642, %v7369
        %7426 = vst.msk [vmem:[#allocation5 + $0xe8] sm:$0xf] %vm6642, %v7371
        %7427 = vst.msk [vmem:[#allocation5 + $0xf4] sm:$0xf] %vm6642, %v7373
        %7428 = vst.msk [vmem:[#allocation5 + $0x100] sm:$0xf] %vm6642, %v7375
        %7429 = vst.msk [vmem:[#allocation5 + $0x10c] sm:$0xf] %vm6642, %v7377
        %7430 = vst.msk [vmem:[#allocation5 + $0x118] sm:$0xf] %vm6642, %v7379
        %v7431 = vld [vmem:[#allocation5 + $0x124] sm:$0x3]
        %v7432 = vsel %vm6668, %v7381, %v7431
        %7433 = vst [vmem:[#allocation5 + $0x124] sm:$0x3] %v7432
        %v7434 = vld [vmem:[#allocation4 + $0x20] sm:$0xff]
        %v7435 = vld [vmem:[#allocation4 + $0x28] sm:$0xff]
        %v7436 = vld [vmem:[#allocation4 + $0x30] sm:$0xff]
        %v7437 = vld [vmem:[#allocation4 + $0x38] sm:$0xff]
        %v7438 = vld [vmem:[#allocation4 + $0x40] sm:$0xff]
        %v7439 = vld [vmem:[#allocation4 + $0x48] sm:$0xff]
        %v7440 = vld [vmem:[#allocation4 + $0x50] sm:$0xff]
        %v7441 = vld [vmem:[#allocation4 + $0x58] sm:$0xff]
        %v7442 = vld [vmem:[#allocation4 + $0x60] sm:$0xff]
        %v7443 = vld [vmem:[#allocation4 + $0x68] sm:$0xff]
        %v7444 = vld [vmem:[#allocation4 + $0x70] sm:$0xff]
        %v7445 = vld [vmem:[#allocation4 + $0x78] sm:$0xff]
        %v7446 = vld [vmem:[#allocation4 + $0x80] sm:$0xff]
        %v7447 = vld [vmem:[#allocation4 + $0x88] sm:$0xff]
        %v7448 = vld [vmem:[#allocation4 + $0x90] sm:$0xff]
        %v7449 = vld [vmem:[#allocation4 + $0x98] sm:$0xff]
        %v7450 = vld [vmem:[#allocation4 + $0xa0] sm:$0xff]
        %v7451 = vld [vmem:[#allocation4 + $0xa8] sm:$0xff]
        %v7452 = vld [vmem:[#allocation4 + $0xb0] sm:$0xff]
        %v7453 = vld [vmem:[#allocation4 + $0xb8] sm:$0xff]
        %v7454 = vld [vmem:[#allocation4 + $0xc0] sm:$0xff]
        %v7455 = vld [vmem:[#allocation4 + $0xc8] sm:$0xff]
        %v7456 = vld [vmem:[#allocation4 + $0xd0] sm:$0xff]
        %v7457 = vld [vmem:[#allocation4 + $0xd8] sm:$0xff]
        %v7458 = vld [vmem:[#allocation4 + $0xe0] sm:$0x7]
        %v7459 = vpack.c.bf16 %v7435, %v7434
        %v7460 = vpack.c.bf16 %v7437, %v7436
        %v7461 = vpack.c.bf16 %v7439, %v7438
        %v7462 = vpack.c.bf16 %v7441, %v7440
        %v7463 = vpack.c.bf16 %v7443, %v7442
        %v7464 = vpack.c.bf16 %v7445, %v7444
        %v7465 = vpack.c.bf16 %v7447, %v7446
        %v7466 = vpack.c.bf16 %v7449, %v7448
        %v7467 = vpack.c.bf16 %v7451, %v7450
        %v7468 = vpack.c.bf16 %v7453, %v7452
        %v7469 = vpack.c.bf16 %v7455, %v7454
        %v7470 = vpack.c.bf16 %v7457, %v7456
        %v7471 = vpack.c.bf16 %v7458, %v7458
        %v7485 = vunpack.c.l.b16 %v7459
        %v7486 = vunpack.c.h.b16 %v7459
        %v7487 = vunpack.c.l.b16 %v7460
        %v7488 = vunpack.c.h.b16 %v7460
        %v7489 = vunpack.c.l.b16 %v7461
        %v7490 = vunpack.c.h.b16 %v7461
        %v7491 = vunpack.c.l.b16 %v7462
        %v7492 = vunpack.c.h.b16 %v7462
        %v7493 = vunpack.c.l.b16 %v7463
        %v7494 = vunpack.c.h.b16 %v7463
        %v7495 = vunpack.c.l.b16 %v7464
        %v7496 = vunpack.c.h.b16 %v7464
        %v7497 = vunpack.c.l.b16 %v7465
        %v7498 = vunpack.c.h.b16 %v7465
        %v7499 = vunpack.c.l.b16 %v7466
        %v7500 = vunpack.c.h.b16 %v7466
        %v7501 = vunpack.c.l.b16 %v7467
        %v7502 = vunpack.c.h.b16 %v7467
        %v7503 = vunpack.c.l.b16 %v7468
        %v7504 = vunpack.c.h.b16 %v7468
        %v7505 = vunpack.c.l.b16 %v7469
        %v7506 = vunpack.c.h.b16 %v7469
        %v7507 = vunpack.c.l.b16 %v7470
        %v7508 = vunpack.c.h.b16 %v7470
        %v7509 = vunpack.c.l.b16 %v7471
        %v7510 = vpack.c.b16 %v7485, %v7485
        %v7511 = vpack.c.b16 %v7486, %v7486
        %v7512 = vpack.c.b16 %v7487, %v7487
        %v7513 = vpack.c.b16 %v7488, %v7488
        %v7514 = vpack.c.b16 %v7489, %v7489
        %v7515 = vpack.c.b16 %v7490, %v7490
        %v7516 = vpack.c.b16 %v7491, %v7491
        %v7517 = vpack.c.b16 %v7492, %v7492
        %v7518 = vpack.c.b16 %v7493, %v7493
        %v7519 = vpack.c.b16 %v7494, %v7494
        %v7520 = vpack.c.b16 %v7495, %v7495
        %v7521 = vpack.c.b16 %v7496, %v7496
        %v7522 = vpack.c.b16 %v7497, %v7497
        %v7523 = vpack.c.b16 %v7498, %v7498
        %v7524 = vpack.c.b16 %v7499, %v7499
        %v7525 = vpack.c.b16 %v7500, %v7500
        %v7526 = vpack.c.b16 %v7501, %v7501
        %v7527 = vpack.c.b16 %v7502, %v7502
        %v7528 = vpack.c.b16 %v7503, %v7503
        %v7529 = vpack.c.b16 %v7504, %v7504
        %v7530 = vpack.c.b16 %v7505, %v7505
        %v7531 = vpack.c.b16 %v7506, %v7506
        %v7532 = vpack.c.b16 %v7507, %v7507
        %v7533 = vpack.c.b16 %v7508, %v7508
        %v7534 = vpack.c.b16 %v7509, %v7509
        %7560 = vst.msk [vmem:[#allocation5 + $0x8] sm:$0xf] %vm6023, %v7510
        %7561 = vst.msk [vmem:[#allocation5 + $0x14] sm:$0xf] %vm6023, %v7511
        %7562 = vst.msk [vmem:[#allocation5 + $0x20] sm:$0xf] %vm6023, %v7512
        %7563 = vst.msk [vmem:[#allocation5 + $0x2c] sm:$0xf] %vm6023, %v7513
        %7564 = vst.msk [vmem:[#allocation5 + $0x38] sm:$0xf] %vm6023, %v7514
        %7565 = vst.msk [vmem:[#allocation5 + $0x44] sm:$0xf] %vm6023, %v7515
        %7566 = vst.msk [vmem:[#allocation5 + $0x50] sm:$0xf] %vm6023, %v7516
        %7567 = vst.msk [vmem:[#allocation5 + $0x5c] sm:$0xf] %vm6023, %v7517
        %7568 = vst.msk [vmem:[#allocation5 + $0x68] sm:$0xf] %vm6023, %v7518
        %7569 = vst.msk [vmem:[#allocation5 + $0x74] sm:$0xf] %vm6023, %v7519
        %7570 = vst.msk [vmem:[#allocation5 + $0x80] sm:$0xf] %vm6023, %v7520
        %7571 = vst.msk [vmem:[#allocation5 + $0x8c] sm:$0xf] %vm6023, %v7521
        %7572 = vst.msk [vmem:[#allocation5 + $0x98] sm:$0xf] %vm6023, %v7522
        %7573 = vst.msk [vmem:[#allocation5 + $0xa4] sm:$0xf] %vm6023, %v7523
        %7574 = vst.msk [vmem:[#allocation5 + $0xb0] sm:$0xf] %vm6023, %v7524
        %7575 = vst.msk [vmem:[#allocation5 + $0xbc] sm:$0xf] %vm6023, %v7525
        %7576 = vst.msk [vmem:[#allocation5 + $0xc8] sm:$0xf] %vm6023, %v7526
        %7577 = vst.msk [vmem:[#allocation5 + $0xd4] sm:$0xf] %vm6023, %v7527
        %7578 = vst.msk [vmem:[#allocation5 + $0xe0] sm:$0xf] %vm6023, %v7528
        %7579 = vst.msk [vmem:[#allocation5 + $0xec] sm:$0xf] %vm6023, %v7529
        %7580 = vst.msk [vmem:[#allocation5 + $0xf8] sm:$0xf] %vm6023, %v7530
        %7581 = vst.msk [vmem:[#allocation5 + $0x104] sm:$0xf] %vm6023, %v7531
        %7582 = vst.msk [vmem:[#allocation5 + $0x110] sm:$0xf] %vm6023, %v7532
        %7583 = vst.msk [vmem:[#allocation5 + $0x11c] sm:$0xf] %vm6023, %v7533
        %v7584 = vld [vmem:[#allocation5 + $0x128] sm:$0x3]
        %v7585 = vsel %vm6050, %v7534, %v7584
        %7586 = vst [vmem:[#allocation5 + $0x128] sm:$0x3] %v7585
        %v7587 = vld [vmem:[#allocation5] sm:$0xff]
        %v7588 = vld [vmem:[#allocation5 + $0x8] sm:$0xf]
        %v7589 = vld [vmem:[#allocation5 + $0xc] sm:$0xff]
        %v7590 = vld [vmem:[#allocation5 + $0x14] sm:$0xf]
        %v7591 = vld [vmem:[#allocation5 + $0x18] sm:$0xff]
        %v7592 = vld [vmem:[#allocation5 + $0x20] sm:$0xf]
        %v7593 = vld [vmem:[#allocation5 + $0x24] sm:$0xff]
        %v7594 = vld [vmem:[#allocation5 + $0x2c] sm:$0xf]
        %v7595 = vld [vmem:[#allocation5 + $0x30] sm:$0xff]
        %v7596 = vld [vmem:[#allocation5 + $0x38] sm:$0xf]
        %v7597 = vld [vmem:[#allocation5 + $0x3c] sm:$0xff]
        %v7598 = vld [vmem:[#allocation5 + $0x44] sm:$0xf]
        %v7599 = vld [vmem:[#allocation5 + $0x48] sm:$0xff]
        %v7600 = vld [vmem:[#allocation5 + $0x50] sm:$0xf]
        %v7601 = vld [vmem:[#allocation5 + $0x54] sm:$0xff]
        %v7602 = vld [vmem:[#allocation5 + $0x5c] sm:$0xf]
        %v7603 = vld [vmem:[#allocation5 + $0x60] sm:$0xff]
        %v7604 = vld [vmem:[#allocation5 + $0x68] sm:$0xf]
        %v7605 = vld [vmem:[#allocation5 + $0x6c] sm:$0xff]
        %v7606 = vld [vmem:[#allocation5 + $0x74] sm:$0xf]
        %v7607 = vld [vmem:[#allocation5 + $0x78] sm:$0xff]
        %v7608 = vld [vmem:[#allocation5 + $0x80] sm:$0xf]
        %v7609 = vld [vmem:[#allocation5 + $0x84] sm:$0xff]
        %v7610 = vld [vmem:[#allocation5 + $0x8c] sm:$0xf]
        %v7611 = vld [vmem:[#allocation5 + $0x90] sm:$0xff]
        %v7612 = vld [vmem:[#allocation5 + $0x98] sm:$0xf]
        %v7613 = vld [vmem:[#allocation5 + $0x9c] sm:$0xff]
        %v7614 = vld [vmem:[#allocation5 + $0xa4] sm:$0xf]
        %v7615 = vld [vmem:[#allocation5 + $0xa8] sm:$0xff]
        %v7616 = vld [vmem:[#allocation5 + $0xb0] sm:$0xf]
        %v7617 = vld [vmem:[#allocation5 + $0xb4] sm:$0xff]
        %v7618 = vld [vmem:[#allocation5 + $0xbc] sm:$0xf]
        %v7619 = vld [vmem:[#allocation5 + $0xc0] sm:$0xff]
        %v7620 = vld [vmem:[#allocation5 + $0xc8] sm:$0xf]
        %v7621 = vld [vmem:[#allocation5 + $0xcc] sm:$0xff]
        %v7622 = vld [vmem:[#allocation5 + $0xd4] sm:$0xf]
        %v7623 = vld [vmem:[#allocation5 + $0xd8] sm:$0xff]
        %v7624 = vld [vmem:[#allocation5 + $0xe0] sm:$0xf]
        %v7625 = vld [vmem:[#allocation5 + $0xe4] sm:$0xff]
        %v7626 = vld [vmem:[#allocation5 + $0xec] sm:$0xf]
        %v7627 = vld [vmem:[#allocation5 + $0xf0] sm:$0xff]
        %v7628 = vld [vmem:[#allocation5 + $0xf8] sm:$0xf]
        %v7629 = vld [vmem:[#allocation5 + $0xfc] sm:$0xff]
        %v7630 = vld [vmem:[#allocation5 + $0x104] sm:$0xf]
        %v7631 = vld [vmem:[#allocation5 + $0x108] sm:$0xff]
        %v7632 = vld [vmem:[#allocation5 + $0x110] sm:$0xf]
        %v7633 = vld [vmem:[#allocation5 + $0x114] sm:$0xff]
        %v7634 = vld [vmem:[#allocation5 + $0x11c] sm:$0xf]
        %v7635 = vld [vmem:[#allocation5 + $0x120] sm:$0x33]
        %v7636 = vld [vmem:[#allocation5 + $0x128] sm:$0x3]
        %v7637 = vld [vmem:[%s3] sm:$0xf]
        %v7638 = vld [vmem:[%s3 + $0x4] sm:$0xf]
        %v7639 = vld [vmem:[%s3 + $0x8] sm:$0xf]
        %v7640 = vld [vmem:[%s3 + $0xc] sm:$0xf]
        %v7641 = vld [vmem:[%s3 + $0x10] sm:$0xf]
        %v7642 = vld [vmem:[%s3 + $0x14] sm:$0xf]
        %v7643 = vld [vmem:[%s3 + $0x18] sm:$0xf]
        %v7644 = vld [vmem:[%s3 + $0x1c] sm:$0xf]
        %v7645 = vld [vmem:[%s3 + $0x20] sm:$0xf]
        %v7646 = vld [vmem:[%s3 + $0x24] sm:$0xf]
        %v7647 = vld [vmem:[%s3 + $0x28] sm:$0xf]
        %v7648 = vld [vmem:[%s3 + $0x2c] sm:$0xf]
        %v7649 = vld [vmem:[%s3 + $0x30] sm:$0xf]
        %v7650 = vld [vmem:[%s3 + $0x34] sm:$0xf]
        %v7651 = vld [vmem:[%s3 + $0x38] sm:$0xf]
        %v7652 = vld [vmem:[%s3 + $0x3c] sm:$0xf]
        %v7653 = vld [vmem:[%s3 + $0x40] sm:$0xf]
        %v7654 = vld [vmem:[%s3 + $0x44] sm:$0xf]
        %v7655 = vld [vmem:[%s3 + $0x48] sm:$0xf]
        %v7656 = vld [vmem:[%s3 + $0x4c] sm:$0xf]
        %v7657 = vld [vmem:[%s3 + $0x50] sm:$0xf]
        %v7658 = vld [vmem:[%s3 + $0x54] sm:$0xf]
        %v7659 = vld [vmem:[%s3 + $0x58] sm:$0xf]
        %v7660 = vld [vmem:[%s3 + $0x5c] sm:$0xf]
        %v7661 = vld [vmem:[%s3 + $0x60] sm:$0xf]
        %v7662 = vld [vmem:[%s3 + $0x64] sm:$0xf]
        %v7663 = vld [vmem:[%s3 + $0x68] sm:$0xf]
        %v7664 = vld [vmem:[%s3 + $0x6c] sm:$0xf]
        %v7665 = vld [vmem:[%s3 + $0x70] sm:$0xf]
        %v7666 = vld [vmem:[%s3 + $0x74] sm:$0xf]
        %v7667 = vld [vmem:[%s3 + $0x78] sm:$0xf]
        %v7668 = vld [vmem:[%s3 + $0x7c] sm:$0xf]
        %v7669 = vld [vmem:[%s3 + $0x80] sm:$0xf]
        %v7670 = vld [vmem:[%s3 + $0x84] sm:$0xf]
        %v7671 = vld [vmem:[%s3 + $0x88] sm:$0xf]
        %v7672 = vld [vmem:[%s3 + $0x8c] sm:$0xf]
        %v7723 = vunpack.c.l.b16 %v7587
        %v7724 = vunpack.c.h.b16 %v7587
        %v7725 = vunpack.c.l.b16 %v7588
        %v7726 = vunpack.c.l.b16 %v7589
        %v7727 = vunpack.c.h.b16 %v7589
        %v7728 = vunpack.c.l.b16 %v7590
        %v7729 = vunpack.c.l.b16 %v7591
        %v7730 = vunpack.c.h.b16 %v7591
        %v7731 = vunpack.c.l.b16 %v7592
        %v7732 = vunpack.c.l.b16 %v7593
        %v7733 = vunpack.c.h.b16 %v7593
        %v7734 = vunpack.c.l.b16 %v7594
        %v7735 = vunpack.c.l.b16 %v7595
        %v7736 = vunpack.c.h.b16 %v7595
        %v7737 = vunpack.c.l.b16 %v7596
        %v7738 = vunpack.c.l.b16 %v7597
        %v7739 = vunpack.c.h.b16 %v7597
        %v7740 = vunpack.c.l.b16 %v7598
        %v7741 = vunpack.c.l.b16 %v7599
        %v7742 = vunpack.c.h.b16 %v7599
        %v7743 = vunpack.c.l.b16 %v7600
        %v7744 = vunpack.c.l.b16 %v7601
        %v7745 = vunpack.c.h.b16 %v7601
        %v7746 = vunpack.c.l.b16 %v7602
        %v7747 = vunpack.c.l.b16 %v7603
        %v7748 = vunpack.c.h.b16 %v7603
        %v7749 = vunpack.c.l.b16 %v7604
        %v7750 = vunpack.c.l.b16 %v7605
        %v7751 = vunpack.c.h.b16 %v7605
        %v7752 = vunpack.c.l.b16 %v7606
        %v7753 = vunpack.c.l.b16 %v7607
        %v7754 = vunpack.c.h.b16 %v7607
        %v7755 = vunpack.c.l.b16 %v7608
        %v7756 = vunpack.c.l.b16 %v7609
        %v7757 = vunpack.c.h.b16 %v7609
        %v7758 = vunpack.c.l.b16 %v7610
        %v7759 = vunpack.c.l.b16 %v7611
        %v7760 = vunpack.c.h.b16 %v7611
        %v7761 = vunpack.c.l.b16 %v7612
        %v7762 = vunpack.c.l.b16 %v7613
        %v7763 = vunpack.c.h.b16 %v7613
        %v7764 = vunpack.c.l.b16 %v7614
        %v7765 = vunpack.c.l.b16 %v7615
        %v7766 = vunpack.c.h.b16 %v7615
        %v7767 = vunpack.c.l.b16 %v7616
        %v7768 = vunpack.c.l.b16 %v7617
        %v7769 = vunpack.c.h.b16 %v7617
        %v7770 = vunpack.c.l.b16 %v7618
        %v7771 = vunpack.c.l.b16 %v7619
        %v7772 = vunpack.c.h.b16 %v7619
        %v7773 = vunpack.c.l.b16 %v7620
        %v7774 = vunpack.c.l.b16 %v7621
        %v7775 = vunpack.c.h.b16 %v7621
        %v7776 = vunpack.c.l.b16 %v7622
        %v7777 = vunpack.c.l.b16 %v7623
        %v7778 = vunpack.c.h.b16 %v7623
        %v7779 = vunpack.c.l.b16 %v7624
        %v7780 = vunpack.c.l.b16 %v7625
        %v7781 = vunpack.c.h.b16 %v7625
        %v7782 = vunpack.c.l.b16 %v7626
        %v7783 = vunpack.c.l.b16 %v7627
        %v7784 = vunpack.c.h.b16 %v7627
        %v7785 = vunpack.c.l.b16 %v7628
        %v7786 = vunpack.c.l.b16 %v7629
        %v7787 = vunpack.c.h.b16 %v7629
        %v7788 = vunpack.c.l.b16 %v7630
        %v7789 = vunpack.c.l.b16 %v7631
        %v7790 = vunpack.c.h.b16 %v7631
        %v7791 = vunpack.c.l.b16 %v7632
        %v7792 = vunpack.c.l.b16 %v7633
        %v7793 = vunpack.c.h.b16 %v7633
        %v7794 = vunpack.c.l.b16 %v7634
        %v7795 = vunpack.c.l.b16 %v7635
        %v7796 = vunpack.c.h.b16 %v7635
        %v7797 = vunpack.c.l.b16 %v7636
        %v7798 = vpack.c.b16 %v7726, %v7723
        %v7799 = vpack.c.b16 %v7727, %v7724
        %v7800 = vpack.c.b16 %v7728, %v7725
        %v7801 = vpack.c.b16 %v7732, %v7729
        %v7802 = vpack.c.b16 %v7733, %v7730
        %v7803 = vpack.c.b16 %v7734, %v7731
        %v7804 = vpack.c.b16 %v7738, %v7735
        %v7805 = vpack.c.b16 %v7739, %v7736
        %v7806 = vpack.c.b16 %v7740, %v7737
        %v7807 = vpack.c.b16 %v7744, %v7741
        %v7808 = vpack.c.b16 %v7745, %v7742
        %v7809 = vpack.c.b16 %v7746, %v7743
        %v7810 = vpack.c.b16 %v7750, %v7747
        %v7811 = vpack.c.b16 %v7751, %v7748
        %v7812 = vpack.c.b16 %v7752, %v7749
        %v7813 = vpack.c.b16 %v7756, %v7753
        %v7814 = vpack.c.b16 %v7757, %v7754
        %v7815 = vpack.c.b16 %v7758, %v7755
        %v7816 = vpack.c.b16 %v7762, %v7759
        %v7817 = vpack.c.b16 %v7763, %v7760
        %v7818 = vpack.c.b16 %v7764, %v7761
        %v7819 = vpack.c.b16 %v7768, %v7765
        %v7820 = vpack.c.b16 %v7769, %v7766
        %v7821 = vpack.c.b16 %v7770, %v7767
        %v7822 = vpack.c.b16 %v7774, %v7771
        %v7823 = vpack.c.b16 %v7775, %v7772
        %v7824 = vpack.c.b16 %v7776, %v7773
        %v7825 = vpack.c.b16 %v7780, %v7777
        %v7826 = vpack.c.b16 %v7781, %v7778
        %v7827 = vpack.c.b16 %v7782, %v7779
        %v7828 = vpack.c.b16 %v7786, %v7783
        %v7829 = vpack.c.b16 %v7787, %v7784
        %v7830 = vpack.c.b16 %v7788, %v7785
        %v7831 = vpack.c.b16 %v7792, %v7789
        %v7832 = vpack.c.b16 %v7793, %v7790
        %v7833 = vpack.c.b16 %v7794, %v7791
        %v7834 = vpack.c.b16 %v7795, %v7795
        %v7835 = vpack.c.b16 %v7796, %v7796
        %v7836 = vpack.c.b16 %v7797, %v7797
        %v7899 = vunpack.c.l.b16 %v7637
        %v7900 = vunpack.c.l.b16 %v7638
        %v7901 = vunpack.c.l.b16 %v7639
        %v7902 = vunpack.c.l.b16 %v7640
        %v7903 = vunpack.c.l.b16 %v7641
        %v7904 = vunpack.c.l.b16 %v7642
        %v7905 = vunpack.c.l.b16 %v7643
        %v7906 = vunpack.c.l.b16 %v7644
        %v7907 = vunpack.c.l.b16 %v7645
        %v7908 = vunpack.c.l.b16 %v7646
        %v7909 = vunpack.c.l.b16 %v7647
        %v7910 = vunpack.c.l.b16 %v7648
        %v7911 = vunpack.c.l.b16 %v7649
        %v7912 = vunpack.c.l.b16 %v7650
        %v7913 = vunpack.c.l.b16 %v7651
        %v7914 = vunpack.c.l.b16 %v7652
        %v7915 = vunpack.c.l.b16 %v7653
        %v7916 = vunpack.c.l.b16 %v7654
        %v7917 = vunpack.c.l.b16 %v7655
        %v7918 = vunpack.c.l.b16 %v7656
        %v7919 = vunpack.c.l.b16 %v7657
        %v7920 = vunpack.c.l.b16 %v7658
        %v7921 = vunpack.c.l.b16 %v7659
        %v7922 = vunpack.c.l.b16 %v7660
        %v7923 = vunpack.c.l.b16 %v7661
        %v7924 = vunpack.c.l.b16 %v7662
        %v7925 = vunpack.c.l.b16 %v7663
        %v7926 = vunpack.c.l.b16 %v7664
        %v7927 = vunpack.c.l.b16 %v7665
        %v7928 = vunpack.c.l.b16 %v7666
        %v7929 = vunpack.c.l.b16 %v7667
        %v7930 = vunpack.c.l.b16 %v7668
        %v7931 = vunpack.c.l.b16 %v7669
        %v7932 = vunpack.c.l.b16 %v7670
        %v7933 = vunpack.c.l.b16 %v7671
        %v7934 = vunpack.c.l.b16 %v7672
        %v7935 = vpack.c.b16 %v7900, %v7899
        %v7936 = vpack.c.b16 %v7902, %v7901
        %v7937 = vpack.c.b16 %v7904, %v7903
        %v7938 = vpack.c.b16 %v7906, %v7905
        %v7939 = vpack.c.b16 %v7908, %v7907
        %v7940 = vpack.c.b16 %v7910, %v7909
        %v7941 = vpack.c.b16 %v7912, %v7911
        %v7942 = vpack.c.b16 %v7914, %v7913
        %v7943 = vpack.c.b16 %v7916, %v7915
        %v7944 = vpack.c.b16 %v7918, %v7917
        %v7945 = vpack.c.b16 %v7920, %v7919
        %v7946 = vpack.c.b16 %v7922, %v7921
        %v7947 = vpack.c.b16 %v7924, %v7923
        %v7948 = vpack.c.b16 %v7926, %v7925
        %v7949 = vpack.c.b16 %v7928, %v7927
        %v7950 = vpack.c.b16 %v7930, %v7929
        %v7951 = vpack.c.b16 %v7932, %v7931
        %v7952 = vpack.c.b16 %v7934, %v7933
        %v7972 = vsel %vm5250, %v7800, 0
        %v7975 = vsel %vm5250, %v7803, 0
        %v7978 = vsel %vm5250, %v7806, 0
        %v7981 = vsel %vm5250, %v7809, 0
        %v7984 = vsel %vm5250, %v7812, 0
        %v7987 = vsel %vm5250, %v7815, 0
        %v7990 = vsel %vm5250, %v7818, 0
        %v7993 = vsel %vm5250, %v7821, 0
        %v7996 = vsel %vm5250, %v7824, 0
        %v7999 = vsel %vm5250, %v7827, 0
        %v8002 = vsel %vm5250, %v7830, 0
        %v8005 = vsel %vm5250, %v7833, 0
        %v8008 = vsel %vm5250, %v7836, 0
        %8010 = vmatprep.subr.bf16.mxu0 0
        %8011 = vmatpush1.bf16.msra.mxu0 %v7935
        %8012 = vmatprep.subr.bf16.mxu0 0
        %8013 = vmatpush1.bf16.msra.mxu0 %v7936
        %8014 = vmatprep.subr.bf16.mxu0 0
        %8015 = vmatpush1.bf16.msra.mxu0 %v7937
        %8016 = vmatprep.subr.bf16.mxu0 0
        %8017 = vmatpush1.bf16.msra.mxu0 %v7938
        %8018 = vmatprep.subr.bf16.mxu0 0
        %8019 = vmatpush1.bf16.msra.mxu0 %v7939
        %8020 = vmatprep.subr.bf16.mxu0 0
        %8021 = vmatpush1.bf16.msra.mxu0 %v7940
        %8022 = vmatprep.subr.bf16.mxu0 0
        %8023 = vmatpush1.bf16.msra.mxu0 %v7941
        %8024 = vmatprep.subr.bf16.mxu0 0
        %8025 = vmatpush1.bf16.msra.mxu0 %v7942
        %8026 = vmatprep.subr.bf16.mxu0 0
        %8027 = vmatpush1.bf16.msra.mxu0 %v7943
        %8028 = vmatprep.subr.bf16.mxu0 0
        %8029 = vmatpush1.bf16.msra.mxu0 %v7944
        %8030 = vmatprep.subr.bf16.mxu0 0
        %8031 = vmatpush1.bf16.msra.mxu0 %v7945
        %8032 = vmatprep.subr.bf16.mxu0 0
        %8033 = vmatpush1.bf16.msra.mxu0 %v7946
        %8034 = vmatprep.subr.bf16.mxu0 0
        %8035 = vmatpush1.bf16.msra.mxu0 %v7947
        %8036 = vmatprep.subr.bf16.mxu0 0
        %8037 = vmatpush1.bf16.msra.mxu0 %v7948
        %8038 = vmatprep.subr.bf16.mxu0 0
        %8039 = vmatpush1.bf16.msra.mxu0 %v7949
        %8040 = vmatprep.subr.bf16.mxu0 0
        %8041 = vmatpush1.bf16.msra.mxu0 %v7950
        %8042 = vmatprep.mubr.bf16.mxu0 %v7799
        %8043 = vmatmul.mubr.bf16.gmra.mrb[0].mxu0 %v7798
        %v8044 = vpop.f32.mrb[0].mxu0
        %v8045 = vadd.f32 0.0, %v8044
        %v8046 = vpop.f32.mrb[0].mxu0
        %v8047 = vpop.f32.mrb[0].mxu0
        %v8048 = vadd.f32 0.0, %v8047
        %v8049 = vpop.f32.mrb[0].mxu0
        %8050 = vmatprep.mubr.bf16.mxu0 %v7802
        %8051 = vmatmul.mubr.bf16.gmra.mrb[0].mxu0 %v7801
        %v8052 = vpop.f32.mrb[0].mxu0
        %v8053 = vadd.f32 0.0, %v8052
        %v8054 = vpop.f32.mrb[0].mxu0
        %v8055 = vpop.f32.mrb[0].mxu0
        %v8056 = vadd.f32 0.0, %v8055
        %v8057 = vpop.f32.mrb[0].mxu0
        %8058 = vmatprep.mubr.bf16.mxu0 %v7805
        %8059 = vmatmul.mubr.bf16.gmra.mrb[0].mxu0 %v7804
        %v8060 = vpop.f32.mrb[0].mxu0
        %v8061 = vadd.f32 0.0, %v8060
        %v8062 = vpop.f32.mrb[0].mxu0
        %v8063 = vpop.f32.mrb[0].mxu0
        %v8064 = vadd.f32 0.0, %v8063
        %v8065 = vpop.f32.mrb[0].mxu0
        %8066 = vmatprep.mubr.bf16.mxu0 %v7808
        %8067 = vmatmul.mubr.bf16.gmra.mrb[0].mxu0 %v7807
        %v8068 = vpop.f32.mrb[0].mxu0
        %v8069 = vadd.f32 0.0, %v8068
        %v8070 = vpop.f32.mrb[0].mxu0
        %v8071 = vpop.f32.mrb[0].mxu0
        %v8072 = vadd.f32 0.0, %v8071
        %v8073 = vpop.f32.mrb[0].mxu0
        %8074 = vmatprep.mubr.bf16.mxu0 %v7811
        %8075 = vmatmul.mubr.bf16.gmra.mrb[0].mxu0 %v7810
        %v8076 = vpop.f32.mrb[0].mxu0
        %v8077 = vadd.f32 0.0, %v8076
        %v8078 = vpop.f32.mrb[0].mxu0
        %v8079 = vpop.f32.mrb[0].mxu0
        %v8080 = vadd.f32 0.0, %v8079
        %v8081 = vpop.f32.mrb[0].mxu0
        %8082 = vmatprep.mubr.bf16.mxu0 %v7814
        %8083 = vmatmul.mubr.bf16.gmra.mrb[0].mxu0 %v7813
        %v8084 = vpop.f32.mrb[0].mxu0
        %v8085 = vadd.f32 0.0, %v8084
        %v8086 = vpop.f32.mrb[0].mxu0
        %v8087 = vpop.f32.mrb[0].mxu0
        %v8088 = vadd.f32 0.0, %v8087
        %v8089 = vpop.f32.mrb[0].mxu0
        %8090 = vmatprep.mubr.bf16.mxu0 %v7817
        %8091 = vmatmul.mubr.bf16.gmra.mrb[0].mxu0 %v7816
        %v8092 = vpop.f32.mrb[0].mxu0
        %v8093 = vadd.f32 0.0, %v8092
        %v8094 = vpop.f32.mrb[0].mxu0
        %v8095 = vpop.f32.mrb[0].mxu0
        %v8096 = vadd.f32 0.0, %v8095
        %v8097 = vpop.f32.mrb[0].mxu0
        %8098 = vmatprep.mubr.bf16.mxu0 %v7820
        %8099 = vmatmul.mubr.bf16.gmra.mrb[0].mxu0 %v7819
        %v8100 = vpop.f32.mrb[0].mxu0
        %v8101 = vadd.f32 0.0, %v8100
        %v8102 = vpop.f32.mrb[0].mxu0
        %v8103 = vpop.f32.mrb[0].mxu0
        %v8104 = vadd.f32 0.0, %v8103
        %v8105 = vpop.f32.mrb[0].mxu0
        %8106 = vmatprep.mubr.bf16.mxu0 %v7823
        %8107 = vmatmul.mubr.bf16.gmra.mrb[0].mxu0 %v7822
        %v8108 = vpop.f32.mrb[0].mxu0
        %v8109 = vadd.f32 0.0, %v8108
        %v8110 = vpop.f32.mrb[0].mxu0
        %v8111 = vpop.f32.mrb[0].mxu0
        %v8112 = vadd.f32 0.0, %v8111
        %v8113 = vpop.f32.mrb[0].mxu0
        %8114 = vmatprep.mubr.bf16.mxu0 %v7826
        %8115 = vmatmul.mubr.bf16.gmra.mrb[0].mxu0 %v7825
        %v8116 = vpop.f32.mrb[0].mxu0
        %v8117 = vadd.f32 0.0, %v8116
        %v8118 = vpop.f32.mrb[0].mxu0
        %v8119 = vpop.f32.mrb[0].mxu0
        %v8120 = vadd.f32 0.0, %v8119
        %v8121 = vpop.f32.mrb[0].mxu0
        %8122 = vmatprep.mubr.bf16.mxu0 %v7829
        %8123 = vmatmul.mubr.bf16.gmra.mrb[0].mxu0 %v7828
        %v8124 = vpop.f32.mrb[0].mxu0
        %v8125 = vadd.f32 0.0, %v8124
        %v8126 = vpop.f32.mrb[0].mxu0
        %v8127 = vpop.f32.mrb[0].mxu0
        %v8128 = vadd.f32 0.0, %v8127
        %v8129 = vpop.f32.mrb[0].mxu0
        %8130 = vmatprep.mubr.bf16.mxu0 %v7832
        %8131 = vmatmul.mubr.bf16.gmra.mrb[0].mxu0 %v7831
        %v8132 = vpop.f32.mrb[0].mxu0
        %v8133 = vadd.f32 0.0, %v8132
        %v8134 = vpop.f32.mrb[0].mxu0
        %v8135 = vpop.f32.mrb[0].mxu0
        %v8136 = vadd.f32 0.0, %v8135
        %v8137 = vpop.f32.mrb[0].mxu0
        %8138 = vmatprep.mubr.bf16.mxu0 %v7835
        %8139 = vmatmul.mubr.bf16.gmra.mrb[0].mxu0 %v7834
        %v8140 = vpop.f32.mrb[0].mxu0
        %v8141 = vadd.f32 0.0, %v8140
        %v8142 = vpop.f32.mrb[0].mxu0
        %v8143 = vpop.f32.mrb[0].mxu0
        %v8144 = vpop.f32.mrb[0].mxu0
        %8145 = vdwg.mxu0
        %8146 = vmatprep.subr.bf16.mxu0 0
        %8147 = vmatpush1.bf16.msra.mxu0 %v7951
        %8148 = vmatprep.subr.bf16.mxu0 0
        %8149 = vmatpush1.bf16.msra.mxu0 %v7952
        %8150 = vmatprep.subr.bf16.mxu0 0
        %8151 = vmatpush1.bf16.msra.mxu0 0
        %8152 = vmatprep.subr.bf16.mxu0 0
        %8153 = vmatpush1.bf16.msra.mxu0 0
        %8154 = vmatprep.subr.bf16.mxu0 0
        %8155 = vmatpush1.bf16.msra.mxu0 0
        %8156 = vmatprep.subr.bf16.mxu0 0
        %8157 = vmatpush1.bf16.msra.mxu0 0
        %8158 = vmatprep.subr.bf16.mxu0 0
        %8159 = vmatpush1.bf16.msra.mxu0 0
        %8160 = vmatprep.subr.bf16.mxu0 0
        %8161 = vmatpush1.bf16.msra.mxu0 0
        %8162 = vmatprep.subr.bf16.mxu0 0
        %8163 = vmatpush1.bf16.msra.mxu0 0
        %8164 = vmatprep.subr.bf16.mxu0 0
        %8165 = vmatpush1.bf16.msra.mxu0 0
        %8166 = vmatprep.subr.bf16.mxu0 0
        %8167 = vmatpush1.bf16.msra.mxu0 0
        %8168 = vmatprep.subr.bf16.mxu0 0
        %8169 = vmatpush1.bf16.msra.mxu0 0
        %8170 = vmatprep.subr.bf16.mxu0 0
        %8171 = vmatpush1.bf16.msra.mxu0 0
        %8172 = vmatprep.subr.bf16.mxu0 0
        %8173 = vmatpush1.bf16.msra.mxu0 0
        %8174 = vmatprep.subr.bf16.mxu0 0
        %8175 = vmatpush1.bf16.msra.mxu0 0
        %8176 = vmatprep.subr.bf16.mxu0 0
        %8177 = vmatpush1.bf16.msra.mxu0 0
        %8178 = vmatprep.mubr.bf16.mxu0 0
        %8179 = vmatmul.mubr.bf16.gmra.mrb[0].mxu0 %v7972
        %v8180 = vpop.f32.mrb[0].mxu0
        %v8181 = vadd.f32 %v8045, %v8180
        %v8182 = vpop.f32.mrb[0].mxu0
        %v8183 = vpop.f32.mrb[0].mxu0
        %v8184 = vadd.f32 %v8048, %v8183
        %v8185 = vpop.f32.mrb[0].mxu0
        %8186 = vmatprep.mubr.bf16.mxu0 0
        %8187 = vmatmul.mubr.bf16.gmra.mrb[0].mxu0 %v7975
        %v8188 = vpop.f32.mrb[0].mxu0
        %v8189 = vadd.f32 %v8053, %v8188
        %v8190 = vpop.f32.mrb[0].mxu0
        %v8191 = vpop.f32.mrb[0].mxu0
        %v8192 = vadd.f32 %v8056, %v8191
        %v8193 = vpop.f32.mrb[0].mxu0
        %8194 = vmatprep.mubr.bf16.mxu0 0
        %8195 = vmatmul.mubr.bf16.gmra.mrb[0].mxu0 %v7978
        %v8196 = vpop.f32.mrb[0].mxu0
        %v8197 = vadd.f32 %v8061, %v8196
        %v8198 = vpop.f32.mrb[0].mxu0
        %v8199 = vpop.f32.mrb[0].mxu0
        %v8200 = vadd.f32 %v8064, %v8199
        %v8201 = vpop.f32.mrb[0].mxu0
        %8202 = vmatprep.mubr.bf16.mxu0 0
        %8203 = vmatmul.mubr.bf16.gmra.mrb[0].mxu0 %v7981
        %v8204 = vpop.f32.mrb[0].mxu0
        %v8205 = vadd.f32 %v8069, %v8204
        %v8206 = vpop.f32.mrb[0].mxu0
        %v8207 = vpop.f32.mrb[0].mxu0
        %v8208 = vadd.f32 %v8072, %v8207
        %v8209 = vpop.f32.mrb[0].mxu0
        %8210 = vmatprep.mubr.bf16.mxu0 0
        %8211 = vmatmul.mubr.bf16.gmra.mrb[0].mxu0 %v7984
        %v8212 = vpop.f32.mrb[0].mxu0
        %v8213 = vadd.f32 %v8077, %v8212
        %v8214 = vpop.f32.mrb[0].mxu0
        %v8215 = vpop.f32.mrb[0].mxu0
        %v8216 = vadd.f32 %v8080, %v8215
        %v8217 = vpop.f32.mrb[0].mxu0
        %8218 = vmatprep.mubr.bf16.mxu0 0
        %8219 = vmatmul.mubr.bf16.gmra.mrb[0].mxu0 %v7987
        %v8220 = vpop.f32.mrb[0].mxu0
        %v8221 = vadd.f32 %v8085, %v8220
        %v8222 = vpop.f32.mrb[0].mxu0
        %v8223 = vpop.f32.mrb[0].mxu0
        %v8224 = vadd.f32 %v8088, %v8223
        %v8225 = vpop.f32.mrb[0].mxu0
        %8226 = vmatprep.mubr.bf16.mxu0 0
        %8227 = vmatmul.mubr.bf16.gmra.mrb[0].mxu0 %v7990
        %v8228 = vpop.f32.mrb[0].mxu0
        %v8229 = vadd.f32 %v8093, %v8228
        %v8230 = vpop.f32.mrb[0].mxu0
        %v8231 = vpop.f32.mrb[0].mxu0
        %v8232 = vadd.f32 %v8096, %v8231
        %v8233 = vpop.f32.mrb[0].mxu0
        %8234 = vmatprep.mubr.bf16.mxu0 0
        %8235 = vmatmul.mubr.bf16.gmra.mrb[0].mxu0 %v7993
        %v8236 = vpop.f32.mrb[0].mxu0
        %v8237 = vadd.f32 %v8101, %v8236
        %v8238 = vpop.f32.mrb[0].mxu0
        %v8239 = vpop.f32.mrb[0].mxu0
        %v8240 = vadd.f32 %v8104, %v8239
        %v8241 = vpop.f32.mrb[0].mxu0
        %8242 = vmatprep.mubr.bf16.mxu0 0
        %8243 = vmatmul.mubr.bf16.gmra.mrb[0].mxu0 %v7996
        %v8244 = vpop.f32.mrb[0].mxu0
        %v8245 = vadd.f32 %v8109, %v8244
        %v8246 = vpop.f32.mrb[0].mxu0
        %v8247 = vpop.f32.mrb[0].mxu0
        %v8248 = vadd.f32 %v8112, %v8247
        %v8249 = vpop.f32.mrb[0].mxu0
        %8250 = vmatprep.mubr.bf16.mxu0 0
        %8251 = vmatmul.mubr.bf16.gmra.mrb[0].mxu0 %v7999
        %v8252 = vpop.f32.mrb[0].mxu0
        %v8253 = vadd.f32 %v8117, %v8252
        %v8254 = vpop.f32.mrb[0].mxu0
        %v8255 = vpop.f32.mrb[0].mxu0
        %v8256 = vadd.f32 %v8120, %v8255
        %v8257 = vpop.f32.mrb[0].mxu0
        %8258 = vmatprep.mubr.bf16.mxu0 0
        %8259 = vmatmul.mubr.bf16.gmra.mrb[0].mxu0 %v8002
        %v8260 = vpop.f32.mrb[0].mxu0
        %v8261 = vadd.f32 %v8125, %v8260
        %v8262 = vpop.f32.mrb[0].mxu0
        %v8263 = vpop.f32.mrb[0].mxu0
        %v8264 = vadd.f32 %v8128, %v8263
        %v8265 = vpop.f32.mrb[0].mxu0
        %8266 = vmatprep.mubr.bf16.mxu0 0
        %8267 = vmatmul.mubr.bf16.gmra.mrb[0].mxu0 %v8005
        %v8268 = vpop.f32.mrb[0].mxu0
        %v8269 = vadd.f32 %v8133, %v8268
        %v8270 = vpop.f32.mrb[0].mxu0
        %v8271 = vpop.f32.mrb[0].mxu0
        %v8272 = vadd.f32 %v8136, %v8271
        %v8273 = vpop.f32.mrb[0].mxu0
        %8274 = vmatprep.mubr.bf16.mxu0 0
        %8275 = vmatmul.mubr.bf16.gmra.mrb[0].mxu0 %v8008
        %v8276 = vpop.f32.mrb[0].mxu0
        %v8277 = vadd.f32 %v8141, %v8276
        %v8278 = vpop.f32.mrb[0].mxu0
        %v8279 = vpop.f32.mrb[0].mxu0
        %v8280 = vpop.f32.mrb[0].mxu0
        %8281 = vdwg.mxu0
        %vm8282 = vcmask 523264
        %8283 = vst.msk [vmem:[#allocation6] sm:$0xff] %vm8282, %v8181
        %8284 = vst.msk [vmem:[#allocation6 + $0x8] sm:$0xff] %vm8282, %v8184
        %8285 = vst.msk [vmem:[#allocation6 + $0x10] sm:$0xff] %vm8282, %v8189
        %8286 = vst.msk [vmem:[#allocation6 + $0x18] sm:$0xff] %vm8282, %v8192
        %8287 = vst.msk [vmem:[#allocation6 + $0x20] sm:$0xff] %vm8282, %v8197
        %8288 = vst.msk [vmem:[#allocation6 + $0x28] sm:$0xff] %vm8282, %v8200
        %8289 = vst.msk [vmem:[#allocation6 + $0x30] sm:$0xff] %vm8282, %v8205
        %8290 = vst.msk [vmem:[#allocation6 + $0x38] sm:$0xff] %vm8282, %v8208
        %8291 = vst.msk [vmem:[#allocation6 + $0x40] sm:$0xff] %vm8282, %v8213
        %8292 = vst.msk [vmem:[#allocation6 + $0x48] sm:$0xff] %vm8282, %v8216
        %8293 = vst.msk [vmem:[#allocation6 + $0x50] sm:$0xff] %vm8282, %v8221
        %8294 = vst.msk [vmem:[#allocation6 + $0x58] sm:$0xff] %vm8282, %v8224
        %8295 = vst.msk [vmem:[#allocation6 + $0x60] sm:$0xff] %vm8282, %v8229
        %8296 = vst.msk [vmem:[#allocation6 + $0x68] sm:$0xff] %vm8282, %v8232
        %8297 = vst.msk [vmem:[#allocation6 + $0x70] sm:$0xff] %vm8282, %v8237
        %8298 = vst.msk [vmem:[#allocation6 + $0x78] sm:$0xff] %vm8282, %v8240
        %8299 = vst.msk [vmem:[#allocation6 + $0x80] sm:$0xff] %vm8282, %v8245
        %8300 = vst.msk [vmem:[#allocation6 + $0x88] sm:$0xff] %vm8282, %v8248
        %8301 = vst.msk [vmem:[#allocation6 + $0x90] sm:$0xff] %vm8282, %v8253
        %8302 = vst.msk [vmem:[#allocation6 + $0x98] sm:$0xff] %vm8282, %v8256
        %8303 = vst.msk [vmem:[#allocation6 + $0xa0] sm:$0xff] %vm8282, %v8261
        %8304 = vst.msk [vmem:[#allocation6 + $0xa8] sm:$0xff] %vm8282, %v8264
        %8305 = vst.msk [vmem:[#allocation6 + $0xb0] sm:$0xff] %vm8282, %v8269
        %8306 = vst.msk [vmem:[#allocation6 + $0xb8] sm:$0xff] %vm8282, %v8272
        %vm8307 = vcmask 518144
        %8308 = vst.msk [vmem:[#allocation6 + $0xc0] sm:$0x7] %vm8307, %v8277
        %v8309 = vld [vmem:[#allocation6] ss:$2 sm:$0x3f]
        %s8310 = scalar_lea.vmem [#allocation6], 1
        %v8311 = vld [vmem:[%s8310] ss:$2 sm:$0x3f]
        %v8312 = vmax.f32 %v8309, %v8311
        %s8313 = scalar_lea.vmem [#allocation6], 15
        %v8314 = vld [vmem:[%s8313] ss:$2 sm:$0x3f]
        %s8315 = scalar_lea.vmem [#allocation6], 16
        %v8316 = vld [vmem:[%s8315] ss:$2 sm:$0x3f]
        %v8317 = vmax.f32 %v8314, %v8316
        %v8318 = vmax.f32 %v8312, %v8317
        %v8319 = vld [vmem:[%s4] sm:$0x1]
        %v8321 = vlaneseq
        %v8322 = vshrl.u32 %v8321, 7
        %v8323 = vsub.s32 0, %v8322
        %v8324 = vrot.slane %v8319, %v8323
        %v8326 = vadd.f32 %v8318, %v8324
        %v8327 = vmax.f32 %v8326, 0.0
        %vm8328 = vcmask 521216
        %8329 = vst.msk [vmem:[#allocation7] sm:$0x3f] %vm8328, %v8327
        %s8330 = scalar_lea.vmem [#allocation6], 30
        %v8331 = vld [vmem:[%s8330] ss:$2 sm:$0x3f]
        %s8332 = scalar_lea.vmem [#allocation6], 31
        %v8333 = vld [vmem:[%s8332] ss:$2 sm:$0x3f]
        %v8334 = vmax.f32 %v8331, %v8333
        %s8335 = scalar_lea.vmem [#allocation6], 45
        %v8336 = vld [vmem:[%s8335] ss:$2 sm:$0x3f]
        %s8337 = scalar_lea.vmem [#allocation6], 46
        %v8338 = vld [vmem:[%s8337] ss:$2 sm:$0x3f]
        %v8339 = vmax.f32 %v8336, %v8338
        %v8340 = vmax.f32 %v8334, %v8339
        %v8341 = vld [vmem:[%s4] sm:$0x1]
        %v8343 = vlaneseq
        %v8344 = vshrl.u32 %v8343, 7
        %v8345 = vsub.s32 0, %v8344
        %v8346 = vrot.slane %v8341, %v8345
        %v8348 = vadd.f32 %v8340, %v8346
        %v8349 = vmax.f32 %v8348, 0.0
        %8350 = vst.msk [vmem:[#allocation7 + $0x6] sm:$0x3f] %vm8328, %v8349
        %s8351 = scalar_lea.vmem [#allocation6], 60
        %v8352 = vld [vmem:[%s8351] ss:$2 sm:$0x3f]
        %s8353 = scalar_lea.vmem [#allocation6], 61
        %v8354 = vld [vmem:[%s8353] ss:$2 sm:$0x3f]
        %v8355 = vmax.f32 %v8352, %v8354
        %s8356 = scalar_lea.vmem [#allocation6], 75
        %v8357 = vld [vmem:[%s8356] ss:$2 sm:$0x3f]
        %s8358 = scalar_lea.vmem [#allocation6], 76
        %v8359 = vld [vmem:[%s8358] ss:$2 sm:$0x3f]
        %v8360 = vmax.f32 %v8357, %v8359
        %v8361 = vmax.f32 %v8355, %v8360
        %v8362 = vld [vmem:[%s4] sm:$0x1]
        %v8364 = vlaneseq
        %v8365 = vshrl.u32 %v8364, 7
        %v8366 = vsub.s32 0, %v8365
        %v8367 = vrot.slane %v8362, %v8366
        %v8369 = vadd.f32 %v8361, %v8367
        %v8370 = vmax.f32 %v8369, 0.0
        %8371 = vst.msk [vmem:[#allocation7 + $0xc] sm:$0x3f] %vm8328, %v8370
        %s8372 = scalar_lea.vmem [#allocation6], 90
        %v8373 = vld [vmem:[%s8372] ss:$2 sm:$0x3f]
        %s8374 = scalar_lea.vmem [#allocation6], 91
        %v8375 = vld [vmem:[%s8374] ss:$2 sm:$0x3f]
        %v8376 = vmax.f32 %v8373, %v8375
        %s8377 = scalar_lea.vmem [#allocation6], 105
        %v8378 = vld [vmem:[%s8377] ss:$2 sm:$0x3f]
        %s8379 = scalar_lea.vmem [#allocation6], 106
        %v8380 = vld [vmem:[%s8379] ss:$2 sm:$0x3f]
        %v8381 = vmax.f32 %v8378, %v8380
        %v8382 = vmax.f32 %v8376, %v8381
        %v8383 = vld [vmem:[%s4] sm:$0x1]
        %v8385 = vlaneseq
        %v8386 = vshrl.u32 %v8385, 7
        %v8387 = vsub.s32 0, %v8386
        %v8388 = vrot.slane %v8383, %v8387
        %v8390 = vadd.f32 %v8382, %v8388
        %v8391 = vmax.f32 %v8390, 0.0
        %8392 = vst.msk [vmem:[#allocation7 + $0x12] sm:$0x3f] %vm8328, %v8391
        %s8393 = scalar_lea.vmem [#allocation6], 120
        %v8394 = vld [vmem:[%s8393] ss:$2 sm:$0x3f]
        %s8395 = scalar_lea.vmem [#allocation6], 121
        %v8396 = vld [vmem:[%s8395] ss:$2 sm:$0x3f]
        %v8397 = vmax.f32 %v8394, %v8396
        %s8398 = scalar_lea.vmem [#allocation6], 135
        %v8399 = vld [vmem:[%s8398] ss:$2 sm:$0x3f]
        %s8400 = scalar_lea.vmem [#allocation6], 136
        %v8401 = vld [vmem:[%s8400] ss:$2 sm:$0x3f]
        %v8402 = vmax.f32 %v8399, %v8401
        %v8403 = vmax.f32 %v8397, %v8402
        %v8404 = vld [vmem:[%s4] sm:$0x1]
        %v8406 = vlaneseq
        %v8407 = vshrl.u32 %v8406, 7
        %v8408 = vsub.s32 0, %v8407
        %v8409 = vrot.slane %v8404, %v8408
        %v8411 = vadd.f32 %v8403, %v8409
        %v8412 = vmax.f32 %v8411, 0.0
        %8413 = vst.msk [vmem:[#allocation7 + $0x18] sm:$0x3f] %vm8328, %v8412
        %s8414 = scalar_lea.vmem [#allocation6], 150
        %v8415 = vld [vmem:[%s8414] ss:$2 sm:$0x3f]
        %s8416 = scalar_lea.vmem [#allocation6], 151
        %v8417 = vld [vmem:[%s8416] ss:$2 sm:$0x3f]
        %v8418 = vmax.f32 %v8415, %v8417
        %s8419 = scalar_lea.vmem [#allocation6], 165
        %v8420 = vld [vmem:[%s8419] ss:$2 sm:$0x3f]
        %s8421 = scalar_lea.vmem [#allocation6], 166
        %v8422 = vld [vmem:[%s8421] ss:$2 sm:$0x3f]
        %v8423 = vmax.f32 %v8420, %v8422
        %v8424 = vmax.f32 %v8418, %v8423
        %v8425 = vld [vmem:[%s4] sm:$0x1]
        %v8427 = vlaneseq
        %v8428 = vshrl.u32 %v8427, 7
        %v8429 = vsub.s32 0, %v8428
        %v8430 = vrot.slane %v8425, %v8429
        %v8432 = vadd.f32 %v8424, %v8430
        %v8433 = vmax.f32 %v8432, 0.0
        %8434 = vst.msk [vmem:[#allocation7 + $0x1e] sm:$0x3f] %vm8328, %v8433
        %vm8435 = vcmask 519168
        %8436 = vst.msk [vmem:[#allocation7 + $0x24] sm:$0xf] %vm8435, 0.0
        %v8437 = vld [vmem:[#allocation7] sm:$0xff]
        %v8438 = vld [vmem:[#allocation7 + $0x8] sm:$0xff]
        %v8439 = vld [vmem:[#allocation7 + $0x10] sm:$0xff]
        %v8440 = vpack.c.bf16 %v8438, %v8437
        %v8441 = vpack.c.bf16 %v8439, %v8439
        %v8444 = vunpack.c.l.b16 %v8440
        %v8445 = vunpack.c.h.b16 %v8440
        %v8446 = vunpack.c.l.b16 %v8441
        %v8447 = vpack.c.b16 %v8444, %v8444
        %v8448 = vpack.c.b16 %v8445, %v8445
        %v8449 = vpack.c.b16 %v8446, %v8446
        %8453 = vst.msk [vmem:[#allocation8] sm:$0xf] %vm8435, %v8447
        %8454 = vst.msk [vmem:[#allocation8 + $0x14] sm:$0xf] %vm8435, %v8448
        %8455 = vst.msk [vmem:[#allocation8 + $0x28] sm:$0xf] %vm8435, %v8449
        %v8456 = vld [vmem:[#allocation7 + $0x1] sm:$0xff]
        %v8457 = vld [vmem:[#allocation7 + $0x9] sm:$0xff]
        %v8458 = vld [vmem:[#allocation7 + $0x11] sm:$0xff]
        %v8459 = vpack.c.bf16 %v8457, %v8456
        %v8460 = vpack.c.bf16 %v8458, %v8458
        %v8463 = vunpack.c.l.b16 %v8459
        %v8464 = vunpack.c.h.b16 %v8459
        %v8465 = vunpack.c.l.b16 %v8460
        %v8466 = vpack.c.b16 %v8463, %v8463
        %v8467 = vpack.c.b16 %v8464, %v8464
        %v8468 = vpack.c.b16 %v8465, %v8465
        %8469 = vrot.lane.b32.xlu0 %v8466, 64
        %v8470 = vpop.permute.xlu0 %8469
        %8471 = vrot.lane.b32.xlu0 %v8467, 64
        %v8472 = vpop.permute.xlu0 %8471
        %8473 = vrot.lane.b32.xlu0 %v8468, 64
        %v8474 = vpop.permute.xlu0 %8473
        %vm8478 = vcmask 1043968
        %8479 = vst.msk [vmem:[#allocation8] sm:$0xf] %vm8478, %v8470
        %8480 = vst.msk [vmem:[#allocation8 + $0x14] sm:$0xf] %vm8478, %v8472
        %8481 = vst.msk [vmem:[#allocation8 + $0x28] sm:$0xf] %vm8478, %v8474
        %v8482 = vld [vmem:[#allocation7 + $0x2] sm:$0xff]
        %v8483 = vld [vmem:[#allocation7 + $0xa] sm:$0xff]
        %v8484 = vld [vmem:[#allocation7 + $0x12] sm:$0xff]
        %v8485 = vpack.c.bf16 %v8483, %v8482
        %v8486 = vpack.c.bf16 %v8484, %v8484
        %v8489 = vunpack.c.l.b16 %v8485
        %v8490 = vunpack.c.h.b16 %v8485
        %v8491 = vunpack.c.l.b16 %v8486
        %v8492 = vpack.c.b16 %v8489, %v8489
        %v8493 = vpack.c.b16 %v8490, %v8490
        %v8494 = vpack.c.b16 %v8491, %v8491
        %8498 = vst.msk [vmem:[#allocation8 + $0x4] sm:$0xf] %vm8435, %v8492
        %8499 = vst.msk [vmem:[#allocation8 + $0x18] sm:$0xf] %vm8435, %v8493
        %8500 = vst.msk [vmem:[#allocation8 + $0x2c] sm:$0xf] %vm8435, %v8494
        %v8501 = vld [vmem:[#allocation7 + $0x6] sm:$0xff]
        %v8502 = vld [vmem:[#allocation7 + $0xe] sm:$0xff]
        %v8503 = vld [vmem:[#allocation7 + $0x16] sm:$0xff]
        %v8504 = vpack.c.bf16 %v8502, %v8501
        %v8505 = vpack.c.bf16 %v8503, %v8503
        %v8508 = vunpack.c.l.b16 %v8504
        %v8509 = vunpack.c.h.b16 %v8504
        %v8510 = vunpack.c.l.b16 %v8505
        %v8511 = vpack.c.b16 %v8508, %v8508
        %v8512 = vpack.c.b16 %v8509, %v8509
        %v8513 = vpack.c.b16 %v8510, %v8510
        %8514 = vrot.lane.b32.xlu0 %v8511, 64
        %v8515 = vpop.permute.xlu0 %8514
        %8516 = vrot.lane.b32.xlu0 %v8512, 64
        %v8517 = vpop.permute.xlu0 %8516
        %8518 = vrot.lane.b32.xlu0 %v8513, 64
        %v8519 = vpop.permute.xlu0 %8518
        %8523 = vst.msk [vmem:[#allocation8 + $0x4] sm:$0xf] %vm8478, %v8515
        %8524 = vst.msk [vmem:[#allocation8 + $0x18] sm:$0xf] %vm8478, %v8517
        %8525 = vst.msk [vmem:[#allocation8 + $0x2c] sm:$0xf] %vm8478, %v8519
        %v8526 = vld [vmem:[#allocation7 + $0x7] sm:$0xff]
        %v8527 = vld [vmem:[#allocation7 + $0xf] sm:$0xff]
        %v8528 = vld [vmem:[#allocation7 + $0x17] sm:$0xff]
        %v8529 = vpack.c.bf16 %v8527, %v8526
        %v8530 = vpack.c.bf16 %v8528, %v8528
        %v8533 = vunpack.c.l.b16 %v8529
        %v8534 = vunpack.c.h.b16 %v8529
        %v8535 = vunpack.c.l.b16 %v8530
        %v8536 = vpack.c.b16 %v8533, %v8533
        %v8537 = vpack.c.b16 %v8534, %v8534
        %v8538 = vpack.c.b16 %v8535, %v8535
        %8542 = vst.msk [vmem:[#allocation8 + $0x8] sm:$0xf] %vm8435, %v8536
        %8543 = vst.msk [vmem:[#allocation8 + $0x1c] sm:$0xf] %vm8435, %v8537
        %8544 = vst.msk [vmem:[#allocation8 + $0x30] sm:$0xf] %vm8435, %v8538
        %v8545 = vld [vmem:[#allocation7 + $0x8] sm:$0xff]
        %v8546 = vld [vmem:[#allocation7 + $0x10] sm:$0xff]
        %v8547 = vld [vmem:[#allocation7 + $0x18] sm:$0xff]
        %v8548 = vpack.c.bf16 %v8546, %v8545
        %v8549 = vpack.c.bf16 %v8547, %v8547
        %v8552 = vunpack.c.l.b16 %v8548
        %v8553 = vunpack.c.h.b16 %v8548
        %v8554 = vunpack.c.l.b16 %v8549
        %v8555 = vpack.c.b16 %v8552, %v8552
        %v8556 = vpack.c.b16 %v8553, %v8553
        %v8557 = vpack.c.b16 %v8554, %v8554
        %8558 = vrot.lane.b32.xlu0 %v8555, 64
        %v8559 = vpop.permute.xlu0 %8558
        %8560 = vrot.lane.b32.xlu0 %v8556, 64
        %v8561 = vpop.permute.xlu0 %8560
        %8562 = vrot.lane.b32.xlu0 %v8557, 64
        %v8563 = vpop.permute.xlu0 %8562
        %8567 = vst.msk [vmem:[#allocation8 + $0x8] sm:$0xf] %vm8478, %v8559
        %8568 = vst.msk [vmem:[#allocation8 + $0x1c] sm:$0xf] %vm8478, %v8561
        %8569 = vst.msk [vmem:[#allocation8 + $0x30] sm:$0xf] %vm8478, %v8563
        %v8570 = vld [vmem:[#allocation7 + $0xc] sm:$0xff]
        %v8571 = vld [vmem:[#allocation7 + $0x14] sm:$0xff]
        %v8572 = vld [vmem:[#allocation7 + $0x1c] sm:$0xff]
        %v8573 = vpack.c.bf16 %v8571, %v8570
        %v8574 = vpack.c.bf16 %v8572, %v8572
        %v8577 = vunpack.c.l.b16 %v8573
        %v8578 = vunpack.c.h.b16 %v8573
        %v8579 = vunpack.c.l.b16 %v8574
        %v8580 = vpack.c.b16 %v8577, %v8577
        %v8581 = vpack.c.b16 %v8578, %v8578
        %v8582 = vpack.c.b16 %v8579, %v8579
        %8586 = vst.msk [vmem:[#allocation8 + $0xc] sm:$0xf] %vm8435, %v8580
        %8587 = vst.msk [vmem:[#allocation8 + $0x20] sm:$0xf] %vm8435, %v8581
        %8588 = vst.msk [vmem:[#allocation8 + $0x34] sm:$0xf] %vm8435, %v8582
        %v8589 = vld [vmem:[#allocation7 + $0xd] sm:$0xff]
        %v8590 = vld [vmem:[#allocation7 + $0x15] sm:$0xff]
        %v8591 = vld [vmem:[#allocation7 + $0x1d] sm:$0xff]
        %v8592 = vpack.c.bf16 %v8590, %v8589
        %v8593 = vpack.c.bf16 %v8591, %v8591
        %v8596 = vunpack.c.l.b16 %v8592
        %v8597 = vunpack.c.h.b16 %v8592
        %v8598 = vunpack.c.l.b16 %v8593
        %v8599 = vpack.c.b16 %v8596, %v8596
        %v8600 = vpack.c.b16 %v8597, %v8597
        %v8601 = vpack.c.b16 %v8598, %v8598
        %8602 = vrot.lane.b32.xlu0 %v8599, 64
        %v8603 = vpop.permute.xlu0 %8602
        %8604 = vrot.lane.b32.xlu0 %v8600, 64
        %v8605 = vpop.permute.xlu0 %8604
        %8606 = vrot.lane.b32.xlu0 %v8601, 64
        %v8607 = vpop.permute.xlu0 %8606
        %8611 = vst.msk [vmem:[#allocation8 + $0xc] sm:$0xf] %vm8478, %v8603
        %8612 = vst.msk [vmem:[#allocation8 + $0x20] sm:$0xf] %vm8478, %v8605
        %8613 = vst.msk [vmem:[#allocation8 + $0x34] sm:$0xf] %vm8478, %v8607
        %v8614 = vld [vmem:[#allocation7 + $0xe] sm:$0xff]
        %v8615 = vld [vmem:[#allocation7 + $0x16] sm:$0xff]
        %v8616 = vld [vmem:[#allocation7 + $0x1e] sm:$0xff]
        %v8617 = vpack.c.bf16 %v8615, %v8614
        %v8618 = vpack.c.bf16 %v8616, %v8616
        %v8621 = vunpack.c.l.b16 %v8617
        %v8622 = vunpack.c.h.b16 %v8617
        %v8623 = vunpack.c.l.b16 %v8618
        %v8624 = vpack.c.b16 %v8621, %v8621
        %v8625 = vpack.c.b16 %v8622, %v8622
        %v8626 = vpack.c.b16 %v8623, %v8623
        %8630 = vst.msk [vmem:[#allocation8 + $0x10] sm:$0xf] %vm8435, %v8624
        %8631 = vst.msk [vmem:[#allocation8 + $0x24] sm:$0xf] %vm8435, %v8625
        %8632 = vst.msk [vmem:[#allocation8 + $0x38] sm:$0xf] %vm8435, %v8626
        %v8633 = vld [vmem:[#allocation8] sm:$0xff]
        %v8634 = vld [vmem:[#allocation8 + $0x8] sm:$0xff]
        %v8635 = vld [vmem:[#allocation8 + $0x10] sm:$0xf]
        %v8636 = vld [vmem:[#allocation8 + $0x14] sm:$0xff]
        %v8637 = vld [vmem:[#allocation8 + $0x1c] sm:$0xff]
        %v8638 = vld [vmem:[#allocation8 + $0x24] sm:$0xf]
        %v8639 = vld [vmem:[#allocation8 + $0x28] sm:$0xff]
        %v8640 = vld [vmem:[#allocation8 + $0x30] sm:$0xff]
        %v8641 = vld [vmem:[#allocation8 + $0x38] sm:$0xf]
        %v8642 = vld [vmem:[%s5] sm:$0xf]
        %v8643 = vld [vmem:[%s5 + $0x4] sm:$0xf]
        %v8644 = vld [vmem:[%s5 + $0x8] sm:$0xf]
        %v8645 = vld [vmem:[%s5 + $0xc] sm:$0xf]
        %v8646 = vld [vmem:[%s5 + $0x10] sm:$0xf]
        %v8647 = vld [vmem:[%s5 + $0x14] sm:$0xf]
        %v8648 = vld [vmem:[%s5 + $0x18] sm:$0xf]
        %v8649 = vld [vmem:[%s5 + $0x1c] sm:$0xf]
        %v8650 = vld [vmem:[%s5 + $0x20] sm:$0xf]
        %v8651 = vld [vmem:[%s5 + $0x24] sm:$0xf]
        %v8652 = vld [vmem:[%s5 + $0x28] sm:$0xf]
        %v8653 = vld [vmem:[%s5 + $0x2c] sm:$0xf]
        %v8654 = vld [vmem:[%s5 + $0x30] sm:$0xf]
        %v8655 = vld [vmem:[%s5 + $0x34] sm:$0xf]
        %v8656 = vld [vmem:[%s5 + $0x38] sm:$0xf]
        %v8657 = vld [vmem:[%s5 + $0x3c] sm:$0xf]
        %v8658 = vld [vmem:[%s5 + $0x40] sm:$0xf]
        %v8659 = vld [vmem:[%s5 + $0x44] sm:$0xf]
        %v8660 = vld [vmem:[%s5 + $0x48] sm:$0xf]
        %v8661 = vld [vmem:[%s5 + $0x4c] sm:$0xf]
        %v8662 = vld [vmem:[%s5 + $0x50] sm:$0xf]
        %v8663 = vld [vmem:[%s5 + $0x54] sm:$0xf]
        %v8664 = vld [vmem:[%s5 + $0x58] sm:$0xf]
        %v8665 = vld [vmem:[%s5 + $0x5c] sm:$0xf]
        %v8666 = vld [vmem:[%s5 + $0x60] sm:$0xf]
        %v8667 = vld [vmem:[%s5 + $0x64] sm:$0xf]
        %v8668 = vld [vmem:[%s5 + $0x68] sm:$0xf]
        %v8669 = vld [vmem:[%s5 + $0x6c] sm:$0xf]
        %v8670 = vld [vmem:[%s5 + $0x70] sm:$0xf]
        %v8671 = vld [vmem:[%s5 + $0x74] sm:$0xf]
        %v8672 = vld [vmem:[%s5 + $0x78] sm:$0xf]
        %v8673 = vld [vmem:[%s5 + $0x7c] sm:$0xf]
        %v8674 = vld [vmem:[%s5 + $0x80] sm:$0xf]
        %v8675 = vld [vmem:[%s5 + $0x84] sm:$0xf]
        %v8676 = vld [vmem:[%s5 + $0x88] sm:$0xf]
        %v8677 = vld [vmem:[%s5 + $0x8c] sm:$0xf]
        %v8678 = vld [vmem:[%s5 + $0x90] sm:$0xf]
        %v8679 = vld [vmem:[%s5 + $0x94] sm:$0xf]
        %v8680 = vld [vmem:[%s5 + $0x98] sm:$0xf]
        %v8681 = vld [vmem:[%s5 + $0x9c] sm:$0xf]
        %v8682 = vld [vmem:[%s5 + $0xa0] sm:$0xf]
        %v8683 = vld [vmem:[%s5 + $0xa4] sm:$0xf]
        %v8684 = vld [vmem:[%s5 + $0xa8] sm:$0xf]
        %v8685 = vld [vmem:[%s5 + $0xac] sm:$0xf]
        %v8686 = vld [vmem:[%s5 + $0xb0] sm:$0xf]
        %v8687 = vld [vmem:[%s5 + $0xb4] sm:$0xf]
        %v8688 = vld [vmem:[%s5 + $0xb8] sm:$0xf]
        %v8689 = vld [vmem:[%s5 + $0xbc] sm:$0xf]
        %v8690 = vld [vmem:[%s5 + $0xc0] sm:$0xf]
        %v8691 = vld [vmem:[%s5 + $0xc4] sm:$0xf]
        %v8692 = vld [vmem:[%s5 + $0xc8] sm:$0xf]
        %v8693 = vld [vmem:[%s5 + $0xcc] sm:$0xf]
        %v8694 = vld [vmem:[%s5 + $0xd0] sm:$0xf]
        %v8695 = vld [vmem:[%s5 + $0xd4] sm:$0xf]
        %v8696 = vld [vmem:[%s5 + $0xd8] sm:$0xf]
        %v8697 = vld [vmem:[%s5 + $0xdc] sm:$0xf]
        %v8698 = vld [vmem:[%s5 + $0xe0] sm:$0xf]
        %v8699 = vld [vmem:[%s5 + $0xe4] sm:$0xf]
        %v8700 = vld [vmem:[%s5 + $0xe8] sm:$0xf]
        %v8701 = vld [vmem:[%s5 + $0xec] sm:$0xf]
        %v8702 = vld [vmem:[%s5 + $0xf0] sm:$0xf]
        %v8703 = vld [vmem:[%s5 + $0xf4] sm:$0xf]
        %v8704 = vld [vmem:[%s5 + $0xf8] sm:$0xf]
        %v8705 = vld [vmem:[%s5 + $0xfc] sm:$0xf]
        %v8706 = vld [vmem:[%s5 + $0x100] sm:$0xf]
        %v8707 = vld [vmem:[%s5 + $0x104] sm:$0xf]
        %v8708 = vld [vmem:[%s5 + $0x108] sm:$0xf]
        %v8709 = vld [vmem:[%s5 + $0x10c] sm:$0xf]
        %v8710 = vld [vmem:[%s5 + $0x110] sm:$0xf]
        %v8711 = vld [vmem:[%s5 + $0x114] sm:$0xf]
        %v8712 = vld [vmem:[%s5 + $0x118] sm:$0xf]
        %v8713 = vld [vmem:[%s5 + $0x11c] sm:$0xf]
        %v8723 = vunpack.c.l.b16 %v8633
        %v8724 = vunpack.c.h.b16 %v8633
        %v8725 = vunpack.c.l.b16 %v8634
        %v8726 = vunpack.c.h.b16 %v8634
        %v8727 = vunpack.c.l.b16 %v8635
        %v8728 = vunpack.c.l.b16 %v8636
        %v8729 = vunpack.c.h.b16 %v8636
        %v8730 = vunpack.c.l.b16 %v8637
        %v8731 = vunpack.c.h.b16 %v8637
        %v8732 = vunpack.c.l.b16 %v8638
        %v8733 = vunpack.c.l.b16 %v8639
        %v8734 = vunpack.c.h.b16 %v8639
        %v8735 = vunpack.c.l.b16 %v8640
        %v8736 = vunpack.c.h.b16 %v8640
        %v8737 = vunpack.c.l.b16 %v8641
        %v8738 = vpack.c.b16 %v8728, %v8723
        %v8739 = vpack.c.b16 %v8729, %v8724
        %v8740 = vpack.c.b16 %v8730, %v8725
        %v8741 = vpack.c.b16 %v8731, %v8726
        %v8742 = vpack.c.b16 %v8732, %v8727
        %v8743 = vpack.c.b16 %v8733, %v8733
        %v8744 = vpack.c.b16 %v8734, %v8734
        %v8745 = vpack.c.b16 %v8735, %v8735
        %v8746 = vpack.c.b16 %v8736, %v8736
        %v8747 = vpack.c.b16 %v8737, %v8737
        %v8828 = vunpack.c.l.b16 %v8642
        %v8829 = vunpack.c.l.b16 %v8643
        %v8830 = vunpack.c.l.b16 %v8644
        %v8831 = vunpack.c.l.b16 %v8645
        %v8832 = vunpack.c.l.b16 %v8646
        %v8833 = vunpack.c.l.b16 %v8647
        %v8834 = vunpack.c.l.b16 %v8648
        %v8835 = vunpack.c.l.b16 %v8649
        %v8836 = vunpack.c.l.b16 %v8650
        %v8837 = vunpack.c.l.b16 %v8651
        %v8838 = vunpack.c.l.b16 %v8652
        %v8839 = vunpack.c.l.b16 %v8653
        %v8840 = vunpack.c.l.b16 %v8654
        %v8841 = vunpack.c.l.b16 %v8655
        %v8842 = vunpack.c.l.b16 %v8656
        %v8843 = vunpack.c.l.b16 %v8657
        %v8844 = vunpack.c.l.b16 %v8658
        %v8845 = vunpack.c.l.b16 %v8659
        %v8846 = vunpack.c.l.b16 %v8660
        %v8847 = vunpack.c.l.b16 %v8661
        %v8848 = vunpack.c.l.b16 %v8662
        %v8849 = vunpack.c.l.b16 %v8663
        %v8850 = vunpack.c.l.b16 %v8664
        %v8851 = vunpack.c.l.b16 %v8665
        %v8852 = vunpack.c.l.b16 %v8666
        %v8853 = vunpack.c.l.b16 %v8667
        %v8854 = vunpack.c.l.b16 %v8668
        %v8855 = vunpack.c.l.b16 %v8669
        %v8856 = vunpack.c.l.b16 %v8670
        %v8857 = vunpack.c.l.b16 %v8671
        %v8858 = vunpack.c.l.b16 %v8672
        %v8859 = vunpack.c.l.b16 %v8673
        %v8860 = vunpack.c.l.b16 %v8674
        %v8861 = vunpack.c.l.b16 %v8675
        %v8862 = vunpack.c.l.b16 %v8676
        %v8863 = vunpack.c.l.b16 %v8677
        %v8864 = vunpack.c.l.b16 %v8678
        %v8865 = vunpack.c.l.b16 %v8679
        %v8866 = vunpack.c.l.b16 %v8680
        %v8867 = vunpack.c.l.b16 %v8681
        %v8868 = vunpack.c.l.b16 %v8682
        %v8869 = vunpack.c.l.b16 %v8683
        %v8870 = vunpack.c.l.b16 %v8684
        %v8871 = vunpack.c.l.b16 %v8685
        %v8872 = vunpack.c.l.b16 %v8686
        %v8873 = vunpack.c.l.b16 %v8687
        %v8874 = vunpack.c.l.b16 %v8688
        %v8875 = vunpack.c.l.b16 %v8689
        %v8876 = vunpack.c.l.b16 %v8690
        %v8877 = vunpack.c.l.b16 %v8691
        %v8878 = vunpack.c.l.b16 %v8692
        %v8879 = vunpack.c.l.b16 %v8693
        %v8880 = vunpack.c.l.b16 %v8694
        %v8881 = vunpack.c.l.b16 %v8695
        %v8882 = vunpack.c.l.b16 %v8696
        %v8883 = vunpack.c.l.b16 %v8697
        %v8884 = vunpack.c.l.b16 %v8698
        %v8885 = vunpack.c.l.b16 %v8699
        %v8886 = vunpack.c.l.b16 %v8700
        %v8887 = vunpack.c.l.b16 %v8701
        %v8888 = vunpack.c.l.b16 %v8702
        %v8889 = vunpack.c.l.b16 %v8703
        %v8890 = vunpack.c.l.b16 %v8704
        %v8891 = vunpack.c.l.b16 %v8705
        %v8892 = vunpack.c.l.b16 %v8706
        %v8893 = vunpack.c.l.b16 %v8707
        %v8894 = vunpack.c.l.b16 %v8708
        %v8895 = vunpack.c.l.b16 %v8709
        %v8896 = vunpack.c.l.b16 %v8710
        %v8897 = vunpack.c.l.b16 %v8711
        %v8898 = vunpack.c.l.b16 %v8712
        %v8899 = vunpack.c.l.b16 %v8713
        %v8900 = vpack.c.b16 %v8829, %v8828
        %v8901 = vpack.c.b16 %v8831, %v8830
        %v8902 = vpack.c.b16 %v8833, %v8832
        %v8903 = vpack.c.b16 %v8835, %v8834
        %v8904 = vpack.c.b16 %v8837, %v8836
        %v8905 = vpack.c.b16 %v8839, %v8838
        %v8906 = vpack.c.b16 %v8841, %v8840
        %v8907 = vpack.c.b16 %v8843, %v8842
        %v8908 = vpack.c.b16 %v8845, %v8844
        %v8909 = vpack.c.b16 %v8847, %v8846
        %v8910 = vpack.c.b16 %v8849, %v8848
        %v8911 = vpack.c.b16 %v8851, %v8850
        %v8912 = vpack.c.b16 %v8853, %v8852
        %v8913 = vpack.c.b16 %v8855, %v8854
        %v8914 = vpack.c.b16 %v8857, %v8856
        %v8915 = vpack.c.b16 %v8859, %v8858
        %v8916 = vpack.c.b16 %v8861, %v8860
        %v8917 = vpack.c.b16 %v8863, %v8862
        %v8918 = vpack.c.b16 %v8865, %v8864
        %v8919 = vpack.c.b16 %v8867, %v8866
        %v8920 = vpack.c.b16 %v8869, %v8868
        %v8921 = vpack.c.b16 %v8871, %v8870
        %v8922 = vpack.c.b16 %v8873, %v8872
        %v8923 = vpack.c.b16 %v8875, %v8874
        %v8924 = vpack.c.b16 %v8877, %v8876
        %v8925 = vpack.c.b16 %v8879, %v8878
        %v8926 = vpack.c.b16 %v8881, %v8880
        %v8927 = vpack.c.b16 %v8883, %v8882
        %v8928 = vpack.c.b16 %v8885, %v8884
        %v8929 = vpack.c.b16 %v8887, %v8886
        %v8930 = vpack.c.b16 %v8889, %v8888
        %v8931 = vpack.c.b16 %v8891, %v8890
        %v8932 = vpack.c.b16 %v8893, %v8892
        %v8933 = vpack.c.b16 %v8895, %v8894
        %v8934 = vpack.c.b16 %v8897, %v8896
        %v8935 = vpack.c.b16 %v8899, %v8898
        %v8973 = vsel %vm8282, %v8742, 0
        %v8976 = vsel %vm8282, %v8747, 0
        %8978 = vmatprep.subr.bf16.mxu0 0
        %8979 = vmatpush1.bf16.msra.mxu0 %v8900
        %8980 = vmatprep.subr.bf16.mxu0 0
        %8981 = vmatpush1.bf16.msra.mxu0 %v8901
        %8982 = vmatprep.subr.bf16.mxu0 0
        %8983 = vmatpush1.bf16.msra.mxu0 %v8902
        %8984 = vmatprep.subr.bf16.mxu0 0
        %8985 = vmatpush1.bf16.msra.mxu0 %v8903
        %8986 = vmatprep.subr.bf16.mxu0 0
        %8987 = vmatpush1.bf16.msra.mxu0 %v8904
        %8988 = vmatprep.subr.bf16.mxu0 0
        %8989 = vmatpush1.bf16.msra.mxu0 %v8905
        %8990 = vmatprep.subr.bf16.mxu0 0
        %8991 = vmatpush1.bf16.msra.mxu0 %v8906
        %8992 = vmatprep.subr.bf16.mxu0 0
        %8993 = vmatpush1.bf16.msra.mxu0 %v8907
        %8994 = vmatprep.subr.bf16.mxu0 0
        %8995 = vmatpush1.bf16.msra.mxu0 %v8908
        %8996 = vmatprep.subr.bf16.mxu0 0
        %8997 = vmatpush1.bf16.msra.mxu0 %v8909
        %8998 = vmatprep.subr.bf16.mxu0 0
        %8999 = vmatpush1.bf16.msra.mxu0 %v8910
        %9000 = vmatprep.subr.bf16.mxu0 0
        %9001 = vmatpush1.bf16.msra.mxu0 %v8911
        %9002 = vmatprep.subr.bf16.mxu0 0
        %9003 = vmatpush1.bf16.msra.mxu0 %v8912
        %9004 = vmatprep.subr.bf16.mxu0 0
        %9005 = vmatpush1.bf16.msra.mxu0 %v8913
        %9006 = vmatprep.subr.bf16.mxu0 0
        %9007 = vmatpush1.bf16.msra.mxu0 %v8914
        %9008 = vmatprep.subr.bf16.mxu0 0
        %9009 = vmatpush1.bf16.msra.mxu0 %v8915
        %9010 = vmatprep.mubr.bf16.mxu0 %v8739
        %9011 = vmatmul.mubr.bf16.gmra.mrb[0].mxu0 %v8738
        %v9012 = vpop.f32.mrb[0].mxu0
        %v9013 = vadd.f32 0.0, %v9012
        %v9014 = vpop.f32.mrb[0].mxu0
        %v9015 = vpop.f32.mrb[0].mxu0
        %v9016 = vadd.f32 0.0, %v9015
        %v9017 = vpop.f32.mrb[0].mxu0
        %9018 = vmatprep.mubr.bf16.mxu0 %v8744
        %9019 = vmatmul.mubr.bf16.gmra.mrb[0].mxu0 %v8743
        %v9020 = vpop.f32.mrb[0].mxu0
        %v9021 = vadd.f32 0.0, %v9020
        %v9022 = vpop.f32.mrb[0].mxu0
        %v9023 = vpop.f32.mrb[0].mxu0
        %v9024 = vpop.f32.mrb[0].mxu0
        %9025 = vdwg.mxu0
        %9026 = vmatprep.subr.bf16.mxu0 0
        %9027 = vmatpush1.bf16.msra.mxu0 %v8916
        %9028 = vmatprep.subr.bf16.mxu0 0
        %9029 = vmatpush1.bf16.msra.mxu0 %v8917
        %9030 = vmatprep.subr.bf16.mxu0 0
        %9031 = vmatpush1.bf16.msra.mxu0 %v8918
        %9032 = vmatprep.subr.bf16.mxu0 0
        %9033 = vmatpush1.bf16.msra.mxu0 %v8919
        %9034 = vmatprep.subr.bf16.mxu0 0
        %9035 = vmatpush1.bf16.msra.mxu0 %v8920
        %9036 = vmatprep.subr.bf16.mxu0 0
        %9037 = vmatpush1.bf16.msra.mxu0 %v8921
        %9038 = vmatprep.subr.bf16.mxu0 0
        %9039 = vmatpush1.bf16.msra.mxu0 %v8922
        %9040 = vmatprep.subr.bf16.mxu0 0
        %9041 = vmatpush1.bf16.msra.mxu0 %v8923
        %9042 = vmatprep.subr.bf16.mxu0 0
        %9043 = vmatpush1.bf16.msra.mxu0 %v8924
        %9044 = vmatprep.subr.bf16.mxu0 0
        %9045 = vmatpush1.bf16.msra.mxu0 %v8925
        %9046 = vmatprep.subr.bf16.mxu0 0
        %9047 = vmatpush1.bf16.msra.mxu0 %v8926
        %9048 = vmatprep.subr.bf16.mxu0 0
        %9049 = vmatpush1.bf16.msra.mxu0 %v8927
        %9050 = vmatprep.subr.bf16.mxu0 0
        %9051 = vmatpush1.bf16.msra.mxu0 %v8928
        %9052 = vmatprep.subr.bf16.mxu0 0
        %9053 = vmatpush1.bf16.msra.mxu0 %v8929
        %9054 = vmatprep.subr.bf16.mxu0 0
        %9055 = vmatpush1.bf16.msra.mxu0 %v8930
        %9056 = vmatprep.subr.bf16.mxu0 0
        %9057 = vmatpush1.bf16.msra.mxu0 %v8931
        %9058 = vmatprep.mubr.bf16.mxu0 %v8741
        %9059 = vmatmul.mubr.bf16.gmra.mrb[0].mxu0 %v8740
        %v9060 = vpop.f32.mrb[0].mxu0
        %v9061 = vadd.f32 %v9013, %v9060
        %v9062 = vpop.f32.mrb[0].mxu0
        %v9063 = vpop.f32.mrb[0].mxu0
        %v9064 = vadd.f32 %v9016, %v9063
        %v9065 = vpop.f32.mrb[0].mxu0
        %9066 = vmatprep.mubr.bf16.mxu0 %v8746
        %9067 = vmatmul.mubr.bf16.gmra.mrb[0].mxu0 %v8745
        %v9068 = vpop.f32.mrb[0].mxu0
        %v9069 = vadd.f32 %v9021, %v9068
        %v9070 = vpop.f32.mrb[0].mxu0
        %v9071 = vpop.f32.mrb[0].mxu0
        %v9072 = vpop.f32.mrb[0].mxu0
        %9073 = vdwg.mxu0
        %9074 = vmatprep.subr.bf16.mxu0 0
        %9075 = vmatpush1.bf16.msra.mxu0 %v8932
        %9076 = vmatprep.subr.bf16.mxu0 0
        %9077 = vmatpush1.bf16.msra.mxu0 %v8933
        %9078 = vmatprep.subr.bf16.mxu0 0
        %9079 = vmatpush1.bf16.msra.mxu0 %v8934
        %9080 = vmatprep.subr.bf16.mxu0 0
        %9081 = vmatpush1.bf16.msra.mxu0 %v8935
        %9082 = vmatprep.subr.bf16.mxu0 0
        %9083 = vmatpush1.bf16.msra.mxu0 0
        %9084 = vmatprep.subr.bf16.mxu0 0
        %9085 = vmatpush1.bf16.msra.mxu0 0
        %9086 = vmatprep.subr.bf16.mxu0 0
        %9087 = vmatpush1.bf16.msra.mxu0 0
        %9088 = vmatprep.subr.bf16.mxu0 0
        %9089 = vmatpush1.bf16.msra.mxu0 0
        %9090 = vmatprep.subr.bf16.mxu0 0
        %9091 = vmatpush1.bf16.msra.mxu0 0
        %9092 = vmatprep.subr.bf16.mxu0 0
        %9093 = vmatpush1.bf16.msra.mxu0 0
        %9094 = vmatprep.subr.bf16.mxu0 0
        %9095 = vmatpush1.bf16.msra.mxu0 0
        %9096 = vmatprep.subr.bf16.mxu0 0
        %9097 = vmatpush1.bf16.msra.mxu0 0
        %9098 = vmatprep.subr.bf16.mxu0 0
        %9099 = vmatpush1.bf16.msra.mxu0 0
        %9100 = vmatprep.subr.bf16.mxu0 0
        %9101 = vmatpush1.bf16.msra.mxu0 0
        %9102 = vmatprep.subr.bf16.mxu0 0
        %9103 = vmatpush1.bf16.msra.mxu0 0
        %9104 = vmatprep.subr.bf16.mxu0 0
        %9105 = vmatpush1.bf16.msra.mxu0 0
        %9106 = vmatprep.mubr.bf16.mxu0 0
        %9107 = vmatmul.mubr.bf16.gmra.mrb[0].mxu0 %v8973
        %v9108 = vpop.f32.mrb[0].mxu0
        %v9109 = vadd.f32 %v9061, %v9108
        %v9110 = vpop.f32.mrb[0].mxu0
        %v9111 = vpop.f32.mrb[0].mxu0
        %v9112 = vadd.f32 %v9064, %v9111
        %v9113 = vpop.f32.mrb[0].mxu0
        %9114 = vmatprep.mubr.bf16.mxu0 0
        %9115 = vmatmul.mubr.bf16.gmra.mrb[0].mxu0 %v8976
        %v9116 = vpop.f32.mrb[0].mxu0
        %v9117 = vadd.f32 %v9069, %v9116
        %v9118 = vpop.f32.mrb[0].mxu0
        %v9119 = vpop.f32.mrb[0].mxu0
        %v9120 = vpop.f32.mrb[0].mxu0
        %9121 = vdwg.mxu0
        %9122 = vst [vmem:[#allocation9] sm:$0xff] %v9109
        %9123 = vst [vmem:[#allocation9 + $0x8] sm:$0xff] %v9112
        %9124 = vst [vmem:[#allocation9 + $0x10] sm:$0xff] %v9117
        %v9125 = vld [vmem:[#allocation9] sm:$0x1]
        %v9126 = vld [vmem:[#allocation9 + $0x1] sm:$0x1]
        %v9127 = vmax.f32 %v9125, %v9126
        %v9128 = vld [vmem:[#allocation9 + $0x6] sm:$0x1]
        %v9129 = vld [vmem:[#allocation9 + $0x7] sm:$0x1]
        %v9130 = vmax.f32 %v9128, %v9129
        %v9131 = vmax.f32 %v9127, %v9130
        %v9132 = vld [vmem:[%s6] sm:$0x1]
        %v9133 = vadd.f32 %v9131, %v9132
        %v9134 = vmax.f32 %v9133, 0.0
        %v9135 = vpack.c.bf16 %v9134, %v9134
        %vm9136 = vcmask 1040384
        %vm9137 = vsmask.f32 256
        %vm9138 = vmand %vm9136, %vm9137
        %v9139 = vld [vmem:[#allocation10] sm:$0x1]
        %v9140 = vsel %vm9138, %v9135, %v9139
        %9141 = vst [vmem:[#allocation10] sm:$0x1] %v9140
        %v9142 = vld [vmem:[#allocation9 + $0x2] sm:$0x1]
        %v9143 = vld [vmem:[#allocation9 + $0x3] sm:$0x1]
        %v9144 = vmax.f32 %v9142, %v9143
        %v9145 = vld [vmem:[#allocation9 + $0x8] sm:$0x1]
        %v9146 = vld [vmem:[#allocation9 + $0x9] sm:$0x1]
        %v9147 = vmax.f32 %v9145, %v9146
        %v9148 = vmax.f32 %v9144, %v9147
        %v9149 = vld [vmem:[%s6] sm:$0x1]
        %v9150 = vadd.f32 %v9148, %v9149
        %v9151 = vmax.f32 %v9150, 0.0
        %v9152 = vpack.c.bf16 %v9151, %v9151
        %v9153 = vld [vmem:[#allocation10 + $0x1] sm:$0x1]
        %v9154 = vsel %vm9138, %v9152, %v9153
        %9155 = vst [vmem:[#allocation10 + $0x1] sm:$0x1] %v9154
        %v9156 = vld [vmem:[#allocation9 + $0xc] sm:$0x1]
        %v9157 = vld [vmem:[#allocation9 + $0xd] sm:$0x1]
        %v9158 = vmax.f32 %v9156, %v9157
        %v9159 = vld [vmem:[#allocation9 + $0x12] sm:$0x1]
        %v9160 = vld [vmem:[#allocation9 + $0x13] sm:$0x1]
        %v9161 = vmax.f32 %v9159, %v9160
        %v9162 = vmax.f32 %v9158, %v9161
        %v9163 = vld [vmem:[%s6] sm:$0x1]
        %v9164 = vadd.f32 %v9162, %v9163
        %v9165 = vmax.f32 %v9164, 0.0
        %v9166 = vpack.c.bf16 %v9165, %v9165
        %v9167 = vld [vmem:[#allocation10 + $0x2] sm:$0x1]
        %v9168 = vsel %vm9138, %v9166, %v9167
        %9169 = vst [vmem:[#allocation10 + $0x2] sm:$0x1] %v9168
        %v9170 = vld [vmem:[#allocation9 + $0xe] sm:$0x1]
        %v9171 = vld [vmem:[#allocation9 + $0xf] sm:$0x1]
        %v9172 = vmax.f32 %v9170, %v9171
        %v9173 = vld [vmem:[#allocation9 + $0x14] sm:$0x1]
        %v9174 = vld [vmem:[#allocation9 + $0x15] sm:$0x1]
        %v9175 = vmax.f32 %v9173, %v9174
        %v9176 = vmax.f32 %v9172, %v9175
        %v9177 = vld [vmem:[%s6] sm:$0x1]
        %v9178 = vadd.f32 %v9176, %v9177
        %v9179 = vmax.f32 %v9178, 0.0
        %v9180 = vpack.c.bf16 %v9179, %v9179
        %v9181 = vld [vmem:[#allocation10 + $0x3] sm:$0x1]
        %v9182 = vsel %vm9138, %v9180, %v9181
        %9183 = vst [vmem:[#allocation10 + $0x3] sm:$0x1] %v9182
        %v9184 = vld [vmem:[#allocation10] sm:$0xf]
        %v9185 = vld [vmem:[%s7] sm:$0xf]
        %v9186 = vld [vmem:[%s7 + $0x4] sm:$0xf]
        %v9187 = vld [vmem:[%s7 + $0x8] sm:$0xf]
        %v9188 = vld [vmem:[%s7 + $0xc] sm:$0xf]
        %v9189 = vld [vmem:[%s7 + $0x10] sm:$0xf]
        %v9190 = vld [vmem:[%s7 + $0x14] sm:$0xf]
        %v9191 = vld [vmem:[%s7 + $0x18] sm:$0xf]
        %v9192 = vld [vmem:[%s7 + $0x1c] sm:$0xf]
        %v9193 = vld [vmem:[%s7 + $0x20] sm:$0xf]
        %v9194 = vld [vmem:[%s7 + $0x24] sm:$0xf]
        %v9195 = vld [vmem:[%s7 + $0x28] sm:$0xf]
        %v9196 = vld [vmem:[%s7 + $0x2c] sm:$0xf]
        %v9197 = vld [vmem:[%s7 + $0x30] sm:$0xf]
        %v9198 = vld [vmem:[%s7 + $0x34] sm:$0xf]
        %v9199 = vld [vmem:[%s7 + $0x38] sm:$0xf]
        %v9200 = vld [vmem:[%s7 + $0x3c] sm:$0xf]
        %v9201 = vld [vmem:[%s7 + $0x40] sm:$0xf]
        %v9202 = vld [vmem:[%s7 + $0x44] sm:$0xf]
        %v9203 = vld [vmem:[%s7 + $0x48] sm:$0xf]
        %v9204 = vld [vmem:[%s7 + $0x4c] sm:$0xf]
        %v9205 = vld [vmem:[%s7 + $0x50] sm:$0xf]
        %v9206 = vld [vmem:[%s7 + $0x54] sm:$0xf]
        %v9207 = vld [vmem:[%s7 + $0x58] sm:$0xf]
        %v9208 = vld [vmem:[%s7 + $0x5c] sm:$0xf]
        %v9209 = vld [vmem:[%s7 + $0x60] sm:$0xf]
        %v9210 = vld [vmem:[%s7 + $0x64] sm:$0xf]
        %v9211 = vld [vmem:[%s7 + $0x68] sm:$0xf]
        %v9212 = vld [vmem:[%s7 + $0x6c] sm:$0xf]
        %v9213 = vld [vmem:[%s7 + $0x70] sm:$0xf]
        %v9214 = vld [vmem:[%s7 + $0x74] sm:$0xf]
        %v9215 = vld [vmem:[%s7 + $0x78] sm:$0xf]
        %v9216 = vld [vmem:[%s7 + $0x7c] sm:$0xf]
        %v9217 = vld [vmem:[%s7 + $0x80] sm:$0xf]
        %v9218 = vld [vmem:[%s7 + $0x84] sm:$0xf]
        %v9219 = vld [vmem:[%s7 + $0x88] sm:$0xf]
        %v9220 = vld [vmem:[%s7 + $0x8c] sm:$0xf]
        %v9221 = vld [vmem:[%s7 + $0x90] sm:$0xf]
        %v9222 = vld [vmem:[%s7 + $0x94] sm:$0xf]
        %v9223 = vld [vmem:[%s7 + $0x98] sm:$0xf]
        %v9224 = vld [vmem:[%s7 + $0x9c] sm:$0xf]
        %v9225 = vld [vmem:[%s7 + $0xa0] sm:$0xf]
        %v9226 = vld [vmem:[%s7 + $0xa4] sm:$0xf]
        %v9227 = vld [vmem:[%s7 + $0xa8] sm:$0xf]
        %v9228 = vld [vmem:[%s7 + $0xac] sm:$0xf]
        %v9229 = vld [vmem:[%s7 + $0xb0] sm:$0xf]
        %v9230 = vld [vmem:[%s7 + $0xb4] sm:$0xf]
        %v9231 = vld [vmem:[%s7 + $0xb8] sm:$0xf]
        %v9232 = vld [vmem:[%s7 + $0xbc] sm:$0xf]
        %v9233 = vld [vmem:[%s7 + $0xc0] sm:$0xf]
        %v9234 = vld [vmem:[%s7 + $0xc4] sm:$0xf]
        %v9235 = vld [vmem:[%s7 + $0xc8] sm:$0xf]
        %v9236 = vld [vmem:[%s7 + $0xcc] sm:$0xf]
        %v9237 = vld [vmem:[%s7 + $0xd0] sm:$0xf]
        %v9238 = vld [vmem:[%s7 + $0xd4] sm:$0xf]
        %v9239 = vld [vmem:[%s7 + $0xd8] sm:$0xf]
        %v9240 = vld [vmem:[%s7 + $0xdc] sm:$0xf]
        %v9241 = vld [vmem:[%s7 + $0xe0] sm:$0xf]
        %v9242 = vld [vmem:[%s7 + $0xe4] sm:$0xf]
        %v9243 = vld [vmem:[%s7 + $0xe8] sm:$0xf]
        %v9244 = vld [vmem:[%s7 + $0xec] sm:$0xf]
        %v9245 = vld [vmem:[%s7 + $0xf0] sm:$0xf]
        %v9246 = vld [vmem:[%s7 + $0xf4] sm:$0xf]
        %v9247 = vld [vmem:[%s7 + $0xf8] sm:$0xf]
        %v9248 = vld [vmem:[%s7 + $0xfc] sm:$0xf]
        %v9249 = vld [vmem:[%s8] sm:$0x1]
        %v9252 = vunpack.c.l.s4 1966171168
        %v9253 = vunpack.c.0.s8 %v9252
        %v9254 = vlaneseq
        %v9255 = vshrl.u32 %v9254, 7
        %v9256 = vsub.s32 %v9253, %v9255
        %v9257 = vrot.slane %v9184, %v9256
        %v9258 = vcombine.high %v9257, %v9257
        %v9260 = vunpack.c.l.s4 1966171168
        %v9261 = vunpack.c.0.s8 %v9260
        %v9262 = vlaneseq
        %v9263 = vshrl.u32 %v9262, 7
        %v9264 = vsub.s32 %v9261, %v9263
        %v9265 = vrot.slane %v9257, %v9264
        %v9267 = vunpack.c.l.s4 1966171168
        %v9268 = vunpack.c.0.s8 %v9267
        %v9269 = vlaneseq
        %v9270 = vshrl.u32 %v9269, 7
        %v9271 = vsub.s32 %v9268, %v9270
        %v9272 = vrot.slane %v9258, %v9271
        %v9273 = vcombine.high %v9265, %v9265
        %v9274 = vcombine.high %v9272, %v9272
        %v9343 = vunpack.c.l.b16 %v9185
        %v9344 = vunpack.c.l.b16 %v9186
        %v9345 = vunpack.c.l.b16 %v9187
        %v9346 = vunpack.c.l.b16 %v9188
        %v9347 = vunpack.c.l.b16 %v9189
        %v9348 = vunpack.c.l.b16 %v9190
        %v9349 = vunpack.c.l.b16 %v9191
        %v9350 = vunpack.c.l.b16 %v9192
        %v9351 = vunpack.c.l.b16 %v9193
        %v9352 = vunpack.c.l.b16 %v9194
        %v9353 = vunpack.c.l.b16 %v9195
        %v9354 = vunpack.c.l.b16 %v9196
        %v9355 = vunpack.c.l.b16 %v9197
        %v9356 = vunpack.c.l.b16 %v9198
        %v9357 = vunpack.c.l.b16 %v9199
        %v9358 = vunpack.c.l.b16 %v9200
        %v9359 = vunpack.c.l.b16 %v9201
        %v9360 = vunpack.c.l.b16 %v9202
        %v9361 = vunpack.c.l.b16 %v9203
        %v9362 = vunpack.c.l.b16 %v9204
        %v9363 = vunpack.c.l.b16 %v9205
        %v9364 = vunpack.c.l.b16 %v9206
        %v9365 = vunpack.c.l.b16 %v9207
        %v9366 = vunpack.c.l.b16 %v9208
        %v9367 = vunpack.c.l.b16 %v9209
        %v9368 = vunpack.c.l.b16 %v9210
        %v9369 = vunpack.c.l.b16 %v9211
        %v9370 = vunpack.c.l.b16 %v9212
        %v9371 = vunpack.c.l.b16 %v9213
        %v9372 = vunpack.c.l.b16 %v9214
        %v9373 = vunpack.c.l.b16 %v9215
        %v9374 = vunpack.c.l.b16 %v9216
        %v9375 = vunpack.c.l.b16 %v9217
        %v9376 = vunpack.c.l.b16 %v9218
        %v9377 = vunpack.c.l.b16 %v9219
        %v9378 = vunpack.c.l.b16 %v9220
        %v9379 = vunpack.c.l.b16 %v9221
        %v9380 = vunpack.c.l.b16 %v9222
        %v9381 = vunpack.c.l.b16 %v9223
        %v9382 = vunpack.c.l.b16 %v9224
        %v9383 = vunpack.c.l.b16 %v9225
        %v9384 = vunpack.c.l.b16 %v9226
        %v9385 = vunpack.c.l.b16 %v9227
        %v9386 = vunpack.c.l.b16 %v9228
        %v9387 = vunpack.c.l.b16 %v9229
        %v9388 = vunpack.c.l.b16 %v9230
        %v9389 = vunpack.c.l.b16 %v9231
        %v9390 = vunpack.c.l.b16 %v9232
        %v9391 = vunpack.c.l.b16 %v9233
        %v9392 = vunpack.c.l.b16 %v9234
        %v9393 = vunpack.c.l.b16 %v9235
        %v9394 = vunpack.c.l.b16 %v9236
        %v9395 = vunpack.c.l.b16 %v9237
        %v9396 = vunpack.c.l.b16 %v9238
        %v9397 = vunpack.c.l.b16 %v9239
        %v9398 = vunpack.c.l.b16 %v9240
        %v9399 = vunpack.c.l.b16 %v9241
        %v9400 = vunpack.c.l.b16 %v9242
        %v9401 = vunpack.c.l.b16 %v9243
        %v9402 = vunpack.c.l.b16 %v9244
        %v9403 = vunpack.c.l.b16 %v9245
        %v9404 = vunpack.c.l.b16 %v9246
        %v9405 = vunpack.c.l.b16 %v9247
        %v9406 = vunpack.c.l.b16 %v9248
        %v9407 = vpack.c.b16 %v9344, %v9343
        %v9408 = vpack.c.b16 %v9346, %v9345
        %v9409 = vpack.c.b16 %v9348, %v9347
        %v9410 = vpack.c.b16 %v9350, %v9349
        %v9411 = vpack.c.b16 %v9352, %v9351
        %v9412 = vpack.c.b16 %v9354, %v9353
        %v9413 = vpack.c.b16 %v9356, %v9355
        %v9414 = vpack.c.b16 %v9358, %v9357
        %v9415 = vpack.c.b16 %v9360, %v9359
        %v9416 = vpack.c.b16 %v9362, %v9361
        %v9417 = vpack.c.b16 %v9364, %v9363
        %v9418 = vpack.c.b16 %v9366, %v9365
        %v9419 = vpack.c.b16 %v9368, %v9367
        %v9420 = vpack.c.b16 %v9370, %v9369
        %v9421 = vpack.c.b16 %v9372, %v9371
        %v9422 = vpack.c.b16 %v9374, %v9373
        %v9423 = vpack.c.b16 %v9376, %v9375
        %v9424 = vpack.c.b16 %v9378, %v9377
        %v9425 = vpack.c.b16 %v9380, %v9379
        %v9426 = vpack.c.b16 %v9382, %v9381
        %v9427 = vpack.c.b16 %v9384, %v9383
        %v9428 = vpack.c.b16 %v9386, %v9385
        %v9429 = vpack.c.b16 %v9388, %v9387
        %v9430 = vpack.c.b16 %v9390, %v9389
        %v9431 = vpack.c.b16 %v9392, %v9391
        %v9432 = vpack.c.b16 %v9394, %v9393
        %v9433 = vpack.c.b16 %v9396, %v9395
        %v9434 = vpack.c.b16 %v9398, %v9397
        %v9435 = vpack.c.b16 %v9400, %v9399
        %v9436 = vpack.c.b16 %v9402, %v9401
        %v9437 = vpack.c.b16 %v9404, %v9403
        %v9438 = vpack.c.b16 %v9406, %v9405
        %9471 = vmatprep.subr.bf16.mxu0 0
        %9472 = vmatpush1.bf16.msra.mxu0 %v9407
        %9473 = vmatprep.subr.bf16.mxu0 0
        %9474 = vmatpush1.bf16.msra.mxu0 %v9408
        %9475 = vmatprep.subr.bf16.mxu0 0
        %9476 = vmatpush1.bf16.msra.mxu0 %v9409
        %9477 = vmatprep.subr.bf16.mxu0 0
        %9478 = vmatpush1.bf16.msra.mxu0 %v9410
        %9479 = vmatprep.subr.bf16.mxu0 0
        %9480 = vmatpush1.bf16.msra.mxu0 %v9411
        %9481 = vmatprep.subr.bf16.mxu0 0
        %9482 = vmatpush1.bf16.msra.mxu0 %v9412
        %9483 = vmatprep.subr.bf16.mxu0 0
        %9484 = vmatpush1.bf16.msra.mxu0 %v9413
        %9485 = vmatprep.subr.bf16.mxu0 0
        %9486 = vmatpush1.bf16.msra.mxu0 %v9414
        %9487 = vmatprep.subr.bf16.mxu0 0
        %9488 = vmatpush1.bf16.msra.mxu0 %v9415
        %9489 = vmatprep.subr.bf16.mxu0 0
        %9490 = vmatpush1.bf16.msra.mxu0 %v9416
        %9491 = vmatprep.subr.bf16.mxu0 0
        %9492 = vmatpush1.bf16.msra.mxu0 %v9417
        %9493 = vmatprep.subr.bf16.mxu0 0
        %9494 = vmatpush1.bf16.msra.mxu0 %v9418
        %9495 = vmatprep.subr.bf16.mxu0 0
        %9496 = vmatpush1.bf16.msra.mxu0 %v9419
        %9497 = vmatprep.subr.bf16.mxu0 0
        %9498 = vmatpush1.bf16.msra.mxu0 %v9420
        %9499 = vmatprep.subr.bf16.mxu0 0
        %9500 = vmatpush1.bf16.msra.mxu0 %v9421
        %9501 = vmatprep.subr.bf16.mxu0 0
        %9502 = vmatpush1.bf16.msra.mxu0 %v9422
        %9503 = vmatprep.mubr.bf16.mxu0 %v9272
        %9504 = vmatmul.mubr.bf16.gmra.mrb[0].mxu0 %v9265
        %v9505 = vpop.f32.mrb[0].mxu0
        %v9506 = vadd.f32 %v9249, %v9505
        %v9507 = vpop.f32.mrb[0].mxu0
        %v9508 = vpop.f32.mrb[0].mxu0
        %v9509 = vpop.f32.mrb[0].mxu0
        %9510 = vdwg.mxu0
        %9511 = vmatprep.subr.bf16.mxu0 0
        %9512 = vmatpush1.bf16.msra.mxu0 %v9423
        %9513 = vmatprep.subr.bf16.mxu0 0
        %9514 = vmatpush1.bf16.msra.mxu0 %v9424
        %9515 = vmatprep.subr.bf16.mxu0 0
        %9516 = vmatpush1.bf16.msra.mxu0 %v9425
        %9517 = vmatprep.subr.bf16.mxu0 0
        %9518 = vmatpush1.bf16.msra.mxu0 %v9426
        %9519 = vmatprep.subr.bf16.mxu0 0
        %9520 = vmatpush1.bf16.msra.mxu0 %v9427
        %9521 = vmatprep.subr.bf16.mxu0 0
        %9522 = vmatpush1.bf16.msra.mxu0 %v9428
        %9523 = vmatprep.subr.bf16.mxu0 0
        %9524 = vmatpush1.bf16.msra.mxu0 %v9429
        %9525 = vmatprep.subr.bf16.mxu0 0
        %9526 = vmatpush1.bf16.msra.mxu0 %v9430
        %9527 = vmatprep.subr.bf16.mxu0 0
        %9528 = vmatpush1.bf16.msra.mxu0 %v9431
        %9529 = vmatprep.subr.bf16.mxu0 0
        %9530 = vmatpush1.bf16.msra.mxu0 %v9432
        %9531 = vmatprep.subr.bf16.mxu0 0
        %9532 = vmatpush1.bf16.msra.mxu0 %v9433
        %9533 = vmatprep.subr.bf16.mxu0 0
        %9534 = vmatpush1.bf16.msra.mxu0 %v9434
        %9535 = vmatprep.subr.bf16.mxu0 0
        %9536 = vmatpush1.bf16.msra.mxu0 %v9435
        %9537 = vmatprep.subr.bf16.mxu0 0
        %9538 = vmatpush1.bf16.msra.mxu0 %v9436
        %9539 = vmatprep.subr.bf16.mxu0 0
        %9540 = vmatpush1.bf16.msra.mxu0 %v9437
        %9541 = vmatprep.subr.bf16.mxu0 0
        %9542 = vmatpush1.bf16.msra.mxu0 %v9438
        %9543 = vmatprep.mubr.bf16.mxu0 %v9274
        %9544 = vmatmul.mubr.bf16.gmra.mrb[0].mxu0 %v9273
        %v9545 = vpop.f32.mrb[0].mxu0
        %v9546 = vadd.f32 %v9506, %v9545
        %v9547 = vpop.f32.mrb[0].mxu0
        %v9548 = vpop.f32.mrb[0].mxu0
        %v9549 = vpop.f32.mrb[0].mxu0
        %9550 = vdwg.mxu0
        %v9551 = vmax.f32 %v9546, 0.0
        %v9552 = vpack.c.bf16 %v9551, %v9551
        %v9553 = vld [vmem:[%s9] sm:$0xf]
        %v9554 = vld [vmem:[%s9 + $0x4] sm:$0xf]
        %v9555 = vld [vmem:[%s9 + $0x8] sm:$0xf]
        %v9556 = vld [vmem:[%s9 + $0xc] sm:$0xf]
        %v9557 = vld [vmem:[%s9 + $0x10] sm:$0xf]
        %v9558 = vld [vmem:[%s9 + $0x14] sm:$0xf]
        %v9559 = vld [vmem:[%s9 + $0x18] sm:$0xf]
        %v9560 = vld [vmem:[%s9 + $0x1c] sm:$0xf]
        %v9561 = vld [vmem:[%s9 + $0x20] sm:$0xf]
        %v9562 = vld [vmem:[%s9 + $0x24] sm:$0xf]
        %v9563 = vld [vmem:[%s9 + $0x28] sm:$0xf]
        %v9564 = vld [vmem:[%s9 + $0x2c] sm:$0xf]
        %v9565 = vld [vmem:[%s9 + $0x30] sm:$0xf]
        %v9566 = vld [vmem:[%s9 + $0x34] sm:$0xf]
        %v9567 = vld [vmem:[%s9 + $0x38] sm:$0xf]
        %v9568 = vld [vmem:[%s9 + $0x3c] sm:$0xf]
        %v9569 = vld [vmem:[%s10] sm:$0x1]
        %v9586 = vunpack.c.l.b16 %v9553
        %v9587 = vunpack.c.l.b16 %v9554
        %v9588 = vunpack.c.l.b16 %v9555
        %v9589 = vunpack.c.l.b16 %v9556
        %v9590 = vunpack.c.l.b16 %v9557
        %v9591 = vunpack.c.l.b16 %v9558
        %v9592 = vunpack.c.l.b16 %v9559
        %v9593 = vunpack.c.l.b16 %v9560
        %v9594 = vunpack.c.l.b16 %v9561
        %v9595 = vunpack.c.l.b16 %v9562
        %v9596 = vunpack.c.l.b16 %v9563
        %v9597 = vunpack.c.l.b16 %v9564
        %v9598 = vunpack.c.l.b16 %v9565
        %v9599 = vunpack.c.l.b16 %v9566
        %v9600 = vunpack.c.l.b16 %v9567
        %v9601 = vunpack.c.l.b16 %v9568
        %v9602 = vpack.c.b16 %v9587, %v9586
        %v9603 = vpack.c.b16 %v9589, %v9588
        %v9604 = vpack.c.b16 %v9591, %v9590
        %v9605 = vpack.c.b16 %v9593, %v9592
        %v9606 = vpack.c.b16 %v9595, %v9594
        %v9607 = vpack.c.b16 %v9597, %v9596
        %v9608 = vpack.c.b16 %v9599, %v9598
        %v9609 = vpack.c.b16 %v9601, %v9600
        %9618 = vmatprep.subr.bf16.mxu0 0
        %9619 = vmatpush1.bf16.msra.mxu0 %v9602
        %9620 = vmatprep.subr.bf16.mxu0 0
        %9621 = vmatpush1.bf16.msra.mxu0 %v9603
        %9622 = vmatprep.subr.bf16.mxu0 0
        %9623 = vmatpush1.bf16.msra.mxu0 %v9604
        %9624 = vmatprep.subr.bf16.mxu0 0
        %9625 = vmatpush1.bf16.msra.mxu0 %v9605
        %9626 = vmatprep.subr.bf16.mxu0 0
        %9627 = vmatpush1.bf16.msra.mxu0 %v9606
        %9628 = vmatprep.subr.bf16.mxu0 0
        %9629 = vmatpush1.bf16.msra.mxu0 %v9607
        %9630 = vmatprep.subr.bf16.mxu0 0
        %9631 = vmatpush1.bf16.msra.mxu0 %v9608
        %9632 = vmatprep.subr.bf16.mxu0 0
        %9633 = vmatpush1.bf16.msra.mxu0 %v9609
        %9634 = vmatprep.subr.bf16.mxu0 0
        %9635 = vmatpush1.bf16.msra.mxu0 0
        %9636 = vmatprep.subr.bf16.mxu0 0
        %9637 = vmatpush1.bf16.msra.mxu0 0
        %9638 = vmatprep.subr.bf16.mxu0 0
        %9639 = vmatpush1.bf16.msra.mxu0 0
        %9640 = vmatprep.subr.bf16.mxu0 0
        %9641 = vmatpush1.bf16.msra.mxu0 0
        %9642 = vmatprep.subr.bf16.mxu0 0
        %9643 = vmatpush1.bf16.msra.mxu0 0
        %9644 = vmatprep.subr.bf16.mxu0 0
        %9645 = vmatpush1.bf16.msra.mxu0 0
        %9646 = vmatprep.subr.bf16.mxu0 0
        %9647 = vmatpush1.bf16.msra.mxu0 0
        %9648 = vmatprep.subr.bf16.mxu0 0
        %9649 = vmatpush1.bf16.msra.mxu0 0
        %9650 = vmatprep.mubr.bf16.mxu0 0
        %9651 = vmatmul.mubr.bf16.gmra.mrb[0].mxu0 %v9552
        %v9652 = vpop.f32.mrb[0].mxu0
        %v9653 = vadd.f32 %v9569, %v9652
        %v9654 = vpop.f32.mrb[0].mxu0
        %v9655 = vpop.f32.mrb[0].mxu0
        %v9656 = vpop.f32.mrb[0].mxu0
        %9657 = vdwg.mxu0
        %vm9658 = vcmask 24576
        %v9659 = vsel %vm9658, %v9653, -inf
        %9660 = vmax.xlane.f32.xlu0 %v9659
        %v9661 = vpop.xlane.xlu0 %9660
        %v9662 = vsub.f32 %v9653, %v9661
        %v9663 = vmul.f32 %v9662, 1.442695
        %v9664 = vpow.pop %v9663
        %v9665 = vsel %vm9658, %v9664, 0.0
        %9666 = vadd.xlane.f32.xlu0 %v9665
        %v9667 = vpop.xlane.xlu0 %9666
        %v9668 = vrcp.pop %v9667
        %v9669 = vmul.f32 %v9664, %v9668
        %9670 = vst.msk [vmem:[%s378] sm:$0x1] %vm9658, %v9669
        %s9671 = sand.u32 %s269, 1
        %s9672 = scalar_lea.sflag [#allocation12], %s9671
        %s9673 = sand.u32 %s269, 1
        %s9674 = scalar_lea.vmem [#allocation11], %s9673
        // Predicated region
        $region65: #{ripeness_classifier_forward.1} parent=63 // pred_check
          %p9675 = pneg %p279
        $region66: #{ripeness_classifier_forward.1} parent=63 // pred_check_branch
          %9677 = sbr.rel (%p9675) target = $region68
        $region67: #{ripeness_classifier_forward.1} parent=63 // pred_region
          %s9679 = ssub.s32 16, 16
          %9680 = vsyncadd %s9672, %s9679
          %s9681 = smul.addr %s25, 16
          %s9682 = scalar_lea.hbm %s11, %s9681
          %s9684 = sshll.u32 %s9674, 4
          %s9685 = int_to_ptr.vmem [resolvable:$true] %s9684
          %9687 = dma.vmem_to_hbm [thread:$0]  %s9685, 16, %s9682, %s9672
        $region68: #{ripeness_classifier_forward.1} parent=63 // pred_fallthru
          _
      $region64: #{ripeness_classifier_forward.1} parent=5 // pred_fallthru
        _
      %p9688 = scmp.le.s32.totalorder 2, %s20
      // Predicated region
      $region69: #{ripeness_classifier_forward.1} parent=5 // pred_check
        %p9689 = pneg %p9688
      $region70: #{ripeness_classifier_forward.1} parent=5 // pred_check_branch
        %9691 = sbr.rel (%p9689) target = $region72
      $region71: #{ripeness_classifier_forward.1} parent=5 // pred_region
        %s9692 = ssub.s32 %s20, 2
        // Predicated region
        $region73: #{ripeness_classifier_forward.1} parent=71 // pred_check
          %p9693 = pneg %p285
        $region74: #{ripeness_classifier_forward.1} parent=71 // pred_check_branch
          %9695 = sbr.rel (%p9693) target = $region76
        $region75: #{ripeness_classifier_forward.1} parent=71 // pred_region
          %s9696 = sand.u32 %s270, 1
          %s9697 = scalar_lea.sflag [#allocation12], %s9696
          %s9698 = sand.u32 %s270, 1
          %s9699 = scalar_lea.vmem [#allocation11], %s9698
          %9700 = dma.done %s9697, 16
        $region76: #{ripeness_classifier_forward.1} parent=71 // pred_fallthru
          _
      $region72: #{ripeness_classifier_forward.1} parent=5 // pred_fallthru
        _
    $region6: #{ripeness_classifier_forward.1} parent=1 // loop_footer
      %s24 = sadd.s32 1, %s20
    $region7: #{ripeness_classifier_forward.1} parent=1 // loop_footer_branch
      %19 = sbr.rel target = $region3
    $region8: #{ripeness_classifier_forward.1} parent=1 // loop_exit
      _
    %9701 = vsyncpa [#allocation12], 1
    %s9702 = scalar_lea.sflag [#allocation12], 1
    %9703 = vsyncpa %s9702, 1

</llo_original>
